<compile_context>
chip_gen: v7x
topology: tpu7x:2x2x1
jax: 0.10.0
libtpu: 0.0.40
codegen_flags: <defaults>
</compile_context>

<pallas_src>
import functools

import jax
import jax.numpy as jnp
from jax.experimental import pallas as pl
from jax.experimental.pallas import tpu as pltpu


def _round_up(x, m):
    return ((x + m - 1) // m) * m


# ---------------------------------------------------------------------------
# Activations (applied on the f32 accumulator inside the kernels)
# ---------------------------------------------------------------------------
def _apply_activation(x, activation):
    if activation == "relu":
        return jnp.maximum(x, 0.0)
    if activation == "leaky_relu":
        return jnp.where(x > 0, x, 0.01 * x)
    if activation == "elu":
        return jnp.where(x > 0, x, jnp.expm1(x))
    if activation == "selu":
        return 1.0507009873554805 * jnp.where(
            x > 0, x, 1.6732632423543772 * jnp.expm1(x))
    if activation == "tanh":
        return jnp.tanh(x)
    if activation == "sigmoid":
        return 1.0 / (1.0 + jnp.exp(-x))
    if activation == "softplus":
        return jnp.maximum(x, 0.0) + jnp.log1p(jnp.exp(-jnp.abs(x)))
    if activation == "identity":
        return x
    raise ValueError(f"unsupported activation: {activation}")


# ---------------------------------------------------------------------------
# Pallas kernel 1: fused im2col + GEMM + bias + activation (one image / step)
# ---------------------------------------------------------------------------
def _conv4x4_s2_kernel(xs_ref, w_ref, b_ref, o_ref, *, w2, activation):
    """4x4 / stride-2 VALID conv on one image, fully fused in VMEM.

    xs_ref: (H2*W2 + 1, 4*Cin)  space-to-depth rows (+1 zero pad row), bf16
    w_ref:  (16*Cin, Np)        packed weights (VMEM resident), bf16
    b_ref:  (1, Np)             bias, f32
    o_ref:  (OH*W2, Np)         output rows in (oh, w2-col) order; rows whose
                                w2-column index == W2-1 are wrap garbage and
                                are sliced off by the caller.
    """
    m = o_ref.shape[0]                                   # OH * W2
    # The 4x4/s2 conv on x is a 2x2/s1 conv on the s2d tensor: each patch is
    # the concat of 4 neighbouring s2d pixels -> 4 contiguous row windows.
    segs = [
        xs_ref[ri * w2 + rj: ri * w2 + rj + m, :]
        for ri in (0, 1) for rj in (0, 1)
    ]
    patches = jnp.concatenate(segs, axis=-1)             # (OH*W2, 16*Cin)
    acc = jnp.dot(patches, w_ref[...], preferred_element_type=jnp.float32)
    acc = _apply_activation(acc + b_ref[...], activation)
    o_ref[...] = acc.astype(o_ref.dtype)


def conv4x4_s2(xs_flat, w2, w_mat, b_row, *, activation, out_dtype=jnp.bfloat16):
    """xs_flat: (B, H2*W2 + 1, 4*Cin) s2d rows.  Returns ((B, OH*W2, Np), OH)."""
    B, R, C4 = xs_flat.shape
    h2w2 = R - 1
    h2 = h2w2 // w2
    assert h2 * w2 == h2w2, (h2, w2, h2w2)
    K, Np = w_mat.shape
    assert K == 4 * C4, (K, C4)
    oh = h2 - 1
    m = oh * w2

    out = pl.pallas_call(
        functools.partial(_conv4x4_s2_kernel, w2=w2, activation=activation),
        out_shape=jax.ShapeDtypeStruct((B, m, Np), out_dtype),
        grid=(B,),
        in_specs=[
            pl.BlockSpec((None, R, C4), lambda b: (b, 0, 0)),   # one image
            pl.BlockSpec((K, Np), lambda b: (0, 0)),            # resident weight
            pl.BlockSpec((1, Np), lambda b: (0, 0)),            # resident bias
        ],
        out_specs=pl.BlockSpec((None, m, Np), lambda b: (b, 0, 0)),
        compiler_params=pltpu.CompilerParams(dimension_semantics=("parallel",)),
    )(xs_flat, w_mat, b_row)
    return out, oh


# ---------------------------------------------------------------------------
# Pallas kernel 2: plain GEMM + bias + activation (used for the fc layer)
# ---------------------------------------------------------------------------
def _linear_kernel(x_ref, w_ref, b_ref, o_ref, *, activation):
    acc = jnp.dot(x_ref[...], w_ref[...], preferred_element_type=jnp.float32)
    o_ref[...] = _apply_activation(acc + b_ref[...], activation).astype(o_ref.dtype)


def linear(x, w_mat, b_row, *, activation="identity", out_dtype=None, tm_max=1024):
    M, K = x.shape
    K2, Np = w_mat.shape
    assert K == K2, (K, K2)
    out_dtype = x.dtype if out_dtype is None else out_dtype
    tm = M if M <= tm_max else tm_max                    # tm_max is a mult. of 8
    out = pl.pallas_call(
        functools.partial(_linear_kernel, activation=activation),
        out_shape=jax.ShapeDtypeStruct((M, Np), out_dtype),
        grid=(pl.cdiv(M, tm),),
        in_specs=[
            pl.BlockSpec((tm, K), lambda i: (i, 0)),
            pl.BlockSpec((K, Np), lambda i: (0, 0)),
            pl.BlockSpec((1, Np), lambda i: (0, 0)),
        ],
        out_specs=pl.BlockSpec((tm, Np), lambda i: (i, 0)),
        compiler_params=pltpu.CompilerParams(dimension_semantics=("parallel",)),
    )(x, w_mat, b_row)
    return out


# ---------------------------------------------------------------------------
# Space-to-depth glue (XLA-side layout shuffle, same byte count as the input)
# ---------------------------------------------------------------------------
def _s2d_from_nchw(x):
    """(B, C, H, W) -> (B, H2*W2 + 1, 4*C); channel order (di, dj, c)."""
    B, C, H, W = x.shape
    h2, w2 = H // 2, W // 2
    x = x[:, :, :2 * h2, :2 * w2]
    x = x.reshape(B, C, h2, 2, w2, 2)
    x = jnp.transpose(x, (0, 2, 4, 3, 5, 1))             # (B, h2, w2, di, dj, C)
    x = x.reshape(B, h2 * w2, 4 * C)
    x = jnp.pad(x, ((0, 0), (0, 1), (0, 0)))             # +1 zero row: slice headroom
    return x, h2, w2


def _s2d_from_nhwc(x):
    """(B, H, W, C) -> (B, H2*W2 + 1, 4*C); channel order (di, dj, c)."""
    B, H, W, C = x.shape
    h2, w2 = H // 2, W // 2
    x = x[:, :2 * h2, :2 * w2, :]
    x = x.reshape(B, h2, 2, w2, 2, C)
    x = jnp.transpose(x, (0, 1, 3, 2, 4, 5))             # (B, h2, w2, di, dj, C)
    x = x.reshape(B, h2 * w2, 4 * C)
    x = jnp.pad(x, ((0, 0), (0, 1), (0, 0)))
    return x, h2, w2


# ---------------------------------------------------------------------------
# Parameter init (PyTorch layout) and one-time packing into kernel layout
# ---------------------------------------------------------------------------
def init_conv_encoder(key, input_shape, embed_size, depth=32):
    kernels = [4, 4, 4, 4]
    params = {"convs": [], "fc": None}
    in_ch = input_shape[0]
    for i, k in enumerate(kernels):
        out_ch = depth * 2 ** i
        key, wk, bk = jax.random.split(key, 3)
        fan_in = in_ch * k * k
        bound = 1.0 / (fan_in ** 0.5)
        w = jax.random.uniform(wk, (out_ch, in_ch, k, k), jnp.float32, -bound, bound)
        b = jax.random.uniform(bk, (out_ch,), jnp.float32, -bound, bound)
        params["convs"].append((w, b))
        in_ch = out_ch
    if embed_size != 1024:  # nn.Linear(1024, embed_size); else nn.Identity()
        key, wk, bk = jax.random.split(key, 3)
        bound = 1.0 / (1024 ** 0.5)
        params["fc"] = (
            jax.random.uniform(wk, (1024, embed_size), jnp.float32, -bound, bound),
            jax.random.uniform(bk, (embed_size,), jnp.float32, -bound, bound),
        )
    return params


def _pack_conv(w, b, dtype):
    """(O, C, 4, 4) PyTorch conv weight -> (16*C, Np) in s2d-patch row order."""
    O, C, KH, KW = w.shape
    assert KH == 4 and KW == 4
    wm = jnp.transpose(w, (2, 3, 1, 0))                  # (kh, kw, C, O)
    wm = wm.reshape(2, 2, 2, 2, C, O)                    # (khH, khL, kwH, kwL, C, O)
    wm = jnp.transpose(wm, (0, 2, 1, 3, 4, 5))           # (khH, kwH, khL, kwL, C, O)
    wm = wm.reshape(16 * C, O)
    n_pad = _round_up(O, 128)                            # lane-dense output columns
    if n_pad != O:
        wm = jnp.pad(wm, ((0, 0), (0, n_pad - O)))
        b = jnp.pad(b, ((0, n_pad - O),))
    return wm.astype(dtype), b.reshape(1, n_pad).astype(jnp.float32)


def _pack_fc(w, b, hw, c, dtype):
    """Permute fc input rows from PyTorch (c,h,w) flatten to NHWC (h,w,c)."""
    in_dim, E = w.shape
    assert in_dim == hw * c, (in_dim, hw, c)
    wm = jnp.transpose(w.reshape(c, hw, E), (1, 0, 2)).reshape(hw * c, E)
    e_pad = _round_up(E, 128)
    if e_pad != E:
        wm = jnp.pad(wm, ((0, 0), (0, e_pad - E)))
        b = jnp.pad(b, ((0, e_pad - E),))
    return wm.astype(dtype), b.reshape(1, e_pad).astype(jnp.float32)


def pack_params(params, input_shape, dtype=jnp.bfloat16):
    """One-time repack (outside jit): transpose/pad/cast weights for the kernels."""
    packed = {"convs": [], "fc": None}
    h, w = input_shape[1], input_shape[2]
    for (wt, bs) in params["convs"]:
        packed["convs"].append(_pack_conv(wt, bs, dtype))
        h, w = (h - 4) // 2 + 1, (w - 4) // 2 + 1
    if params["fc"] is not None:
        out_ch = params["convs"][-1][0].shape[0]
        packed["fc"] = _pack_fc(params["fc"][0], params["fc"][1], h * w, out_ch, dtype)
    meta = {
        "conv_channels": tuple(int(wt.shape[0]) for (wt, _) in params["convs"]),
        "embed_size": (int(params["fc"][0].shape[1])
                       if params["fc"] is not None else None),
    }
    return packed, meta


# ---------------------------------------------------------------------------
# Forward pass (mirrors the PyTorch ConvEncoder.forward)
# ---------------------------------------------------------------------------
@functools.partial(jax.jit,
                   static_argnames=("input_shape", "conv_channels",
                                    "embed_size", "activation"))
def conv_encoder_forward(packed, inputs, *, input_shape, conv_channels,
                         embed_size, activation="relu"):
    batch_shape = inputs.shape[:-3]
    x = inputs.reshape((-1,) + tuple(input_shape)).astype(jnp.bfloat16)   # (B,C,H,W)
    B = x.shape[0]

    # Single NCHW -> space-to-depth shuffle; bf16 activations for the conv stack
    # (f32 accumulation happens inside the kernels).
    xs, h2, w2 = _s2d_from_nchw(x)
    feat = None
    n_layers = len(conv_channels)
    for li, ((w_mat, b_row), out_ch) in enumerate(zip(packed["convs"], conv_channels)):
        y, oh = conv4x4_s2(xs, w2, w_mat, b_row, activation=activation)
        ow = w2 - 1
        # Drop the wrap-around column and lane padding (fused into next-layer prep).
        y = y.reshape(B, oh, w2, y.shape[-1])[:, :, :ow, :out_ch]   # (B,OH,OW,out_ch)
        if li + 1 < n_layers:
            xs, h2, w2 = _s2d_from_nhwc(y)
        else:
            feat = y

    if packed["fc"] is not None:
        w_fc, b_fc = packed["fc"]
        # fc weight rows were permuted at pack time to NHWC flatten order,
        # so no runtime transpose is needed here.
        out = linear(feat.reshape(B, -1), w_fc, b_fc,
                     activation="identity", out_dtype=jnp.float32)
        if out.shape[-1] != embed_size:
            out = out[:, :embed_size]
    else:
        # nn.Identity() fc: PyTorch flattens the conv output in (c, h, w) order.
        out = jnp.transpose(feat, (0, 3, 1, 2)).reshape(B, -1).astype(jnp.float32)
    return out.reshape(batch_shape + (out.shape[-1],))


# ---------------------------------------------------------------------------
# Pure-JAX f32 reference (correctness sanity check)
# ---------------------------------------------------------------------------
def reference_forward(params, inputs, input_shape, activation="relu"):
    x = inputs.reshape((-1,) + tuple(input_shape)).astype(jnp.float32)
    for (w, b) in params["convs"]:
        x = jax.lax.conv_general_dilated(
            x, w, window_strides=(2, 2), padding="VALID",
            dimension_numbers=("NCHW", "OIHW", "NCHW"))
        x = _apply_activation(x + b[None, :, None, None], activation)
    x = x.reshape(x.shape[0], -1)
    if params["fc"] is not None:
        w, b = params["fc"]
        x = x @ w + b
    return x.reshape(inputs.shape[:-3] + (x.shape[-1],))


if __name__ == "__main__":
    key = jax.random.PRNGKey(0)
    input_shape = (3, 64, 64)   # C,H,W: 64x64 so the flattened conv output is 1024
    embed_size = 128
    depth = 32

    pkey, xkey = jax.random.split(key)
    params = init_conv_encoder(pkey, input_shape, embed_size, depth=depth)
    packed, meta = pack_params(params, input_shape)          # one-time, outside jit

    x = jax.random.normal(xkey, (2,) + input_shape, dtype=jnp.float32)

    out = conv_encoder_forward(
        packed, x,
        input_shape=input_shape,
        conv_channels=meta["conv_channels"],
        embed_size=meta["embed_size"],
        activation="relu")
    out = jax.block_until_ready(out)
    assert out.shape == (2, embed_size), out.shape
    assert out.dtype == jnp.float32, out.dtype
    assert bool(jnp.all(jnp.isfinite(out)))

    # Loose tolerance: Pallas path uses bf16 MXU inputs vs the f32 reference.
    ref = reference_forward(params, x, input_shape, activation="relu")
    err = float(jnp.max(jnp.abs(out - ref)))
    tol = 2e-2 + 5e-2 * float(jnp.max(jnp.abs(ref)))
    assert err <= tol, (err, tol)

    print("KERNEL_OK")
</pallas_src>

<mosaic_0001>
module attributes {stable_mosaic.version = 11 : i64} {
  func.func @_conv4x4_s2_kernel(%arg0: i32, %arg1: memref<1x1025x12xbf16, #tpu.memory_space<vmem>>, %arg2: memref<48x128xbf16, #tpu.memory_space<vmem>>, %arg3: memref<1x128xf32, #tpu.memory_space<vmem>>, %arg4: memref<1x992x128xbf16, #tpu.memory_space<vmem>>) attributes {dimension_semantics = [#tpu.dimension_semantics<parallel>], iteration_bounds = array<i64: 2>, scalar_prefetch = 0 : i64, scratch_operands = 0 : i64, tpu.core_type = #tpu.core_type<tc>, window_params = [{transform_indices = @transform_0, window_bounds = array<i64: 1, 1025, 12>}, {pipeline_mode = #tpu.pipeline_mode<synchronous>, transform_indices = @transform_1, window_bounds = array<i64: 48, 128>}, {pipeline_mode = #tpu.pipeline_mode<synchronous>, transform_indices = @transform_2, window_bounds = array<i64: 1, 128>}, {transform_indices = @transform_3, window_bounds = array<i64: 1, 992, 128>}]} {
    %c0 = arith.constant 0 : index
    %c0_0 = arith.constant 0 : index
    %c0_1 = arith.constant 0 : index
    %0 = vector.load %arg1[%c0, %c0_0, %c0_1] : memref<1x1025x12xbf16, #tpu.memory_space<vmem>>, vector<1x992x12xbf16>
    %1 = vector.shape_cast %0 : vector<1x992x12xbf16> to vector<992x12xbf16>
    %c0_2 = arith.constant 0 : index
    %c1 = arith.constant 1 : index
    %c0_3 = arith.constant 0 : index
    %2 = vector.load %arg1[%c0_2, %c1, %c0_3] : memref<1x1025x12xbf16, #tpu.memory_space<vmem>>, vector<1x992x12xbf16>
    %3 = vector.shape_cast %2 : vector<1x992x12xbf16> to vector<992x12xbf16>
    %c0_4 = arith.constant 0 : index
    %c32 = arith.constant 32 : index
    %c0_5 = arith.constant 0 : index
    %4 = vector.load %arg1[%c0_4, %c32, %c0_5] : memref<1x1025x12xbf16, #tpu.memory_space<vmem>>, vector<1x992x12xbf16>
    %5 = vector.shape_cast %4 : vector<1x992x12xbf16> to vector<992x12xbf16>
    %c0_6 = arith.constant 0 : index
    %c33 = arith.constant 33 : index
    %c0_7 = arith.constant 0 : index
    %6 = vector.load %arg1[%c0_6, %c33, %c0_7] : memref<1x1025x12xbf16, #tpu.memory_space<vmem>>, vector<1x992x12xbf16>
    %7 = vector.shape_cast %6 : vector<1x992x12xbf16> to vector<992x12xbf16>
    %8 = tpu.concatenate %1, %3, %5, %7 in 1 : vector<992x12xbf16>, vector<992x12xbf16>, vector<992x12xbf16>, vector<992x12xbf16> -> vector<992x48xbf16>
    %c0_8 = arith.constant 0 : index
    %c0_9 = arith.constant 0 : index
    %9 = vector.load %arg2[%c0_8, %c0_9] : memref<48x128xbf16, #tpu.memory_space<vmem>>, vector<48x128xbf16>
    %cst = arith.constant dense<0.000000e+00> : vector<992x128xf32>
    %10 = tpu.matmul %8, %9, %cst {dimension_numbers = #tpu.dot_dimension_numbers<[1], [0], [0], [1], [0, 0, 1, 1], [], []>} : vector<992x48xbf16>, vector<48x128xbf16>, vector<992x128xf32> -> vector<992x128xf32>
    %c0_10 = arith.constant 0 : index
    %c0_11 = arith.constant 0 : index
    %11 = vector.load %arg3[%c0_10, %c0_11] : memref<1x128xf32, #tpu.memory_space<vmem>>, vector<1x128xf32>
    %12 = vector.broadcast %11 : vector<1x128xf32> to vector<992x128xf32>
    %13 = arith.addf %10, %12 : vector<992x128xf32>
    %cst_12 = arith.constant 0.000000e+00 : f32
    %14 = vector.broadcast %cst_12 : f32 to vector<992x128xf32>
    %15 = arith.maximumf %13, %14 : vector<992x128xf32>
    %16 = arith.truncf %15 : vector<992x128xf32> to vector<992x128xbf16>
    %c0_13 = arith.constant 0 : index
    %c0_14 = arith.constant 0 : index
    %c0_15 = arith.constant 0 : index
    %17 = vector.load %arg4[%c0_13, %c0_14, %c0_15] : memref<1x992x128xbf16, #tpu.memory_space<vmem>>, vector<1x992x128xbf16>
    %18 = vector.shape_cast %17 : vector<1x992x128xbf16> to vector<992x128xbf16>
    %19 = vector.shape_cast %16 : vector<992x128xbf16> to vector<1x992x128xbf16>
    tpu.vector_store %arg4[%c0_13, %c0_14, %c0_15], %19 {strides = array<i32>} : memref<1x992x128xbf16, #tpu.memory_space<vmem>>, vector<1x992x128xbf16>,
    return
  }
  func.func @transform_0(%arg0: i32) -> (i32, i32, i32) {
    %c0_i32 = arith.constant 0 : i32
    %c0_i32_0 = arith.constant 0 : i32
    %c0_i32_1 = arith.constant 0 : i32
    return %arg0, %c0_i32, %c0_i32_0 : i32, i32, i32
  }
  func.func @transform_1(%arg0: i32) -> (i32, i32) {
    %c0_i32 = arith.constant 0 : i32
    %c0_i32_0 = arith.constant 0 : i32
    %c0_i32_1 = arith.constant 0 : i32
    return %c0_i32, %c0_i32_0 : i32, i32
  }
  func.func @transform_2(%arg0: i32) -> (i32, i32) {
    %c0_i32 = arith.constant 0 : i32
    %c0_i32_0 = arith.constant 0 : i32
    %c0_i32_1 = arith.constant 0 : i32
    return %c0_i32, %c0_i32_0 : i32, i32
  }
  func.func @transform_3(%arg0: i32) -> (i32, i32, i32) {
    %c0_i32 = arith.constant 0 : i32
    %c0_i32_0 = arith.constant 0 : i32
    %c0_i32_1 = arith.constant 0 : i32
    return %arg0, %c0_i32, %c0_i32_0 : i32, i32, i32
  }
}

module attributes {stable_mosaic.version = 11 : i64} {
  func.func @_conv4x4_s2_kernel(%arg0: i32, %arg1: memref<1x226x128xbf16, #tpu.memory_space<vmem>>, %arg2: memref<512x128xbf16, #tpu.memory_space<vmem>>, %arg3: memref<1x128xf32, #tpu.memory_space<vmem>>, %arg4: memref<1x210x128xbf16, #tpu.memory_space<vmem>>) attributes {dimension_semantics = [#tpu.dimension_semantics<parallel>], iteration_bounds = array<i64: 2>, scalar_prefetch = 0 : i64, scratch_operands = 0 : i64, tpu.core_type = #tpu.core_type<tc>, window_params = [{transform_indices = @transform_0, window_bounds = array<i64: 1, 226, 128>}, {pipeline_mode = #tpu.pipeline_mode<synchronous>, transform_indices = @transform_1, window_bounds = array<i64: 512, 128>}, {pipeline_mode = #tpu.pipeline_mode<synchronous>, transform_indices = @transform_2, window_bounds = array<i64: 1, 128>}, {transform_indices = @transform_3, window_bounds = array<i64: 1, 210, 128>}]} {
    %c0 = arith.constant 0 : index
    %c0_0 = arith.constant 0 : index
    %c0_1 = arith.constant 0 : index
    %0 = vector.load %arg1[%c0, %c0_0, %c0_1] : memref<1x226x128xbf16, #tpu.memory_space<vmem>>, vector<1x210x128xbf16>
    %1 = vector.shape_cast %0 : vector<1x210x128xbf16> to vector<210x128xbf16>
    %c0_2 = arith.constant 0 : index
    %c1 = arith.constant 1 : index
    %c0_3 = arith.constant 0 : index
    %2 = vector.load %arg1[%c0_2, %c1, %c0_3] : memref<1x226x128xbf16, #tpu.memory_space<vmem>>, vector<1x210x128xbf16>
    %3 = vector.shape_cast %2 : vector<1x210x128xbf16> to vector<210x128xbf16>
    %c0_4 = arith.constant 0 : index
    %c15 = arith.constant 15 : index
    %c0_5 = arith.constant 0 : index
    %4 = vector.load %arg1[%c0_4, %c15, %c0_5] : memref<1x226x128xbf16, #tpu.memory_space<vmem>>, vector<1x210x128xbf16>
    %5 = vector.shape_cast %4 : vector<1x210x128xbf16> to vector<210x128xbf16>
    %c0_6 = arith.constant 0 : index
    %c16 = arith.constant 16 : index
    %c0_7 = arith.constant 0 : index
    %6 = vector.load %arg1[%c0_6, %c16, %c0_7] : memref<1x226x128xbf16, #tpu.memory_space<vmem>>, vector<1x210x128xbf16>
    %7 = vector.shape_cast %6 : vector<1x210x128xbf16> to vector<210x128xbf16>
    %8 = tpu.concatenate %1, %3, %5, %7 in 1 : vector<210x128xbf16>, vector<210x128xbf16>, vector<210x128xbf16>, vector<210x128xbf16> -> vector<210x512xbf16>
    %c0_8 = arith.constant 0 : index
    %c0_9 = arith.constant 0 : index
    %9 = vector.load %arg2[%c0_8, %c0_9] : memref<512x128xbf16, #tpu.memory_space<vmem>>, vector<512x128xbf16>
    %cst = arith.constant dense<0.000000e+00> : vector<210x128xf32>
    %10 = tpu.matmul %8, %9, %cst {dimension_numbers = #tpu.dot_dimension_numbers<[1], [0], [0], [1], [0, 0, 1, 1], [], []>} : vector<210x512xbf16>, vector<512x128xbf16>, vector<210x128xf32> -> vector<210x128xf32>
    %c0_10 = arith.constant 0 : index
    %c0_11 = arith.constant 0 : index
    %11 = vector.load %arg3[%c0_10, %c0_11] : memref<1x128xf32, #tpu.memory_space<vmem>>, vector<1x128xf32>
    %12 = vector.broadcast %11 : vector<1x128xf32> to vector<210x128xf32>
    %13 = arith.addf %10, %12 : vector<210x128xf32>
    %cst_12 = arith.constant 0.000000e+00 : f32
    %14 = vector.broadcast %cst_12 : f32 to vector<210x128xf32>
    %15 = arith.maximumf %13, %14 : vector<210x128xf32>
    %16 = arith.truncf %15 : vector<210x128xf32> to vector<210x128xbf16>
    %c0_13 = arith.constant 0 : index
    %c0_14 = arith.constant 0 : index
    %c0_15 = arith.constant 0 : index
    %17 = vector.load %arg4[%c0_13, %c0_14, %c0_15] : memref<1x210x128xbf16, #tpu.memory_space<vmem>>, vector<1x210x128xbf16>
    %18 = vector.shape_cast %17 : vector<1x210x128xbf16> to vector<210x128xbf16>
    %19 = vector.shape_cast %16 : vector<210x128xbf16> to vector<1x210x128xbf16>
    tpu.vector_store %arg4[%c0_13, %c0_14, %c0_15], %19 {strides = array<i32>} : memref<1x210x128xbf16, #tpu.memory_space<vmem>>, vector<1x210x128xbf16>,
    return
  }
  func.func @transform_0(%arg0: i32) -> (i32, i32, i32) {
    %c0_i32 = arith.constant 0 : i32
    %c0_i32_0 = arith.constant 0 : i32
    %c0_i32_1 = arith.constant 0 : i32
    return %arg0, %c0_i32, %c0_i32_0 : i32, i32, i32
  }
  func.func @transform_1(%arg0: i32) -> (i32, i32) {
    %c0_i32 = arith.constant 0 : i32
    %c0_i32_0 = arith.constant 0 : i32
    %c0_i32_1 = arith.constant 0 : i32
    return %c0_i32, %c0_i32_0 : i32, i32
  }
  func.func @transform_2(%arg0: i32) -> (i32, i32) {
    %c0_i32 = arith.constant 0 : i32
    %c0_i32_0 = arith.constant 0 : i32
    %c0_i32_1 = arith.constant 0 : i32
    return %c0_i32, %c0_i32_0 : i32, i32
  }
  func.func @transform_3(%arg0: i32) -> (i32, i32, i32) {
    %c0_i32 = arith.constant 0 : i32
    %c0_i32_0 = arith.constant 0 : i32
    %c0_i32_1 = arith.constant 0 : i32
    return %arg0, %c0_i32, %c0_i32_0 : i32, i32, i32
  }
}

module attributes {stable_mosaic.version = 11 : i64} {
  func.func @_conv4x4_s2_kernel(%arg0: i32, %arg1: memref<1x50x256xbf16, #tpu.memory_space<vmem>>, %arg2: memref<1024x128xbf16, #tpu.memory_space<vmem>>, %arg3: memref<1x128xf32, #tpu.memory_space<vmem>>, %arg4: memref<1x42x128xbf16, #tpu.memory_space<vmem>>) attributes {dimension_semantics = [#tpu.dimension_semantics<parallel>], iteration_bounds = array<i64: 2>, scalar_prefetch = 0 : i64, scratch_operands = 0 : i64, tpu.core_type = #tpu.core_type<tc>, window_params = [{transform_indices = @transform_0, window_bounds = array<i64: 1, 50, 256>}, {pipeline_mode = #tpu.pipeline_mode<synchronous>, transform_indices = @transform_1, window_bounds = array<i64: 1024, 128>}, {pipeline_mode = #tpu.pipeline_mode<synchronous>, transform_indices = @transform_2, window_bounds = array<i64: 1, 128>}, {transform_indices = @transform_3, window_bounds = array<i64: 1, 42, 128>}]} {
    %c0 = arith.constant 0 : index
    %c0_0 = arith.constant 0 : index
    %c0_1 = arith.constant 0 : index
    %0 = vector.load %arg1[%c0, %c0_0, %c0_1] : memref<1x50x256xbf16, #tpu.memory_space<vmem>>, vector<1x42x256xbf16>
    %1 = vector.shape_cast %0 : vector<1x42x256xbf16> to vector<42x256xbf16>
    %c0_2 = arith.constant 0 : index
    %c1 = arith.constant 1 : index
    %c0_3 = arith.constant 0 : index
    %2 = vector.load %arg1[%c0_2, %c1, %c0_3] : memref<1x50x256xbf16, #tpu.memory_space<vmem>>, vector<1x42x256xbf16>
    %3 = vector.shape_cast %2 : vector<1x42x256xbf16> to vector<42x256xbf16>
    %c0_4 = arith.constant 0 : index
    %c7 = arith.constant 7 : index
    %c0_5 = arith.constant 0 : index
    %4 = vector.load %arg1[%c0_4, %c7, %c0_5] : memref<1x50x256xbf16, #tpu.memory_space<vmem>>, vector<1x42x256xbf16>
    %5 = vector.shape_cast %4 : vector<1x42x256xbf16> to vector<42x256xbf16>
    %c0_6 = arith.constant 0 : index
    %c8 = arith.constant 8 : index
    %c0_7 = arith.constant 0 : index
    %6 = vector.load %arg1[%c0_6, %c8, %c0_7] : memref<1x50x256xbf16, #tpu.memory_space<vmem>>, vector<1x42x256xbf16>
    %7 = vector.shape_cast %6 : vector<1x42x256xbf16> to vector<42x256xbf16>
    %8 = tpu.concatenate %1, %3, %5, %7 in 1 : vector<42x256xbf16>, vector<42x256xbf16>, vector<42x256xbf16>, vector<42x256xbf16> -> vector<42x1024xbf16>
    %c0_8 = arith.constant 0 : index
    %c0_9 = arith.constant 0 : index
    %9 = vector.load %arg2[%c0_8, %c0_9] : memref<1024x128xbf16, #tpu.memory_space<vmem>>, vector<1024x128xbf16>
    %cst = arith.constant dense<0.000000e+00> : vector<42x128xf32>
    %10 = tpu.matmul %8, %9, %cst {dimension_numbers = #tpu.dot_dimension_numbers<[1], [0], [0], [1], [0, 0, 1, 1], [], []>} : vector<42x1024xbf16>, vector<1024x128xbf16>, vector<42x128xf32> -> vector<42x128xf32>
    %c0_10 = arith.constant 0 : index
    %c0_11 = arith.constant 0 : index
    %11 = vector.load %arg3[%c0_10, %c0_11] : memref<1x128xf32, #tpu.memory_space<vmem>>, vector<1x128xf32>
    %12 = vector.broadcast %11 : vector<1x128xf32> to vector<42x128xf32>
    %13 = arith.addf %10, %12 : vector<42x128xf32>
    %cst_12 = arith.constant 0.000000e+00 : f32
    %14 = vector.broadcast %cst_12 : f32 to vector<42x128xf32>
    %15 = arith.maximumf %13, %14 : vector<42x128xf32>
    %16 = arith.truncf %15 : vector<42x128xf32> to vector<42x128xbf16>
    %c0_13 = arith.constant 0 : index
    %c0_14 = arith.constant 0 : index
    %c0_15 = arith.constant 0 : index
    %17 = vector.load %arg4[%c0_13, %c0_14, %c0_15] : memref<1x42x128xbf16, #tpu.memory_space<vmem>>, vector<1x42x128xbf16>
    %18 = vector.shape_cast %17 : vector<1x42x128xbf16> to vector<42x128xbf16>
    %19 = vector.shape_cast %16 : vector<42x128xbf16> to vector<1x42x128xbf16>
    tpu.vector_store %arg4[%c0_13, %c0_14, %c0_15], %19 {strides = array<i32>} : memref<1x42x128xbf16, #tpu.memory_space<vmem>>, vector<1x42x128xbf16>,
    return
  }
  func.func @transform_0(%arg0: i32) -> (i32, i32, i32) {
    %c0_i32 = arith.constant 0 : i32
    %c0_i32_0 = arith.constant 0 : i32
    %c0_i32_1 = arith.constant 0 : i32
    return %arg0, %c0_i32, %c0_i32_0 : i32, i32, i32
  }
  func.func @transform_1(%arg0: i32) -> (i32, i32) {
    %c0_i32 = arith.constant 0 : i32
    %c0_i32_0 = arith.constant 0 : i32
    %c0_i32_1 = arith.constant 0 : i32
    return %c0_i32, %c0_i32_0 : i32, i32
  }
  func.func @transform_2(%arg0: i32) -> (i32, i32) {
    %c0_i32 = arith.constant 0 : i32
    %c0_i32_0 = arith.constant 0 : i32
    %c0_i32_1 = arith.constant 0 : i32
    return %c0_i32, %c0_i32_0 : i32, i32
  }
  func.func @transform_3(%arg0: i32) -> (i32, i32, i32) {
    %c0_i32 = arith.constant 0 : i32
    %c0_i32_0 = arith.constant 0 : i32
    %c0_i32_1 = arith.constant 0 : i32
    return %arg0, %c0_i32, %c0_i32_0 : i32, i32, i32
  }
}

module attributes {stable_mosaic.version = 11 : i64} {
  func.func @_linear_kernel(%arg0: i32, %arg1: memref<2x1024xbf16, #tpu.memory_space<vmem>>, %arg2: memref<1024x128xbf16, #tpu.memory_space<vmem>>, %arg3: memref<1x128xf32, #tpu.memory_space<vmem>>, %arg4: memref<2x128xf32, #tpu.memory_space<vmem>>) attributes {dimension_semantics = [#tpu.dimension_semantics<parallel>], iteration_bounds = array<i64: 1>, scalar_prefetch = 0 : i64, scratch_operands = 0 : i64, tpu.core_type = #tpu.core_type<tc>, window_params = [{transform_indices = @transform_0, window_bounds = array<i64: 2, 1024>}, {pipeline_mode = #tpu.pipeline_mode<synchronous>, transform_indices = @transform_1, window_bounds = array<i64: 1024, 128>}, {pipeline_mode = #tpu.pipeline_mode<synchronous>, transform_indices = @transform_2, window_bounds = array<i64: 1, 128>}, {transform_indices = @transform_3, window_bounds = array<i64: 2, 128>}]} {
    %c0 = arith.constant 0 : index
    %c0_0 = arith.constant 0 : index
    %0 = vector.load %arg1[%c0, %c0_0] : memref<2x1024xbf16, #tpu.memory_space<vmem>>, vector<2x1024xbf16>
    %c0_1 = arith.constant 0 : index
    %c0_2 = arith.constant 0 : index
    %1 = vector.load %arg2[%c0_1, %c0_2] : memref<1024x128xbf16, #tpu.memory_space<vmem>>, vector<1024x128xbf16>
    %cst = arith.constant dense<0.000000e+00> : vector<2x128xf32>
    %2 = tpu.matmul %0, %1, %cst {dimension_numbers = #tpu.dot_dimension_numbers<[1], [0], [0], [1], [0, 0, 1, 1], [], []>} : vector<2x1024xbf16>, vector<1024x128xbf16>, vector<2x128xf32> -> vector<2x128xf32>
    %c0_3 = arith.constant 0 : index
    %c0_4 = arith.constant 0 : index
    %3 = vector.load %arg3[%c0_3, %c0_4] : memref<1x128xf32, #tpu.memory_space<vmem>>, vector<1x128xf32>
    %4 = vector.broadcast %3 : vector<1x128xf32> to vector<2x128xf32>
    %5 = arith.addf %2, %4 : vector<2x128xf32>
    %c0_5 = arith.constant 0 : index
    %c0_6 = arith.constant 0 : index
    %6 = vector.load %arg4[%c0_5, %c0_6] : memref<2x128xf32, #tpu.memory_space<vmem>>, vector<2x128xf32>
    tpu.vector_store %arg4[%c0_5, %c0_6], %5 {strides = array<i32>} : memref<2x128xf32, #tpu.memory_space<vmem>>, vector<2x128xf32>,
    return
  }
  func.func @transform_0(%arg0: i32) -> (i32, i32) {
    %c0_i32 = arith.constant 0 : i32
    %c0_i32_0 = arith.constant 0 : i32
    return %arg0, %c0_i32 : i32, i32
  }
  func.func @transform_1(%arg0: i32) -> (i32, i32) {
    %c0_i32 = arith.constant 0 : i32
    %c0_i32_0 = arith.constant 0 : i32
    %c0_i32_1 = arith.constant 0 : i32
    return %c0_i32, %c0_i32_0 : i32, i32
  }
  func.func @transform_2(%arg0: i32) -> (i32, i32) {
    %c0_i32 = arith.constant 0 : i32
    %c0_i32_0 = arith.constant 0 : i32
    %c0_i32_1 = arith.constant 0 : i32
    return %c0_i32, %c0_i32_0 : i32, i32
  }
  func.func @transform_3(%arg0: i32) -> (i32, i32) {
    %c0_i32 = arith.constant 0 : i32
    %c0_i32_0 = arith.constant 0 : i32
    return %arg0, %c0_i32 : i32, i32
  }
}

module attributes {stable_mosaic.version = 11 : i64} {
  func.func @_conv4x4_s2_kernel(%arg0: i32, %arg1: memref<1x10x512xbf16, #tpu.memory_space<vmem>>, %arg2: memref<2048x256xbf16, #tpu.memory_space<vmem>>, %arg3: memref<1x256xf32, #tpu.memory_space<vmem>>, %arg4: memref<1x6x256xbf16, #tpu.memory_space<vmem>>) attributes {dimension_semantics = [#tpu.dimension_semantics<parallel>], iteration_bounds = array<i64: 2>, scalar_prefetch = 0 : i64, scratch_operands = 0 : i64, tpu.core_type = #tpu.core_type<tc>, window_params = [{transform_indices = @transform_0, window_bounds = array<i64: 1, 10, 512>}, {pipeline_mode = #tpu.pipeline_mode<synchronous>, transform_indices = @transform_1, window_bounds = array<i64: 2048, 256>}, {pipeline_mode = #tpu.pipeline_mode<synchronous>, transform_indices = @transform_2, window_bounds = array<i64: 1, 256>}, {transform_indices = @transform_3, window_bounds = array<i64: 1, 6, 256>}]} {
    %c0 = arith.constant 0 : index
    %c0_0 = arith.constant 0 : index
    %c0_1 = arith.constant 0 : index
    %0 = vector.load %arg1[%c0, %c0_0, %c0_1] : memref<1x10x512xbf16, #tpu.memory_space<vmem>>, vector<1x6x512xbf16>
    %1 = vector.shape_cast %0 : vector<1x6x512xbf16> to vector<6x512xbf16>
    %c0_2 = arith.constant 0 : index
    %c1 = arith.constant 1 : index
    %c0_3 = arith.constant 0 : index
    %2 = vector.load %arg1[%c0_2, %c1, %c0_3] : memref<1x10x512xbf16, #tpu.memory_space<vmem>>, vector<1x6x512xbf16>
    %3 = vector.shape_cast %2 : vector<1x6x512xbf16> to vector<6x512xbf16>
    %c0_4 = arith.constant 0 : index
    %c3 = arith.constant 3 : index
    %c0_5 = arith.constant 0 : index
    %4 = vector.load %arg1[%c0_4, %c3, %c0_5] : memref<1x10x512xbf16, #tpu.memory_space<vmem>>, vector<1x6x512xbf16>
    %5 = vector.shape_cast %4 : vector<1x6x512xbf16> to vector<6x512xbf16>
    %c0_6 = arith.constant 0 : index
    %c4 = arith.constant 4 : index
    %c0_7 = arith.constant 0 : index
    %6 = vector.load %arg1[%c0_6, %c4, %c0_7] : memref<1x10x512xbf16, #tpu.memory_space<vmem>>, vector<1x6x512xbf16>
    %7 = vector.shape_cast %6 : vector<1x6x512xbf16> to vector<6x512xbf16>
    %8 = tpu.concatenate %1, %3, %5, %7 in 1 : vector<6x512xbf16>, vector<6x512xbf16>, vector<6x512xbf16>, vector<6x512xbf16> -> vector<6x2048xbf16>
    %c0_8 = arith.constant 0 : index
    %c0_9 = arith.constant 0 : index
    %9 = vector.load %arg2[%c0_8, %c0_9] : memref<2048x256xbf16, #tpu.memory_space<vmem>>, vector<2048x256xbf16>
    %cst = arith.constant dense<0.000000e+00> : vector<6x256xf32>
    %10 = tpu.matmul %8, %9, %cst {dimension_numbers = #tpu.dot_dimension_numbers<[1], [0], [0], [1], [0, 0, 1, 1], [], []>} : vector<6x2048xbf16>, vector<2048x256xbf16>, vector<6x256xf32> -> vector<6x256xf32>
    %c0_10 = arith.constant 0 : index
    %c0_11 = arith.constant 0 : index
    %11 = vector.load %arg3[%c0_10, %c0_11] : memref<1x256xf32, #tpu.memory_space<vmem>>, vector<1x256xf32>
    %12 = vector.broadcast %11 : vector<1x256xf32> to vector<6x256xf32>
    %13 = arith.addf %10, %12 : vector<6x256xf32>
    %cst_12 = arith.constant 0.000000e+00 : f32
    %14 = vector.broadcast %cst_12 : f32 to vector<6x256xf32>
    %15 = arith.maximumf %13, %14 : vector<6x256xf32>
    %16 = arith.truncf %15 : vector<6x256xf32> to vector<6x256xbf16>
    %c0_13 = arith.constant 0 : index
    %c0_14 = arith.constant 0 : index
    %c0_15 = arith.constant 0 : index
    %17 = vector.load %arg4[%c0_13, %c0_14, %c0_15] : memref<1x6x256xbf16, #tpu.memory_space<vmem>>, vector<1x6x256xbf16>
    %18 = vector.shape_cast %17 : vector<1x6x256xbf16> to vector<6x256xbf16>
    %19 = vector.shape_cast %16 : vector<6x256xbf16> to vector<1x6x256xbf16>
    tpu.vector_store %arg4[%c0_13, %c0_14, %c0_15], %19 {strides = array<i32>} : memref<1x6x256xbf16, #tpu.memory_space<vmem>>, vector<1x6x256xbf16>,
    return
  }
  func.func @transform_0(%arg0: i32) -> (i32, i32, i32) {
    %c0_i32 = arith.constant 0 : i32
    %c0_i32_0 = arith.constant 0 : i32
    %c0_i32_1 = arith.constant 0 : i32
    return %arg0, %c0_i32, %c0_i32_0 : i32, i32, i32
  }
  func.func @transform_1(%arg0: i32) -> (i32, i32) {
    %c0_i32 = arith.constant 0 : i32
    %c0_i32_0 = arith.constant 0 : i32
    %c0_i32_1 = arith.constant 0 : i32
    return %c0_i32, %c0_i32_0 : i32, i32
  }
  func.func @transform_2(%arg0: i32) -> (i32, i32) {
    %c0_i32 = arith.constant 0 : i32
    %c0_i32_0 = arith.constant 0 : i32
    %c0_i32_1 = arith.constant 0 : i32
    return %c0_i32, %c0_i32_0 : i32, i32
  }
  func.func @transform_3(%arg0: i32) -> (i32, i32, i32) {
    %c0_i32 = arith.constant 0 : i32
    %c0_i32_0 = arith.constant 0 : i32
    %c0_i32_1 = arith.constant 0 : i32
    return %arg0, %c0_i32, %c0_i32_0 : i32, i32, i32
  }
}

</mosaic_0001>

<llo_original>
// kernel: conv_encoder_forward.5
$region0: #{conv_encoder_forward.5}
  #allocation0 [shape = 'u32[]', space=smem, size = 0x4, offset = 0x4, fixed_abs, tag = 'smem constant byte address 0x4 - core index']
  #allocation1 [shape = 'u32[144,128]{1,0:T(1,128)}', space=vmem, size = 0x12000, scoped, tag = 'internal scratch']
  %s0 = inlined_call_operand.vmem [shape: bf16[2,1025,12], index: 0, kind: input, shape index: {}]
  %s1 = inlined_call_operand.vmem [shape: bf16[48,128], index: 1, kind: input, shape index: {}]
  %s2 = inlined_call_operand.vmem [shape: f32[1,128], index: 2, kind: input, shape index: {}]
  %s3 = inlined_call_operand.vmem [shape: bf16[2,992,128], index: 3, kind: output, shape index: {}]
  %s4 = sld [smem:[#allocation0]]
  $region45: #{conv_encoder_forward.5} parent=0
    _
  %s6 = ssub.s32 1, %s4
  %s7 = scalar_select 0, %s6, %s4
  loop: start=0, step=1, limit=4
  $region2: #{conv_encoder_forward.5} parent=0 // loop_pre_header
    _
  $region3: #{conv_encoder_forward.5} parent=0 // loop_header
    %s9 = sphi 0, %s13
    %p10 = scmp.ge.s32.totalorder %s9, 4
    %s19 = sphi 0, %s21
    %s22 = sphi 0, %s19
    %s23 = sphi 0, %s22
    %s39 = sphi 0, %s23
    %s43 = sphi 0, %s43
    %s45 = sphi 0, %s43
    %s46 = sphi 0, %s45
    %s60 = sphi 0, %s46
    %s64 = sphi 0, %s64
    %s66 = sphi 0, %s64
    %s67 = sphi 0, %s66
    %s81 = sphi 0, %s67
    %s87 = sphi 0, %s89
    %s90 = sphi 0, %s87
    %s91 = sphi 0, %s90
    %s107 = sphi 0, %s91
  $region4: #{conv_encoder_forward.5} parent=0 // loop_header_branch
    %12 = sbr.rel (%p10) target = $region8
  $region5: #{conv_encoder_forward.5} parent=0 // loop_body
    %s14 = ssub.s32 %s9, 1
    %s15 = ssub.s32 %s9, 2
    %s16 = sadd.s32 %s9, 1
    %s17 = ssub.s32 %s9, %s16
    %p18 = scmp.eq.s32.totalorder %s17, 0
    %s20 = sadd.s32 %s19, 1
    %s21 = scalar_select %p18, %s19, %s20
    %p24 = pneg %p18
    %p25 = scmp.eq.s32.totalorder %s9, 1
    %p26 = por %p24, %p25
    %p27 = scmp.ne.s32.totalorder %s19, %s22
    %p28 = scmp.eq.s32.totalorder %s9, 0
    %p29 = por %p27, %p28
    %p30 = scmp.ne.s32.totalorder %s19, %s22
    %p31 = scmp.eq.s32.totalorder %s14, 1
    %p32 = por %p30, %p31
    %p33 = scmp.ne.s32.totalorder %s22, %s23
    %p34 = scmp.eq.s32.totalorder %s14, 0
    %p35 = por %p33, %p34
    %p36 = scmp.ne.s32.totalorder %s22, %s23
    %p37 = scmp.eq.s32.totalorder %s15, 1
    %p38 = por %p36, %p37
    %p40 = scmp.ne.s32.totalorder %s23, %s39
    %p41 = scmp.eq.s32.totalorder %s15, 0
    %p42 = por %p40, %p41
    %s44 = sadd.s32 %s43, 1
    %p47 = scmp.eq.s32.totalorder %s9, 1
    %p48 = scmp.ne.s32.totalorder %s43, %s45
    %p49 = scmp.eq.s32.totalorder %s9, 0
    %p50 = por %p48, %p49
    %p51 = scmp.ne.s32.totalorder %s43, %s45
    %p52 = scmp.eq.s32.totalorder %s14, 1
    %p53 = por %p51, %p52
    %p54 = scmp.ne.s32.totalorder %s45, %s46
    %p55 = scmp.eq.s32.totalorder %s14, 0
    %p56 = por %p54, %p55
    %p57 = scmp.ne.s32.totalorder %s45, %s46
    %p58 = scmp.eq.s32.totalorder %s15, 1
    %p59 = por %p57, %p58
    %p61 = scmp.ne.s32.totalorder %s46, %s60
    %p62 = scmp.eq.s32.totalorder %s15, 0
    %p63 = por %p61, %p62
    %s65 = sadd.s32 %s64, 1
    %p68 = scmp.eq.s32.totalorder %s9, 1
    %p69 = scmp.ne.s32.totalorder %s64, %s66
    %p70 = scmp.eq.s32.totalorder %s9, 0
    %p71 = por %p69, %p70
    %p72 = scmp.ne.s32.totalorder %s64, %s66
    %p73 = scmp.eq.s32.totalorder %s14, 1
    %p74 = por %p72, %p73
    %p75 = scmp.ne.s32.totalorder %s66, %s67
    %p76 = scmp.eq.s32.totalorder %s14, 0
    %p77 = por %p75, %p76
    %p78 = scmp.ne.s32.totalorder %s66, %s67
    %p79 = scmp.eq.s32.totalorder %s15, 1
    %p80 = por %p78, %p79
    %p82 = scmp.ne.s32.totalorder %s67, %s81
    %p83 = scmp.eq.s32.totalorder %s15, 0
    %p84 = por %p82, %p83
    %s85 = ssub.s32 %s9, %s16
    %p86 = scmp.eq.s32.totalorder %s85, 0
    %s88 = sadd.s32 %s87, 1
    %s89 = scalar_select %p86, %s87, %s88
    %p92 = pneg %p86
    %p93 = scmp.eq.s32.totalorder %s9, 1
    %p94 = por %p92, %p93
    %p95 = scmp.ne.s32.totalorder %s87, %s90
    %p96 = scmp.eq.s32.totalorder %s9, 0
    %p97 = por %p95, %p96
    %p98 = scmp.ne.s32.totalorder %s87, %s90
    %p99 = scmp.eq.s32.totalorder %s14, 1
    %p100 = por %p98, %p99
    %p101 = scmp.ne.s32.totalorder %s90, %s91
    %p102 = scmp.eq.s32.totalorder %s14, 0
    %p103 = por %p101, %p102
    %p104 = scmp.ne.s32.totalorder %s90, %s91
    %p105 = scmp.eq.s32.totalorder %s15, 1
    %p106 = por %p104, %p105
    %p108 = scmp.ne.s32.totalorder %s91, %s107
    %p109 = scmp.eq.s32.totalorder %s15, 0
    %p110 = por %p108, %p109
    %p111 = scmp.le.s32.totalorder 1, %s9
    %p112 = scmp.lt.s32.totalorder %s9, 3
    %p113 = pnand %p111, %p112
    %p114 = pneg %p113
    // Predicated region
    $region9: #{conv_encoder_forward.5} parent=5 // pred_check
      _
    $region10: #{conv_encoder_forward.5} parent=5 // pred_check_branch
      %116 = sbr.rel (%p113) target = $region12
    $region11: #{conv_encoder_forward.5} parent=5 // pred_region
      %s117 = ssub.s32 %s9, 1
      // Predicated region
      $region13: #{conv_encoder_forward.5} parent=11 // pred_check
        %p118 = pneg %p56
      $region14: #{conv_encoder_forward.5} parent=11 // pred_check_branch
        %120 = sbr.rel (%p118) target = $region16
      $region15: #{conv_encoder_forward.5} parent=11 // pred_region
        _
      $region16: #{conv_encoder_forward.5} parent=11 // pred_fallthru
        _
      // Predicated region
      $region17: #{conv_encoder_forward.5} parent=11 // pred_check
        %p121 = pneg %p77
      $region18: #{conv_encoder_forward.5} parent=11 // pred_check_branch
        %123 = sbr.rel (%p121) target = $region20
      $region19: #{conv_encoder_forward.5} parent=11 // pred_region
        _
      $region20: #{conv_encoder_forward.5} parent=11 // pred_fallthru
        _
    $region12: #{conv_encoder_forward.5} parent=5 // pred_fallthru
      _
    %p124 = scmp.lt.s32.totalorder %s9, 2
    // Predicated region
    $region21: #{conv_encoder_forward.5} parent=5 // pred_check
      %p125 = pneg %p124
    $region22: #{conv_encoder_forward.5} parent=5 // pred_check_branch
      %127 = sbr.rel (%p125) target = $region24
    $region23: #{conv_encoder_forward.5} parent=5 // pred_region
      // Predicated region
      $region25: #{conv_encoder_forward.5} parent=23 // pred_check
        %p128 = pneg %p29
      $region26: #{conv_encoder_forward.5} parent=23 // pred_check_branch
        %130 = sbr.rel (%p128) target = $region28
      $region27: #{conv_encoder_forward.5} parent=23 // pred_region
        %p131 = scmp.lt.s32.totalorder %s9, 1
        %s132 = scalar_select %p131, %s9, 1
        %s133 = smul.addr %s132, 129
        %s134 = smul.addr %s133, 4
        %s135 = scalar_lea.vmem %s0, %s134
      $region28: #{conv_encoder_forward.5} parent=23 // pred_fallthru
        _
    $region24: #{conv_encoder_forward.5} parent=5 // pred_fallthru
      _
    %p136 = scmp.le.s32.totalorder 1, %s9
    %p137 = scmp.lt.s32.totalorder %s9, 3
    %p138 = pnand %p136, %p137
    %p139 = pneg %p138
    // Predicated region
    $region29: #{conv_encoder_forward.5} parent=5 // pred_check
      _
    $region30: #{conv_encoder_forward.5} parent=5 // pred_check_branch
      %141 = sbr.rel (%p138) target = $region32
    $region31: #{conv_encoder_forward.5} parent=5 // pred_region
      %s142 = ssub.s32 %s9, 1
      %p143 = scmp.lt.s32.totalorder %s14, 1
      %s144 = scalar_select %p143, %s14, 1
      %s145 = smul.addr %s144, 129
      %s146 = smul.addr %s145, 4
      %s147 = scalar_lea.vmem %s0, %s146
      %p148 = pneg %p35
      %p149 = pneg %p32
      %p150 = pneg %p56
      %p151 = pneg %p53
      %p152 = pneg %p77
      %p153 = pneg %p74
      %p154 = pneg %p103
      %p155 = pneg %p100
      %p156 = scmp.lt.s32.totalorder %s14, 1
      %s157 = scalar_select %p156, %s14, 1
      %s158 = smul.addr %s157, 124
      %s159 = smul.addr %s158, 4
      %s160 = scalar_lea.vmem %s3, %s159
      %p161 = scmp.lt.s32.totalorder %s14, 1
      %s162 = scalar_select %p161, %s14, 1
      %s163 = smul.addr %s162, 129
      %s164 = smul.addr %s163, 4
      %s165 = scalar_lea.vmem %s0, %s164
      %p166 = scmp.lt.s32.totalorder %s14, 1
      %s167 = scalar_select %p166, %s14, 1
      %s168 = smul.addr %s167, 124
      %s169 = smul.addr %s168, 4
      %s170 = scalar_lea.vmem %s3, %s169
      %v172 = vld [vmem:[%s165] sm:$0xf]
      %v173 = vld [vmem:[%s165 + $0x4] sm:$0xf]
      %v174 = vld [vmem:[%s165 + $0x8] sm:$0xf]
      %v175 = vld [vmem:[%s165 + $0xc] sm:$0xf]
      %v176 = vld [vmem:[%s165 + $0x10] sm:$0xf]
      %v177 = vld [vmem:[%s165 + $0x14] sm:$0xf]
      %v178 = vld [vmem:[%s165 + $0x18] sm:$0xf]
      %v179 = vld [vmem:[%s165 + $0x1c] sm:$0xf]
      %v180 = vld [vmem:[%s165 + $0x20] sm:$0xf]
      %v181 = vld [vmem:[%s165 + $0x24] sm:$0xf]
      %v182 = vld [vmem:[%s165 + $0x28] sm:$0xf]
      %v183 = vld [vmem:[%s165 + $0x2c] sm:$0xf]
      %v184 = vld [vmem:[%s165 + $0x30] sm:$0xf]
      %v185 = vld [vmem:[%s165 + $0x34] sm:$0xf]
      %v186 = vld [vmem:[%s165 + $0x38] sm:$0xf]
      %v187 = vld [vmem:[%s165 + $0x3c] sm:$0xf]
      %v188 = vld [vmem:[%s165 + $0x40] sm:$0xf]
      %v189 = vld [vmem:[%s165 + $0x44] sm:$0xf]
      %v190 = vld [vmem:[%s165 + $0x48] sm:$0xf]
      %v191 = vld [vmem:[%s165 + $0x4c] sm:$0xf]
      %v192 = vld [vmem:[%s165 + $0x50] sm:$0xf]
      %v193 = vld [vmem:[%s165 + $0x54] sm:$0xf]
      %v194 = vld [vmem:[%s165 + $0x58] sm:$0xf]
      %v195 = vld [vmem:[%s165 + $0x5c] sm:$0xf]
      %v196 = vld [vmem:[%s165 + $0x60] sm:$0xf]
      %v197 = vld [vmem:[%s165 + $0x64] sm:$0xf]
      %v198 = vld [vmem:[%s165 + $0x68] sm:$0xf]
      %v199 = vld [vmem:[%s165 + $0x6c] sm:$0xf]
      %v200 = vld [vmem:[%s165 + $0x70] sm:$0xf]
      %v201 = vld [vmem:[%s165 + $0x74] sm:$0xf]
      %v202 = vld [vmem:[%s165 + $0x78] sm:$0xf]
      %v203 = vld [vmem:[%s165 + $0x7c] sm:$0xf]
      %v204 = vld [vmem:[%s165 + $0x80] sm:$0xf]
      %v205 = vld [vmem:[%s165 + $0x84] sm:$0xf]
      %v206 = vld [vmem:[%s165 + $0x88] sm:$0xf]
      %v207 = vld [vmem:[%s165 + $0x8c] sm:$0xf]
      %v208 = vld [vmem:[%s165 + $0x90] sm:$0xf]
      %v209 = vld [vmem:[%s165 + $0x94] sm:$0xf]
      %v210 = vld [vmem:[%s165 + $0x98] sm:$0xf]
      %v211 = vld [vmem:[%s165 + $0x9c] sm:$0xf]
      %v212 = vld [vmem:[%s165 + $0xa0] sm:$0xf]
      %v213 = vld [vmem:[%s165 + $0xa4] sm:$0xf]
      %v214 = vld [vmem:[%s165 + $0xa8] sm:$0xf]
      %v215 = vld [vmem:[%s165 + $0xac] sm:$0xf]
      %v216 = vld [vmem:[%s165 + $0xb0] sm:$0xf]
      %v217 = vld [vmem:[%s165 + $0xb4] sm:$0xf]
      %v218 = vld [vmem:[%s165 + $0xb8] sm:$0xf]
      %v219 = vld [vmem:[%s165 + $0xbc] sm:$0xf]
      %v220 = vld [vmem:[%s165 + $0xc0] sm:$0xf]
      %v221 = vld [vmem:[%s165 + $0xc4] sm:$0xf]
      %v222 = vld [vmem:[%s165 + $0xc8] sm:$0xf]
      %v223 = vld [vmem:[%s165 + $0xcc] sm:$0xf]
      %v224 = vld [vmem:[%s165 + $0xd0] sm:$0xf]
      %v225 = vld [vmem:[%s165 + $0xd4] sm:$0xf]
      %v226 = vld [vmem:[%s165 + $0xd8] sm:$0xf]
      %v227 = vld [vmem:[%s165 + $0xdc] sm:$0xf]
      %v228 = vld [vmem:[%s165 + $0xe0] sm:$0xf]
      %v229 = vld [vmem:[%s165 + $0xe4] sm:$0xf]
      %v230 = vld [vmem:[%s165 + $0xe8] sm:$0xf]
      %v231 = vld [vmem:[%s165 + $0xec] sm:$0xf]
      %v232 = vld [vmem:[%s165 + $0xf0] sm:$0xf]
      %v233 = vld [vmem:[%s165 + $0xf4] sm:$0xf]
      %v234 = vld [vmem:[%s165 + $0xf8] sm:$0xf]
      %v235 = vld [vmem:[%s165 + $0xfc] sm:$0xf]
      %v236 = vld [vmem:[%s165 + $0x100] sm:$0xf]
      %v237 = vld [vmem:[%s165 + $0x104] sm:$0xf]
      %v238 = vld [vmem:[%s165 + $0x108] sm:$0xf]
      %v239 = vld [vmem:[%s165 + $0x10c] sm:$0xf]
      %v240 = vld [vmem:[%s165 + $0x110] sm:$0xf]
      %v241 = vld [vmem:[%s165 + $0x114] sm:$0xf]
      %v242 = vld [vmem:[%s165 + $0x118] sm:$0xf]
      %v243 = vld [vmem:[%s165 + $0x11c] sm:$0xf]
      %v244 = vld [vmem:[%s165 + $0x120] sm:$0xf]
      %v245 = vld [vmem:[%s165 + $0x124] sm:$0xf]
      %v246 = vld [vmem:[%s165 + $0x128] sm:$0xf]
      %v247 = vld [vmem:[%s165 + $0x12c] sm:$0xf]
      %v248 = vld [vmem:[%s165 + $0x130] sm:$0xf]
      %v249 = vld [vmem:[%s165 + $0x134] sm:$0xf]
      %v250 = vld [vmem:[%s165 + $0x138] sm:$0xf]
      %v251 = vld [vmem:[%s165 + $0x13c] sm:$0xf]
      %v252 = vld [vmem:[%s165 + $0x140] sm:$0xf]
      %v253 = vld [vmem:[%s165 + $0x144] sm:$0xf]
      %v254 = vld [vmem:[%s165 + $0x148] sm:$0xf]
      %v255 = vld [vmem:[%s165 + $0x14c] sm:$0xf]
      %v256 = vld [vmem:[%s165 + $0x150] sm:$0xf]
      %v257 = vld [vmem:[%s165 + $0x154] sm:$0xf]
      %v258 = vld [vmem:[%s165 + $0x158] sm:$0xf]
      %v259 = vld [vmem:[%s165 + $0x15c] sm:$0xf]
      %v260 = vld [vmem:[%s165 + $0x160] sm:$0xf]
      %v261 = vld [vmem:[%s165 + $0x164] sm:$0xf]
      %v262 = vld [vmem:[%s165 + $0x168] sm:$0xf]
      %v263 = vld [vmem:[%s165 + $0x16c] sm:$0xf]
      %v264 = vld [vmem:[%s165 + $0x170] sm:$0xf]
      %v265 = vld [vmem:[%s165 + $0x174] sm:$0xf]
      %v266 = vld [vmem:[%s165 + $0x178] sm:$0xf]
      %v267 = vld [vmem:[%s165 + $0x17c] sm:$0xf]
      %v268 = vld [vmem:[%s165 + $0x180] sm:$0xf]
      %v269 = vld [vmem:[%s165 + $0x184] sm:$0xf]
      %v270 = vld [vmem:[%s165 + $0x188] sm:$0xf]
      %v271 = vld [vmem:[%s165 + $0x18c] sm:$0xf]
      %v272 = vld [vmem:[%s165 + $0x190] sm:$0xf]
      %v273 = vld [vmem:[%s165 + $0x194] sm:$0xf]
      %v274 = vld [vmem:[%s165 + $0x198] sm:$0xf]
      %v275 = vld [vmem:[%s165 + $0x19c] sm:$0xf]
      %v276 = vld [vmem:[%s165 + $0x1a0] sm:$0xf]
      %v277 = vld [vmem:[%s165 + $0x1a4] sm:$0xf]
      %v278 = vld [vmem:[%s165 + $0x1a8] sm:$0xf]
      %v279 = vld [vmem:[%s165 + $0x1ac] sm:$0xf]
      %v280 = vld [vmem:[%s165 + $0x1b0] sm:$0xf]
      %v281 = vld [vmem:[%s165 + $0x1b4] sm:$0xf]
      %v282 = vld [vmem:[%s165 + $0x1b8] sm:$0xf]
      %v283 = vld [vmem:[%s165 + $0x1bc] sm:$0xf]
      %v284 = vld [vmem:[%s165 + $0x1c0] sm:$0xf]
      %v285 = vld [vmem:[%s165 + $0x1c4] sm:$0xf]
      %v286 = vld [vmem:[%s165 + $0x1c8] sm:$0xf]
      %v287 = vld [vmem:[%s165 + $0x1cc] sm:$0xf]
      %v288 = vld [vmem:[%s165 + $0x1d0] sm:$0xf]
      %v289 = vld [vmem:[%s165 + $0x1d4] sm:$0xf]
      %v290 = vld [vmem:[%s165 + $0x1d8] sm:$0xf]
      %v291 = vld [vmem:[%s165 + $0x1dc] sm:$0xf]
      %v292 = vld [vmem:[%s165 + $0x1e0] sm:$0xf]
      %v293 = vld [vmem:[%s165 + $0x1e4] sm:$0xf]
      %v294 = vld [vmem:[%s165 + $0x1e8] sm:$0xf]
      %v295 = vld [vmem:[%s165 + $0x1ec] sm:$0xf]
      %v296 = vld [vmem:[%s165 + $0x1f0] sm:$0x1]
      %v297 = vld [vmem:[%s165 + $0x1f0] sm:$0xf]
      %v298 = vld [vmem:[%s165 + $0x1f4] sm:$0xf]
      %v299 = vld [vmem:[%s165 + $0x1f8] sm:$0xf]
      %v300 = vld [vmem:[%s165 + $0x1fc] sm:$0xf]
      %v301 = vld [vmem:[%s165 + $0x200] sm:$0x1]
      %v426 = vunpack.c.l.b16 %v172
      %v427 = vunpack.c.l.b16 %v173
      %v428 = vunpack.c.l.b16 %v174
      %v429 = vunpack.c.l.b16 %v175
      %v430 = vunpack.c.l.b16 %v176
      %v431 = vunpack.c.l.b16 %v177
      %v432 = vunpack.c.l.b16 %v178
      %v433 = vunpack.c.l.b16 %v179
      %v434 = vunpack.c.l.b16 %v180
      %v435 = vunpack.c.l.b16 %v181
      %v436 = vunpack.c.l.b16 %v182
      %v437 = vunpack.c.l.b16 %v183
      %v438 = vunpack.c.l.b16 %v184
      %v439 = vunpack.c.l.b16 %v185
      %v440 = vunpack.c.l.b16 %v186
      %v441 = vunpack.c.l.b16 %v187
      %v442 = vunpack.c.l.b16 %v188
      %v443 = vunpack.c.l.b16 %v189
      %v444 = vunpack.c.l.b16 %v190
      %v445 = vunpack.c.l.b16 %v191
      %v446 = vunpack.c.l.b16 %v192
      %v447 = vunpack.c.l.b16 %v193
      %v448 = vunpack.c.l.b16 %v194
      %v449 = vunpack.c.l.b16 %v195
      %v450 = vunpack.c.l.b16 %v196
      %v451 = vunpack.c.l.b16 %v197
      %v452 = vunpack.c.l.b16 %v198
      %v453 = vunpack.c.l.b16 %v199
      %v454 = vunpack.c.l.b16 %v200
      %v455 = vunpack.c.l.b16 %v201
      %v456 = vunpack.c.l.b16 %v202
      %v457 = vunpack.c.l.b16 %v203
      %v458 = vunpack.c.l.b16 %v204
      %v459 = vunpack.c.l.b16 %v205
      %v460 = vunpack.c.l.b16 %v206
      %v461 = vunpack.c.l.b16 %v207
      %v462 = vunpack.c.l.b16 %v208
      %v463 = vunpack.c.l.b16 %v209
      %v464 = vunpack.c.l.b16 %v210
      %v465 = vunpack.c.l.b16 %v211
      %v466 = vunpack.c.l.b16 %v212
      %v467 = vunpack.c.l.b16 %v213
      %v468 = vunpack.c.l.b16 %v214
      %v469 = vunpack.c.l.b16 %v215
      %v470 = vunpack.c.l.b16 %v216
      %v471 = vunpack.c.l.b16 %v217
      %v472 = vunpack.c.l.b16 %v218
      %v473 = vunpack.c.l.b16 %v219
      %v474 = vunpack.c.l.b16 %v220
      %v475 = vunpack.c.l.b16 %v221
      %v476 = vunpack.c.l.b16 %v222
      %v477 = vunpack.c.l.b16 %v223
      %v478 = vunpack.c.l.b16 %v224
      %v479 = vunpack.c.l.b16 %v225
      %v480 = vunpack.c.l.b16 %v226
      %v481 = vunpack.c.l.b16 %v227
      %v482 = vunpack.c.l.b16 %v228
      %v483 = vunpack.c.l.b16 %v229
      %v484 = vunpack.c.l.b16 %v230
      %v485 = vunpack.c.l.b16 %v231
      %v486 = vunpack.c.l.b16 %v232
      %v487 = vunpack.c.l.b16 %v233
      %v488 = vunpack.c.l.b16 %v234
      %v489 = vunpack.c.l.b16 %v235
      %v490 = vunpack.c.l.b16 %v236
      %v491 = vunpack.c.l.b16 %v237
      %v492 = vunpack.c.l.b16 %v238
      %v493 = vunpack.c.l.b16 %v239
      %v494 = vunpack.c.l.b16 %v240
      %v495 = vunpack.c.l.b16 %v241
      %v496 = vunpack.c.l.b16 %v242
      %v497 = vunpack.c.l.b16 %v243
      %v498 = vunpack.c.l.b16 %v244
      %v499 = vunpack.c.l.b16 %v245
      %v500 = vunpack.c.l.b16 %v246
      %v501 = vunpack.c.l.b16 %v247
      %v502 = vunpack.c.l.b16 %v248
      %v503 = vunpack.c.l.b16 %v249
      %v504 = vunpack.c.l.b16 %v250
      %v505 = vunpack.c.l.b16 %v251
      %v506 = vunpack.c.l.b16 %v252
      %v507 = vunpack.c.l.b16 %v253
      %v508 = vunpack.c.l.b16 %v254
      %v509 = vunpack.c.l.b16 %v255
      %v510 = vunpack.c.l.b16 %v256
      %v511 = vunpack.c.l.b16 %v257
      %v512 = vunpack.c.l.b16 %v258
      %v513 = vunpack.c.l.b16 %v259
      %v514 = vunpack.c.l.b16 %v260
      %v515 = vunpack.c.l.b16 %v261
      %v516 = vunpack.c.l.b16 %v262
      %v517 = vunpack.c.l.b16 %v263
      %v518 = vunpack.c.l.b16 %v264
      %v519 = vunpack.c.l.b16 %v265
      %v520 = vunpack.c.l.b16 %v266
      %v521 = vunpack.c.l.b16 %v267
      %v522 = vunpack.c.l.b16 %v268
      %v523 = vunpack.c.l.b16 %v269
      %v524 = vunpack.c.l.b16 %v270
      %v525 = vunpack.c.l.b16 %v271
      %v526 = vunpack.c.l.b16 %v272
      %v527 = vunpack.c.l.b16 %v273
      %v528 = vunpack.c.l.b16 %v274
      %v529 = vunpack.c.l.b16 %v275
      %v530 = vunpack.c.l.b16 %v276
      %v531 = vunpack.c.l.b16 %v277
      %v532 = vunpack.c.l.b16 %v278
      %v533 = vunpack.c.l.b16 %v279
      %v534 = vunpack.c.l.b16 %v280
      %v535 = vunpack.c.l.b16 %v281
      %v536 = vunpack.c.l.b16 %v282
      %v537 = vunpack.c.l.b16 %v283
      %v538 = vunpack.c.l.b16 %v284
      %v539 = vunpack.c.l.b16 %v285
      %v540 = vunpack.c.l.b16 %v286
      %v541 = vunpack.c.l.b16 %v287
      %v542 = vunpack.c.l.b16 %v288
      %v543 = vunpack.c.l.b16 %v289
      %v544 = vunpack.c.l.b16 %v290
      %v545 = vunpack.c.l.b16 %v291
      %v546 = vunpack.c.l.b16 %v292
      %v547 = vunpack.c.l.b16 %v293
      %v548 = vunpack.c.l.b16 %v294
      %v549 = vunpack.c.l.b16 %v295
      %v550 = vpack.c.b16 %v427, %v426
      %v551 = vpack.c.b16 %v429, %v428
      %v552 = vpack.c.b16 %v431, %v430
      %v553 = vpack.c.b16 %v433, %v432
      %v554 = vpack.c.b16 %v435, %v434
      %v555 = vpack.c.b16 %v437, %v436
      %v556 = vpack.c.b16 %v439, %v438
      %v557 = vpack.c.b16 %v441, %v440
      %v558 = vpack.c.b16 %v443, %v442
      %v559 = vpack.c.b16 %v445, %v444
      %v560 = vpack.c.b16 %v447, %v446
      %v561 = vpack.c.b16 %v449, %v448
      %v562 = vpack.c.b16 %v451, %v450
      %v563 = vpack.c.b16 %v453, %v452
      %v564 = vpack.c.b16 %v455, %v454
      %v565 = vpack.c.b16 %v457, %v456
      %v566 = vpack.c.b16 %v459, %v458
      %v567 = vpack.c.b16 %v461, %v460
      %v568 = vpack.c.b16 %v463, %v462
      %v569 = vpack.c.b16 %v465, %v464
      %v570 = vpack.c.b16 %v467, %v466
      %v571 = vpack.c.b16 %v469, %v468
      %v572 = vpack.c.b16 %v471, %v470
      %v573 = vpack.c.b16 %v473, %v472
      %v574 = vpack.c.b16 %v475, %v474
      %v575 = vpack.c.b16 %v477, %v476
      %v576 = vpack.c.b16 %v479, %v478
      %v577 = vpack.c.b16 %v481, %v480
      %v578 = vpack.c.b16 %v483, %v482
      %v579 = vpack.c.b16 %v485, %v484
      %v580 = vpack.c.b16 %v487, %v486
      %v581 = vpack.c.b16 %v489, %v488
      %v582 = vpack.c.b16 %v491, %v490
      %v583 = vpack.c.b16 %v493, %v492
      %v584 = vpack.c.b16 %v495, %v494
      %v585 = vpack.c.b16 %v497, %v496
      %v586 = vpack.c.b16 %v499, %v498
      %v587 = vpack.c.b16 %v501, %v500
      %v588 = vpack.c.b16 %v503, %v502
      %v589 = vpack.c.b16 %v505, %v504
      %v590 = vpack.c.b16 %v507, %v506
      %v591 = vpack.c.b16 %v509, %v508
      %v592 = vpack.c.b16 %v511, %v510
      %v593 = vpack.c.b16 %v513, %v512
      %v594 = vpack.c.b16 %v515, %v514
      %v595 = vpack.c.b16 %v517, %v516
      %v596 = vpack.c.b16 %v519, %v518
      %v597 = vpack.c.b16 %v521, %v520
      %v598 = vpack.c.b16 %v523, %v522
      %v599 = vpack.c.b16 %v525, %v524
      %v600 = vpack.c.b16 %v527, %v526
      %v601 = vpack.c.b16 %v529, %v528
      %v602 = vpack.c.b16 %v531, %v530
      %v603 = vpack.c.b16 %v533, %v532
      %v604 = vpack.c.b16 %v535, %v534
      %v605 = vpack.c.b16 %v537, %v536
      %v606 = vpack.c.b16 %v539, %v538
      %v607 = vpack.c.b16 %v541, %v540
      %v608 = vpack.c.b16 %v543, %v542
      %v609 = vpack.c.b16 %v545, %v544
      %v610 = vpack.c.b16 %v547, %v546
      %v611 = vpack.c.b16 %v549, %v548
      %v613 = vunpack.c.l.b16 %v296
      %v614 = vpack.c.b16 %v613, %v613
      %vm615 = vsmask.f32 7424
      %v617 = vshrl.u32 %v550, 16
      %v619 = vshll.u32 %v550, 16
      %v621 = vrot.slane %v619, 1
      %v622 = vor.u32 %v617, %v621
      %v624 = vshll.u32 %v551, 16
      %v626 = vrot.slane %v624, 1
      %v627 = vsel %vm615, %v622, %v626
      %v628 = vshrl.u32 %v551, 16
      %v630 = vor.u32 %v628, %v626
      %v632 = vshll.u32 %v552, 16
      %v634 = vrot.slane %v632, 1
      %v635 = vsel %vm615, %v630, %v634
      %v636 = vshrl.u32 %v552, 16
      %v638 = vor.u32 %v636, %v634
      %v640 = vshll.u32 %v553, 16
      %v642 = vrot.slane %v640, 1
      %v643 = vsel %vm615, %v638, %v642
      %v644 = vshrl.u32 %v553, 16
      %v646 = vor.u32 %v644, %v642
      %v648 = vshll.u32 %v554, 16
      %v650 = vrot.slane %v648, 1
      %v651 = vsel %vm615, %v646, %v650
      %v652 = vshrl.u32 %v554, 16
      %v654 = vor.u32 %v652, %v650
      %v656 = vshll.u32 %v555, 16
      %v658 = vrot.slane %v656, 1
      %v659 = vsel %vm615, %v654, %v658
      %v660 = vshrl.u32 %v555, 16
      %v662 = vor.u32 %v660, %v658
      %v664 = vshll.u32 %v556, 16
      %v666 = vrot.slane %v664, 1
      %v667 = vsel %vm615, %v662, %v666
      %v668 = vshrl.u32 %v556, 16
      %v670 = vor.u32 %v668, %v666
      %v672 = vshll.u32 %v557, 16
      %v674 = vrot.slane %v672, 1
      %v675 = vsel %vm615, %v670, %v674
      %v676 = vshrl.u32 %v557, 16
      %v678 = vor.u32 %v676, %v674
      %v680 = vshll.u32 %v558, 16
      %v682 = vrot.slane %v680, 1
      %v683 = vsel %vm615, %v678, %v682
      %v684 = vshrl.u32 %v558, 16
      %v686 = vor.u32 %v684, %v682
      %v688 = vshll.u32 %v559, 16
      %v690 = vrot.slane %v688, 1
      %v691 = vsel %vm615, %v686, %v690
      %v692 = vshrl.u32 %v559, 16
      %v694 = vor.u32 %v692, %v690
      %v696 = vshll.u32 %v560, 16
      %v698 = vrot.slane %v696, 1
      %v699 = vsel %vm615, %v694, %v698
      %v700 = vshrl.u32 %v560, 16
      %v702 = vor.u32 %v700, %v698
      %v704 = vshll.u32 %v561, 16
      %v706 = vrot.slane %v704, 1
      %v707 = vsel %vm615, %v702, %v706
      %v708 = vshrl.u32 %v561, 16
      %v710 = vor.u32 %v708, %v706
      %v712 = vshll.u32 %v562, 16
      %v714 = vrot.slane %v712, 1
      %v715 = vsel %vm615, %v710, %v714
      %v716 = vshrl.u32 %v562, 16
      %v718 = vor.u32 %v716, %v714
      %v720 = vshll.u32 %v563, 16
      %v722 = vrot.slane %v720, 1
      %v723 = vsel %vm615, %v718, %v722
      %v724 = vshrl.u32 %v563, 16
      %v726 = vor.u32 %v724, %v722
      %v728 = vshll.u32 %v564, 16
      %v730 = vrot.slane %v728, 1
      %v731 = vsel %vm615, %v726, %v730
      %v732 = vshrl.u32 %v564, 16
      %v734 = vor.u32 %v732, %v730
      %v736 = vshll.u32 %v565, 16
      %v738 = vrot.slane %v736, 1
      %v739 = vsel %vm615, %v734, %v738
      %v740 = vshrl.u32 %v565, 16
      %v742 = vor.u32 %v740, %v738
      %v744 = vshll.u32 %v566, 16
      %v746 = vrot.slane %v744, 1
      %v747 = vsel %vm615, %v742, %v746
      %v748 = vshrl.u32 %v566, 16
      %v750 = vor.u32 %v748, %v746
      %v752 = vshll.u32 %v567, 16
      %v754 = vrot.slane %v752, 1
      %v755 = vsel %vm615, %v750, %v754
      %v756 = vshrl.u32 %v567, 16
      %v758 = vor.u32 %v756, %v754
      %v760 = vshll.u32 %v568, 16
      %v762 = vrot.slane %v760, 1
      %v763 = vsel %vm615, %v758, %v762
      %v764 = vshrl.u32 %v568, 16
      %v766 = vor.u32 %v764, %v762
      %v768 = vshll.u32 %v569, 16
      %v770 = vrot.slane %v768, 1
      %v771 = vsel %vm615, %v766, %v770
      %v772 = vshrl.u32 %v569, 16
      %v774 = vor.u32 %v772, %v770
      %v776 = vshll.u32 %v570, 16
      %v778 = vrot.slane %v776, 1
      %v779 = vsel %vm615, %v774, %v778
      %v780 = vshrl.u32 %v570, 16
      %v782 = vor.u32 %v780, %v778
      %v784 = vshll.u32 %v571, 16
      %v786 = vrot.slane %v784, 1
      %v787 = vsel %vm615, %v782, %v786
      %v788 = vshrl.u32 %v571, 16
      %v790 = vor.u32 %v788, %v786
      %v792 = vshll.u32 %v572, 16
      %v794 = vrot.slane %v792, 1
      %v795 = vsel %vm615, %v790, %v794
      %v796 = vshrl.u32 %v572, 16
      %v798 = vor.u32 %v796, %v794
      %v800 = vshll.u32 %v573, 16
      %v802 = vrot.slane %v800, 1
      %v803 = vsel %vm615, %v798, %v802
      %v804 = vshrl.u32 %v573, 16
      %v806 = vor.u32 %v804, %v802
      %v808 = vshll.u32 %v574, 16
      %v810 = vrot.slane %v808, 1
      %v811 = vsel %vm615, %v806, %v810
      %v812 = vshrl.u32 %v574, 16
      %v814 = vor.u32 %v812, %v810
      %v816 = vshll.u32 %v575, 16
      %v818 = vrot.slane %v816, 1
      %v819 = vsel %vm615, %v814, %v818
      %v820 = vshrl.u32 %v575, 16
      %v822 = vor.u32 %v820, %v818
      %v824 = vshll.u32 %v576, 16
      %v826 = vrot.slane %v824, 1
      %v827 = vsel %vm615, %v822, %v826
      %v828 = vshrl.u32 %v576, 16
      %v830 = vor.u32 %v828, %v826
      %v832 = vshll.u32 %v577, 16
      %v834 = vrot.slane %v832, 1
      %v835 = vsel %vm615, %v830, %v834
      %v836 = vshrl.u32 %v577, 16
      %v838 = vor.u32 %v836, %v834
      %v840 = vshll.u32 %v578, 16
      %v842 = vrot.slane %v840, 1
      %v843 = vsel %vm615, %v838, %v842
      %v844 = vshrl.u32 %v578, 16
      %v846 = vor.u32 %v844, %v842
      %v848 = vshll.u32 %v579, 16
      %v850 = vrot.slane %v848, 1
      %v851 = vsel %vm615, %v846, %v850
      %v852 = vshrl.u32 %v579, 16
      %v854 = vor.u32 %v852, %v850
      %v856 = vshll.u32 %v580, 16
      %v858 = vrot.slane %v856, 1
      %v859 = vsel %vm615, %v854, %v858
      %v860 = vshrl.u32 %v580, 16
      %v862 = vor.u32 %v860, %v858
      %v864 = vshll.u32 %v581, 16
      %v866 = vrot.slane %v864, 1
      %v867 = vsel %vm615, %v862, %v866
      %v868 = vshrl.u32 %v581, 16
      %v870 = vor.u32 %v868, %v866
      %v872 = vshll.u32 %v582, 16
      %v874 = vrot.slane %v872, 1
      %v875 = vsel %vm615, %v870, %v874
      %v876 = vshrl.u32 %v582, 16
      %v878 = vor.u32 %v876, %v874
      %v880 = vshll.u32 %v583, 16
      %v882 = vrot.slane %v880, 1
      %v883 = vsel %vm615, %v878, %v882
      %v884 = vshrl.u32 %v583, 16
      %v886 = vor.u32 %v884, %v882
      %v888 = vshll.u32 %v584, 16
      %v890 = vrot.slane %v888, 1
      %v891 = vsel %vm615, %v886, %v890
      %v892 = vshrl.u32 %v584, 16
      %v894 = vor.u32 %v892, %v890
      %v896 = vshll.u32 %v585, 16
      %v898 = vrot.slane %v896, 1
      %v899 = vsel %vm615, %v894, %v898
      %v900 = vshrl.u32 %v585, 16
      %v902 = vor.u32 %v900, %v898
      %v904 = vshll.u32 %v586, 16
      %v906 = vrot.slane %v904, 1
      %v907 = vsel %vm615, %v902, %v906
      %v908 = vshrl.u32 %v586, 16
      %v910 = vor.u32 %v908, %v906
      %v912 = vshll.u32 %v587, 16
      %v914 = vrot.slane %v912, 1
      %v915 = vsel %vm615, %v910, %v914
      %v916 = vshrl.u32 %v587, 16
      %v918 = vor.u32 %v916, %v914
      %v920 = vshll.u32 %v588, 16
      %v922 = vrot.slane %v920, 1
      %v923 = vsel %vm615, %v918, %v922
      %v924 = vshrl.u32 %v588, 16
      %v926 = vor.u32 %v924, %v922
      %v928 = vshll.u32 %v589, 16
      %v930 = vrot.slane %v928, 1
      %v931 = vsel %vm615, %v926, %v930
      %v932 = vshrl.u32 %v589, 16
      %v934 = vor.u32 %v932, %v930
      %v936 = vshll.u32 %v590, 16
      %v938 = vrot.slane %v936, 1
      %v939 = vsel %vm615, %v934, %v938
      %v940 = vshrl.u32 %v590, 16
      %v942 = vor.u32 %v940, %v938
      %v944 = vshll.u32 %v591, 16
      %v946 = vrot.slane %v944, 1
      %v947 = vsel %vm615, %v942, %v946
      %v948 = vshrl.u32 %v591, 16
      %v950 = vor.u32 %v948, %v946
      %v952 = vshll.u32 %v592, 16
      %v954 = vrot.slane %v952, 1
      %v955 = vsel %vm615, %v950, %v954
      %v956 = vshrl.u32 %v592, 16
      %v958 = vor.u32 %v956, %v954
      %v960 = vshll.u32 %v593, 16
      %v962 = vrot.slane %v960, 1
      %v963 = vsel %vm615, %v958, %v962
      %v964 = vshrl.u32 %v593, 16
      %v966 = vor.u32 %v964, %v962
      %v968 = vshll.u32 %v594, 16
      %v970 = vrot.slane %v968, 1
      %v971 = vsel %vm615, %v966, %v970
      %v972 = vshrl.u32 %v594, 16
      %v974 = vor.u32 %v972, %v970
      %v976 = vshll.u32 %v595, 16
      %v978 = vrot.slane %v976, 1
      %v979 = vsel %vm615, %v974, %v978
      %v980 = vshrl.u32 %v595, 16
      %v982 = vor.u32 %v980, %v978
      %v984 = vshll.u32 %v596, 16
      %v986 = vrot.slane %v984, 1
      %v987 = vsel %vm615, %v982, %v986
      %v988 = vshrl.u32 %v596, 16
      %v990 = vor.u32 %v988, %v986
      %v992 = vshll.u32 %v597, 16
      %v994 = vrot.slane %v992, 1
      %v995 = vsel %vm615, %v990, %v994
      %v996 = vshrl.u32 %v597, 16
      %v998 = vor.u32 %v996, %v994
      %v1000 = vshll.u32 %v598, 16
      %v1002 = vrot.slane %v1000, 1
      %v1003 = vsel %vm615, %v998, %v1002
      %v1004 = vshrl.u32 %v598, 16
      %v1006 = vor.u32 %v1004, %v1002
      %v1008 = vshll.u32 %v599, 16
      %v1010 = vrot.slane %v1008, 1
      %v1011 = vsel %vm615, %v1006, %v1010
      %v1012 = vshrl.u32 %v599, 16
      %v1014 = vor.u32 %v1012, %v1010
      %v1016 = vshll.u32 %v600, 16
      %v1018 = vrot.slane %v1016, 1
      %v1019 = vsel %vm615, %v1014, %v1018
      %v1020 = vshrl.u32 %v600, 16
      %v1022 = vor.u32 %v1020, %v1018
      %v1024 = vshll.u32 %v601, 16
      %v1026 = vrot.slane %v1024, 1
      %v1027 = vsel %vm615, %v1022, %v1026
      %v1028 = vshrl.u32 %v601, 16
      %v1030 = vor.u32 %v1028, %v1026
      %v1032 = vshll.u32 %v602, 16
      %v1034 = vrot.slane %v1032, 1
      %v1035 = vsel %vm615, %v1030, %v1034
      %v1036 = vshrl.u32 %v602, 16
      %v1038 = vor.u32 %v1036, %v1034
      %v1040 = vshll.u32 %v603, 16
      %v1042 = vrot.slane %v1040, 1
      %v1043 = vsel %vm615, %v1038, %v1042
      %v1044 = vshrl.u32 %v603, 16
      %v1046 = vor.u32 %v1044, %v1042
      %v1048 = vshll.u32 %v604, 16
      %v1050 = vrot.slane %v1048, 1
      %v1051 = vsel %vm615, %v1046, %v1050
      %v1052 = vshrl.u32 %v604, 16
      %v1054 = vor.u32 %v1052, %v1050
      %v1056 = vshll.u32 %v605, 16
      %v1058 = vrot.slane %v1056, 1
      %v1059 = vsel %vm615, %v1054, %v1058
      %v1060 = vshrl.u32 %v605, 16
      %v1062 = vor.u32 %v1060, %v1058
      %v1064 = vshll.u32 %v606, 16
      %v1066 = vrot.slane %v1064, 1
      %v1067 = vsel %vm615, %v1062, %v1066
      %v1068 = vshrl.u32 %v606, 16
      %v1070 = vor.u32 %v1068, %v1066
      %v1072 = vshll.u32 %v607, 16
      %v1074 = vrot.slane %v1072, 1
      %v1075 = vsel %vm615, %v1070, %v1074
      %v1076 = vshrl.u32 %v607, 16
      %v1078 = vor.u32 %v1076, %v1074
      %v1080 = vshll.u32 %v608, 16
      %v1082 = vrot.slane %v1080, 1
      %v1083 = vsel %vm615, %v1078, %v1082
      %v1084 = vshrl.u32 %v608, 16
      %v1086 = vor.u32 %v1084, %v1082
      %v1088 = vshll.u32 %v609, 16
      %v1090 = vrot.slane %v1088, 1
      %v1091 = vsel %vm615, %v1086, %v1090
      %v1092 = vshrl.u32 %v609, 16
      %v1094 = vor.u32 %v1092, %v1090
      %v1096 = vshll.u32 %v610, 16
      %v1098 = vrot.slane %v1096, 1
      %v1099 = vsel %vm615, %v1094, %v1098
      %v1100 = vshrl.u32 %v610, 16
      %v1102 = vor.u32 %v1100, %v1098
      %v1104 = vshll.u32 %v611, 16
      %v1106 = vrot.slane %v1104, 1
      %v1107 = vsel %vm615, %v1102, %v1106
      %v1108 = vshrl.u32 %v611, 16
      %v1110 = vor.u32 %v1108, %v1106
      %v1112 = vshll.u32 %v614, 16
      %v1114 = vrot.slane %v1112, 1
      %v1115 = vsel %vm615, %v1110, %v1114
      %1116 = vrot.lane.b32.xlu0 %v627, 12
      %v1117 = vpop.permute.xlu0 %1116
      %1118 = vrot.lane.b32.xlu0 %v635, 12
      %v1119 = vpop.permute.xlu0 %1118
      %1120 = vrot.lane.b32.xlu0 %v643, 12
      %v1121 = vpop.permute.xlu0 %1120
      %1122 = vrot.lane.b32.xlu0 %v651, 12
      %v1123 = vpop.permute.xlu0 %1122
      %1124 = vrot.lane.b32.xlu0 %v659, 12
      %v1125 = vpop.permute.xlu0 %1124
      %1126 = vrot.lane.b32.xlu0 %v667, 12
      %v1127 = vpop.permute.xlu0 %1126
      %1128 = vrot.lane.b32.xlu0 %v675, 12
      %v1129 = vpop.permute.xlu0 %1128
      %1130 = vrot.lane.b32.xlu0 %v683, 12
      %v1131 = vpop.permute.xlu0 %1130
      %1132 = vrot.lane.b32.xlu0 %v691, 12
      %v1133 = vpop.permute.xlu0 %1132
      %1134 = vrot.lane.b32.xlu0 %v699, 12
      %v1135 = vpop.permute.xlu0 %1134
      %1136 = vrot.lane.b32.xlu0 %v707, 12
      %v1137 = vpop.permute.xlu0 %1136
      %1138 = vrot.lane.b32.xlu0 %v715, 12
      %v1139 = vpop.permute.xlu0 %1138
      %1140 = vrot.lane.b32.xlu0 %v723, 12
      %v1141 = vpop.permute.xlu0 %1140
      %1142 = vrot.lane.b32.xlu0 %v731, 12
      %v1143 = vpop.permute.xlu0 %1142
      %1144 = vrot.lane.b32.xlu0 %v739, 12
      %v1145 = vpop.permute.xlu0 %1144
      %1146 = vrot.lane.b32.xlu0 %v747, 12
      %v1147 = vpop.permute.xlu0 %1146
      %1148 = vrot.lane.b32.xlu0 %v755, 12
      %v1149 = vpop.permute.xlu0 %1148
      %1150 = vrot.lane.b32.xlu0 %v763, 12
      %v1151 = vpop.permute.xlu0 %1150
      %1152 = vrot.lane.b32.xlu0 %v771, 12
      %v1153 = vpop.permute.xlu0 %1152
      %1154 = vrot.lane.b32.xlu0 %v779, 12
      %v1155 = vpop.permute.xlu0 %1154
      %1156 = vrot.lane.b32.xlu0 %v787, 12
      %v1157 = vpop.permute.xlu0 %1156
      %1158 = vrot.lane.b32.xlu0 %v795, 12
      %v1159 = vpop.permute.xlu0 %1158
      %1160 = vrot.lane.b32.xlu0 %v803, 12
      %v1161 = vpop.permute.xlu0 %1160
      %1162 = vrot.lane.b32.xlu0 %v811, 12
      %v1163 = vpop.permute.xlu0 %1162
      %1164 = vrot.lane.b32.xlu0 %v819, 12
      %v1165 = vpop.permute.xlu0 %1164
      %1166 = vrot.lane.b32.xlu0 %v827, 12
      %v1167 = vpop.permute.xlu0 %1166
      %1168 = vrot.lane.b32.xlu0 %v835, 12
      %v1169 = vpop.permute.xlu0 %1168
      %1170 = vrot.lane.b32.xlu0 %v843, 12
      %v1171 = vpop.permute.xlu0 %1170
      %1172 = vrot.lane.b32.xlu0 %v851, 12
      %v1173 = vpop.permute.xlu0 %1172
      %1174 = vrot.lane.b32.xlu0 %v859, 12
      %v1175 = vpop.permute.xlu0 %1174
      %1176 = vrot.lane.b32.xlu0 %v867, 12
      %v1177 = vpop.permute.xlu0 %1176
      %1178 = vrot.lane.b32.xlu0 %v875, 12
      %v1179 = vpop.permute.xlu0 %1178
      %1180 = vrot.lane.b32.xlu0 %v883, 12
      %v1181 = vpop.permute.xlu0 %1180
      %1182 = vrot.lane.b32.xlu0 %v891, 12
      %v1183 = vpop.permute.xlu0 %1182
      %1184 = vrot.lane.b32.xlu0 %v899, 12
      %v1185 = vpop.permute.xlu0 %1184
      %1186 = vrot.lane.b32.xlu0 %v907, 12
      %v1187 = vpop.permute.xlu0 %1186
      %1188 = vrot.lane.b32.xlu0 %v915, 12
      %v1189 = vpop.permute.xlu0 %1188
      %1190 = vrot.lane.b32.xlu0 %v923, 12
      %v1191 = vpop.permute.xlu0 %1190
      %1192 = vrot.lane.b32.xlu0 %v931, 12
      %v1193 = vpop.permute.xlu0 %1192
      %1194 = vrot.lane.b32.xlu0 %v939, 12
      %v1195 = vpop.permute.xlu0 %1194
      %1196 = vrot.lane.b32.xlu0 %v947, 12
      %v1197 = vpop.permute.xlu0 %1196
      %1198 = vrot.lane.b32.xlu0 %v955, 12
      %v1199 = vpop.permute.xlu0 %1198
      %1200 = vrot.lane.b32.xlu0 %v963, 12
      %v1201 = vpop.permute.xlu0 %1200
      %1202 = vrot.lane.b32.xlu0 %v971, 12
      %v1203 = vpop.permute.xlu0 %1202
      %1204 = vrot.lane.b32.xlu0 %v979, 12
      %v1205 = vpop.permute.xlu0 %1204
      %1206 = vrot.lane.b32.xlu0 %v987, 12
      %v1207 = vpop.permute.xlu0 %1206
      %1208 = vrot.lane.b32.xlu0 %v995, 12
      %v1209 = vpop.permute.xlu0 %1208
      %1210 = vrot.lane.b32.xlu0 %v1003, 12
      %v1211 = vpop.permute.xlu0 %1210
      %1212 = vrot.lane.b32.xlu0 %v1011, 12
      %v1213 = vpop.permute.xlu0 %1212
      %1214 = vrot.lane.b32.xlu0 %v1019, 12
      %v1215 = vpop.permute.xlu0 %1214
      %1216 = vrot.lane.b32.xlu0 %v1027, 12
      %v1217 = vpop.permute.xlu0 %1216
      %1218 = vrot.lane.b32.xlu0 %v1035, 12
      %v1219 = vpop.permute.xlu0 %1218
      %1220 = vrot.lane.b32.xlu0 %v1043, 12
      %v1221 = vpop.permute.xlu0 %1220
      %1222 = vrot.lane.b32.xlu0 %v1051, 12
      %v1223 = vpop.permute.xlu0 %1222
      %1224 = vrot.lane.b32.xlu0 %v1059, 12
      %v1225 = vpop.permute.xlu0 %1224
      %1226 = vrot.lane.b32.xlu0 %v1067, 12
      %v1227 = vpop.permute.xlu0 %1226
      %1228 = vrot.lane.b32.xlu0 %v1075, 12
      %v1229 = vpop.permute.xlu0 %1228
      %1230 = vrot.lane.b32.xlu0 %v1083, 12
      %v1231 = vpop.permute.xlu0 %1230
      %1232 = vrot.lane.b32.xlu0 %v1091, 12
      %v1233 = vpop.permute.xlu0 %1232
      %1234 = vrot.lane.b32.xlu0 %v1099, 12
      %v1235 = vpop.permute.xlu0 %1234
      %1236 = vrot.lane.b32.xlu0 %v1107, 12
      %v1237 = vpop.permute.xlu0 %1236
      %1238 = vrot.lane.b32.xlu0 %v1115, 12
      %v1239 = vpop.permute.xlu0 %1238
      %v1244 = vunpack.c.l.b16 %v297
      %v1245 = vunpack.c.l.b16 %v298
      %v1246 = vunpack.c.l.b16 %v299
      %v1247 = vunpack.c.l.b16 %v300
      %v1248 = vpack.c.b16 %v1245, %v1244
      %v1249 = vpack.c.b16 %v1247, %v1246
      %1250 = vrot.lane.b32.xlu0 %v552, 24
      %v1251 = vpop.permute.xlu0 %1250
      %1252 = vrot.lane.b32.xlu0 %v553, 24
      %v1253 = vpop.permute.xlu0 %1252
      %1254 = vrot.lane.b32.xlu0 %v554, 24
      %v1255 = vpop.permute.xlu0 %1254
      %1256 = vrot.lane.b32.xlu0 %v555, 24
      %v1257 = vpop.permute.xlu0 %1256
      %1258 = vrot.lane.b32.xlu0 %v556, 24
      %v1259 = vpop.permute.xlu0 %1258
      %1260 = vrot.lane.b32.xlu0 %v557, 24
      %v1261 = vpop.permute.xlu0 %1260
      %1262 = vrot.lane.b32.xlu0 %v558, 24
      %v1263 = vpop.permute.xlu0 %1262
      %1264 = vrot.lane.b32.xlu0 %v559, 24
      %v1265 = vpop.permute.xlu0 %1264
      %1266 = vrot.lane.b32.xlu0 %v560, 24
      %v1267 = vpop.permute.xlu0 %1266
      %1268 = vrot.lane.b32.xlu0 %v561, 24
      %v1269 = vpop.permute.xlu0 %1268
      %1270 = vrot.lane.b32.xlu0 %v562, 24
      %v1271 = vpop.permute.xlu0 %1270
      %1272 = vrot.lane.b32.xlu0 %v563, 24
      %v1273 = vpop.permute.xlu0 %1272
      %1274 = vrot.lane.b32.xlu0 %v564, 24
      %v1275 = vpop.permute.xlu0 %1274
      %1276 = vrot.lane.b32.xlu0 %v565, 24
      %v1277 = vpop.permute.xlu0 %1276
      %1278 = vrot.lane.b32.xlu0 %v566, 24
      %v1279 = vpop.permute.xlu0 %1278
      %1280 = vrot.lane.b32.xlu0 %v567, 24
      %v1281 = vpop.permute.xlu0 %1280
      %1282 = vrot.lane.b32.xlu0 %v568, 24
      %v1283 = vpop.permute.xlu0 %1282
      %1284 = vrot.lane.b32.xlu0 %v569, 24
      %v1285 = vpop.permute.xlu0 %1284
      %1286 = vrot.lane.b32.xlu0 %v570, 24
      %v1287 = vpop.permute.xlu0 %1286
      %1288 = vrot.lane.b32.xlu0 %v571, 24
      %v1289 = vpop.permute.xlu0 %1288
      %1290 = vrot.lane.b32.xlu0 %v572, 24
      %v1291 = vpop.permute.xlu0 %1290
      %1292 = vrot.lane.b32.xlu0 %v573, 24
      %v1293 = vpop.permute.xlu0 %1292
      %1294 = vrot.lane.b32.xlu0 %v574, 24
      %v1295 = vpop.permute.xlu0 %1294
      %1296 = vrot.lane.b32.xlu0 %v575, 24
      %v1297 = vpop.permute.xlu0 %1296
      %1298 = vrot.lane.b32.xlu0 %v576, 24
      %v1299 = vpop.permute.xlu0 %1298
      %1300 = vrot.lane.b32.xlu0 %v577, 24
      %v1301 = vpop.permute.xlu0 %1300
      %1302 = vrot.lane.b32.xlu0 %v578, 24
      %v1303 = vpop.permute.xlu0 %1302
      %1304 = vrot.lane.b32.xlu0 %v579, 24
      %v1305 = vpop.permute.xlu0 %1304
      %1306 = vrot.lane.b32.xlu0 %v580, 24
      %v1307 = vpop.permute.xlu0 %1306
      %1308 = vrot.lane.b32.xlu0 %v581, 24
      %v1309 = vpop.permute.xlu0 %1308
      %1310 = vrot.lane.b32.xlu0 %v582, 24
      %v1311 = vpop.permute.xlu0 %1310
      %1312 = vrot.lane.b32.xlu0 %v583, 24
      %v1313 = vpop.permute.xlu0 %1312
      %1314 = vrot.lane.b32.xlu0 %v584, 24
      %v1315 = vpop.permute.xlu0 %1314
      %1316 = vrot.lane.b32.xlu0 %v585, 24
      %v1317 = vpop.permute.xlu0 %1316
      %1318 = vrot.lane.b32.xlu0 %v586, 24
      %v1319 = vpop.permute.xlu0 %1318
      %1320 = vrot.lane.b32.xlu0 %v587, 24
      %v1321 = vpop.permute.xlu0 %1320
      %1322 = vrot.lane.b32.xlu0 %v588, 24
      %v1323 = vpop.permute.xlu0 %1322
      %1324 = vrot.lane.b32.xlu0 %v589, 24
      %v1325 = vpop.permute.xlu0 %1324
      %1326 = vrot.lane.b32.xlu0 %v590, 24
      %v1327 = vpop.permute.xlu0 %1326
      %1328 = vrot.lane.b32.xlu0 %v591, 24
      %v1329 = vpop.permute.xlu0 %1328
      %1330 = vrot.lane.b32.xlu0 %v592, 24
      %v1331 = vpop.permute.xlu0 %1330
      %1332 = vrot.lane.b32.xlu0 %v593, 24
      %v1333 = vpop.permute.xlu0 %1332
      %1334 = vrot.lane.b32.xlu0 %v594, 24
      %v1335 = vpop.permute.xlu0 %1334
      %1336 = vrot.lane.b32.xlu0 %v595, 24
      %v1337 = vpop.permute.xlu0 %1336
      %1338 = vrot.lane.b32.xlu0 %v596, 24
      %v1339 = vpop.permute.xlu0 %1338
      %1340 = vrot.lane.b32.xlu0 %v597, 24
      %v1341 = vpop.permute.xlu0 %1340
      %1342 = vrot.lane.b32.xlu0 %v598, 24
      %v1343 = vpop.permute.xlu0 %1342
      %1344 = vrot.lane.b32.xlu0 %v599, 24
      %v1345 = vpop.permute.xlu0 %1344
      %1346 = vrot.lane.b32.xlu0 %v600, 24
      %v1347 = vpop.permute.xlu0 %1346
      %1348 = vrot.lane.b32.xlu0 %v601, 24
      %v1349 = vpop.permute.xlu0 %1348
      %1350 = vrot.lane.b32.xlu0 %v602, 24
      %v1351 = vpop.permute.xlu0 %1350
      %1352 = vrot.lane.b32.xlu0 %v603, 24
      %v1353 = vpop.permute.xlu0 %1352
      %1354 = vrot.lane.b32.xlu0 %v604, 24
      %v1355 = vpop.permute.xlu0 %1354
      %1356 = vrot.lane.b32.xlu0 %v605, 24
      %v1357 = vpop.permute.xlu0 %1356
      %1358 = vrot.lane.b32.xlu0 %v606, 24
      %v1359 = vpop.permute.xlu0 %1358
      %1360 = vrot.lane.b32.xlu0 %v607, 24
      %v1361 = vpop.permute.xlu0 %1360
      %1362 = vrot.lane.b32.xlu0 %v608, 24
      %v1363 = vpop.permute.xlu0 %1362
      %1364 = vrot.lane.b32.xlu0 %v609, 24
      %v1365 = vpop.permute.xlu0 %1364
      %1366 = vrot.lane.b32.xlu0 %v610, 24
      %v1367 = vpop.permute.xlu0 %1366
      %1368 = vrot.lane.b32.xlu0 %v611, 24
      %v1369 = vpop.permute.xlu0 %1368
      %1370 = vrot.lane.b32.xlu0 %v1248, 24
      %v1371 = vpop.permute.xlu0 %1370
      %1372 = vrot.lane.b32.xlu0 %v1249, 24
      %v1373 = vpop.permute.xlu0 %1372
      %v1375 = vunpack.c.l.b16 %v301
      %v1376 = vpack.c.b16 %v1375, %v1375
      %v1378 = vshll.u32 %v1248, 16
      %v1380 = vrot.slane %v1378, 1
      %v1381 = vsel %vm615, %v1110, %v1380
      %v1382 = vshrl.u32 %v1248, 16
      %v1384 = vor.u32 %v1382, %v1380
      %v1386 = vshll.u32 %v1249, 16
      %v1388 = vrot.slane %v1386, 1
      %v1389 = vsel %vm615, %v1384, %v1388
      %v1390 = vshrl.u32 %v1249, 16
      %v1392 = vor.u32 %v1390, %v1388
      %v1394 = vshll.u32 %v1376, 16
      %v1396 = vrot.slane %v1394, 1
      %v1397 = vsel %vm615, %v1392, %v1396
      %1398 = vrot.lane.b32.xlu0 %v643, 36
      %v1399 = vpop.permute.xlu0 %1398
      %1400 = vrot.lane.b32.xlu0 %v651, 36
      %v1401 = vpop.permute.xlu0 %1400
      %1402 = vrot.lane.b32.xlu0 %v659, 36
      %v1403 = vpop.permute.xlu0 %1402
      %1404 = vrot.lane.b32.xlu0 %v667, 36
      %v1405 = vpop.permute.xlu0 %1404
      %1406 = vrot.lane.b32.xlu0 %v675, 36
      %v1407 = vpop.permute.xlu0 %1406
      %1408 = vrot.lane.b32.xlu0 %v683, 36
      %v1409 = vpop.permute.xlu0 %1408
      %1410 = vrot.lane.b32.xlu0 %v691, 36
      %v1411 = vpop.permute.xlu0 %1410
      %1412 = vrot.lane.b32.xlu0 %v699, 36
      %v1413 = vpop.permute.xlu0 %1412
      %1414 = vrot.lane.b32.xlu0 %v707, 36
      %v1415 = vpop.permute.xlu0 %1414
      %1416 = vrot.lane.b32.xlu0 %v715, 36
      %v1417 = vpop.permute.xlu0 %1416
      %1418 = vrot.lane.b32.xlu0 %v723, 36
      %v1419 = vpop.permute.xlu0 %1418
      %1420 = vrot.lane.b32.xlu0 %v731, 36
      %v1421 = vpop.permute.xlu0 %1420
      %1422 = vrot.lane.b32.xlu0 %v739, 36
      %v1423 = vpop.permute.xlu0 %1422
      %1424 = vrot.lane.b32.xlu0 %v747, 36
      %v1425 = vpop.permute.xlu0 %1424
      %1426 = vrot.lane.b32.xlu0 %v755, 36
      %v1427 = vpop.permute.xlu0 %1426
      %1428 = vrot.lane.b32.xlu0 %v763, 36
      %v1429 = vpop.permute.xlu0 %1428
      %1430 = vrot.lane.b32.xlu0 %v771, 36
      %v1431 = vpop.permute.xlu0 %1430
      %1432 = vrot.lane.b32.xlu0 %v779, 36
      %v1433 = vpop.permute.xlu0 %1432
      %1434 = vrot.lane.b32.xlu0 %v787, 36
      %v1435 = vpop.permute.xlu0 %1434
      %1436 = vrot.lane.b32.xlu0 %v795, 36
      %v1437 = vpop.permute.xlu0 %1436
      %1438 = vrot.lane.b32.xlu0 %v803, 36
      %v1439 = vpop.permute.xlu0 %1438
      %1440 = vrot.lane.b32.xlu0 %v811, 36
      %v1441 = vpop.permute.xlu0 %1440
      %1442 = vrot.lane.b32.xlu0 %v819, 36
      %v1443 = vpop.permute.xlu0 %1442
      %1444 = vrot.lane.b32.xlu0 %v827, 36
      %v1445 = vpop.permute.xlu0 %1444
      %1446 = vrot.lane.b32.xlu0 %v835, 36
      %v1447 = vpop.permute.xlu0 %1446
      %1448 = vrot.lane.b32.xlu0 %v843, 36
      %v1449 = vpop.permute.xlu0 %1448
      %1450 = vrot.lane.b32.xlu0 %v851, 36
      %v1451 = vpop.permute.xlu0 %1450
      %1452 = vrot.lane.b32.xlu0 %v859, 36
      %v1453 = vpop.permute.xlu0 %1452
      %1454 = vrot.lane.b32.xlu0 %v867, 36
      %v1455 = vpop.permute.xlu0 %1454
      %1456 = vrot.lane.b32.xlu0 %v875, 36
      %v1457 = vpop.permute.xlu0 %1456
      %1458 = vrot.lane.b32.xlu0 %v883, 36
      %v1459 = vpop.permute.xlu0 %1458
      %1460 = vrot.lane.b32.xlu0 %v891, 36
      %v1461 = vpop.permute.xlu0 %1460
      %1462 = vrot.lane.b32.xlu0 %v899, 36
      %v1463 = vpop.permute.xlu0 %1462
      %1464 = vrot.lane.b32.xlu0 %v907, 36
      %v1465 = vpop.permute.xlu0 %1464
      %1466 = vrot.lane.b32.xlu0 %v915, 36
      %v1467 = vpop.permute.xlu0 %1466
      %1468 = vrot.lane.b32.xlu0 %v923, 36
      %v1469 = vpop.permute.xlu0 %1468
      %1470 = vrot.lane.b32.xlu0 %v931, 36
      %v1471 = vpop.permute.xlu0 %1470
      %1472 = vrot.lane.b32.xlu0 %v939, 36
      %v1473 = vpop.permute.xlu0 %1472
      %1474 = vrot.lane.b32.xlu0 %v947, 36
      %v1475 = vpop.permute.xlu0 %1474
      %1476 = vrot.lane.b32.xlu0 %v955, 36
      %v1477 = vpop.permute.xlu0 %1476
      %1478 = vrot.lane.b32.xlu0 %v963, 36
      %v1479 = vpop.permute.xlu0 %1478
      %1480 = vrot.lane.b32.xlu0 %v971, 36
      %v1481 = vpop.permute.xlu0 %1480
      %1482 = vrot.lane.b32.xlu0 %v979, 36
      %v1483 = vpop.permute.xlu0 %1482
      %1484 = vrot.lane.b32.xlu0 %v987, 36
      %v1485 = vpop.permute.xlu0 %1484
      %1486 = vrot.lane.b32.xlu0 %v995, 36
      %v1487 = vpop.permute.xlu0 %1486
      %1488 = vrot.lane.b32.xlu0 %v1003, 36
      %v1489 = vpop.permute.xlu0 %1488
      %1490 = vrot.lane.b32.xlu0 %v1011, 36
      %v1491 = vpop.permute.xlu0 %1490
      %1492 = vrot.lane.b32.xlu0 %v1019, 36
      %v1493 = vpop.permute.xlu0 %1492
      %1494 = vrot.lane.b32.xlu0 %v1027, 36
      %v1495 = vpop.permute.xlu0 %1494
      %1496 = vrot.lane.b32.xlu0 %v1035, 36
      %v1497 = vpop.permute.xlu0 %1496
      %1498 = vrot.lane.b32.xlu0 %v1043, 36
      %v1499 = vpop.permute.xlu0 %1498
      %1500 = vrot.lane.b32.xlu0 %v1051, 36
      %v1501 = vpop.permute.xlu0 %1500
      %1502 = vrot.lane.b32.xlu0 %v1059, 36
      %v1503 = vpop.permute.xlu0 %1502
      %1504 = vrot.lane.b32.xlu0 %v1067, 36
      %v1505 = vpop.permute.xlu0 %1504
      %1506 = vrot.lane.b32.xlu0 %v1075, 36
      %v1507 = vpop.permute.xlu0 %1506
      %1508 = vrot.lane.b32.xlu0 %v1083, 36
      %v1509 = vpop.permute.xlu0 %1508
      %1510 = vrot.lane.b32.xlu0 %v1091, 36
      %v1511 = vpop.permute.xlu0 %1510
      %1512 = vrot.lane.b32.xlu0 %v1099, 36
      %v1513 = vpop.permute.xlu0 %1512
      %1514 = vrot.lane.b32.xlu0 %v1107, 36
      %v1515 = vpop.permute.xlu0 %1514
      %1516 = vrot.lane.b32.xlu0 %v1381, 36
      %v1517 = vpop.permute.xlu0 %1516
      %1518 = vrot.lane.b32.xlu0 %v1389, 36
      %v1519 = vpop.permute.xlu0 %1518
      %1520 = vrot.lane.b32.xlu0 %v1397, 36
      %v1521 = vpop.permute.xlu0 %1520
      %vm1522 = vcmask 97280
      %v1524 = vsel %vm1522, %v550, %v1117
      %v1526 = vsel %vm1522, %v551, %v1119
      %v1528 = vsel %vm1522, %v552, %v1121
      %v1530 = vsel %vm1522, %v553, %v1123
      %v1532 = vsel %vm1522, %v554, %v1125
      %v1534 = vsel %vm1522, %v555, %v1127
      %v1536 = vsel %vm1522, %v556, %v1129
      %v1538 = vsel %vm1522, %v557, %v1131
      %v1540 = vsel %vm1522, %v558, %v1133
      %v1542 = vsel %vm1522, %v559, %v1135
      %v1544 = vsel %vm1522, %v560, %v1137
      %v1546 = vsel %vm1522, %v561, %v1139
      %v1548 = vsel %vm1522, %v562, %v1141
      %v1550 = vsel %vm1522, %v563, %v1143
      %v1552 = vsel %vm1522, %v564, %v1145
      %v1554 = vsel %vm1522, %v565, %v1147
      %v1556 = vsel %vm1522, %v566, %v1149
      %v1558 = vsel %vm1522, %v567, %v1151
      %v1560 = vsel %vm1522, %v568, %v1153
      %v1562 = vsel %vm1522, %v569, %v1155
      %v1564 = vsel %vm1522, %v570, %v1157
      %v1566 = vsel %vm1522, %v571, %v1159
      %v1568 = vsel %vm1522, %v572, %v1161
      %v1570 = vsel %vm1522, %v573, %v1163
      %v1572 = vsel %vm1522, %v574, %v1165
      %v1574 = vsel %vm1522, %v575, %v1167
      %v1576 = vsel %vm1522, %v576, %v1169
      %v1578 = vsel %vm1522, %v577, %v1171
      %v1580 = vsel %vm1522, %v578, %v1173
      %v1582 = vsel %vm1522, %v579, %v1175
      %v1584 = vsel %vm1522, %v580, %v1177
      %v1586 = vsel %vm1522, %v581, %v1179
      %v1588 = vsel %vm1522, %v582, %v1181
      %v1590 = vsel %vm1522, %v583, %v1183
      %v1592 = vsel %vm1522, %v584, %v1185
      %v1594 = vsel %vm1522, %v585, %v1187
      %v1596 = vsel %vm1522, %v586, %v1189
      %v1598 = vsel %vm1522, %v587, %v1191
      %v1600 = vsel %vm1522, %v588, %v1193
      %v1602 = vsel %vm1522, %v589, %v1195
      %v1604 = vsel %vm1522, %v590, %v1197
      %v1606 = vsel %vm1522, %v591, %v1199
      %v1608 = vsel %vm1522, %v592, %v1201
      %v1610 = vsel %vm1522, %v593, %v1203
      %v1612 = vsel %vm1522, %v594, %v1205
      %v1614 = vsel %vm1522, %v595, %v1207
      %v1616 = vsel %vm1522, %v596, %v1209
      %v1618 = vsel %vm1522, %v597, %v1211
      %v1620 = vsel %vm1522, %v598, %v1213
      %v1622 = vsel %vm1522, %v599, %v1215
      %v1624 = vsel %vm1522, %v600, %v1217
      %v1626 = vsel %vm1522, %v601, %v1219
      %v1628 = vsel %vm1522, %v602, %v1221
      %v1630 = vsel %vm1522, %v603, %v1223
      %v1632 = vsel %vm1522, %v604, %v1225
      %v1634 = vsel %vm1522, %v605, %v1227
      %v1636 = vsel %vm1522, %v606, %v1229
      %v1638 = vsel %vm1522, %v607, %v1231
      %v1640 = vsel %vm1522, %v608, %v1233
      %v1642 = vsel %vm1522, %v609, %v1235
      %v1644 = vsel %vm1522, %v610, %v1237
      %v1646 = vsel %vm1522, %v611, %v1239
      %vm1647 = vcmask 195584
      %v1649 = vsel %vm1647, %v1524, %v1251
      %v1651 = vsel %vm1647, %v1526, %v1253
      %v1653 = vsel %vm1647, %v1528, %v1255
      %v1655 = vsel %vm1647, %v1530, %v1257
      %v1657 = vsel %vm1647, %v1532, %v1259
      %v1659 = vsel %vm1647, %v1534, %v1261
      %v1661 = vsel %vm1647, %v1536, %v1263
      %v1663 = vsel %vm1647, %v1538, %v1265
      %v1665 = vsel %vm1647, %v1540, %v1267
      %v1667 = vsel %vm1647, %v1542, %v1269
      %v1669 = vsel %vm1647, %v1544, %v1271
      %v1671 = vsel %vm1647, %v1546, %v1273
      %v1673 = vsel %vm1647, %v1548, %v1275
      %v1675 = vsel %vm1647, %v1550, %v1277
      %v1677 = vsel %vm1647, %v1552, %v1279
      %v1679 = vsel %vm1647, %v1554, %v1281
      %v1681 = vsel %vm1647, %v1556, %v1283
      %v1683 = vsel %vm1647, %v1558, %v1285
      %v1685 = vsel %vm1647, %v1560, %v1287
      %v1687 = vsel %vm1647, %v1562, %v1289
      %v1689 = vsel %vm1647, %v1564, %v1291
      %v1691 = vsel %vm1647, %v1566, %v1293
      %v1693 = vsel %vm1647, %v1568, %v1295
      %v1695 = vsel %vm1647, %v1570, %v1297
      %v1697 = vsel %vm1647, %v1572, %v1299
      %v1699 = vsel %vm1647, %v1574, %v1301
      %v1701 = vsel %vm1647, %v1576, %v1303
      %v1703 = vsel %vm1647, %v1578, %v1305
      %v1705 = vsel %vm1647, %v1580, %v1307
      %v1707 = vsel %vm1647, %v1582, %v1309
      %v1709 = vsel %vm1647, %v1584, %v1311
      %v1711 = vsel %vm1647, %v1586, %v1313
      %v1713 = vsel %vm1647, %v1588, %v1315
      %v1715 = vsel %vm1647, %v1590, %v1317
      %v1717 = vsel %vm1647, %v1592, %v1319
      %v1719 = vsel %vm1647, %v1594, %v1321
      %v1721 = vsel %vm1647, %v1596, %v1323
      %v1723 = vsel %vm1647, %v1598, %v1325
      %v1725 = vsel %vm1647, %v1600, %v1327
      %v1727 = vsel %vm1647, %v1602, %v1329
      %v1729 = vsel %vm1647, %v1604, %v1331
      %v1731 = vsel %vm1647, %v1606, %v1333
      %v1733 = vsel %vm1647, %v1608, %v1335
      %v1735 = vsel %vm1647, %v1610, %v1337
      %v1737 = vsel %vm1647, %v1612, %v1339
      %v1739 = vsel %vm1647, %v1614, %v1341
      %v1741 = vsel %vm1647, %v1616, %v1343
      %v1743 = vsel %vm1647, %v1618, %v1345
      %v1745 = vsel %vm1647, %v1620, %v1347
      %v1747 = vsel %vm1647, %v1622, %v1349
      %v1749 = vsel %vm1647, %v1624, %v1351
      %v1751 = vsel %vm1647, %v1626, %v1353
      %v1753 = vsel %vm1647, %v1628, %v1355
      %v1755 = vsel %vm1647, %v1630, %v1357
      %v1757 = vsel %vm1647, %v1632, %v1359
      %v1759 = vsel %vm1647, %v1634, %v1361
      %v1761 = vsel %vm1647, %v1636, %v1363
      %v1763 = vsel %vm1647, %v1638, %v1365
      %v1765 = vsel %vm1647, %v1640, %v1367
      %v1767 = vsel %vm1647, %v1642, %v1369
      %v1769 = vsel %vm1647, %v1644, %v1371
      %v1771 = vsel %vm1647, %v1646, %v1373
      %vm1772 = vcmask 293888
      %v1774 = vsel %vm1772, %v1649, %v1399
      %v1776 = vsel %vm1772, %v1651, %v1401
      %v1778 = vsel %vm1772, %v1653, %v1403
      %v1780 = vsel %vm1772, %v1655, %v1405
      %v1782 = vsel %vm1772, %v1657, %v1407
      %v1784 = vsel %vm1772, %v1659, %v1409
      %v1786 = vsel %vm1772, %v1661, %v1411
      %v1788 = vsel %vm1772, %v1663, %v1413
      %v1790 = vsel %vm1772, %v1665, %v1415
      %v1792 = vsel %vm1772, %v1667, %v1417
      %v1794 = vsel %vm1772, %v1669, %v1419
      %v1796 = vsel %vm1772, %v1671, %v1421
      %v1798 = vsel %vm1772, %v1673, %v1423
      %v1800 = vsel %vm1772, %v1675, %v1425
      %v1802 = vsel %vm1772, %v1677, %v1427
      %v1804 = vsel %vm1772, %v1679, %v1429
      %v1806 = vsel %vm1772, %v1681, %v1431
      %v1808 = vsel %vm1772, %v1683, %v1433
      %v1810 = vsel %vm1772, %v1685, %v1435
      %v1812 = vsel %vm1772, %v1687, %v1437
      %v1814 = vsel %vm1772, %v1689, %v1439
      %v1816 = vsel %vm1772, %v1691, %v1441
      %v1818 = vsel %vm1772, %v1693, %v1443
      %v1820 = vsel %vm1772, %v1695, %v1445
      %v1822 = vsel %vm1772, %v1697, %v1447
      %v1824 = vsel %vm1772, %v1699, %v1449
      %v1826 = vsel %vm1772, %v1701, %v1451
      %v1828 = vsel %vm1772, %v1703, %v1453
      %v1830 = vsel %vm1772, %v1705, %v1455
      %v1832 = vsel %vm1772, %v1707, %v1457
      %v1834 = vsel %vm1772, %v1709, %v1459
      %v1836 = vsel %vm1772, %v1711, %v1461
      %v1838 = vsel %vm1772, %v1713, %v1463
      %v1840 = vsel %vm1772, %v1715, %v1465
      %v1842 = vsel %vm1772, %v1717, %v1467
      %v1844 = vsel %vm1772, %v1719, %v1469
      %v1846 = vsel %vm1772, %v1721, %v1471
      %v1848 = vsel %vm1772, %v1723, %v1473
      %v1850 = vsel %vm1772, %v1725, %v1475
      %v1852 = vsel %vm1772, %v1727, %v1477
      %v1854 = vsel %vm1772, %v1729, %v1479
      %v1856 = vsel %vm1772, %v1731, %v1481
      %v1858 = vsel %vm1772, %v1733, %v1483
      %v1860 = vsel %vm1772, %v1735, %v1485
      %v1862 = vsel %vm1772, %v1737, %v1487
      %v1864 = vsel %vm1772, %v1739, %v1489
      %v1866 = vsel %vm1772, %v1741, %v1491
      %v1868 = vsel %vm1772, %v1743, %v1493
      %v1870 = vsel %vm1772, %v1745, %v1495
      %v1872 = vsel %vm1772, %v1747, %v1497
      %v1874 = vsel %vm1772, %v1749, %v1499
      %v1876 = vsel %vm1772, %v1751, %v1501
      %v1878 = vsel %vm1772, %v1753, %v1503
      %v1880 = vsel %vm1772, %v1755, %v1505
      %v1882 = vsel %vm1772, %v1757, %v1507
      %v1884 = vsel %vm1772, %v1759, %v1509
      %v1886 = vsel %vm1772, %v1761, %v1511
      %v1888 = vsel %vm1772, %v1763, %v1513
      %v1890 = vsel %vm1772, %v1765, %v1515
      %v1892 = vsel %vm1772, %v1767, %v1517
      %v1894 = vsel %vm1772, %v1769, %v1519
      %v1896 = vsel %vm1772, %v1771, %v1521
      %v1897 = vld [vmem:[%s1] sm:$0xf]
      %v1898 = vld [vmem:[%s1 + $0x4] sm:$0xf]
      %v1899 = vld [vmem:[%s1 + $0x8] sm:$0xf]
      %v1900 = vld [vmem:[%s1 + $0xc] sm:$0xf]
      %v1901 = vld [vmem:[%s1 + $0x10] sm:$0xf]
      %v1902 = vld [vmem:[%s1 + $0x14] sm:$0xf]
      %v1903 = vld [vmem:[%s2] sm:$0x1]
      %v1905 = vlaneseq
      %v1906 = vshrl.u32 %v1905, 7
      %v1907 = vsub.s32 0, %v1906
      %v1908 = vrot.slane %v1903, %v1907
      %v1916 = vunpack.c.l.b16 %v1897
      %v1917 = vunpack.c.l.b16 %v1898
      %v1918 = vunpack.c.l.b16 %v1899
      %v1919 = vunpack.c.l.b16 %v1900
      %v1920 = vunpack.c.l.b16 %v1901
      %v1921 = vunpack.c.l.b16 %v1902
      %v1922 = vpack.c.b16 %v1917, %v1916
      %v1923 = vpack.c.b16 %v1919, %v1918
      %v1924 = vpack.c.b16 %v1921, %v1920
      %vm1928 = vcmask 392192
      %v1929 = vsel %vm1928, %v1774, 0
      %v1931 = vsel %vm1928, %v1776, 0
      %v1933 = vsel %vm1928, %v1778, 0
      %v1935 = vsel %vm1928, %v1780, 0
      %v1937 = vsel %vm1928, %v1782, 0
      %v1939 = vsel %vm1928, %v1784, 0
      %v1941 = vsel %vm1928, %v1786, 0
      %v1943 = vsel %vm1928, %v1788, 0
      %v1945 = vsel %vm1928, %v1790, 0
      %v1947 = vsel %vm1928, %v1792, 0
      %v1949 = vsel %vm1928, %v1794, 0
      %v1951 = vsel %vm1928, %v1796, 0
      %v1953 = vsel %vm1928, %v1798, 0
      %v1955 = vsel %vm1928, %v1800, 0
      %v1957 = vsel %vm1928, %v1802, 0
      %v1959 = vsel %vm1928, %v1804, 0
      %v1961 = vsel %vm1928, %v1806, 0
      %v1963 = vsel %vm1928, %v1808, 0
      %v1965 = vsel %vm1928, %v1810, 0
      %v1967 = vsel %vm1928, %v1812, 0
      %v1969 = vsel %vm1928, %v1814, 0
      %v1971 = vsel %vm1928, %v1816, 0
      %v1973 = vsel %vm1928, %v1818, 0
      %v1975 = vsel %vm1928, %v1820, 0
      %v1977 = vsel %vm1928, %v1822, 0
      %v1979 = vsel %vm1928, %v1824, 0
      %v1981 = vsel %vm1928, %v1826, 0
      %v1983 = vsel %vm1928, %v1828, 0
      %v1985 = vsel %vm1928, %v1830, 0
      %v1987 = vsel %vm1928, %v1832, 0
      %v1989 = vsel %vm1928, %v1834, 0
      %v1991 = vsel %vm1928, %v1836, 0
      %v1993 = vsel %vm1928, %v1838, 0
      %v1995 = vsel %vm1928, %v1840, 0
      %v1997 = vsel %vm1928, %v1842, 0
      %v1999 = vsel %vm1928, %v1844, 0
      %v2001 = vsel %vm1928, %v1846, 0
      %v2003 = vsel %vm1928, %v1848, 0
      %v2005 = vsel %vm1928, %v1850, 0
      %v2007 = vsel %vm1928, %v1852, 0
      %v2009 = vsel %vm1928, %v1854, 0
      %v2011 = vsel %vm1928, %v1856, 0
      %v2013 = vsel %vm1928, %v1858, 0
      %v2015 = vsel %vm1928, %v1860, 0
      %v2017 = vsel %vm1928, %v1862, 0
      %v2019 = vsel %vm1928, %v1864, 0
      %v2021 = vsel %vm1928, %v1866, 0
      %v2023 = vsel %vm1928, %v1868, 0
      %v2025 = vsel %vm1928, %v1870, 0
      %v2027 = vsel %vm1928, %v1872, 0
      %v2029 = vsel %vm1928, %v1874, 0
      %v2031 = vsel %vm1928, %v1876, 0
      %v2033 = vsel %vm1928, %v1878, 0
      %v2035 = vsel %vm1928, %v1880, 0
      %v2037 = vsel %vm1928, %v1882, 0
      %v2039 = vsel %vm1928, %v1884, 0
      %v2041 = vsel %vm1928, %v1886, 0
      %v2043 = vsel %vm1928, %v1888, 0
      %v2045 = vsel %vm1928, %v1890, 0
      %v2047 = vsel %vm1928, %v1892, 0
      %v2049 = vsel %vm1928, %v1894, 0
      %v2051 = vsel %vm1928, %v1896, 0
      %2053 = vmatprep.subr.bf16.mxu0 0
      %2054 = vmatpush1.bf16.msra.mxu0 %v1922
      %2055 = vmatprep.subr.bf16.mxu0 0
      %2056 = vmatpush1.bf16.msra.mxu0 %v1923
      %2057 = vmatprep.subr.bf16.mxu0 0
      %2058 = vmatpush1.bf16.msra.mxu0 %v1924
      %2059 = vmatprep.subr.bf16.mxu0 0
      %2060 = vmatpush1.bf16.msra.mxu0 0
      %2061 = vmatprep.subr.bf16.mxu0 0
      %2062 = vmatpush1.bf16.msra.mxu0 0
      %2063 = vmatprep.subr.bf16.mxu0 0
      %2064 = vmatpush1.bf16.msra.mxu0 0
      %2065 = vmatprep.subr.bf16.mxu0 0
      %2066 = vmatpush1.bf16.msra.mxu0 0
      %2067 = vmatprep.subr.bf16.mxu0 0
      %2068 = vmatpush1.bf16.msra.mxu0 0
      %2069 = vmatprep.subr.bf16.mxu0 0
      %2070 = vmatpush1.bf16.msra.mxu0 0
      %2071 = vmatprep.subr.bf16.mxu0 0
      %2072 = vmatpush1.bf16.msra.mxu0 0
      %2073 = vmatprep.subr.bf16.mxu0 0
      %2074 = vmatpush1.bf16.msra.mxu0 0
      %2075 = vmatprep.subr.bf16.mxu0 0
      %2076 = vmatpush1.bf16.msra.mxu0 0
      %2077 = vmatprep.subr.bf16.mxu0 0
      %2078 = vmatpush1.bf16.msra.mxu0 0
      %2079 = vmatprep.subr.bf16.mxu0 0
      %2080 = vmatpush1.bf16.msra.mxu0 0
      %2081 = vmatprep.subr.bf16.mxu0 0
      %2082 = vmatpush1.bf16.msra.mxu0 0
      %2083 = vmatprep.subr.bf16.mxu0 0
      %2084 = vmatpush1.bf16.msra.mxu0 0
      %2085 = vmatprep.mubr.bf16.mxu0 0
      %2086 = vmatmul.mubr.bf16.gmra.mrb[0].mxu0 %v1929
      %v2087 = vpop.f32.mrb[0].mxu0
      %v2088 = vadd.f32 %v1908, %v2087
      %v2089 = vpop.f32.mrb[0].mxu0
      %v2090 = vpop.f32.mrb[0].mxu0
      %v2091 = vadd.f32 %v1908, %v2090
      %v2092 = vpop.f32.mrb[0].mxu0
      %2093 = vmatprep.mubr.bf16.mxu0 0
      %2094 = vmatmul.mubr.bf16.gmra.mrb[0].mxu0 %v1931
      %v2095 = vpop.f32.mrb[0].mxu0
      %v2096 = vadd.f32 %v1908, %v2095
      %v2097 = vpop.f32.mrb[0].mxu0
      %v2098 = vpop.f32.mrb[0].mxu0
      %v2099 = vadd.f32 %v1908, %v2098
      %v2100 = vpop.f32.mrb[0].mxu0
      %2101 = vmatprep.mubr.bf16.mxu0 0
      %2102 = vmatmul.mubr.bf16.gmra.mrb[0].mxu0 %v1933
      %v2103 = vpop.f32.mrb[0].mxu0
      %v2104 = vadd.f32 %v1908, %v2103
      %v2105 = vpop.f32.mrb[0].mxu0
      %v2106 = vpop.f32.mrb[0].mxu0
      %v2107 = vadd.f32 %v1908, %v2106
      %v2108 = vpop.f32.mrb[0].mxu0
      %2109 = vmatprep.mubr.bf16.mxu0 0
      %2110 = vmatmul.mubr.bf16.gmra.mrb[0].mxu0 %v1935
      %v2111 = vpop.f32.mrb[0].mxu0
      %v2112 = vadd.f32 %v1908, %v2111
      %v2113 = vpop.f32.mrb[0].mxu0
      %v2114 = vpop.f32.mrb[0].mxu0
      %v2115 = vadd.f32 %v1908, %v2114
      %v2116 = vpop.f32.mrb[0].mxu0
      %2117 = vmatprep.mubr.bf16.mxu0 0
      %2118 = vmatmul.mubr.bf16.gmra.mrb[0].mxu0 %v1937
      %v2119 = vpop.f32.mrb[0].mxu0
      %v2120 = vadd.f32 %v1908, %v2119
      %v2121 = vpop.f32.mrb[0].mxu0
      %v2122 = vpop.f32.mrb[0].mxu0
      %v2123 = vadd.f32 %v1908, %v2122
      %v2124 = vpop.f32.mrb[0].mxu0
      %2125 = vmatprep.mubr.bf16.mxu0 0
      %2126 = vmatmul.mubr.bf16.gmra.mrb[0].mxu0 %v1939
      %v2127 = vpop.f32.mrb[0].mxu0
      %v2128 = vadd.f32 %v1908, %v2127
      %v2129 = vpop.f32.mrb[0].mxu0
      %v2130 = vpop.f32.mrb[0].mxu0
      %v2131 = vadd.f32 %v1908, %v2130
      %v2132 = vpop.f32.mrb[0].mxu0
      %2133 = vmatprep.mubr.bf16.mxu0 0
      %2134 = vmatmul.mubr.bf16.gmra.mrb[0].mxu0 %v1941
      %v2135 = vpop.f32.mrb[0].mxu0
      %v2136 = vadd.f32 %v1908, %v2135
      %v2137 = vpop.f32.mrb[0].mxu0
      %v2138 = vpop.f32.mrb[0].mxu0
      %v2139 = vadd.f32 %v1908, %v2138
      %v2140 = vpop.f32.mrb[0].mxu0
      %2141 = vmatprep.mubr.bf16.mxu0 0
      %2142 = vmatmul.mubr.bf16.gmra.mrb[0].mxu0 %v1943
      %v2143 = vpop.f32.mrb[0].mxu0
      %v2144 = vadd.f32 %v1908, %v2143
      %v2145 = vpop.f32.mrb[0].mxu0
      %v2146 = vpop.f32.mrb[0].mxu0
      %v2147 = vadd.f32 %v1908, %v2146
      %v2148 = vpop.f32.mrb[0].mxu0
      %2149 = vmatprep.mubr.bf16.mxu0 0
      %2150 = vmatmul.mubr.bf16.gmra.mrb[0].mxu0 %v1945
      %v2151 = vpop.f32.mrb[0].mxu0
      %v2152 = vadd.f32 %v1908, %v2151
      %v2153 = vpop.f32.mrb[0].mxu0
      %v2154 = vpop.f32.mrb[0].mxu0
      %v2155 = vadd.f32 %v1908, %v2154
      %v2156 = vpop.f32.mrb[0].mxu0
      %2157 = vmatprep.mubr.bf16.mxu0 0
      %2158 = vmatmul.mubr.bf16.gmra.mrb[0].mxu0 %v1947
      %v2159 = vpop.f32.mrb[0].mxu0
      %v2160 = vadd.f32 %v1908, %v2159
      %v2161 = vpop.f32.mrb[0].mxu0
      %v2162 = vpop.f32.mrb[0].mxu0
      %v2163 = vadd.f32 %v1908, %v2162
      %v2164 = vpop.f32.mrb[0].mxu0
      %2165 = vmatprep.mubr.bf16.mxu0 0
      %2166 = vmatmul.mubr.bf16.gmra.mrb[0].mxu0 %v1949
      %v2167 = vpop.f32.mrb[0].mxu0
      %v2168 = vadd.f32 %v1908, %v2167
      %v2169 = vpop.f32.mrb[0].mxu0
      %v2170 = vpop.f32.mrb[0].mxu0
      %v2171 = vadd.f32 %v1908, %v2170
      %v2172 = vpop.f32.mrb[0].mxu0
      %2173 = vmatprep.mubr.bf16.mxu0 0
      %2174 = vmatmul.mubr.bf16.gmra.mrb[0].mxu0 %v1951
      %v2175 = vpop.f32.mrb[0].mxu0
      %v2176 = vadd.f32 %v1908, %v2175
      %v2177 = vpop.f32.mrb[0].mxu0
      %v2178 = vpop.f32.mrb[0].mxu0
      %v2179 = vadd.f32 %v1908, %v2178
      %v2180 = vpop.f32.mrb[0].mxu0
      %2181 = vmatprep.mubr.bf16.mxu0 0
      %2182 = vmatmul.mubr.bf16.gmra.mrb[0].mxu0 %v1953
      %v2183 = vpop.f32.mrb[0].mxu0
      %v2184 = vadd.f32 %v1908, %v2183
      %v2185 = vpop.f32.mrb[0].mxu0
      %v2186 = vpop.f32.mrb[0].mxu0
      %v2187 = vadd.f32 %v1908, %v2186
      %v2188 = vpop.f32.mrb[0].mxu0
      %2189 = vmatprep.mubr.bf16.mxu0 0
      %2190 = vmatmul.mubr.bf16.gmra.mrb[0].mxu0 %v1955
      %v2191 = vpop.f32.mrb[0].mxu0
      %v2192 = vadd.f32 %v1908, %v2191
      %v2193 = vpop.f32.mrb[0].mxu0
      %v2194 = vpop.f32.mrb[0].mxu0
      %v2195 = vadd.f32 %v1908, %v2194
      %v2196 = vpop.f32.mrb[0].mxu0
      %2197 = vmatprep.mubr.bf16.mxu0 0
      %2198 = vmatmul.mubr.bf16.gmra.mrb[0].mxu0 %v1957
      %v2199 = vpop.f32.mrb[0].mxu0
      %v2200 = vadd.f32 %v1908, %v2199
      %v2201 = vpop.f32.mrb[0].mxu0
      %v2202 = vpop.f32.mrb[0].mxu0
      %v2203 = vadd.f32 %v1908, %v2202
      %v2204 = vpop.f32.mrb[0].mxu0
      %2205 = vmatprep.mubr.bf16.mxu0 0
      %2206 = vmatmul.mubr.bf16.gmra.mrb[0].mxu0 %v1959
      %v2207 = vpop.f32.mrb[0].mxu0
      %v2208 = vadd.f32 %v1908, %v2207
      %v2209 = vpop.f32.mrb[0].mxu0
      %v2210 = vpop.f32.mrb[0].mxu0
      %v2211 = vadd.f32 %v1908, %v2210
      %v2212 = vpop.f32.mrb[0].mxu0
      %2213 = vmatprep.mubr.bf16.mxu0 0
      %2214 = vmatmul.mubr.bf16.gmra.mrb[0].mxu0 %v1961
      %v2215 = vpop.f32.mrb[0].mxu0
      %v2216 = vadd.f32 %v1908, %v2215
      %v2217 = vpop.f32.mrb[0].mxu0
      %v2218 = vpop.f32.mrb[0].mxu0
      %v2219 = vadd.f32 %v1908, %v2218
      %v2220 = vpop.f32.mrb[0].mxu0
      %2221 = vmatprep.mubr.bf16.mxu0 0
      %2222 = vmatmul.mubr.bf16.gmra.mrb[0].mxu0 %v1963
      %v2223 = vpop.f32.mrb[0].mxu0
      %v2224 = vadd.f32 %v1908, %v2223
      %v2225 = vpop.f32.mrb[0].mxu0
      %v2226 = vpop.f32.mrb[0].mxu0
      %v2227 = vadd.f32 %v1908, %v2226
      %v2228 = vpop.f32.mrb[0].mxu0
      %2229 = vmatprep.mubr.bf16.mxu0 0
      %2230 = vmatmul.mubr.bf16.gmra.mrb[0].mxu0 %v1965
      %v2231 = vpop.f32.mrb[0].mxu0
      %v2232 = vadd.f32 %v1908, %v2231
      %v2233 = vpop.f32.mrb[0].mxu0
      %v2234 = vpop.f32.mrb[0].mxu0
      %v2235 = vadd.f32 %v1908, %v2234
      %v2236 = vpop.f32.mrb[0].mxu0
      %2237 = vmatprep.mubr.bf16.mxu0 0
      %2238 = vmatmul.mubr.bf16.gmra.mrb[0].mxu0 %v1967
      %v2239 = vpop.f32.mrb[0].mxu0
      %v2240 = vadd.f32 %v1908, %v2239
      %v2241 = vpop.f32.mrb[0].mxu0
      %v2242 = vpop.f32.mrb[0].mxu0
      %v2243 = vadd.f32 %v1908, %v2242
      %v2244 = vpop.f32.mrb[0].mxu0
      %2245 = vmatprep.mubr.bf16.mxu0 0
      %2246 = vmatmul.mubr.bf16.gmra.mrb[0].mxu0 %v1969
      %v2247 = vpop.f32.mrb[0].mxu0
      %v2248 = vadd.f32 %v1908, %v2247
      %v2249 = vpop.f32.mrb[0].mxu0
      %v2250 = vpop.f32.mrb[0].mxu0
      %v2251 = vadd.f32 %v1908, %v2250
      %v2252 = vpop.f32.mrb[0].mxu0
      %2253 = vmatprep.mubr.bf16.mxu0 0
      %2254 = vmatmul.mubr.bf16.gmra.mrb[0].mxu0 %v1971
      %v2255 = vpop.f32.mrb[0].mxu0
      %v2256 = vadd.f32 %v1908, %v2255
      %v2257 = vpop.f32.mrb[0].mxu0
      %v2258 = vpop.f32.mrb[0].mxu0
      %v2259 = vadd.f32 %v1908, %v2258
      %v2260 = vpop.f32.mrb[0].mxu0
      %2261 = vmatprep.mubr.bf16.mxu0 0
      %2262 = vmatmul.mubr.bf16.gmra.mrb[0].mxu0 %v1973
      %v2263 = vpop.f32.mrb[0].mxu0
      %v2264 = vadd.f32 %v1908, %v2263
      %v2265 = vpop.f32.mrb[0].mxu0
      %v2266 = vpop.f32.mrb[0].mxu0
      %v2267 = vadd.f32 %v1908, %v2266
      %v2268 = vpop.f32.mrb[0].mxu0
      %2269 = vmatprep.mubr.bf16.mxu0 0
      %2270 = vmatmul.mubr.bf16.gmra.mrb[0].mxu0 %v1975
      %v2271 = vpop.f32.mrb[0].mxu0
      %v2272 = vadd.f32 %v1908, %v2271
      %v2273 = vpop.f32.mrb[0].mxu0
      %v2274 = vpop.f32.mrb[0].mxu0
      %v2275 = vadd.f32 %v1908, %v2274
      %v2276 = vpop.f32.mrb[0].mxu0
      %2277 = vmatprep.mubr.bf16.mxu0 0
      %2278 = vmatmul.mubr.bf16.gmra.mrb[0].mxu0 %v1977
      %v2279 = vpop.f32.mrb[0].mxu0
      %v2280 = vadd.f32 %v1908, %v2279
      %v2281 = vpop.f32.mrb[0].mxu0
      %v2282 = vpop.f32.mrb[0].mxu0
      %v2283 = vadd.f32 %v1908, %v2282
      %v2284 = vpop.f32.mrb[0].mxu0
      %2285 = vmatprep.mubr.bf16.mxu0 0
      %2286 = vmatmul.mubr.bf16.gmra.mrb[0].mxu0 %v1979
      %v2287 = vpop.f32.mrb[0].mxu0
      %v2288 = vadd.f32 %v1908, %v2287
      %v2289 = vpop.f32.mrb[0].mxu0
      %v2290 = vpop.f32.mrb[0].mxu0
      %v2291 = vadd.f32 %v1908, %v2290
      %v2292 = vpop.f32.mrb[0].mxu0
      %2293 = vmatprep.mubr.bf16.mxu0 0
      %2294 = vmatmul.mubr.bf16.gmra.mrb[0].mxu0 %v1981
      %v2295 = vpop.f32.mrb[0].mxu0
      %v2296 = vadd.f32 %v1908, %v2295
      %v2297 = vpop.f32.mrb[0].mxu0
      %v2298 = vpop.f32.mrb[0].mxu0
      %v2299 = vadd.f32 %v1908, %v2298
      %v2300 = vpop.f32.mrb[0].mxu0
      %2301 = vmatprep.mubr.bf16.mxu0 0
      %2302 = vmatmul.mubr.bf16.gmra.mrb[0].mxu0 %v1983
      %v2303 = vpop.f32.mrb[0].mxu0
      %v2304 = vadd.f32 %v1908, %v2303
      %v2305 = vpop.f32.mrb[0].mxu0
      %v2306 = vpop.f32.mrb[0].mxu0
      %v2307 = vadd.f32 %v1908, %v2306
      %v2308 = vpop.f32.mrb[0].mxu0
      %2309 = vmatprep.mubr.bf16.mxu0 0
      %2310 = vmatmul.mubr.bf16.gmra.mrb[0].mxu0 %v1985
      %v2311 = vpop.f32.mrb[0].mxu0
      %v2312 = vadd.f32 %v1908, %v2311
      %v2313 = vpop.f32.mrb[0].mxu0
      %v2314 = vpop.f32.mrb[0].mxu0
      %v2315 = vadd.f32 %v1908, %v2314
      %v2316 = vpop.f32.mrb[0].mxu0
      %2317 = vmatprep.mubr.bf16.mxu0 0
      %2318 = vmatmul.mubr.bf16.gmra.mrb[0].mxu0 %v1987
      %v2319 = vpop.f32.mrb[0].mxu0
      %v2320 = vadd.f32 %v1908, %v2319
      %v2321 = vpop.f32.mrb[0].mxu0
      %v2322 = vpop.f32.mrb[0].mxu0
      %v2323 = vadd.f32 %v1908, %v2322
      %v2324 = vpop.f32.mrb[0].mxu0
      %2325 = vmatprep.mubr.bf16.mxu0 0
      %2326 = vmatmul.mubr.bf16.gmra.mrb[0].mxu0 %v1989
      %v2327 = vpop.f32.mrb[0].mxu0
      %v2328 = vadd.f32 %v1908, %v2327
      %v2329 = vpop.f32.mrb[0].mxu0
      %v2330 = vpop.f32.mrb[0].mxu0
      %v2331 = vadd.f32 %v1908, %v2330
      %v2332 = vpop.f32.mrb[0].mxu0
      %2333 = vmatprep.mubr.bf16.mxu0 0
      %2334 = vmatmul.mubr.bf16.gmra.mrb[0].mxu0 %v1991
      %v2335 = vpop.f32.mrb[0].mxu0
      %v2336 = vadd.f32 %v1908, %v2335
      %v2337 = vpop.f32.mrb[0].mxu0
      %v2338 = vpop.f32.mrb[0].mxu0
      %v2339 = vadd.f32 %v1908, %v2338
      %v2340 = vpop.f32.mrb[0].mxu0
      %2341 = vmatprep.mubr.bf16.mxu0 0
      %2342 = vmatmul.mubr.bf16.gmra.mrb[0].mxu0 %v1993
      %v2343 = vpop.f32.mrb[0].mxu0
      %v2344 = vadd.f32 %v1908, %v2343
      %v2345 = vpop.f32.mrb[0].mxu0
      %v2346 = vpop.f32.mrb[0].mxu0
      %v2347 = vadd.f32 %v1908, %v2346
      %v2348 = vpop.f32.mrb[0].mxu0
      %2349 = vmatprep.mubr.bf16.mxu0 0
      %2350 = vmatmul.mubr.bf16.gmra.mrb[0].mxu0 %v1995
      %v2351 = vpop.f32.mrb[0].mxu0
      %v2352 = vadd.f32 %v1908, %v2351
      %v2353 = vpop.f32.mrb[0].mxu0
      %v2354 = vpop.f32.mrb[0].mxu0
      %v2355 = vadd.f32 %v1908, %v2354
      %v2356 = vpop.f32.mrb[0].mxu0
      %2357 = vmatprep.mubr.bf16.mxu0 0
      %2358 = vmatmul.mubr.bf16.gmra.mrb[0].mxu0 %v1997
      %v2359 = vpop.f32.mrb[0].mxu0
      %v2360 = vadd.f32 %v1908, %v2359
      %v2361 = vpop.f32.mrb[0].mxu0
      %v2362 = vpop.f32.mrb[0].mxu0
      %v2363 = vadd.f32 %v1908, %v2362
      %v2364 = vpop.f32.mrb[0].mxu0
      %2365 = vmatprep.mubr.bf16.mxu0 0
      %2366 = vmatmul.mubr.bf16.gmra.mrb[0].mxu0 %v1999
      %v2367 = vpop.f32.mrb[0].mxu0
      %v2368 = vadd.f32 %v1908, %v2367
      %v2369 = vpop.f32.mrb[0].mxu0
      %v2370 = vpop.f32.mrb[0].mxu0
      %v2371 = vadd.f32 %v1908, %v2370
      %v2372 = vpop.f32.mrb[0].mxu0
      %2373 = vmatprep.mubr.bf16.mxu0 0
      %2374 = vmatmul.mubr.bf16.gmra.mrb[0].mxu0 %v2001
      %v2375 = vpop.f32.mrb[0].mxu0
      %v2376 = vadd.f32 %v1908, %v2375
      %v2377 = vpop.f32.mrb[0].mxu0
      %v2378 = vpop.f32.mrb[0].mxu0
      %v2379 = vadd.f32 %v1908, %v2378
      %v2380 = vpop.f32.mrb[0].mxu0
      %2381 = vmatprep.mubr.bf16.mxu0 0
      %2382 = vmatmul.mubr.bf16.gmra.mrb[0].mxu0 %v2003
      %v2383 = vpop.f32.mrb[0].mxu0
      %v2384 = vadd.f32 %v1908, %v2383
      %v2385 = vpop.f32.mrb[0].mxu0
      %v2386 = vpop.f32.mrb[0].mxu0
      %v2387 = vadd.f32 %v1908, %v2386
      %v2388 = vpop.f32.mrb[0].mxu0
      %2389 = vmatprep.mubr.bf16.mxu0 0
      %2390 = vmatmul.mubr.bf16.gmra.mrb[0].mxu0 %v2005
      %v2391 = vpop.f32.mrb[0].mxu0
      %v2392 = vadd.f32 %v1908, %v2391
      %v2393 = vpop.f32.mrb[0].mxu0
      %v2394 = vpop.f32.mrb[0].mxu0
      %v2395 = vadd.f32 %v1908, %v2394
      %v2396 = vpop.f32.mrb[0].mxu0
      %2397 = vmatprep.mubr.bf16.mxu0 0
      %2398 = vmatmul.mubr.bf16.gmra.mrb[0].mxu0 %v2007
      %v2399 = vpop.f32.mrb[0].mxu0
      %v2400 = vadd.f32 %v1908, %v2399
      %v2401 = vpop.f32.mrb[0].mxu0
      %v2402 = vpop.f32.mrb[0].mxu0
      %v2403 = vadd.f32 %v1908, %v2402
      %v2404 = vpop.f32.mrb[0].mxu0
      %2405 = vmatprep.mubr.bf16.mxu0 0
      %2406 = vmatmul.mubr.bf16.gmra.mrb[0].mxu0 %v2009
      %v2407 = vpop.f32.mrb[0].mxu0
      %v2408 = vadd.f32 %v1908, %v2407
      %v2409 = vpop.f32.mrb[0].mxu0
      %v2410 = vpop.f32.mrb[0].mxu0
      %v2411 = vadd.f32 %v1908, %v2410
      %v2412 = vpop.f32.mrb[0].mxu0
      %2413 = vmatprep.mubr.bf16.mxu0 0
      %2414 = vmatmul.mubr.bf16.gmra.mrb[0].mxu0 %v2011
      %v2415 = vpop.f32.mrb[0].mxu0
      %v2416 = vadd.f32 %v1908, %v2415
      %v2417 = vpop.f32.mrb[0].mxu0
      %v2418 = vpop.f32.mrb[0].mxu0
      %v2419 = vadd.f32 %v1908, %v2418
      %v2420 = vpop.f32.mrb[0].mxu0
      %2421 = vmatprep.mubr.bf16.mxu0 0
      %2422 = vmatmul.mubr.bf16.gmra.mrb[0].mxu0 %v2013
      %v2423 = vpop.f32.mrb[0].mxu0
      %v2424 = vadd.f32 %v1908, %v2423
      %v2425 = vpop.f32.mrb[0].mxu0
      %v2426 = vpop.f32.mrb[0].mxu0
      %v2427 = vadd.f32 %v1908, %v2426
      %v2428 = vpop.f32.mrb[0].mxu0
      %2429 = vmatprep.mubr.bf16.mxu0 0
      %2430 = vmatmul.mubr.bf16.gmra.mrb[0].mxu0 %v2015
      %v2431 = vpop.f32.mrb[0].mxu0
      %v2432 = vadd.f32 %v1908, %v2431
      %v2433 = vpop.f32.mrb[0].mxu0
      %v2434 = vpop.f32.mrb[0].mxu0
      %v2435 = vadd.f32 %v1908, %v2434
      %v2436 = vpop.f32.mrb[0].mxu0
      %2437 = vmatprep.mubr.bf16.mxu0 0
      %2438 = vmatmul.mubr.bf16.gmra.mrb[0].mxu0 %v2017
      %v2439 = vpop.f32.mrb[0].mxu0
      %v2440 = vadd.f32 %v1908, %v2439
      %v2441 = vpop.f32.mrb[0].mxu0
      %v2442 = vpop.f32.mrb[0].mxu0
      %v2443 = vadd.f32 %v1908, %v2442
      %v2444 = vpop.f32.mrb[0].mxu0
      %2445 = vmatprep.mubr.bf16.mxu0 0
      %2446 = vmatmul.mubr.bf16.gmra.mrb[0].mxu0 %v2019
      %v2447 = vpop.f32.mrb[0].mxu0
      %v2448 = vadd.f32 %v1908, %v2447
      %v2449 = vpop.f32.mrb[0].mxu0
      %v2450 = vpop.f32.mrb[0].mxu0
      %v2451 = vadd.f32 %v1908, %v2450
      %v2452 = vpop.f32.mrb[0].mxu0
      %2453 = vmatprep.mubr.bf16.mxu0 0
      %2454 = vmatmul.mubr.bf16.gmra.mrb[0].mxu0 %v2021
      %v2455 = vpop.f32.mrb[0].mxu0
      %v2456 = vadd.f32 %v1908, %v2455
      %v2457 = vpop.f32.mrb[0].mxu0
      %v2458 = vpop.f32.mrb[0].mxu0
      %v2459 = vadd.f32 %v1908, %v2458
      %v2460 = vpop.f32.mrb[0].mxu0
      %2461 = vmatprep.mubr.bf16.mxu0 0
      %2462 = vmatmul.mubr.bf16.gmra.mrb[0].mxu0 %v2023
      %v2463 = vpop.f32.mrb[0].mxu0
      %v2464 = vadd.f32 %v1908, %v2463
      %v2465 = vpop.f32.mrb[0].mxu0
      %v2466 = vpop.f32.mrb[0].mxu0
      %v2467 = vadd.f32 %v1908, %v2466
      %v2468 = vpop.f32.mrb[0].mxu0
      %2469 = vmatprep.mubr.bf16.mxu0 0
      %2470 = vmatmul.mubr.bf16.gmra.mrb[0].mxu0 %v2025
      %v2471 = vpop.f32.mrb[0].mxu0
      %v2472 = vadd.f32 %v1908, %v2471
      %v2473 = vpop.f32.mrb[0].mxu0
      %v2474 = vpop.f32.mrb[0].mxu0
      %v2475 = vadd.f32 %v1908, %v2474
      %v2476 = vpop.f32.mrb[0].mxu0
      %2477 = vmatprep.mubr.bf16.mxu0 0
      %2478 = vmatmul.mubr.bf16.gmra.mrb[0].mxu0 %v2027
      %v2479 = vpop.f32.mrb[0].mxu0
      %v2480 = vadd.f32 %v1908, %v2479
      %v2481 = vpop.f32.mrb[0].mxu0
      %v2482 = vpop.f32.mrb[0].mxu0
      %v2483 = vadd.f32 %v1908, %v2482
      %v2484 = vpop.f32.mrb[0].mxu0
      %2485 = vmatprep.mubr.bf16.mxu0 0
      %2486 = vmatmul.mubr.bf16.gmra.mrb[0].mxu0 %v2029
      %v2487 = vpop.f32.mrb[0].mxu0
      %v2488 = vadd.f32 %v1908, %v2487
      %v2489 = vpop.f32.mrb[0].mxu0
      %v2490 = vpop.f32.mrb[0].mxu0
      %v2491 = vadd.f32 %v1908, %v2490
      %v2492 = vpop.f32.mrb[0].mxu0
      %2493 = vmatprep.mubr.bf16.mxu0 0
      %2494 = vmatmul.mubr.bf16.gmra.mrb[0].mxu0 %v2031
      %v2495 = vpop.f32.mrb[0].mxu0
      %v2496 = vadd.f32 %v1908, %v2495
      %v2497 = vpop.f32.mrb[0].mxu0
      %v2498 = vpop.f32.mrb[0].mxu0
      %v2499 = vadd.f32 %v1908, %v2498
      %v2500 = vpop.f32.mrb[0].mxu0
      %2501 = vmatprep.mubr.bf16.mxu0 0
      %2502 = vmatmul.mubr.bf16.gmra.mrb[0].mxu0 %v2033
      %v2503 = vpop.f32.mrb[0].mxu0
      %v2504 = vadd.f32 %v1908, %v2503
      %v2505 = vpop.f32.mrb[0].mxu0
      %v2506 = vpop.f32.mrb[0].mxu0
      %v2507 = vadd.f32 %v1908, %v2506
      %v2508 = vpop.f32.mrb[0].mxu0
      %2509 = vmatprep.mubr.bf16.mxu0 0
      %2510 = vmatmul.mubr.bf16.gmra.mrb[0].mxu0 %v2035
      %v2511 = vpop.f32.mrb[0].mxu0
      %v2512 = vadd.f32 %v1908, %v2511
      %v2513 = vpop.f32.mrb[0].mxu0
      %v2514 = vpop.f32.mrb[0].mxu0
      %v2515 = vadd.f32 %v1908, %v2514
      %v2516 = vpop.f32.mrb[0].mxu0
      %2517 = vmatprep.mubr.bf16.mxu0 0
      %2518 = vmatmul.mubr.bf16.gmra.mrb[0].mxu0 %v2037
      %v2519 = vpop.f32.mrb[0].mxu0
      %v2520 = vadd.f32 %v1908, %v2519
      %v2521 = vpop.f32.mrb[0].mxu0
      %v2522 = vpop.f32.mrb[0].mxu0
      %v2523 = vadd.f32 %v1908, %v2522
      %v2524 = vpop.f32.mrb[0].mxu0
      %2525 = vmatprep.mubr.bf16.mxu0 0
      %2526 = vmatmul.mubr.bf16.gmra.mrb[0].mxu0 %v2039
      %v2527 = vpop.f32.mrb[0].mxu0
      %v2528 = vadd.f32 %v1908, %v2527
      %v2529 = vpop.f32.mrb[0].mxu0
      %v2530 = vpop.f32.mrb[0].mxu0
      %v2531 = vadd.f32 %v1908, %v2530
      %v2532 = vpop.f32.mrb[0].mxu0
      %2533 = vmatprep.mubr.bf16.mxu0 0
      %2534 = vmatmul.mubr.bf16.gmra.mrb[0].mxu0 %v2041
      %v2535 = vpop.f32.mrb[0].mxu0
      %v2536 = vadd.f32 %v1908, %v2535
      %v2537 = vpop.f32.mrb[0].mxu0
      %v2538 = vpop.f32.mrb[0].mxu0
      %v2539 = vadd.f32 %v1908, %v2538
      %v2540 = vpop.f32.mrb[0].mxu0
      %2541 = vmatprep.mubr.bf16.mxu0 0
      %2542 = vmatmul.mubr.bf16.gmra.mrb[0].mxu0 %v2043
      %v2543 = vpop.f32.mrb[0].mxu0
      %v2544 = vadd.f32 %v1908, %v2543
      %v2545 = vpop.f32.mrb[0].mxu0
      %v2546 = vpop.f32.mrb[0].mxu0
      %v2547 = vadd.f32 %v1908, %v2546
      %v2548 = vpop.f32.mrb[0].mxu0
      %2549 = vmatprep.mubr.bf16.mxu0 0
      %2550 = vmatmul.mubr.bf16.gmra.mrb[0].mxu0 %v2045
      %v2551 = vpop.f32.mrb[0].mxu0
      %v2552 = vadd.f32 %v1908, %v2551
      %v2553 = vpop.f32.mrb[0].mxu0
      %v2554 = vpop.f32.mrb[0].mxu0
      %v2555 = vadd.f32 %v1908, %v2554
      %v2556 = vpop.f32.mrb[0].mxu0
      %2557 = vmatprep.mubr.bf16.mxu0 0
      %2558 = vmatmul.mubr.bf16.gmra.mrb[0].mxu0 %v2047
      %v2559 = vpop.f32.mrb[0].mxu0
      %v2560 = vadd.f32 %v1908, %v2559
      %v2561 = vpop.f32.mrb[0].mxu0
      %v2562 = vpop.f32.mrb[0].mxu0
      %v2563 = vadd.f32 %v1908, %v2562
      %v2564 = vpop.f32.mrb[0].mxu0
      %2565 = vmatprep.mubr.bf16.mxu0 0
      %2566 = vmatmul.mubr.bf16.gmra.mrb[0].mxu0 %v2049
      %v2567 = vpop.f32.mrb[0].mxu0
      %v2568 = vadd.f32 %v1908, %v2567
      %v2569 = vpop.f32.mrb[0].mxu0
      %v2570 = vpop.f32.mrb[0].mxu0
      %v2571 = vadd.f32 %v1908, %v2570
      %v2572 = vpop.f32.mrb[0].mxu0
      %2573 = vmatprep.mubr.bf16.mxu0 0
      %2574 = vmatmul.mubr.bf16.gmra.mrb[0].mxu0 %v2051
      %v2575 = vpop.f32.mrb[0].mxu0
      %v2576 = vadd.f32 %v1908, %v2575
      %v2577 = vpop.f32.mrb[0].mxu0
      %v2578 = vpop.f32.mrb[0].mxu0
      %v2579 = vadd.f32 %v1908, %v2578
      %v2580 = vpop.f32.mrb[0].mxu0
      %2581 = vdwg.mxu0
      %v2582 = vmax.f32 %v2088, 0.0
      %v2583 = vmax.f32 %v2091, 0.0
      %v2584 = vmax.f32 %v2096, 0.0
      %v2585 = vmax.f32 %v2099, 0.0
      %v2586 = vmax.f32 %v2104, 0.0
      %v2587 = vmax.f32 %v2107, 0.0
      %v2588 = vmax.f32 %v2112, 0.0
      %v2589 = vmax.f32 %v2115, 0.0
      %v2590 = vmax.f32 %v2120, 0.0
      %v2591 = vmax.f32 %v2123, 0.0
      %v2592 = vmax.f32 %v2128, 0.0
      %v2593 = vmax.f32 %v2131, 0.0
      %v2594 = vmax.f32 %v2136, 0.0
      %v2595 = vmax.f32 %v2139, 0.0
      %v2596 = vmax.f32 %v2144, 0.0
      %v2597 = vmax.f32 %v2147, 0.0
      %v2598 = vmax.f32 %v2152, 0.0
      %v2599 = vmax.f32 %v2155, 0.0
      %v2600 = vmax.f32 %v2160, 0.0
      %v2601 = vmax.f32 %v2163, 0.0
      %v2602 = vmax.f32 %v2168, 0.0
      %v2603 = vmax.f32 %v2171, 0.0
      %v2604 = vmax.f32 %v2176, 0.0
      %v2605 = vmax.f32 %v2179, 0.0
      %v2606 = vmax.f32 %v2184, 0.0
      %v2607 = vmax.f32 %v2187, 0.0
      %v2608 = vmax.f32 %v2192, 0.0
      %v2609 = vmax.f32 %v2195, 0.0
      %v2610 = vmax.f32 %v2200, 0.0
      %v2611 = vmax.f32 %v2203, 0.0
      %v2612 = vmax.f32 %v2208, 0.0
      %v2613 = vmax.f32 %v2211, 0.0
      %v2614 = vmax.f32 %v2216, 0.0
      %v2615 = vmax.f32 %v2219, 0.0
      %v2616 = vmax.f32 %v2224, 0.0
      %v2617 = vmax.f32 %v2227, 0.0
      %v2618 = vmax.f32 %v2232, 0.0
      %v2619 = vmax.f32 %v2235, 0.0
      %v2620 = vmax.f32 %v2240, 0.0
      %v2621 = vmax.f32 %v2243, 0.0
      %v2622 = vmax.f32 %v2248, 0.0
      %v2623 = vmax.f32 %v2251, 0.0
      %v2624 = vmax.f32 %v2256, 0.0
      %v2625 = vmax.f32 %v2259, 0.0
      %v2626 = vmax.f32 %v2264, 0.0
      %v2627 = vmax.f32 %v2267, 0.0
      %v2628 = vmax.f32 %v2272, 0.0
      %v2629 = vmax.f32 %v2275, 0.0
      %v2630 = vmax.f32 %v2280, 0.0
      %v2631 = vmax.f32 %v2283, 0.0
      %v2632 = vmax.f32 %v2288, 0.0
      %v2633 = vmax.f32 %v2291, 0.0
      %v2634 = vmax.f32 %v2296, 0.0
      %v2635 = vmax.f32 %v2299, 0.0
      %v2636 = vmax.f32 %v2304, 0.0
      %v2637 = vmax.f32 %v2307, 0.0
      %v2638 = vmax.f32 %v2312, 0.0
      %v2639 = vmax.f32 %v2315, 0.0
      %v2640 = vmax.f32 %v2320, 0.0
      %v2641 = vmax.f32 %v2323, 0.0
      %v2642 = vmax.f32 %v2328, 0.0
      %v2643 = vmax.f32 %v2331, 0.0
      %v2644 = vmax.f32 %v2336, 0.0
      %v2645 = vmax.f32 %v2339, 0.0
      %v2646 = vmax.f32 %v2344, 0.0
      %v2647 = vmax.f32 %v2347, 0.0
      %v2648 = vmax.f32 %v2352, 0.0
      %v2649 = vmax.f32 %v2355, 0.0
      %v2650 = vmax.f32 %v2360, 0.0
      %v2651 = vmax.f32 %v2363, 0.0
      %v2652 = vmax.f32 %v2368, 0.0
      %v2653 = vmax.f32 %v2371, 0.0
      %v2654 = vmax.f32 %v2376, 0.0
      %v2655 = vmax.f32 %v2379, 0.0
      %v2656 = vmax.f32 %v2384, 0.0
      %v2657 = vmax.f32 %v2387, 0.0
      %v2658 = vmax.f32 %v2392, 0.0
      %v2659 = vmax.f32 %v2395, 0.0
      %v2660 = vmax.f32 %v2400, 0.0
      %v2661 = vmax.f32 %v2403, 0.0
      %v2662 = vmax.f32 %v2408, 0.0
      %v2663 = vmax.f32 %v2411, 0.0
      %v2664 = vmax.f32 %v2416, 0.0
      %v2665 = vmax.f32 %v2419, 0.0
      %v2666 = vmax.f32 %v2424, 0.0
      %v2667 = vmax.f32 %v2427, 0.0
      %v2668 = vmax.f32 %v2432, 0.0
      %v2669 = vmax.f32 %v2435, 0.0
      %v2670 = vmax.f32 %v2440, 0.0
      %v2671 = vmax.f32 %v2443, 0.0
      %v2672 = vmax.f32 %v2448, 0.0
      %v2673 = vmax.f32 %v2451, 0.0
      %v2674 = vmax.f32 %v2456, 0.0
      %v2675 = vmax.f32 %v2459, 0.0
      %v2676 = vmax.f32 %v2464, 0.0
      %v2677 = vmax.f32 %v2467, 0.0
      %v2678 = vmax.f32 %v2472, 0.0
      %v2679 = vmax.f32 %v2475, 0.0
      %v2680 = vmax.f32 %v2480, 0.0
      %v2681 = vmax.f32 %v2483, 0.0
      %v2682 = vmax.f32 %v2488, 0.0
      %v2683 = vmax.f32 %v2491, 0.0
      %v2684 = vmax.f32 %v2496, 0.0
      %v2685 = vmax.f32 %v2499, 0.0
      %v2686 = vmax.f32 %v2504, 0.0
      %v2687 = vmax.f32 %v2507, 0.0
      %v2688 = vmax.f32 %v2512, 0.0
      %v2689 = vmax.f32 %v2515, 0.0
      %v2690 = vmax.f32 %v2520, 0.0
      %v2691 = vmax.f32 %v2523, 0.0
      %v2692 = vmax.f32 %v2528, 0.0
      %v2693 = vmax.f32 %v2531, 0.0
      %v2694 = vmax.f32 %v2536, 0.0
      %v2695 = vmax.f32 %v2539, 0.0
      %v2696 = vmax.f32 %v2544, 0.0
      %v2697 = vmax.f32 %v2547, 0.0
      %v2698 = vmax.f32 %v2552, 0.0
      %v2699 = vmax.f32 %v2555, 0.0
      %v2700 = vmax.f32 %v2560, 0.0
      %v2701 = vmax.f32 %v2563, 0.0
      %v2702 = vmax.f32 %v2568, 0.0
      %v2703 = vmax.f32 %v2571, 0.0
      %v2704 = vmax.f32 %v2576, 0.0
      %v2705 = vmax.f32 %v2579, 0.0
      %v2706 = vpack.c.bf16 %v2583, %v2582
      %v2707 = vpack.c.bf16 %v2585, %v2584
      %v2708 = vpack.c.bf16 %v2587, %v2586
      %v2709 = vpack.c.bf16 %v2589, %v2588
      %v2710 = vpack.c.bf16 %v2591, %v2590
      %v2711 = vpack.c.bf16 %v2593, %v2592
      %v2712 = vpack.c.bf16 %v2595, %v2594
      %v2713 = vpack.c.bf16 %v2597, %v2596
      %v2714 = vpack.c.bf16 %v2599, %v2598
      %v2715 = vpack.c.bf16 %v2601, %v2600
      %v2716 = vpack.c.bf16 %v2603, %v2602
      %v2717 = vpack.c.bf16 %v2605, %v2604
      %v2718 = vpack.c.bf16 %v2607, %v2606
      %v2719 = vpack.c.bf16 %v2609, %v2608
      %v2720 = vpack.c.bf16 %v2611, %v2610
      %v2721 = vpack.c.bf16 %v2613, %v2612
      %v2722 = vpack.c.bf16 %v2615, %v2614
      %v2723 = vpack.c.bf16 %v2617, %v2616
      %v2724 = vpack.c.bf16 %v2619, %v2618
      %v2725 = vpack.c.bf16 %v2621, %v2620
      %v2726 = vpack.c.bf16 %v2623, %v2622
      %v2727 = vpack.c.bf16 %v2625, %v2624
      %v2728 = vpack.c.bf16 %v2627, %v2626
      %v2729 = vpack.c.bf16 %v2629, %v2628
      %v2730 = vpack.c.bf16 %v2631, %v2630
      %v2731 = vpack.c.bf16 %v2633, %v2632
      %v2732 = vpack.c.bf16 %v2635, %v2634
      %v2733 = vpack.c.bf16 %v2637, %v2636
      %v2734 = vpack.c.bf16 %v2639, %v2638
      %v2735 = vpack.c.bf16 %v2641, %v2640
      %v2736 = vpack.c.bf16 %v2643, %v2642
      %v2737 = vpack.c.bf16 %v2645, %v2644
      %v2738 = vpack.c.bf16 %v2647, %v2646
      %v2739 = vpack.c.bf16 %v2649, %v2648
      %v2740 = vpack.c.bf16 %v2651, %v2650
      %v2741 = vpack.c.bf16 %v2653, %v2652
      %v2742 = vpack.c.bf16 %v2655, %v2654
      %v2743 = vpack.c.bf16 %v2657, %v2656
      %v2744 = vpack.c.bf16 %v2659, %v2658
      %v2745 = vpack.c.bf16 %v2661, %v2660
      %v2746 = vpack.c.bf16 %v2663, %v2662
      %v2747 = vpack.c.bf16 %v2665, %v2664
      %v2748 = vpack.c.bf16 %v2667, %v2666
      %v2749 = vpack.c.bf16 %v2669, %v2668
      %v2750 = vpack.c.bf16 %v2671, %v2670
      %v2751 = vpack.c.bf16 %v2673, %v2672
      %v2752 = vpack.c.bf16 %v2675, %v2674
      %v2753 = vpack.c.bf16 %v2677, %v2676
      %v2754 = vpack.c.bf16 %v2679, %v2678
      %v2755 = vpack.c.bf16 %v2681, %v2680
      %v2756 = vpack.c.bf16 %v2683, %v2682
      %v2757 = vpack.c.bf16 %v2685, %v2684
      %v2758 = vpack.c.bf16 %v2687, %v2686
      %v2759 = vpack.c.bf16 %v2689, %v2688
      %v2760 = vpack.c.bf16 %v2691, %v2690
      %v2761 = vpack.c.bf16 %v2693, %v2692
      %v2762 = vpack.c.bf16 %v2695, %v2694
      %v2763 = vpack.c.bf16 %v2697, %v2696
      %v2764 = vpack.c.bf16 %v2699, %v2698
      %v2765 = vpack.c.bf16 %v2701, %v2700
      %v2766 = vpack.c.bf16 %v2703, %v2702
      %v2767 = vpack.c.bf16 %v2705, %v2704
      %v2830 = vunpack.c.l.b16 %v2706
      %v2831 = vunpack.c.h.b16 %v2706
      %v2832 = vunpack.c.l.b16 %v2707
      %v2833 = vunpack.c.h.b16 %v2707
      %v2834 = vunpack.c.l.b16 %v2708
      %v2835 = vunpack.c.h.b16 %v2708
      %v2836 = vunpack.c.l.b16 %v2709
      %v2837 = vunpack.c.h.b16 %v2709
      %v2838 = vunpack.c.l.b16 %v2710
      %v2839 = vunpack.c.h.b16 %v2710
      %v2840 = vunpack.c.l.b16 %v2711
      %v2841 = vunpack.c.h.b16 %v2711
      %v2842 = vunpack.c.l.b16 %v2712
      %v2843 = vunpack.c.h.b16 %v2712
      %v2844 = vunpack.c.l.b16 %v2713
      %v2845 = vunpack.c.h.b16 %v2713
      %v2846 = vunpack.c.l.b16 %v2714
      %v2847 = vunpack.c.h.b16 %v2714
      %v2848 = vunpack.c.l.b16 %v2715
      %v2849 = vunpack.c.h.b16 %v2715
      %v2850 = vunpack.c.l.b16 %v2716
      %v2851 = vunpack.c.h.b16 %v2716
      %v2852 = vunpack.c.l.b16 %v2717
      %v2853 = vunpack.c.h.b16 %v2717
      %v2854 = vunpack.c.l.b16 %v2718
      %v2855 = vunpack.c.h.b16 %v2718
      %v2856 = vunpack.c.l.b16 %v2719
      %v2857 = vunpack.c.h.b16 %v2719
      %v2858 = vunpack.c.l.b16 %v2720
      %v2859 = vunpack.c.h.b16 %v2720
      %v2860 = vunpack.c.l.b16 %v2721
      %v2861 = vunpack.c.h.b16 %v2721
      %v2862 = vunpack.c.l.b16 %v2722
      %v2863 = vunpack.c.h.b16 %v2722
      %v2864 = vunpack.c.l.b16 %v2723
      %v2865 = vunpack.c.h.b16 %v2723
      %v2866 = vunpack.c.l.b16 %v2724
      %v2867 = vunpack.c.h.b16 %v2724
      %v2868 = vunpack.c.l.b16 %v2725
      %v2869 = vunpack.c.h.b16 %v2725
      %v2870 = vunpack.c.l.b16 %v2726
      %v2871 = vunpack.c.h.b16 %v2726
      %v2872 = vunpack.c.l.b16 %v2727
      %v2873 = vunpack.c.h.b16 %v2727
      %v2874 = vunpack.c.l.b16 %v2728
      %v2875 = vunpack.c.h.b16 %v2728
      %v2876 = vunpack.c.l.b16 %v2729
      %v2877 = vunpack.c.h.b16 %v2729
      %v2878 = vunpack.c.l.b16 %v2730
      %v2879 = vunpack.c.h.b16 %v2730
      %v2880 = vunpack.c.l.b16 %v2731
      %v2881 = vunpack.c.h.b16 %v2731
      %v2882 = vunpack.c.l.b16 %v2732
      %v2883 = vunpack.c.h.b16 %v2732
      %v2884 = vunpack.c.l.b16 %v2733
      %v2885 = vunpack.c.h.b16 %v2733
      %v2886 = vunpack.c.l.b16 %v2734
      %v2887 = vunpack.c.h.b16 %v2734
      %v2888 = vunpack.c.l.b16 %v2735
      %v2889 = vunpack.c.h.b16 %v2735
      %v2890 = vunpack.c.l.b16 %v2736
      %v2891 = vunpack.c.h.b16 %v2736
      %v2892 = vunpack.c.l.b16 %v2737
      %v2893 = vunpack.c.h.b16 %v2737
      %v2894 = vunpack.c.l.b16 %v2738
      %v2895 = vunpack.c.h.b16 %v2738
      %v2896 = vunpack.c.l.b16 %v2739
      %v2897 = vunpack.c.h.b16 %v2739
      %v2898 = vunpack.c.l.b16 %v2740
      %v2899 = vunpack.c.h.b16 %v2740
      %v2900 = vunpack.c.l.b16 %v2741
      %v2901 = vunpack.c.h.b16 %v2741
      %v2902 = vunpack.c.l.b16 %v2742
      %v2903 = vunpack.c.h.b16 %v2742
      %v2904 = vunpack.c.l.b16 %v2743
      %v2905 = vunpack.c.h.b16 %v2743
      %v2906 = vunpack.c.l.b16 %v2744
      %v2907 = vunpack.c.h.b16 %v2744
      %v2908 = vunpack.c.l.b16 %v2745
      %v2909 = vunpack.c.h.b16 %v2745
      %v2910 = vunpack.c.l.b16 %v2746
      %v2911 = vunpack.c.h.b16 %v2746
      %v2912 = vunpack.c.l.b16 %v2747
      %v2913 = vunpack.c.h.b16 %v2747
      %v2914 = vunpack.c.l.b16 %v2748
      %v2915 = vunpack.c.h.b16 %v2748
      %v2916 = vunpack.c.l.b16 %v2749
      %v2917 = vunpack.c.h.b16 %v2749
      %v2918 = vunpack.c.l.b16 %v2750
      %v2919 = vunpack.c.h.b16 %v2750
      %v2920 = vunpack.c.l.b16 %v2751
      %v2921 = vunpack.c.h.b16 %v2751
      %v2922 = vunpack.c.l.b16 %v2752
      %v2923 = vunpack.c.h.b16 %v2752
      %v2924 = vunpack.c.l.b16 %v2753
      %v2925 = vunpack.c.h.b16 %v2753
      %v2926 = vunpack.c.l.b16 %v2754
      %v2927 = vunpack.c.h.b16 %v2754
      %v2928 = vunpack.c.l.b16 %v2755
      %v2929 = vunpack.c.h.b16 %v2755
      %v2930 = vunpack.c.l.b16 %v2756
      %v2931 = vunpack.c.h.b16 %v2756
      %v2932 = vunpack.c.l.b16 %v2757
      %v2933 = vunpack.c.h.b16 %v2757
      %v2934 = vunpack.c.l.b16 %v2758
      %v2935 = vunpack.c.h.b16 %v2758
      %v2936 = vunpack.c.l.b16 %v2759
      %v2937 = vunpack.c.h.b16 %v2759
      %v2938 = vunpack.c.l.b16 %v2760
      %v2939 = vunpack.c.h.b16 %v2760
      %v2940 = vunpack.c.l.b16 %v2761
      %v2941 = vunpack.c.h.b16 %v2761
      %v2942 = vunpack.c.l.b16 %v2762
      %v2943 = vunpack.c.h.b16 %v2762
      %v2944 = vunpack.c.l.b16 %v2763
      %v2945 = vunpack.c.h.b16 %v2763
      %v2946 = vunpack.c.l.b16 %v2764
      %v2947 = vunpack.c.h.b16 %v2764
      %v2948 = vunpack.c.l.b16 %v2765
      %v2949 = vunpack.c.h.b16 %v2765
      %v2950 = vunpack.c.l.b16 %v2766
      %v2951 = vunpack.c.h.b16 %v2766
      %v2952 = vunpack.c.l.b16 %v2767
      %v2953 = vunpack.c.h.b16 %v2767
      %v2954 = vpack.c.b16 %v2830, %v2830
      %v2955 = vpack.c.b16 %v2831, %v2831
      %v2956 = vpack.c.b16 %v2832, %v2832
      %v2957 = vpack.c.b16 %v2833, %v2833
      %v2958 = vpack.c.b16 %v2834, %v2834
      %v2959 = vpack.c.b16 %v2835, %v2835
      %v2960 = vpack.c.b16 %v2836, %v2836
      %v2961 = vpack.c.b16 %v2837, %v2837
      %v2962 = vpack.c.b16 %v2838, %v2838
      %v2963 = vpack.c.b16 %v2839, %v2839
      %v2964 = vpack.c.b16 %v2840, %v2840
      %v2965 = vpack.c.b16 %v2841, %v2841
      %v2966 = vpack.c.b16 %v2842, %v2842
      %v2967 = vpack.c.b16 %v2843, %v2843
      %v2968 = vpack.c.b16 %v2844, %v2844
      %v2969 = vpack.c.b16 %v2845, %v2845
      %v2970 = vpack.c.b16 %v2846, %v2846
      %v2971 = vpack.c.b16 %v2847, %v2847
      %v2972 = vpack.c.b16 %v2848, %v2848
      %v2973 = vpack.c.b16 %v2849, %v2849
      %v2974 = vpack.c.b16 %v2850, %v2850
      %v2975 = vpack.c.b16 %v2851, %v2851
      %v2976 = vpack.c.b16 %v2852, %v2852
      %v2977 = vpack.c.b16 %v2853, %v2853
      %v2978 = vpack.c.b16 %v2854, %v2854
      %v2979 = vpack.c.b16 %v2855, %v2855
      %v2980 = vpack.c.b16 %v2856, %v2856
      %v2981 = vpack.c.b16 %v2857, %v2857
      %v2982 = vpack.c.b16 %v2858, %v2858
      %v2983 = vpack.c.b16 %v2859, %v2859
      %v2984 = vpack.c.b16 %v2860, %v2860
      %v2985 = vpack.c.b16 %v2861, %v2861
      %v2986 = vpack.c.b16 %v2862, %v2862
      %v2987 = vpack.c.b16 %v2863, %v2863
      %v2988 = vpack.c.b16 %v2864, %v2864
      %v2989 = vpack.c.b16 %v2865, %v2865
      %v2990 = vpack.c.b16 %v2866, %v2866
      %v2991 = vpack.c.b16 %v2867, %v2867
      %v2992 = vpack.c.b16 %v2868, %v2868
      %v2993 = vpack.c.b16 %v2869, %v2869
      %v2994 = vpack.c.b16 %v2870, %v2870
      %v2995 = vpack.c.b16 %v2871, %v2871
      %v2996 = vpack.c.b16 %v2872, %v2872
      %v2997 = vpack.c.b16 %v2873, %v2873
      %v2998 = vpack.c.b16 %v2874, %v2874
      %v2999 = vpack.c.b16 %v2875, %v2875
      %v3000 = vpack.c.b16 %v2876, %v2876
      %v3001 = vpack.c.b16 %v2877, %v2877
      %v3002 = vpack.c.b16 %v2878, %v2878
      %v3003 = vpack.c.b16 %v2879, %v2879
      %v3004 = vpack.c.b16 %v2880, %v2880
      %v3005 = vpack.c.b16 %v2881, %v2881
      %v3006 = vpack.c.b16 %v2882, %v2882
      %v3007 = vpack.c.b16 %v2883, %v2883
      %v3008 = vpack.c.b16 %v2884, %v2884
      %v3009 = vpack.c.b16 %v2885, %v2885
      %v3010 = vpack.c.b16 %v2886, %v2886
      %v3011 = vpack.c.b16 %v2887, %v2887
      %v3012 = vpack.c.b16 %v2888, %v2888
      %v3013 = vpack.c.b16 %v2889, %v2889
      %v3014 = vpack.c.b16 %v2890, %v2890
      %v3015 = vpack.c.b16 %v2891, %v2891
      %v3016 = vpack.c.b16 %v2892, %v2892
      %v3017 = vpack.c.b16 %v2893, %v2893
      %v3018 = vpack.c.b16 %v2894, %v2894
      %v3019 = vpack.c.b16 %v2895, %v2895
      %v3020 = vpack.c.b16 %v2896, %v2896
      %v3021 = vpack.c.b16 %v2897, %v2897
      %v3022 = vpack.c.b16 %v2898, %v2898
      %v3023 = vpack.c.b16 %v2899, %v2899
      %v3024 = vpack.c.b16 %v2900, %v2900
      %v3025 = vpack.c.b16 %v2901, %v2901
      %v3026 = vpack.c.b16 %v2902, %v2902
      %v3027 = vpack.c.b16 %v2903, %v2903
      %v3028 = vpack.c.b16 %v2904, %v2904
      %v3029 = vpack.c.b16 %v2905, %v2905
      %v3030 = vpack.c.b16 %v2906, %v2906
      %v3031 = vpack.c.b16 %v2907, %v2907
      %v3032 = vpack.c.b16 %v2908, %v2908
      %v3033 = vpack.c.b16 %v2909, %v2909
      %v3034 = vpack.c.b16 %v2910, %v2910
      %v3035 = vpack.c.b16 %v2911, %v2911
      %v3036 = vpack.c.b16 %v2912, %v2912
      %v3037 = vpack.c.b16 %v2913, %v2913
      %v3038 = vpack.c.b16 %v2914, %v2914
      %v3039 = vpack.c.b16 %v2915, %v2915
      %v3040 = vpack.c.b16 %v2916, %v2916
      %v3041 = vpack.c.b16 %v2917, %v2917
      %v3042 = vpack.c.b16 %v2918, %v2918
      %v3043 = vpack.c.b16 %v2919, %v2919
      %v3044 = vpack.c.b16 %v2920, %v2920
      %v3045 = vpack.c.b16 %v2921, %v2921
      %v3046 = vpack.c.b16 %v2922, %v2922
      %v3047 = vpack.c.b16 %v2923, %v2923
      %v3048 = vpack.c.b16 %v2924, %v2924
      %v3049 = vpack.c.b16 %v2925, %v2925
      %v3050 = vpack.c.b16 %v2926, %v2926
      %v3051 = vpack.c.b16 %v2927, %v2927
      %v3052 = vpack.c.b16 %v2928, %v2928
      %v3053 = vpack.c.b16 %v2929, %v2929
      %v3054 = vpack.c.b16 %v2930, %v2930
      %v3055 = vpack.c.b16 %v2931, %v2931
      %v3056 = vpack.c.b16 %v2932, %v2932
      %v3057 = vpack.c.b16 %v2933, %v2933
      %v3058 = vpack.c.b16 %v2934, %v2934
      %v3059 = vpack.c.b16 %v2935, %v2935
      %v3060 = vpack.c.b16 %v2936, %v2936
      %v3061 = vpack.c.b16 %v2937, %v2937
      %v3062 = vpack.c.b16 %v2938, %v2938
      %v3063 = vpack.c.b16 %v2939, %v2939
      %v3064 = vpack.c.b16 %v2940, %v2940
      %v3065 = vpack.c.b16 %v2941, %v2941
      %v3066 = vpack.c.b16 %v2942, %v2942
      %v3067 = vpack.c.b16 %v2943, %v2943
      %v3068 = vpack.c.b16 %v2944, %v2944
      %v3069 = vpack.c.b16 %v2945, %v2945
      %v3070 = vpack.c.b16 %v2946, %v2946
      %v3071 = vpack.c.b16 %v2947, %v2947
      %v3072 = vpack.c.b16 %v2948, %v2948
      %v3073 = vpack.c.b16 %v2949, %v2949
      %v3074 = vpack.c.b16 %v2950, %v2950
      %v3075 = vpack.c.b16 %v2951, %v2951
      %v3076 = vpack.c.b16 %v2952, %v2952
      %v3077 = vpack.c.b16 %v2953, %v2953
      %3202 = vst [vmem:[%s170] sm:$0xf] %v2954
      %3203 = vst [vmem:[%s170 + $0x4] sm:$0xf] %v2955
      %3204 = vst [vmem:[%s170 + $0x8] sm:$0xf] %v2956
      %3205 = vst [vmem:[%s170 + $0xc] sm:$0xf] %v2957
      %3206 = vst [vmem:[%s170 + $0x10] sm:$0xf] %v2958
      %3207 = vst [vmem:[%s170 + $0x14] sm:$0xf] %v2959
      %3208 = vst [vmem:[%s170 + $0x18] sm:$0xf] %v2960
      %3209 = vst [vmem:[%s170 + $0x1c] sm:$0xf] %v2961
      %3210 = vst [vmem:[%s170 + $0x20] sm:$0xf] %v2962
      %3211 = vst [vmem:[%s170 + $0x24] sm:$0xf] %v2963
      %3212 = vst [vmem:[%s170 + $0x28] sm:$0xf] %v2964
      %3213 = vst [vmem:[%s170 + $0x2c] sm:$0xf] %v2965
      %3214 = vst [vmem:[%s170 + $0x30] sm:$0xf] %v2966
      %3215 = vst [vmem:[%s170 + $0x34] sm:$0xf] %v2967
      %3216 = vst [vmem:[%s170 + $0x38] sm:$0xf] %v2968
      %3217 = vst [vmem:[%s170 + $0x3c] sm:$0xf] %v2969
      %3218 = vst [vmem:[%s170 + $0x40] sm:$0xf] %v2970
      %3219 = vst [vmem:[%s170 + $0x44] sm:$0xf] %v2971
      %3220 = vst [vmem:[%s170 + $0x48] sm:$0xf] %v2972
      %3221 = vst [vmem:[%s170 + $0x4c] sm:$0xf] %v2973
      %3222 = vst [vmem:[%s170 + $0x50] sm:$0xf] %v2974
      %3223 = vst [vmem:[%s170 + $0x54] sm:$0xf] %v2975
      %3224 = vst [vmem:[%s170 + $0x58] sm:$0xf] %v2976
      %3225 = vst [vmem:[%s170 + $0x5c] sm:$0xf] %v2977
      %3226 = vst [vmem:[%s170 + $0x60] sm:$0xf] %v2978
      %3227 = vst [vmem:[%s170 + $0x64] sm:$0xf] %v2979
      %3228 = vst [vmem:[%s170 + $0x68] sm:$0xf] %v2980
      %3229 = vst [vmem:[%s170 + $0x6c] sm:$0xf] %v2981
      %3230 = vst [vmem:[%s170 + $0x70] sm:$0xf] %v2982
      %3231 = vst [vmem:[%s170 + $0x74] sm:$0xf] %v2983
      %3232 = vst [vmem:[%s170 + $0x78] sm:$0xf] %v2984
      %3233 = vst [vmem:[%s170 + $0x7c] sm:$0xf] %v2985
      %3234 = vst [vmem:[%s170 + $0x80] sm:$0xf] %v2986
      %3235 = vst [vmem:[%s170 + $0x84] sm:$0xf] %v2987
      %3236 = vst [vmem:[%s170 + $0x88] sm:$0xf] %v2988
      %3237 = vst [vmem:[%s170 + $0x8c] sm:$0xf] %v2989
      %3238 = vst [vmem:[%s170 + $0x90] sm:$0xf] %v2990
      %3239 = vst [vmem:[%s170 + $0x94] sm:$0xf] %v2991
      %3240 = vst [vmem:[%s170 + $0x98] sm:$0xf] %v2992
      %3241 = vst [vmem:[%s170 + $0x9c] sm:$0xf] %v2993
      %3242 = vst [vmem:[%s170 + $0xa0] sm:$0xf] %v2994
      %3243 = vst [vmem:[%s170 + $0xa4] sm:$0xf] %v2995
      %3244 = vst [vmem:[%s170 + $0xa8] sm:$0xf] %v2996
      %3245 = vst [vmem:[%s170 + $0xac] sm:$0xf] %v2997
      %3246 = vst [vmem:[%s170 + $0xb0] sm:$0xf] %v2998
      %3247 = vst [vmem:[%s170 + $0xb4] sm:$0xf] %v2999
      %3248 = vst [vmem:[%s170 + $0xb8] sm:$0xf] %v3000
      %3249 = vst [vmem:[%s170 + $0xbc] sm:$0xf] %v3001
      %3250 = vst [vmem:[%s170 + $0xc0] sm:$0xf] %v3002
      %3251 = vst [vmem:[%s170 + $0xc4] sm:$0xf] %v3003
      %3252 = vst [vmem:[%s170 + $0xc8] sm:$0xf] %v3004
      %3253 = vst [vmem:[%s170 + $0xcc] sm:$0xf] %v3005
      %3254 = vst [vmem:[%s170 + $0xd0] sm:$0xf] %v3006
      %3255 = vst [vmem:[%s170 + $0xd4] sm:$0xf] %v3007
      %3256 = vst [vmem:[%s170 + $0xd8] sm:$0xf] %v3008
      %3257 = vst [vmem:[%s170 + $0xdc] sm:$0xf] %v3009
      %3258 = vst [vmem:[%s170 + $0xe0] sm:$0xf] %v3010
      %3259 = vst [vmem:[%s170 + $0xe4] sm:$0xf] %v3011
      %3260 = vst [vmem:[%s170 + $0xe8] sm:$0xf] %v3012
      %3261 = vst [vmem:[%s170 + $0xec] sm:$0xf] %v3013
      %3262 = vst [vmem:[%s170 + $0xf0] sm:$0xf] %v3014
      %3263 = vst [vmem:[%s170 + $0xf4] sm:$0xf] %v3015
      %3264 = vst [vmem:[%s170 + $0xf8] sm:$0xf] %v3016
      %3265 = vst [vmem:[%s170 + $0xfc] sm:$0xf] %v3017
      %3266 = vst [vmem:[%s170 + $0x100] sm:$0xf] %v3018
      %3267 = vst [vmem:[%s170 + $0x104] sm:$0xf] %v3019
      %3268 = vst [vmem:[%s170 + $0x108] sm:$0xf] %v3020
      %3269 = vst [vmem:[%s170 + $0x10c] sm:$0xf] %v3021
      %3270 = vst [vmem:[%s170 + $0x110] sm:$0xf] %v3022
      %3271 = vst [vmem:[%s170 + $0x114] sm:$0xf] %v3023
      %3272 = vst [vmem:[%s170 + $0x118] sm:$0xf] %v3024
      %3273 = vst [vmem:[%s170 + $0x11c] sm:$0xf] %v3025
      %3274 = vst [vmem:[%s170 + $0x120] sm:$0xf] %v3026
      %3275 = vst [vmem:[%s170 + $0x124] sm:$0xf] %v3027
      %3276 = vst [vmem:[%s170 + $0x128] sm:$0xf] %v3028
      %3277 = vst [vmem:[%s170 + $0x12c] sm:$0xf] %v3029
      %3278 = vst [vmem:[%s170 + $0x130] sm:$0xf] %v3030
      %3279 = vst [vmem:[%s170 + $0x134] sm:$0xf] %v3031
      %3280 = vst [vmem:[%s170 + $0x138] sm:$0xf] %v3032
      %3281 = vst [vmem:[%s170 + $0x13c] sm:$0xf] %v3033
      %3282 = vst [vmem:[%s170 + $0x140] sm:$0xf] %v3034
      %3283 = vst [vmem:[%s170 + $0x144] sm:$0xf] %v3035
      %3284 = vst [vmem:[%s170 + $0x148] sm:$0xf] %v3036
      %3285 = vst [vmem:[%s170 + $0x14c] sm:$0xf] %v3037
      %3286 = vst [vmem:[%s170 + $0x150] sm:$0xf] %v3038
      %3287 = vst [vmem:[%s170 + $0x154] sm:$0xf] %v3039
      %3288 = vst [vmem:[%s170 + $0x158] sm:$0xf] %v3040
      %3289 = vst [vmem:[%s170 + $0x15c] sm:$0xf] %v3041
      %3290 = vst [vmem:[%s170 + $0x160] sm:$0xf] %v3042
      %3291 = vst [vmem:[%s170 + $0x164] sm:$0xf] %v3043
      %3292 = vst [vmem:[%s170 + $0x168] sm:$0xf] %v3044
      %3293 = vst [vmem:[%s170 + $0x16c] sm:$0xf] %v3045
      %3294 = vst [vmem:[%s170 + $0x170] sm:$0xf] %v3046
      %3295 = vst [vmem:[%s170 + $0x174] sm:$0xf] %v3047
      %3296 = vst [vmem:[%s170 + $0x178] sm:$0xf] %v3048
      %3297 = vst [vmem:[%s170 + $0x17c] sm:$0xf] %v3049
      %3298 = vst [vmem:[%s170 + $0x180] sm:$0xf] %v3050
      %3299 = vst [vmem:[%s170 + $0x184] sm:$0xf] %v3051
      %3300 = vst [vmem:[%s170 + $0x188] sm:$0xf] %v3052
      %3301 = vst [vmem:[%s170 + $0x18c] sm:$0xf] %v3053
      %3302 = vst [vmem:[%s170 + $0x190] sm:$0xf] %v3054
      %3303 = vst [vmem:[%s170 + $0x194] sm:$0xf] %v3055
      %3304 = vst [vmem:[%s170 + $0x198] sm:$0xf] %v3056
      %3305 = vst [vmem:[%s170 + $0x19c] sm:$0xf] %v3057
      %3306 = vst [vmem:[%s170 + $0x1a0] sm:$0xf] %v3058
      %3307 = vst [vmem:[%s170 + $0x1a4] sm:$0xf] %v3059
      %3308 = vst [vmem:[%s170 + $0x1a8] sm:$0xf] %v3060
      %3309 = vst [vmem:[%s170 + $0x1ac] sm:$0xf] %v3061
      %3310 = vst [vmem:[%s170 + $0x1b0] sm:$0xf] %v3062
      %3311 = vst [vmem:[%s170 + $0x1b4] sm:$0xf] %v3063
      %3312 = vst [vmem:[%s170 + $0x1b8] sm:$0xf] %v3064
      %3313 = vst [vmem:[%s170 + $0x1bc] sm:$0xf] %v3065
      %3314 = vst [vmem:[%s170 + $0x1c0] sm:$0xf] %v3066
      %3315 = vst [vmem:[%s170 + $0x1c4] sm:$0xf] %v3067
      %3316 = vst [vmem:[%s170 + $0x1c8] sm:$0xf] %v3068
      %3317 = vst [vmem:[%s170 + $0x1cc] sm:$0xf] %v3069
      %3318 = vst [vmem:[%s170 + $0x1d0] sm:$0xf] %v3070
      %3319 = vst [vmem:[%s170 + $0x1d4] sm:$0xf] %v3071
      %3320 = vst [vmem:[%s170 + $0x1d8] sm:$0xf] %v3072
      %3321 = vst [vmem:[%s170 + $0x1dc] sm:$0xf] %v3073
      %3322 = vst [vmem:[%s170 + $0x1e0] sm:$0xf] %v3074
      %3323 = vst [vmem:[%s170 + $0x1e4] sm:$0xf] %v3075
      %3324 = vst [vmem:[%s170 + $0x1e8] sm:$0xf] %v3076
      %3325 = vst [vmem:[%s170 + $0x1ec] sm:$0xf] %v3077
      %p3326 = scmp.lt.s32.totalorder %s14, 1
      %s3327 = scalar_select %p3326, %s14, 1
      %s3328 = smul.addr %s3327, 124
      %s3329 = smul.addr %s3328, 4
      %s3330 = scalar_lea.vmem %s3, %s3329
      // Predicated region
      $region33: #{conv_encoder_forward.5} parent=31 // pred_check
        %p3331 = pneg %p100
      $region34: #{conv_encoder_forward.5} parent=31 // pred_check_branch
        %3333 = sbr.rel (%p3331) target = $region36
      $region35: #{conv_encoder_forward.5} parent=31 // pred_region
        _
      $region36: #{conv_encoder_forward.5} parent=31 // pred_fallthru
        _
    $region32: #{conv_encoder_forward.5} parent=5 // pred_fallthru
      _
    %p3334 = scmp.le.s32.totalorder 2, %s9
    // Predicated region
    $region37: #{conv_encoder_forward.5} parent=5 // pred_check
      %p3335 = pneg %p3334
    $region38: #{conv_encoder_forward.5} parent=5 // pred_check_branch
      %3337 = sbr.rel (%p3335) target = $region40
    $region39: #{conv_encoder_forward.5} parent=5 // pred_region
      %s3338 = ssub.s32 %s9, 2
      // Predicated region
      $region41: #{conv_encoder_forward.5} parent=39 // pred_check
        %p3339 = pneg %p106
      $region42: #{conv_encoder_forward.5} parent=39 // pred_check_branch
        %3341 = sbr.rel (%p3339) target = $region44
      $region43: #{conv_encoder_forward.5} parent=39 // pred_region
        %p3342 = scmp.lt.s32.totalorder %s15, 1
        %s3343 = scalar_select %p3342, %s15, 1
        %s3344 = smul.addr %s3343, 124
        %s3345 = smul.addr %s3344, 4
        %s3346 = scalar_lea.vmem %s3, %s3345
      $region44: #{conv_encoder_forward.5} parent=39 // pred_fallthru
        _
    $region40: #{conv_encoder_forward.5} parent=5 // pred_fallthru
      _
  $region6: #{conv_encoder_forward.5} parent=0 // loop_footer
    %s13 = sadd.s32 1, %s9
  $region7: #{conv_encoder_forward.5} parent=0 // loop_footer_branch
    %8 = sbr.rel target = $region3
  $region8: #{conv_encoder_forward.5} parent=0 // loop_exit
    _

// kernel: conv_encoder_forward.6
$region0: #{conv_encoder_forward.6}
  #allocation0 [shape = 'u32[]', space=smem, size = 0x4, offset = 0x4, fixed_abs, tag = 'smem constant byte address 0x4 - core index']
  #allocation1 [shape = 'u32[144,128]{1,0:T(1,128)}', space=vmem, size = 0x12000, scoped, tag = 'internal scratch']
  %s0 = inlined_call_operand.vmem [shape: bf16[2,226,128], index: 0, kind: input, shape index: {}]
  %s1 = inlined_call_operand.vmem [shape: bf16[512,128], index: 1, kind: input, shape index: {}]
  %s2 = inlined_call_operand.vmem [shape: f32[1,128], index: 2, kind: input, shape index: {}]
  %s3 = inlined_call_operand.vmem [shape: bf16[2,210,128], index: 3, kind: output, shape index: {}]
  %s4 = sld [smem:[#allocation0]]
  $region45: #{conv_encoder_forward.6} parent=0
    _
  %s6 = ssub.s32 1, %s4
  %s7 = scalar_select 0, %s6, %s4
  loop: start=0, step=1, limit=4
  $region2: #{conv_encoder_forward.6} parent=0 // loop_pre_header
    _
  $region3: #{conv_encoder_forward.6} parent=0 // loop_header
    %s9 = sphi 0, %s13
    %p10 = scmp.ge.s32.totalorder %s9, 4
    %s19 = sphi 0, %s21
    %s22 = sphi 0, %s19
    %s23 = sphi 0, %s22
    %s39 = sphi 0, %s23
    %s43 = sphi 0, %s43
    %s45 = sphi 0, %s43
    %s46 = sphi 0, %s45
    %s60 = sphi 0, %s46
    %s64 = sphi 0, %s64
    %s66 = sphi 0, %s64
    %s67 = sphi 0, %s66
    %s81 = sphi 0, %s67
    %s87 = sphi 0, %s89
    %s90 = sphi 0, %s87
    %s91 = sphi 0, %s90
    %s107 = sphi 0, %s91
  $region4: #{conv_encoder_forward.6} parent=0 // loop_header_branch
    %12 = sbr.rel (%p10) target = $region8
  $region5: #{conv_encoder_forward.6} parent=0 // loop_body
    %s14 = ssub.s32 %s9, 1
    %s15 = ssub.s32 %s9, 2
    %s16 = sadd.s32 %s9, 1
    %s17 = ssub.s32 %s9, %s16
    %p18 = scmp.eq.s32.totalorder %s17, 0
    %s20 = sadd.s32 %s19, 1
    %s21 = scalar_select %p18, %s19, %s20
    %p24 = pneg %p18
    %p25 = scmp.eq.s32.totalorder %s9, 1
    %p26 = por %p24, %p25
    %p27 = scmp.ne.s32.totalorder %s19, %s22
    %p28 = scmp.eq.s32.totalorder %s9, 0
    %p29 = por %p27, %p28
    %p30 = scmp.ne.s32.totalorder %s19, %s22
    %p31 = scmp.eq.s32.totalorder %s14, 1
    %p32 = por %p30, %p31
    %p33 = scmp.ne.s32.totalorder %s22, %s23
    %p34 = scmp.eq.s32.totalorder %s14, 0
    %p35 = por %p33, %p34
    %p36 = scmp.ne.s32.totalorder %s22, %s23
    %p37 = scmp.eq.s32.totalorder %s15, 1
    %p38 = por %p36, %p37
    %p40 = scmp.ne.s32.totalorder %s23, %s39
    %p41 = scmp.eq.s32.totalorder %s15, 0
    %p42 = por %p40, %p41
    %s44 = sadd.s32 %s43, 1
    %p47 = scmp.eq.s32.totalorder %s9, 1
    %p48 = scmp.ne.s32.totalorder %s43, %s45
    %p49 = scmp.eq.s32.totalorder %s9, 0
    %p50 = por %p48, %p49
    %p51 = scmp.ne.s32.totalorder %s43, %s45
    %p52 = scmp.eq.s32.totalorder %s14, 1
    %p53 = por %p51, %p52
    %p54 = scmp.ne.s32.totalorder %s45, %s46
    %p55 = scmp.eq.s32.totalorder %s14, 0
    %p56 = por %p54, %p55
    %p57 = scmp.ne.s32.totalorder %s45, %s46
    %p58 = scmp.eq.s32.totalorder %s15, 1
    %p59 = por %p57, %p58
    %p61 = scmp.ne.s32.totalorder %s46, %s60
    %p62 = scmp.eq.s32.totalorder %s15, 0
    %p63 = por %p61, %p62
    %s65 = sadd.s32 %s64, 1
    %p68 = scmp.eq.s32.totalorder %s9, 1
    %p69 = scmp.ne.s32.totalorder %s64, %s66
    %p70 = scmp.eq.s32.totalorder %s9, 0
    %p71 = por %p69, %p70
    %p72 = scmp.ne.s32.totalorder %s64, %s66
    %p73 = scmp.eq.s32.totalorder %s14, 1
    %p74 = por %p72, %p73
    %p75 = scmp.ne.s32.totalorder %s66, %s67
    %p76 = scmp.eq.s32.totalorder %s14, 0
    %p77 = por %p75, %p76
    %p78 = scmp.ne.s32.totalorder %s66, %s67
    %p79 = scmp.eq.s32.totalorder %s15, 1
    %p80 = por %p78, %p79
    %p82 = scmp.ne.s32.totalorder %s67, %s81
    %p83 = scmp.eq.s32.totalorder %s15, 0
    %p84 = por %p82, %p83
    %s85 = ssub.s32 %s9, %s16
    %p86 = scmp.eq.s32.totalorder %s85, 0
    %s88 = sadd.s32 %s87, 1
    %s89 = scalar_select %p86, %s87, %s88
    %p92 = pneg %p86
    %p93 = scmp.eq.s32.totalorder %s9, 1
    %p94 = por %p92, %p93
    %p95 = scmp.ne.s32.totalorder %s87, %s90
    %p96 = scmp.eq.s32.totalorder %s9, 0
    %p97 = por %p95, %p96
    %p98 = scmp.ne.s32.totalorder %s87, %s90
    %p99 = scmp.eq.s32.totalorder %s14, 1
    %p100 = por %p98, %p99
    %p101 = scmp.ne.s32.totalorder %s90, %s91
    %p102 = scmp.eq.s32.totalorder %s14, 0
    %p103 = por %p101, %p102
    %p104 = scmp.ne.s32.totalorder %s90, %s91
    %p105 = scmp.eq.s32.totalorder %s15, 1
    %p106 = por %p104, %p105
    %p108 = scmp.ne.s32.totalorder %s91, %s107
    %p109 = scmp.eq.s32.totalorder %s15, 0
    %p110 = por %p108, %p109
    %p111 = scmp.le.s32.totalorder 1, %s9
    %p112 = scmp.lt.s32.totalorder %s9, 3
    %p113 = pnand %p111, %p112
    %p114 = pneg %p113
    // Predicated region
    $region9: #{conv_encoder_forward.6} parent=5 // pred_check
      _
    $region10: #{conv_encoder_forward.6} parent=5 // pred_check_branch
      %116 = sbr.rel (%p113) target = $region12
    $region11: #{conv_encoder_forward.6} parent=5 // pred_region
      %s117 = ssub.s32 %s9, 1
      // Predicated region
      $region13: #{conv_encoder_forward.6} parent=11 // pred_check
        %p118 = pneg %p56
      $region14: #{conv_encoder_forward.6} parent=11 // pred_check_branch
        %120 = sbr.rel (%p118) target = $region16
      $region15: #{conv_encoder_forward.6} parent=11 // pred_region
        _
      $region16: #{conv_encoder_forward.6} parent=11 // pred_fallthru
        _
      // Predicated region
      $region17: #{conv_encoder_forward.6} parent=11 // pred_check
        %p121 = pneg %p77
      $region18: #{conv_encoder_forward.6} parent=11 // pred_check_branch
        %123 = sbr.rel (%p121) target = $region20
      $region19: #{conv_encoder_forward.6} parent=11 // pred_region
        _
      $region20: #{conv_encoder_forward.6} parent=11 // pred_fallthru
        _
    $region12: #{conv_encoder_forward.6} parent=5 // pred_fallthru
      _
    %p124 = scmp.lt.s32.totalorder %s9, 2
    // Predicated region
    $region21: #{conv_encoder_forward.6} parent=5 // pred_check
      %p125 = pneg %p124
    $region22: #{conv_encoder_forward.6} parent=5 // pred_check_branch
      %127 = sbr.rel (%p125) target = $region24
    $region23: #{conv_encoder_forward.6} parent=5 // pred_region
      // Predicated region
      $region25: #{conv_encoder_forward.6} parent=23 // pred_check
        %p128 = pneg %p29
      $region26: #{conv_encoder_forward.6} parent=23 // pred_check_branch
        %130 = sbr.rel (%p128) target = $region28
      $region27: #{conv_encoder_forward.6} parent=23 // pred_region
        %p131 = scmp.lt.s32.totalorder %s9, 1
        %s132 = scalar_select %p131, %s9, 1
        %s133 = smul.addr %s132, 29
        %s134 = smul.addr %s133, 4
        %s135 = scalar_lea.vmem %s0, %s134
      $region28: #{conv_encoder_forward.6} parent=23 // pred_fallthru
        _
    $region24: #{conv_encoder_forward.6} parent=5 // pred_fallthru
      _
    %p136 = scmp.le.s32.totalorder 1, %s9
    %p137 = scmp.lt.s32.totalorder %s9, 3
    %p138 = pnand %p136, %p137
    %p139 = pneg %p138
    // Predicated region
    $region29: #{conv_encoder_forward.6} parent=5 // pred_check
      _
    $region30: #{conv_encoder_forward.6} parent=5 // pred_check_branch
      %141 = sbr.rel (%p138) target = $region32
    $region31: #{conv_encoder_forward.6} parent=5 // pred_region
      %s142 = ssub.s32 %s9, 1
      %p143 = scmp.lt.s32.totalorder %s14, 1
      %s144 = scalar_select %p143, %s14, 1
      %s145 = smul.addr %s144, 29
      %s146 = smul.addr %s145, 4
      %s147 = scalar_lea.vmem %s0, %s146
      %p148 = pneg %p35
      %p149 = pneg %p32
      %p150 = pneg %p56
      %p151 = pneg %p53
      %p152 = pneg %p77
      %p153 = pneg %p74
      %p154 = pneg %p103
      %p155 = pneg %p100
      %p156 = scmp.lt.s32.totalorder %s14, 1
      %s157 = scalar_select %p156, %s14, 1
      %s158 = smul.addr %s157, 27
      %s159 = smul.addr %s158, 4
      %s160 = scalar_lea.vmem %s3, %s159
      %p161 = scmp.lt.s32.totalorder %s14, 1
      %s162 = scalar_select %p161, %s14, 1
      %s163 = smul.addr %s162, 29
      %s164 = smul.addr %s163, 4
      %s165 = scalar_lea.vmem %s0, %s164
      %p166 = scmp.lt.s32.totalorder %s14, 1
      %s167 = scalar_select %p166, %s14, 1
      %s168 = smul.addr %s167, 27
      %s169 = smul.addr %s168, 4
      %s170 = scalar_lea.vmem %s3, %s169
      %v172 = vld [vmem:[%s165] sm:$0xf]
      %v173 = vld [vmem:[%s165 + $0x4] sm:$0xf]
      %v174 = vld [vmem:[%s165 + $0x8] sm:$0xf]
      %v175 = vld [vmem:[%s165 + $0xc] sm:$0xf]
      %v176 = vld [vmem:[%s165 + $0x10] sm:$0xf]
      %v177 = vld [vmem:[%s165 + $0x14] sm:$0xf]
      %v178 = vld [vmem:[%s165 + $0x18] sm:$0xf]
      %v179 = vld [vmem:[%s165 + $0x1c] sm:$0xf]
      %v180 = vld [vmem:[%s165 + $0x20] sm:$0xf]
      %v181 = vld [vmem:[%s165 + $0x24] sm:$0xf]
      %v182 = vld [vmem:[%s165 + $0x28] sm:$0xf]
      %v183 = vld [vmem:[%s165 + $0x2c] sm:$0xf]
      %v184 = vld [vmem:[%s165 + $0x30] sm:$0xf]
      %v185 = vld [vmem:[%s165 + $0x34] sm:$0xf]
      %v186 = vld [vmem:[%s165 + $0x38] sm:$0xf]
      %v187 = vld [vmem:[%s165 + $0x3c] sm:$0xf]
      %v188 = vld [vmem:[%s165 + $0x40] sm:$0xf]
      %v189 = vld [vmem:[%s165 + $0x44] sm:$0xf]
      %v190 = vld [vmem:[%s165 + $0x48] sm:$0xf]
      %v191 = vld [vmem:[%s165 + $0x4c] sm:$0xf]
      %v192 = vld [vmem:[%s165 + $0x50] sm:$0xf]
      %v193 = vld [vmem:[%s165 + $0x54] sm:$0xf]
      %v194 = vld [vmem:[%s165 + $0x58] sm:$0xf]
      %v195 = vld [vmem:[%s165 + $0x5c] sm:$0xf]
      %v196 = vld [vmem:[%s165 + $0x60] sm:$0xf]
      %v197 = vld [vmem:[%s165 + $0x64] sm:$0xf]
      %v198 = vld [vmem:[%s165 + $0x68] sm:$0x1]
      %v199 = vld [vmem:[%s165 + $0x68] sm:$0x3]
      %v200 = vld [vmem:[%s165 + $0x4] sm:$0x8]
      %v201 = vld [vmem:[%s165 + $0x68] sm:$0xf]
      %v202 = vld [vmem:[%s165 + $0x6c] sm:$0xf]
      %v203 = vld [vmem:[%s165 + $0x70] sm:$0x1]
      %v231 = vunpack.c.l.b16 %v172
      %v232 = vunpack.c.l.b16 %v173
      %v233 = vunpack.c.l.b16 %v174
      %v234 = vunpack.c.l.b16 %v175
      %v235 = vunpack.c.l.b16 %v176
      %v236 = vunpack.c.l.b16 %v177
      %v237 = vunpack.c.l.b16 %v178
      %v238 = vunpack.c.l.b16 %v179
      %v239 = vunpack.c.l.b16 %v180
      %v240 = vunpack.c.l.b16 %v181
      %v241 = vunpack.c.l.b16 %v182
      %v242 = vunpack.c.l.b16 %v183
      %v243 = vunpack.c.l.b16 %v184
      %v244 = vunpack.c.l.b16 %v185
      %v245 = vunpack.c.l.b16 %v186
      %v246 = vunpack.c.l.b16 %v187
      %v247 = vunpack.c.l.b16 %v188
      %v248 = vunpack.c.l.b16 %v189
      %v249 = vunpack.c.l.b16 %v190
      %v250 = vunpack.c.l.b16 %v191
      %v251 = vunpack.c.l.b16 %v192
      %v252 = vunpack.c.l.b16 %v193
      %v253 = vunpack.c.l.b16 %v194
      %v254 = vunpack.c.l.b16 %v195
      %v255 = vunpack.c.l.b16 %v196
      %v256 = vunpack.c.l.b16 %v197
      %v257 = vunpack.c.l.b16 %v198
      %v258 = vpack.c.b16 %v232, %v231
      %v259 = vpack.c.b16 %v234, %v233
      %v260 = vpack.c.b16 %v236, %v235
      %v261 = vpack.c.b16 %v238, %v237
      %v262 = vpack.c.b16 %v240, %v239
      %v263 = vpack.c.b16 %v242, %v241
      %v264 = vpack.c.b16 %v244, %v243
      %v265 = vpack.c.b16 %v246, %v245
      %v266 = vpack.c.b16 %v248, %v247
      %v267 = vpack.c.b16 %v250, %v249
      %v268 = vpack.c.b16 %v252, %v251
      %v269 = vpack.c.b16 %v254, %v253
      %v270 = vpack.c.b16 %v256, %v255
      %v271 = vpack.c.b16 %v257, %v257
      %v287 = vunpack.c.l.b16 %v199
      %v288 = vpack.c.b16 %v287, %v287
      %vm289 = vsmask.f32 7424
      %v291 = vshrl.u32 %v258, 16
      %v293 = vshll.u32 %v258, 16
      %v295 = vrot.slane %v293, 1
      %v296 = vor.u32 %v291, %v295
      %v298 = vshll.u32 %v259, 16
      %v300 = vrot.slane %v298, 1
      %v301 = vsel %vm289, %v296, %v300
      %v302 = vshrl.u32 %v259, 16
      %v304 = vor.u32 %v302, %v300
      %v306 = vshll.u32 %v260, 16
      %v308 = vrot.slane %v306, 1
      %v309 = vsel %vm289, %v304, %v308
      %v310 = vshrl.u32 %v260, 16
      %v312 = vor.u32 %v310, %v308
      %v314 = vshll.u32 %v261, 16
      %v316 = vrot.slane %v314, 1
      %v317 = vsel %vm289, %v312, %v316
      %v318 = vshrl.u32 %v261, 16
      %v320 = vor.u32 %v318, %v316
      %v322 = vshll.u32 %v262, 16
      %v324 = vrot.slane %v322, 1
      %v325 = vsel %vm289, %v320, %v324
      %v326 = vshrl.u32 %v262, 16
      %v328 = vor.u32 %v326, %v324
      %v330 = vshll.u32 %v263, 16
      %v332 = vrot.slane %v330, 1
      %v333 = vsel %vm289, %v328, %v332
      %v334 = vshrl.u32 %v263, 16
      %v336 = vor.u32 %v334, %v332
      %v338 = vshll.u32 %v264, 16
      %v340 = vrot.slane %v338, 1
      %v341 = vsel %vm289, %v336, %v340
      %v342 = vshrl.u32 %v264, 16
      %v344 = vor.u32 %v342, %v340
      %v346 = vshll.u32 %v265, 16
      %v348 = vrot.slane %v346, 1
      %v349 = vsel %vm289, %v344, %v348
      %v350 = vshrl.u32 %v265, 16
      %v352 = vor.u32 %v350, %v348
      %v354 = vshll.u32 %v266, 16
      %v356 = vrot.slane %v354, 1
      %v357 = vsel %vm289, %v352, %v356
      %v358 = vshrl.u32 %v266, 16
      %v360 = vor.u32 %v358, %v356
      %v362 = vshll.u32 %v267, 16
      %v364 = vrot.slane %v362, 1
      %v365 = vsel %vm289, %v360, %v364
      %v366 = vshrl.u32 %v267, 16
      %v368 = vor.u32 %v366, %v364
      %v370 = vshll.u32 %v268, 16
      %v372 = vrot.slane %v370, 1
      %v373 = vsel %vm289, %v368, %v372
      %v374 = vshrl.u32 %v268, 16
      %v376 = vor.u32 %v374, %v372
      %v378 = vshll.u32 %v269, 16
      %v380 = vrot.slane %v378, 1
      %v381 = vsel %vm289, %v376, %v380
      %v382 = vshrl.u32 %v269, 16
      %v384 = vor.u32 %v382, %v380
      %v386 = vshll.u32 %v270, 16
      %v388 = vrot.slane %v386, 1
      %v389 = vsel %vm289, %v384, %v388
      %v390 = vshrl.u32 %v270, 16
      %v392 = vor.u32 %v390, %v388
      %v394 = vshll.u32 %v288, 16
      %v396 = vrot.slane %v394, 1
      %v397 = vsel %vm289, %v392, %v396
      %v398 = vshrl.u32 %v288, 16
      %v400 = vor.u32 %v398, %v396
      %v419 = vunpack.c.l.b16 %v200
      %v420 = vunpack.c.l.b16 %v201
      %v421 = vunpack.c.l.b16 %v202
      %v422 = vunpack.c.l.b16 %v203
      %v423 = vpack.c.b16 %v233, %v419
      %v424 = vpack.c.b16 %v235, %v234
      %v425 = vpack.c.b16 %v237, %v236
      %v426 = vpack.c.b16 %v239, %v238
      %v427 = vpack.c.b16 %v241, %v240
      %v428 = vpack.c.b16 %v243, %v242
      %v429 = vpack.c.b16 %v245, %v244
      %v430 = vpack.c.b16 %v247, %v246
      %v431 = vpack.c.b16 %v249, %v248
      %v432 = vpack.c.b16 %v251, %v250
      %v433 = vpack.c.b16 %v253, %v252
      %v434 = vpack.c.b16 %v255, %v254
      %v435 = vpack.c.b16 %v420, %v256
      %v436 = vpack.c.b16 %v422, %v421
      %vm437 = vsmask.f32 4352
      %v439 = vshrl.u32 %v423, 16
      %v441 = vrot.slane %v439, 3
      %v442 = vshll.u32 %v423, 16
      %v444 = vrot.slane %v442, 4
      %v445 = vor.u32 %v441, %v444
      %v447 = vshrl.u32 %v424, 16
      %v449 = vrot.slane %v447, 3
      %v450 = vshll.u32 %v424, 16
      %v452 = vrot.slane %v450, 4
      %v453 = vor.u32 %v449, %v452
      %v454 = vsel %vm437, %v445, %v453
      %v456 = vshrl.u32 %v425, 16
      %v458 = vrot.slane %v456, 3
      %v459 = vshll.u32 %v425, 16
      %v461 = vrot.slane %v459, 4
      %v462 = vor.u32 %v458, %v461
      %v463 = vsel %vm437, %v453, %v462
      %v465 = vshrl.u32 %v426, 16
      %v467 = vrot.slane %v465, 3
      %v468 = vshll.u32 %v426, 16
      %v470 = vrot.slane %v468, 4
      %v471 = vor.u32 %v467, %v470
      %v472 = vsel %vm437, %v462, %v471
      %v474 = vshrl.u32 %v427, 16
      %v476 = vrot.slane %v474, 3
      %v477 = vshll.u32 %v427, 16
      %v479 = vrot.slane %v477, 4
      %v480 = vor.u32 %v476, %v479
      %v481 = vsel %vm437, %v471, %v480
      %v483 = vshrl.u32 %v428, 16
      %v485 = vrot.slane %v483, 3
      %v486 = vshll.u32 %v428, 16
      %v488 = vrot.slane %v486, 4
      %v489 = vor.u32 %v485, %v488
      %v490 = vsel %vm437, %v480, %v489
      %v492 = vshrl.u32 %v429, 16
      %v494 = vrot.slane %v492, 3
      %v495 = vshll.u32 %v429, 16
      %v497 = vrot.slane %v495, 4
      %v498 = vor.u32 %v494, %v497
      %v499 = vsel %vm437, %v489, %v498
      %v501 = vshrl.u32 %v430, 16
      %v503 = vrot.slane %v501, 3
      %v504 = vshll.u32 %v430, 16
      %v506 = vrot.slane %v504, 4
      %v507 = vor.u32 %v503, %v506
      %v508 = vsel %vm437, %v498, %v507
      %v510 = vshrl.u32 %v431, 16
      %v512 = vrot.slane %v510, 3
      %v513 = vshll.u32 %v431, 16
      %v515 = vrot.slane %v513, 4
      %v516 = vor.u32 %v512, %v515
      %v517 = vsel %vm437, %v507, %v516
      %v519 = vshrl.u32 %v432, 16
      %v521 = vrot.slane %v519, 3
      %v522 = vshll.u32 %v432, 16
      %v524 = vrot.slane %v522, 4
      %v525 = vor.u32 %v521, %v524
      %v526 = vsel %vm437, %v516, %v525
      %v528 = vshrl.u32 %v433, 16
      %v530 = vrot.slane %v528, 3
      %v531 = vshll.u32 %v433, 16
      %v533 = vrot.slane %v531, 4
      %v534 = vor.u32 %v530, %v533
      %v535 = vsel %vm437, %v525, %v534
      %v537 = vshrl.u32 %v434, 16
      %v539 = vrot.slane %v537, 3
      %v540 = vshll.u32 %v434, 16
      %v542 = vrot.slane %v540, 4
      %v543 = vor.u32 %v539, %v542
      %v544 = vsel %vm437, %v534, %v543
      %v546 = vshrl.u32 %v435, 16
      %v548 = vrot.slane %v546, 3
      %v549 = vshll.u32 %v435, 16
      %v551 = vrot.slane %v549, 4
      %v552 = vor.u32 %v548, %v551
      %v553 = vsel %vm437, %v543, %v552
      %v555 = vshrl.u32 %v436, 16
      %v557 = vrot.slane %v555, 3
      %v558 = vshll.u32 %v436, 16
      %v560 = vrot.slane %v558, 4
      %v561 = vor.u32 %v557, %v560
      %v562 = vsel %vm437, %v552, %v561
      %v577 = vpack.c.b16 %v421, %v420
      %v578 = vpack.c.b16 %v422, %v422
      %v581 = vld [vmem:[%s1] sm:$0xf]
      %v582 = vld [vmem:[%s1 + $0x4] sm:$0xf]
      %v583 = vld [vmem:[%s1 + $0x8] sm:$0xf]
      %v584 = vld [vmem:[%s1 + $0xc] sm:$0xf]
      %v585 = vld [vmem:[%s1 + $0x10] sm:$0xf]
      %v586 = vld [vmem:[%s1 + $0x14] sm:$0xf]
      %v587 = vld [vmem:[%s1 + $0x18] sm:$0xf]
      %v588 = vld [vmem:[%s1 + $0x1c] sm:$0xf]
      %v589 = vld [vmem:[%s1 + $0x20] sm:$0xf]
      %v590 = vld [vmem:[%s1 + $0x24] sm:$0xf]
      %v591 = vld [vmem:[%s1 + $0x28] sm:$0xf]
      %v592 = vld [vmem:[%s1 + $0x2c] sm:$0xf]
      %v593 = vld [vmem:[%s1 + $0x30] sm:$0xf]
      %v594 = vld [vmem:[%s1 + $0x34] sm:$0xf]
      %v595 = vld [vmem:[%s1 + $0x38] sm:$0xf]
      %v596 = vld [vmem:[%s1 + $0x3c] sm:$0xf]
      %v597 = vld [vmem:[%s1 + $0x40] sm:$0xf]
      %v598 = vld [vmem:[%s1 + $0x44] sm:$0xf]
      %v599 = vld [vmem:[%s1 + $0x48] sm:$0xf]
      %v600 = vld [vmem:[%s1 + $0x4c] sm:$0xf]
      %v601 = vld [vmem:[%s1 + $0x50] sm:$0xf]
      %v602 = vld [vmem:[%s1 + $0x54] sm:$0xf]
      %v603 = vld [vmem:[%s1 + $0x58] sm:$0xf]
      %v604 = vld [vmem:[%s1 + $0x5c] sm:$0xf]
      %v605 = vld [vmem:[%s1 + $0x60] sm:$0xf]
      %v606 = vld [vmem:[%s1 + $0x64] sm:$0xf]
      %v607 = vld [vmem:[%s1 + $0x68] sm:$0xf]
      %v608 = vld [vmem:[%s1 + $0x6c] sm:$0xf]
      %v609 = vld [vmem:[%s1 + $0x70] sm:$0xf]
      %v610 = vld [vmem:[%s1 + $0x74] sm:$0xf]
      %v611 = vld [vmem:[%s1 + $0x78] sm:$0xf]
      %v612 = vld [vmem:[%s1 + $0x7c] sm:$0xf]
      %v613 = vld [vmem:[%s1 + $0x80] sm:$0xf]
      %v614 = vld [vmem:[%s1 + $0x84] sm:$0xf]
      %v615 = vld [vmem:[%s1 + $0x88] sm:$0xf]
      %v616 = vld [vmem:[%s1 + $0x8c] sm:$0xf]
      %v617 = vld [vmem:[%s1 + $0x90] sm:$0xf]
      %v618 = vld [vmem:[%s1 + $0x94] sm:$0xf]
      %v619 = vld [vmem:[%s1 + $0x98] sm:$0xf]
      %v620 = vld [vmem:[%s1 + $0x9c] sm:$0xf]
      %v621 = vld [vmem:[%s1 + $0xa0] sm:$0xf]
      %v622 = vld [vmem:[%s1 + $0xa4] sm:$0xf]
      %v623 = vld [vmem:[%s1 + $0xa8] sm:$0xf]
      %v624 = vld [vmem:[%s1 + $0xac] sm:$0xf]
      %v625 = vld [vmem:[%s1 + $0xb0] sm:$0xf]
      %v626 = vld [vmem:[%s1 + $0xb4] sm:$0xf]
      %v627 = vld [vmem:[%s1 + $0xb8] sm:$0xf]
      %v628 = vld [vmem:[%s1 + $0xbc] sm:$0xf]
      %v629 = vld [vmem:[%s1 + $0xc0] sm:$0xf]
      %v630 = vld [vmem:[%s1 + $0xc4] sm:$0xf]
      %v631 = vld [vmem:[%s1 + $0xc8] sm:$0xf]
      %v632 = vld [vmem:[%s1 + $0xcc] sm:$0xf]
      %v633 = vld [vmem:[%s1 + $0xd0] sm:$0xf]
      %v634 = vld [vmem:[%s1 + $0xd4] sm:$0xf]
      %v635 = vld [vmem:[%s1 + $0xd8] sm:$0xf]
      %v636 = vld [vmem:[%s1 + $0xdc] sm:$0xf]
      %v637 = vld [vmem:[%s1 + $0xe0] sm:$0xf]
      %v638 = vld [vmem:[%s1 + $0xe4] sm:$0xf]
      %v639 = vld [vmem:[%s1 + $0xe8] sm:$0xf]
      %v640 = vld [vmem:[%s1 + $0xec] sm:$0xf]
      %v641 = vld [vmem:[%s1 + $0xf0] sm:$0xf]
      %v642 = vld [vmem:[%s1 + $0xf4] sm:$0xf]
      %v643 = vld [vmem:[%s1 + $0xf8] sm:$0xf]
      %v644 = vld [vmem:[%s1 + $0xfc] sm:$0xf]
      %v645 = vld [vmem:[%s2] sm:$0x1]
      %v647 = vlaneseq
      %v648 = vshrl.u32 %v647, 7
      %v649 = vsub.s32 0, %v648
      %v650 = vrot.slane %v645, %v649
      %v716 = vunpack.c.l.b16 %v581
      %v717 = vunpack.c.l.b16 %v582
      %v718 = vunpack.c.l.b16 %v583
      %v719 = vunpack.c.l.b16 %v584
      %v720 = vunpack.c.l.b16 %v585
      %v721 = vunpack.c.l.b16 %v586
      %v722 = vunpack.c.l.b16 %v587
      %v723 = vunpack.c.l.b16 %v588
      %v724 = vunpack.c.l.b16 %v589
      %v725 = vunpack.c.l.b16 %v590
      %v726 = vunpack.c.l.b16 %v591
      %v727 = vunpack.c.l.b16 %v592
      %v728 = vunpack.c.l.b16 %v593
      %v729 = vunpack.c.l.b16 %v594
      %v730 = vunpack.c.l.b16 %v595
      %v731 = vunpack.c.l.b16 %v596
      %v732 = vunpack.c.l.b16 %v597
      %v733 = vunpack.c.l.b16 %v598
      %v734 = vunpack.c.l.b16 %v599
      %v735 = vunpack.c.l.b16 %v600
      %v736 = vunpack.c.l.b16 %v601
      %v737 = vunpack.c.l.b16 %v602
      %v738 = vunpack.c.l.b16 %v603
      %v739 = vunpack.c.l.b16 %v604
      %v740 = vunpack.c.l.b16 %v605
      %v741 = vunpack.c.l.b16 %v606
      %v742 = vunpack.c.l.b16 %v607
      %v743 = vunpack.c.l.b16 %v608
      %v744 = vunpack.c.l.b16 %v609
      %v745 = vunpack.c.l.b16 %v610
      %v746 = vunpack.c.l.b16 %v611
      %v747 = vunpack.c.l.b16 %v612
      %v748 = vunpack.c.l.b16 %v613
      %v749 = vunpack.c.l.b16 %v614
      %v750 = vunpack.c.l.b16 %v615
      %v751 = vunpack.c.l.b16 %v616
      %v752 = vunpack.c.l.b16 %v617
      %v753 = vunpack.c.l.b16 %v618
      %v754 = vunpack.c.l.b16 %v619
      %v755 = vunpack.c.l.b16 %v620
      %v756 = vunpack.c.l.b16 %v621
      %v757 = vunpack.c.l.b16 %v622
      %v758 = vunpack.c.l.b16 %v623
      %v759 = vunpack.c.l.b16 %v624
      %v760 = vunpack.c.l.b16 %v625
      %v761 = vunpack.c.l.b16 %v626
      %v762 = vunpack.c.l.b16 %v627
      %v763 = vunpack.c.l.b16 %v628
      %v764 = vunpack.c.l.b16 %v629
      %v765 = vunpack.c.l.b16 %v630
      %v766 = vunpack.c.l.b16 %v631
      %v767 = vunpack.c.l.b16 %v632
      %v768 = vunpack.c.l.b16 %v633
      %v769 = vunpack.c.l.b16 %v634
      %v770 = vunpack.c.l.b16 %v635
      %v771 = vunpack.c.l.b16 %v636
      %v772 = vunpack.c.l.b16 %v637
      %v773 = vunpack.c.l.b16 %v638
      %v774 = vunpack.c.l.b16 %v639
      %v775 = vunpack.c.l.b16 %v640
      %v776 = vunpack.c.l.b16 %v641
      %v777 = vunpack.c.l.b16 %v642
      %v778 = vunpack.c.l.b16 %v643
      %v779 = vunpack.c.l.b16 %v644
      %v780 = vpack.c.b16 %v717, %v716
      %v781 = vpack.c.b16 %v719, %v718
      %v782 = vpack.c.b16 %v721, %v720
      %v783 = vpack.c.b16 %v723, %v722
      %v784 = vpack.c.b16 %v725, %v724
      %v785 = vpack.c.b16 %v727, %v726
      %v786 = vpack.c.b16 %v729, %v728
      %v787 = vpack.c.b16 %v731, %v730
      %v788 = vpack.c.b16 %v733, %v732
      %v789 = vpack.c.b16 %v735, %v734
      %v790 = vpack.c.b16 %v737, %v736
      %v791 = vpack.c.b16 %v739, %v738
      %v792 = vpack.c.b16 %v741, %v740
      %v793 = vpack.c.b16 %v743, %v742
      %v794 = vpack.c.b16 %v745, %v744
      %v795 = vpack.c.b16 %v747, %v746
      %v796 = vpack.c.b16 %v749, %v748
      %v797 = vpack.c.b16 %v751, %v750
      %v798 = vpack.c.b16 %v753, %v752
      %v799 = vpack.c.b16 %v755, %v754
      %v800 = vpack.c.b16 %v757, %v756
      %v801 = vpack.c.b16 %v759, %v758
      %v802 = vpack.c.b16 %v761, %v760
      %v803 = vpack.c.b16 %v763, %v762
      %v804 = vpack.c.b16 %v765, %v764
      %v805 = vpack.c.b16 %v767, %v766
      %v806 = vpack.c.b16 %v769, %v768
      %v807 = vpack.c.b16 %v771, %v770
      %v808 = vpack.c.b16 %v773, %v772
      %v809 = vpack.c.b16 %v775, %v774
      %v810 = vpack.c.b16 %v777, %v776
      %v811 = vpack.c.b16 %v779, %v778
      %844 = vmatprep.subr.bf16.mxu0 0
      %845 = vmatpush1.bf16.msra.mxu0 %v780
      %846 = vmatprep.subr.bf16.mxu0 0
      %847 = vmatpush1.bf16.msra.mxu0 %v781
      %848 = vmatprep.subr.bf16.mxu0 0
      %849 = vmatpush1.bf16.msra.mxu0 %v782
      %850 = vmatprep.subr.bf16.mxu0 0
      %851 = vmatpush1.bf16.msra.mxu0 %v783
      %852 = vmatprep.subr.bf16.mxu0 0
      %853 = vmatpush1.bf16.msra.mxu0 %v784
      %854 = vmatprep.subr.bf16.mxu0 0
      %855 = vmatpush1.bf16.msra.mxu0 %v785
      %856 = vmatprep.subr.bf16.mxu0 0
      %857 = vmatpush1.bf16.msra.mxu0 %v786
      %858 = vmatprep.subr.bf16.mxu0 0
      %859 = vmatpush1.bf16.msra.mxu0 %v787
      %860 = vmatprep.subr.bf16.mxu0 0
      %861 = vmatpush1.bf16.msra.mxu0 %v788
      %862 = vmatprep.subr.bf16.mxu0 0
      %863 = vmatpush1.bf16.msra.mxu0 %v789
      %864 = vmatprep.subr.bf16.mxu0 0
      %865 = vmatpush1.bf16.msra.mxu0 %v790
      %866 = vmatprep.subr.bf16.mxu0 0
      %867 = vmatpush1.bf16.msra.mxu0 %v791
      %868 = vmatprep.subr.bf16.mxu0 0
      %869 = vmatpush1.bf16.msra.mxu0 %v792
      %870 = vmatprep.subr.bf16.mxu0 0
      %871 = vmatpush1.bf16.msra.mxu0 %v793
      %872 = vmatprep.subr.bf16.mxu0 0
      %873 = vmatpush1.bf16.msra.mxu0 %v794
      %874 = vmatprep.subr.bf16.mxu0 0
      %875 = vmatpush1.bf16.msra.mxu0 %v795
      %876 = vmatprep.mubr.bf16.mxu0 %v301
      %877 = vmatmul.mubr.bf16.gmra.mrb[0].mxu0 %v258
      %v878 = vpop.f32.mrb[0].mxu0
      %v879 = vadd.f32 %v650, %v878
      %v880 = vpop.f32.mrb[0].mxu0
      %v881 = vpop.f32.mrb[0].mxu0
      %v882 = vadd.f32 %v650, %v881
      %v883 = vpop.f32.mrb[0].mxu0
      %884 = vmatprep.mubr.bf16.mxu0 %v309
      %885 = vmatmul.mubr.bf16.gmra.mrb[0].mxu0 %v259
      %v886 = vpop.f32.mrb[0].mxu0
      %v887 = vadd.f32 %v650, %v886
      %v888 = vpop.f32.mrb[0].mxu0
      %v889 = vpop.f32.mrb[0].mxu0
      %v890 = vadd.f32 %v650, %v889
      %v891 = vpop.f32.mrb[0].mxu0
      %892 = vmatprep.mubr.bf16.mxu0 %v317
      %893 = vmatmul.mubr.bf16.gmra.mrb[0].mxu0 %v260
      %v894 = vpop.f32.mrb[0].mxu0
      %v895 = vadd.f32 %v650, %v894
      %v896 = vpop.f32.mrb[0].mxu0
      %v897 = vpop.f32.mrb[0].mxu0
      %v898 = vadd.f32 %v650, %v897
      %v899 = vpop.f32.mrb[0].mxu0
      %900 = vmatprep.mubr.bf16.mxu0 %v325
      %901 = vmatmul.mubr.bf16.gmra.mrb[0].mxu0 %v261
      %v902 = vpop.f32.mrb[0].mxu0
      %v903 = vadd.f32 %v650, %v902
      %v904 = vpop.f32.mrb[0].mxu0
      %v905 = vpop.f32.mrb[0].mxu0
      %v906 = vadd.f32 %v650, %v905
      %v907 = vpop.f32.mrb[0].mxu0
      %908 = vmatprep.mubr.bf16.mxu0 %v333
      %909 = vmatmul.mubr.bf16.gmra.mrb[0].mxu0 %v262
      %v910 = vpop.f32.mrb[0].mxu0
      %v911 = vadd.f32 %v650, %v910
      %v912 = vpop.f32.mrb[0].mxu0
      %v913 = vpop.f32.mrb[0].mxu0
      %v914 = vadd.f32 %v650, %v913
      %v915 = vpop.f32.mrb[0].mxu0
      %916 = vmatprep.mubr.bf16.mxu0 %v341
      %917 = vmatmul.mubr.bf16.gmra.mrb[0].mxu0 %v263
      %v918 = vpop.f32.mrb[0].mxu0
      %v919 = vadd.f32 %v650, %v918
      %v920 = vpop.f32.mrb[0].mxu0
      %v921 = vpop.f32.mrb[0].mxu0
      %v922 = vadd.f32 %v650, %v921
      %v923 = vpop.f32.mrb[0].mxu0
      %924 = vmatprep.mubr.bf16.mxu0 %v349
      %925 = vmatmul.mubr.bf16.gmra.mrb[0].mxu0 %v264
      %v926 = vpop.f32.mrb[0].mxu0
      %v927 = vadd.f32 %v650, %v926
      %v928 = vpop.f32.mrb[0].mxu0
      %v929 = vpop.f32.mrb[0].mxu0
      %v930 = vadd.f32 %v650, %v929
      %v931 = vpop.f32.mrb[0].mxu0
      %932 = vmatprep.mubr.bf16.mxu0 %v357
      %933 = vmatmul.mubr.bf16.gmra.mrb[0].mxu0 %v265
      %v934 = vpop.f32.mrb[0].mxu0
      %v935 = vadd.f32 %v650, %v934
      %v936 = vpop.f32.mrb[0].mxu0
      %v937 = vpop.f32.mrb[0].mxu0
      %v938 = vadd.f32 %v650, %v937
      %v939 = vpop.f32.mrb[0].mxu0
      %940 = vmatprep.mubr.bf16.mxu0 %v365
      %941 = vmatmul.mubr.bf16.gmra.mrb[0].mxu0 %v266
      %v942 = vpop.f32.mrb[0].mxu0
      %v943 = vadd.f32 %v650, %v942
      %v944 = vpop.f32.mrb[0].mxu0
      %v945 = vpop.f32.mrb[0].mxu0
      %v946 = vadd.f32 %v650, %v945
      %v947 = vpop.f32.mrb[0].mxu0
      %948 = vmatprep.mubr.bf16.mxu0 %v373
      %949 = vmatmul.mubr.bf16.gmra.mrb[0].mxu0 %v267
      %v950 = vpop.f32.mrb[0].mxu0
      %v951 = vadd.f32 %v650, %v950
      %v952 = vpop.f32.mrb[0].mxu0
      %v953 = vpop.f32.mrb[0].mxu0
      %v954 = vadd.f32 %v650, %v953
      %v955 = vpop.f32.mrb[0].mxu0
      %956 = vmatprep.mubr.bf16.mxu0 %v381
      %957 = vmatmul.mubr.bf16.gmra.mrb[0].mxu0 %v268
      %v958 = vpop.f32.mrb[0].mxu0
      %v959 = vadd.f32 %v650, %v958
      %v960 = vpop.f32.mrb[0].mxu0
      %v961 = vpop.f32.mrb[0].mxu0
      %v962 = vadd.f32 %v650, %v961
      %v963 = vpop.f32.mrb[0].mxu0
      %964 = vmatprep.mubr.bf16.mxu0 %v389
      %965 = vmatmul.mubr.bf16.gmra.mrb[0].mxu0 %v269
      %v966 = vpop.f32.mrb[0].mxu0
      %v967 = vadd.f32 %v650, %v966
      %v968 = vpop.f32.mrb[0].mxu0
      %v969 = vpop.f32.mrb[0].mxu0
      %v970 = vadd.f32 %v650, %v969
      %v971 = vpop.f32.mrb[0].mxu0
      %972 = vmatprep.mubr.bf16.mxu0 %v397
      %973 = vmatmul.mubr.bf16.gmra.mrb[0].mxu0 %v270
      %v974 = vpop.f32.mrb[0].mxu0
      %v975 = vadd.f32 %v650, %v974
      %v976 = vpop.f32.mrb[0].mxu0
      %v977 = vpop.f32.mrb[0].mxu0
      %v978 = vadd.f32 %v650, %v977
      %v979 = vpop.f32.mrb[0].mxu0
      %980 = vmatprep.mubr.bf16.mxu0 %v400
      %981 = vmatmul.mubr.bf16.gmra.mrb[0].mxu0 %v271
      %v982 = vpop.f32.mrb[0].mxu0
      %v983 = vadd.f32 %v650, %v982
      %v984 = vpop.f32.mrb[0].mxu0
      %v985 = vpop.f32.mrb[0].mxu0
      %v986 = vpop.f32.mrb[0].mxu0
      %987 = vdwg.mxu0
      %988 = vmatprep.subr.bf16.mxu0 0
      %989 = vmatpush1.bf16.msra.mxu0 %v796
      %990 = vmatprep.subr.bf16.mxu0 0
      %991 = vmatpush1.bf16.msra.mxu0 %v797
      %992 = vmatprep.subr.bf16.mxu0 0
      %993 = vmatpush1.bf16.msra.mxu0 %v798
      %994 = vmatprep.subr.bf16.mxu0 0
      %995 = vmatpush1.bf16.msra.mxu0 %v799
      %996 = vmatprep.subr.bf16.mxu0 0
      %997 = vmatpush1.bf16.msra.mxu0 %v800
      %998 = vmatprep.subr.bf16.mxu0 0
      %999 = vmatpush1.bf16.msra.mxu0 %v801
      %1000 = vmatprep.subr.bf16.mxu0 0
      %1001 = vmatpush1.bf16.msra.mxu0 %v802
      %1002 = vmatprep.subr.bf16.mxu0 0
      %1003 = vmatpush1.bf16.msra.mxu0 %v803
      %1004 = vmatprep.subr.bf16.mxu0 0
      %1005 = vmatpush1.bf16.msra.mxu0 %v804
      %1006 = vmatprep.subr.bf16.mxu0 0
      %1007 = vmatpush1.bf16.msra.mxu0 %v805
      %1008 = vmatprep.subr.bf16.mxu0 0
      %1009 = vmatpush1.bf16.msra.mxu0 %v806
      %1010 = vmatprep.subr.bf16.mxu0 0
      %1011 = vmatpush1.bf16.msra.mxu0 %v807
      %1012 = vmatprep.subr.bf16.mxu0 0
      %1013 = vmatpush1.bf16.msra.mxu0 %v808
      %1014 = vmatprep.subr.bf16.mxu0 0
      %1015 = vmatpush1.bf16.msra.mxu0 %v809
      %1016 = vmatprep.subr.bf16.mxu0 0
      %1017 = vmatpush1.bf16.msra.mxu0 %v810
      %1018 = vmatprep.subr.bf16.mxu0 0
      %1019 = vmatpush1.bf16.msra.mxu0 %v811
      %1020 = vmatprep.mubr.bf16.mxu0 %v259
      %1021 = vmatmul.mubr.bf16.gmra.mrb[0].mxu0 %v454
      %v1022 = vpop.f32.mrb[0].mxu0
      %v1023 = vadd.f32 %v879, %v1022
      %v1024 = vpop.f32.mrb[0].mxu0
      %v1025 = vpop.f32.mrb[0].mxu0
      %v1026 = vadd.f32 %v882, %v1025
      %v1027 = vpop.f32.mrb[0].mxu0
      %1028 = vmatprep.mubr.bf16.mxu0 %v260
      %1029 = vmatmul.mubr.bf16.gmra.mrb[0].mxu0 %v463
      %v1030 = vpop.f32.mrb[0].mxu0
      %v1031 = vadd.f32 %v887, %v1030
      %v1032 = vpop.f32.mrb[0].mxu0
      %v1033 = vpop.f32.mrb[0].mxu0
      %v1034 = vadd.f32 %v890, %v1033
      %v1035 = vpop.f32.mrb[0].mxu0
      %1036 = vmatprep.mubr.bf16.mxu0 %v261
      %1037 = vmatmul.mubr.bf16.gmra.mrb[0].mxu0 %v472
      %v1038 = vpop.f32.mrb[0].mxu0
      %v1039 = vadd.f32 %v895, %v1038
      %v1040 = vpop.f32.mrb[0].mxu0
      %v1041 = vpop.f32.mrb[0].mxu0
      %v1042 = vadd.f32 %v898, %v1041
      %v1043 = vpop.f32.mrb[0].mxu0
      %1044 = vmatprep.mubr.bf16.mxu0 %v262
      %1045 = vmatmul.mubr.bf16.gmra.mrb[0].mxu0 %v481
      %v1046 = vpop.f32.mrb[0].mxu0
      %v1047 = vadd.f32 %v903, %v1046
      %v1048 = vpop.f32.mrb[0].mxu0
      %v1049 = vpop.f32.mrb[0].mxu0
      %v1050 = vadd.f32 %v906, %v1049
      %v1051 = vpop.f32.mrb[0].mxu0
      %1052 = vmatprep.mubr.bf16.mxu0 %v263
      %1053 = vmatmul.mubr.bf16.gmra.mrb[0].mxu0 %v490
      %v1054 = vpop.f32.mrb[0].mxu0
      %v1055 = vadd.f32 %v911, %v1054
      %v1056 = vpop.f32.mrb[0].mxu0
      %v1057 = vpop.f32.mrb[0].mxu0
      %v1058 = vadd.f32 %v914, %v1057
      %v1059 = vpop.f32.mrb[0].mxu0
      %1060 = vmatprep.mubr.bf16.mxu0 %v264
      %1061 = vmatmul.mubr.bf16.gmra.mrb[0].mxu0 %v499
      %v1062 = vpop.f32.mrb[0].mxu0
      %v1063 = vadd.f32 %v919, %v1062
      %v1064 = vpop.f32.mrb[0].mxu0
      %v1065 = vpop.f32.mrb[0].mxu0
      %v1066 = vadd.f32 %v922, %v1065
      %v1067 = vpop.f32.mrb[0].mxu0
      %1068 = vmatprep.mubr.bf16.mxu0 %v265
      %1069 = vmatmul.mubr.bf16.gmra.mrb[0].mxu0 %v508
      %v1070 = vpop.f32.mrb[0].mxu0
      %v1071 = vadd.f32 %v927, %v1070
      %v1072 = vpop.f32.mrb[0].mxu0
      %v1073 = vpop.f32.mrb[0].mxu0
      %v1074 = vadd.f32 %v930, %v1073
      %v1075 = vpop.f32.mrb[0].mxu0
      %1076 = vmatprep.mubr.bf16.mxu0 %v266
      %1077 = vmatmul.mubr.bf16.gmra.mrb[0].mxu0 %v517
      %v1078 = vpop.f32.mrb[0].mxu0
      %v1079 = vadd.f32 %v935, %v1078
      %v1080 = vpop.f32.mrb[0].mxu0
      %v1081 = vpop.f32.mrb[0].mxu0
      %v1082 = vadd.f32 %v938, %v1081
      %v1083 = vpop.f32.mrb[0].mxu0
      %1084 = vmatprep.mubr.bf16.mxu0 %v267
      %1085 = vmatmul.mubr.bf16.gmra.mrb[0].mxu0 %v526
      %v1086 = vpop.f32.mrb[0].mxu0
      %v1087 = vadd.f32 %v943, %v1086
      %v1088 = vpop.f32.mrb[0].mxu0
      %v1089 = vpop.f32.mrb[0].mxu0
      %v1090 = vadd.f32 %v946, %v1089
      %v1091 = vpop.f32.mrb[0].mxu0
      %1092 = vmatprep.mubr.bf16.mxu0 %v268
      %1093 = vmatmul.mubr.bf16.gmra.mrb[0].mxu0 %v535
      %v1094 = vpop.f32.mrb[0].mxu0
      %v1095 = vadd.f32 %v951, %v1094
      %v1096 = vpop.f32.mrb[0].mxu0
      %v1097 = vpop.f32.mrb[0].mxu0
      %v1098 = vadd.f32 %v954, %v1097
      %v1099 = vpop.f32.mrb[0].mxu0
      %1100 = vmatprep.mubr.bf16.mxu0 %v269
      %1101 = vmatmul.mubr.bf16.gmra.mrb[0].mxu0 %v544
      %v1102 = vpop.f32.mrb[0].mxu0
      %v1103 = vadd.f32 %v959, %v1102
      %v1104 = vpop.f32.mrb[0].mxu0
      %v1105 = vpop.f32.mrb[0].mxu0
      %v1106 = vadd.f32 %v962, %v1105
      %v1107 = vpop.f32.mrb[0].mxu0
      %1108 = vmatprep.mubr.bf16.mxu0 %v270
      %1109 = vmatmul.mubr.bf16.gmra.mrb[0].mxu0 %v553
      %v1110 = vpop.f32.mrb[0].mxu0
      %v1111 = vadd.f32 %v967, %v1110
      %v1112 = vpop.f32.mrb[0].mxu0
      %v1113 = vpop.f32.mrb[0].mxu0
      %v1114 = vadd.f32 %v970, %v1113
      %v1115 = vpop.f32.mrb[0].mxu0
      %1116 = vmatprep.mubr.bf16.mxu0 %v577
      %1117 = vmatmul.mubr.bf16.gmra.mrb[0].mxu0 %v562
      %v1118 = vpop.f32.mrb[0].mxu0
      %v1119 = vadd.f32 %v975, %v1118
      %v1120 = vpop.f32.mrb[0].mxu0
      %v1121 = vpop.f32.mrb[0].mxu0
      %v1122 = vadd.f32 %v978, %v1121
      %v1123 = vpop.f32.mrb[0].mxu0
      %1124 = vmatprep.mubr.bf16.mxu0 %v578
      %1125 = vmatmul.mubr.bf16.gmra.mrb[0].mxu0 %v561
      %v1126 = vpop.f32.mrb[0].mxu0
      %v1127 = vadd.f32 %v983, %v1126
      %v1128 = vpop.f32.mrb[0].mxu0
      %v1129 = vpop.f32.mrb[0].mxu0
      %v1130 = vpop.f32.mrb[0].mxu0
      %1131 = vdwg.mxu0
      %v1132 = vmax.f32 %v1023, 0.0
      %v1133 = vmax.f32 %v1026, 0.0
      %v1134 = vmax.f32 %v1031, 0.0
      %v1135 = vmax.f32 %v1034, 0.0
      %v1136 = vmax.f32 %v1039, 0.0
      %v1137 = vmax.f32 %v1042, 0.0
      %v1138 = vmax.f32 %v1047, 0.0
      %v1139 = vmax.f32 %v1050, 0.0
      %v1140 = vmax.f32 %v1055, 0.0
      %v1141 = vmax.f32 %v1058, 0.0
      %v1142 = vmax.f32 %v1063, 0.0
      %v1143 = vmax.f32 %v1066, 0.0
      %v1144 = vmax.f32 %v1071, 0.0
      %v1145 = vmax.f32 %v1074, 0.0
      %v1146 = vmax.f32 %v1079, 0.0
      %v1147 = vmax.f32 %v1082, 0.0
      %v1148 = vmax.f32 %v1087, 0.0
      %v1149 = vmax.f32 %v1090, 0.0
      %v1150 = vmax.f32 %v1095, 0.0
      %v1151 = vmax.f32 %v1098, 0.0
      %v1152 = vmax.f32 %v1103, 0.0
      %v1153 = vmax.f32 %v1106, 0.0
      %v1154 = vmax.f32 %v1111, 0.0
      %v1155 = vmax.f32 %v1114, 0.0
      %v1156 = vmax.f32 %v1119, 0.0
      %v1157 = vmax.f32 %v1122, 0.0
      %v1158 = vmax.f32 %v1127, 0.0
      %v1159 = vpack.c.bf16 %v1133, %v1132
      %v1160 = vpack.c.bf16 %v1135, %v1134
      %v1161 = vpack.c.bf16 %v1137, %v1136
      %v1162 = vpack.c.bf16 %v1139, %v1138
      %v1163 = vpack.c.bf16 %v1141, %v1140
      %v1164 = vpack.c.bf16 %v1143, %v1142
      %v1165 = vpack.c.bf16 %v1145, %v1144
      %v1166 = vpack.c.bf16 %v1147, %v1146
      %v1167 = vpack.c.bf16 %v1149, %v1148
      %v1168 = vpack.c.bf16 %v1151, %v1150
      %v1169 = vpack.c.bf16 %v1153, %v1152
      %v1170 = vpack.c.bf16 %v1155, %v1154
      %v1171 = vpack.c.bf16 %v1157, %v1156
      %v1172 = vpack.c.bf16 %v1158, %v1158
      %v1187 = vunpack.c.l.b16 %v1159
      %v1188 = vunpack.c.h.b16 %v1159
      %v1189 = vunpack.c.l.b16 %v1160
      %v1190 = vunpack.c.h.b16 %v1160
      %v1191 = vunpack.c.l.b16 %v1161
      %v1192 = vunpack.c.h.b16 %v1161
      %v1193 = vunpack.c.l.b16 %v1162
      %v1194 = vunpack.c.h.b16 %v1162
      %v1195 = vunpack.c.l.b16 %v1163
      %v1196 = vunpack.c.h.b16 %v1163
      %v1197 = vunpack.c.l.b16 %v1164
      %v1198 = vunpack.c.h.b16 %v1164
      %v1199 = vunpack.c.l.b16 %v1165
      %v1200 = vunpack.c.h.b16 %v1165
      %v1201 = vunpack.c.l.b16 %v1166
      %v1202 = vunpack.c.h.b16 %v1166
      %v1203 = vunpack.c.l.b16 %v1167
      %v1204 = vunpack.c.h.b16 %v1167
      %v1205 = vunpack.c.l.b16 %v1168
      %v1206 = vunpack.c.h.b16 %v1168
      %v1207 = vunpack.c.l.b16 %v1169
      %v1208 = vunpack.c.h.b16 %v1169
      %v1209 = vunpack.c.l.b16 %v1170
      %v1210 = vunpack.c.h.b16 %v1170
      %v1211 = vunpack.c.l.b16 %v1171
      %v1212 = vunpack.c.h.b16 %v1171
      %v1213 = vunpack.c.l.b16 %v1172
      %v1214 = vpack.c.b16 %v1187, %v1187
      %v1215 = vpack.c.b16 %v1188, %v1188
      %v1216 = vpack.c.b16 %v1189, %v1189
      %v1217 = vpack.c.b16 %v1190, %v1190
      %v1218 = vpack.c.b16 %v1191, %v1191
      %v1219 = vpack.c.b16 %v1192, %v1192
      %v1220 = vpack.c.b16 %v1193, %v1193
      %v1221 = vpack.c.b16 %v1194, %v1194
      %v1222 = vpack.c.b16 %v1195, %v1195
      %v1223 = vpack.c.b16 %v1196, %v1196
      %v1224 = vpack.c.b16 %v1197, %v1197
      %v1225 = vpack.c.b16 %v1198, %v1198
      %v1226 = vpack.c.b16 %v1199, %v1199
      %v1227 = vpack.c.b16 %v1200, %v1200
      %v1228 = vpack.c.b16 %v1201, %v1201
      %v1229 = vpack.c.b16 %v1202, %v1202
      %v1230 = vpack.c.b16 %v1203, %v1203
      %v1231 = vpack.c.b16 %v1204, %v1204
      %v1232 = vpack.c.b16 %v1205, %v1205
      %v1233 = vpack.c.b16 %v1206, %v1206
      %v1234 = vpack.c.b16 %v1207, %v1207
      %v1235 = vpack.c.b16 %v1208, %v1208
      %v1236 = vpack.c.b16 %v1209, %v1209
      %v1237 = vpack.c.b16 %v1210, %v1210
      %v1238 = vpack.c.b16 %v1211, %v1211
      %v1239 = vpack.c.b16 %v1212, %v1212
      %v1240 = vpack.c.b16 %v1213, %v1213
      %1268 = vst [vmem:[%s170] sm:$0xf] %v1214
      %1269 = vst [vmem:[%s170 + $0x4] sm:$0xf] %v1215
      %1270 = vst [vmem:[%s170 + $0x8] sm:$0xf] %v1216
      %1271 = vst [vmem:[%s170 + $0xc] sm:$0xf] %v1217
      %1272 = vst [vmem:[%s170 + $0x10] sm:$0xf] %v1218
      %1273 = vst [vmem:[%s170 + $0x14] sm:$0xf] %v1219
      %1274 = vst [vmem:[%s170 + $0x18] sm:$0xf] %v1220
      %1275 = vst [vmem:[%s170 + $0x1c] sm:$0xf] %v1221
      %1276 = vst [vmem:[%s170 + $0x20] sm:$0xf] %v1222
      %1277 = vst [vmem:[%s170 + $0x24] sm:$0xf] %v1223
      %1278 = vst [vmem:[%s170 + $0x28] sm:$0xf] %v1224
      %1279 = vst [vmem:[%s170 + $0x2c] sm:$0xf] %v1225
      %1280 = vst [vmem:[%s170 + $0x30] sm:$0xf] %v1226
      %1281 = vst [vmem:[%s170 + $0x34] sm:$0xf] %v1227
      %1282 = vst [vmem:[%s170 + $0x38] sm:$0xf] %v1228
      %1283 = vst [vmem:[%s170 + $0x3c] sm:$0xf] %v1229
      %1284 = vst [vmem:[%s170 + $0x40] sm:$0xf] %v1230
      %1285 = vst [vmem:[%s170 + $0x44] sm:$0xf] %v1231
      %1286 = vst [vmem:[%s170 + $0x48] sm:$0xf] %v1232
      %1287 = vst [vmem:[%s170 + $0x4c] sm:$0xf] %v1233
      %1288 = vst [vmem:[%s170 + $0x50] sm:$0xf] %v1234
      %1289 = vst [vmem:[%s170 + $0x54] sm:$0xf] %v1235
      %1290 = vst [vmem:[%s170 + $0x58] sm:$0xf] %v1236
      %1291 = vst [vmem:[%s170 + $0x5c] sm:$0xf] %v1237
      %1292 = vst [vmem:[%s170 + $0x60] sm:$0xf] %v1238
      %1293 = vst [vmem:[%s170 + $0x64] sm:$0xf] %v1239
      %1294 = vst [vmem:[%s170 + $0x68] sm:$0x1] %v1240
      %p1295 = scmp.lt.s32.totalorder %s14, 1
      %s1296 = scalar_select %p1295, %s14, 1
      %s1297 = smul.addr %s1296, 27
      %s1298 = smul.addr %s1297, 4
      %s1299 = scalar_lea.vmem %s3, %s1298
      // Predicated region
      $region33: #{conv_encoder_forward.6} parent=31 // pred_check
        %p1300 = pneg %p100
      $region34: #{conv_encoder_forward.6} parent=31 // pred_check_branch
        %1302 = sbr.rel (%p1300) target = $region36
      $region35: #{conv_encoder_forward.6} parent=31 // pred_region
        _
      $region36: #{conv_encoder_forward.6} parent=31 // pred_fallthru
        _
    $region32: #{conv_encoder_forward.6} parent=5 // pred_fallthru
      _
    %p1303 = scmp.le.s32.totalorder 2, %s9
    // Predicated region
    $region37: #{conv_encoder_forward.6} parent=5 // pred_check
      %p1304 = pneg %p1303
    $region38: #{conv_encoder_forward.6} parent=5 // pred_check_branch
      %1306 = sbr.rel (%p1304) target = $region40
    $region39: #{conv_encoder_forward.6} parent=5 // pred_region
      %s1307 = ssub.s32 %s9, 2
      // Predicated region
      $region41: #{conv_encoder_forward.6} parent=39 // pred_check
        %p1308 = pneg %p106
      $region42: #{conv_encoder_forward.6} parent=39 // pred_check_branch
        %1310 = sbr.rel (%p1308) target = $region44
      $region43: #{conv_encoder_forward.6} parent=39 // pred_region
        %p1311 = scmp.lt.s32.totalorder %s15, 1
        %s1312 = scalar_select %p1311, %s15, 1
        %s1313 = smul.addr %s1312, 27
        %s1314 = smul.addr %s1313, 4
        %s1315 = scalar_lea.vmem %s3, %s1314
      $region44: #{conv_encoder_forward.6} parent=39 // pred_fallthru
        _
    $region40: #{conv_encoder_forward.6} parent=5 // pred_fallthru
      _
  $region6: #{conv_encoder_forward.6} parent=0 // loop_footer
    %s13 = sadd.s32 1, %s9
  $region7: #{conv_encoder_forward.6} parent=0 // loop_footer_branch
    %8 = sbr.rel target = $region3
  $region8: #{conv_encoder_forward.6} parent=0 // loop_exit
    _

// kernel: conv_encoder_forward.7
$region0: #{conv_encoder_forward.7}
  #allocation0 [shape = 'u32[]', space=smem, size = 0x4, offset = 0x4, fixed_abs, tag = 'smem constant byte address 0x4 - core index']
  #allocation1 [shape = 'u32[144,128]{1,0:T(1,128)}', space=vmem, size = 0x12000, scoped, tag = 'internal scratch']
  %s0 = inlined_call_operand.vmem [shape: bf16[2,50,256], index: 0, kind: input, shape index: {}]
  %s1 = inlined_call_operand.vmem [shape: bf16[1024,128], index: 1, kind: input, shape index: {}]
  %s2 = inlined_call_operand.vmem [shape: f32[1,128], index: 2, kind: input, shape index: {}]
  %s3 = inlined_call_operand.vmem [shape: bf16[2,42,128], index: 3, kind: output, shape index: {}]
  %s4 = sld [smem:[#allocation0]]
  $region45: #{conv_encoder_forward.7} parent=0
    _
  %s6 = ssub.s32 1, %s4
  %s7 = scalar_select 0, %s6, %s4
  loop: start=0, step=1, limit=4
  $region2: #{conv_encoder_forward.7} parent=0 // loop_pre_header
    _
  $region3: #{conv_encoder_forward.7} parent=0 // loop_header
    %s9 = sphi 0, %s13
    %p10 = scmp.ge.s32.totalorder %s9, 4
    %s19 = sphi 0, %s21
    %s22 = sphi 0, %s19
    %s23 = sphi 0, %s22
    %s39 = sphi 0, %s23
    %s43 = sphi 0, %s43
    %s45 = sphi 0, %s43
    %s46 = sphi 0, %s45
    %s60 = sphi 0, %s46
    %s64 = sphi 0, %s64
    %s66 = sphi 0, %s64
    %s67 = sphi 0, %s66
    %s81 = sphi 0, %s67
    %s87 = sphi 0, %s89
    %s90 = sphi 0, %s87
    %s91 = sphi 0, %s90
    %s107 = sphi 0, %s91
  $region4: #{conv_encoder_forward.7} parent=0 // loop_header_branch
    %12 = sbr.rel (%p10) target = $region8
  $region5: #{conv_encoder_forward.7} parent=0 // loop_body
    %s14 = ssub.s32 %s9, 1
    %s15 = ssub.s32 %s9, 2
    %s16 = sadd.s32 %s9, 1
    %s17 = ssub.s32 %s9, %s16
    %p18 = scmp.eq.s32.totalorder %s17, 0
    %s20 = sadd.s32 %s19, 1
    %s21 = scalar_select %p18, %s19, %s20
    %p24 = pneg %p18
    %p25 = scmp.eq.s32.totalorder %s9, 1
    %p26 = por %p24, %p25
    %p27 = scmp.ne.s32.totalorder %s19, %s22
    %p28 = scmp.eq.s32.totalorder %s9, 0
    %p29 = por %p27, %p28
    %p30 = scmp.ne.s32.totalorder %s19, %s22
    %p31 = scmp.eq.s32.totalorder %s14, 1
    %p32 = por %p30, %p31
    %p33 = scmp.ne.s32.totalorder %s22, %s23
    %p34 = scmp.eq.s32.totalorder %s14, 0
    %p35 = por %p33, %p34
    %p36 = scmp.ne.s32.totalorder %s22, %s23
    %p37 = scmp.eq.s32.totalorder %s15, 1
    %p38 = por %p36, %p37
    %p40 = scmp.ne.s32.totalorder %s23, %s39
    %p41 = scmp.eq.s32.totalorder %s15, 0
    %p42 = por %p40, %p41
    %s44 = sadd.s32 %s43, 1
    %p47 = scmp.eq.s32.totalorder %s9, 1
    %p48 = scmp.ne.s32.totalorder %s43, %s45
    %p49 = scmp.eq.s32.totalorder %s9, 0
    %p50 = por %p48, %p49
    %p51 = scmp.ne.s32.totalorder %s43, %s45
    %p52 = scmp.eq.s32.totalorder %s14, 1
    %p53 = por %p51, %p52
    %p54 = scmp.ne.s32.totalorder %s45, %s46
    %p55 = scmp.eq.s32.totalorder %s14, 0
    %p56 = por %p54, %p55
    %p57 = scmp.ne.s32.totalorder %s45, %s46
    %p58 = scmp.eq.s32.totalorder %s15, 1
    %p59 = por %p57, %p58
    %p61 = scmp.ne.s32.totalorder %s46, %s60
    %p62 = scmp.eq.s32.totalorder %s15, 0
    %p63 = por %p61, %p62
    %s65 = sadd.s32 %s64, 1
    %p68 = scmp.eq.s32.totalorder %s9, 1
    %p69 = scmp.ne.s32.totalorder %s64, %s66
    %p70 = scmp.eq.s32.totalorder %s9, 0
    %p71 = por %p69, %p70
    %p72 = scmp.ne.s32.totalorder %s64, %s66
    %p73 = scmp.eq.s32.totalorder %s14, 1
    %p74 = por %p72, %p73
    %p75 = scmp.ne.s32.totalorder %s66, %s67
    %p76 = scmp.eq.s32.totalorder %s14, 0
    %p77 = por %p75, %p76
    %p78 = scmp.ne.s32.totalorder %s66, %s67
    %p79 = scmp.eq.s32.totalorder %s15, 1
    %p80 = por %p78, %p79
    %p82 = scmp.ne.s32.totalorder %s67, %s81
    %p83 = scmp.eq.s32.totalorder %s15, 0
    %p84 = por %p82, %p83
    %s85 = ssub.s32 %s9, %s16
    %p86 = scmp.eq.s32.totalorder %s85, 0
    %s88 = sadd.s32 %s87, 1
    %s89 = scalar_select %p86, %s87, %s88
    %p92 = pneg %p86
    %p93 = scmp.eq.s32.totalorder %s9, 1
    %p94 = por %p92, %p93
    %p95 = scmp.ne.s32.totalorder %s87, %s90
    %p96 = scmp.eq.s32.totalorder %s9, 0
    %p97 = por %p95, %p96
    %p98 = scmp.ne.s32.totalorder %s87, %s90
    %p99 = scmp.eq.s32.totalorder %s14, 1
    %p100 = por %p98, %p99
    %p101 = scmp.ne.s32.totalorder %s90, %s91
    %p102 = scmp.eq.s32.totalorder %s14, 0
    %p103 = por %p101, %p102
    %p104 = scmp.ne.s32.totalorder %s90, %s91
    %p105 = scmp.eq.s32.totalorder %s15, 1
    %p106 = por %p104, %p105
    %p108 = scmp.ne.s32.totalorder %s91, %s107
    %p109 = scmp.eq.s32.totalorder %s15, 0
    %p110 = por %p108, %p109
    %p111 = scmp.le.s32.totalorder 1, %s9
    %p112 = scmp.lt.s32.totalorder %s9, 3
    %p113 = pnand %p111, %p112
    %p114 = pneg %p113
    // Predicated region
    $region9: #{conv_encoder_forward.7} parent=5 // pred_check
      _
    $region10: #{conv_encoder_forward.7} parent=5 // pred_check_branch
      %116 = sbr.rel (%p113) target = $region12
    $region11: #{conv_encoder_forward.7} parent=5 // pred_region
      %s117 = ssub.s32 %s9, 1
      // Predicated region
      $region13: #{conv_encoder_forward.7} parent=11 // pred_check
        %p118 = pneg %p56
      $region14: #{conv_encoder_forward.7} parent=11 // pred_check_branch
        %120 = sbr.rel (%p118) target = $region16
      $region15: #{conv_encoder_forward.7} parent=11 // pred_region
        _
      $region16: #{conv_encoder_forward.7} parent=11 // pred_fallthru
        _
      // Predicated region
      $region17: #{conv_encoder_forward.7} parent=11 // pred_check
        %p121 = pneg %p77
      $region18: #{conv_encoder_forward.7} parent=11 // pred_check_branch
        %123 = sbr.rel (%p121) target = $region20
      $region19: #{conv_encoder_forward.7} parent=11 // pred_region
        _
      $region20: #{conv_encoder_forward.7} parent=11 // pred_fallthru
        _
    $region12: #{conv_encoder_forward.7} parent=5 // pred_fallthru
      _
    %p124 = scmp.lt.s32.totalorder %s9, 2
    // Predicated region
    $region21: #{conv_encoder_forward.7} parent=5 // pred_check
      %p125 = pneg %p124
    $region22: #{conv_encoder_forward.7} parent=5 // pred_check_branch
      %127 = sbr.rel (%p125) target = $region24
    $region23: #{conv_encoder_forward.7} parent=5 // pred_region
      // Predicated region
      $region25: #{conv_encoder_forward.7} parent=23 // pred_check
        %p128 = pneg %p29
      $region26: #{conv_encoder_forward.7} parent=23 // pred_check_branch
        %130 = sbr.rel (%p128) target = $region28
      $region27: #{conv_encoder_forward.7} parent=23 // pred_region
        %p131 = scmp.lt.s32.totalorder %s9, 1
        %s132 = scalar_select %p131, %s9, 1
        %s133 = smul.addr %s132, 14
        %s134 = smul.addr %s133, 4
        %s135 = scalar_lea.vmem %s0, %s134
      $region28: #{conv_encoder_forward.7} parent=23 // pred_fallthru
        _
    $region24: #{conv_encoder_forward.7} parent=5 // pred_fallthru
      _
    %p136 = scmp.le.s32.totalorder 1, %s9
    %p137 = scmp.lt.s32.totalorder %s9, 3
    %p138 = pnand %p136, %p137
    %p139 = pneg %p138
    // Predicated region
    $region29: #{conv_encoder_forward.7} parent=5 // pred_check
      _
    $region30: #{conv_encoder_forward.7} parent=5 // pred_check_branch
      %141 = sbr.rel (%p138) target = $region32
    $region31: #{conv_encoder_forward.7} parent=5 // pred_region
      %s142 = ssub.s32 %s9, 1
      %p143 = scmp.lt.s32.totalorder %s14, 1
      %s144 = scalar_select %p143, %s14, 1
      %s145 = smul.addr %s144, 14
      %s146 = smul.addr %s145, 4
      %s147 = scalar_lea.vmem %s0, %s146
      %p148 = pneg %p35
      %p149 = pneg %p32
      %p150 = pneg %p56
      %p151 = pneg %p53
      %p152 = pneg %p77
      %p153 = pneg %p74
      %p154 = pneg %p103
      %p155 = pneg %p100
      %p156 = scmp.lt.s32.totalorder %s14, 1
      %s157 = scalar_select %p156, %s14, 1
      %s158 = smul.addr %s157, 6
      %s159 = smul.addr %s158, 4
      %s160 = scalar_lea.vmem %s3, %s159
      %p161 = scmp.lt.s32.totalorder %s14, 1
      %s162 = scalar_select %p161, %s14, 1
      %s163 = smul.addr %s162, 14
      %s164 = smul.addr %s163, 4
      %s165 = scalar_lea.vmem %s0, %s164
      %p166 = scmp.lt.s32.totalorder %s14, 1
      %s167 = scalar_select %p166, %s14, 1
      %s168 = smul.addr %s167, 6
      %s169 = smul.addr %s168, 4
      %s170 = scalar_lea.vmem %s3, %s169
      %v172 = vld [vmem:[%s165] sm:$0xff]
      %v173 = vld [vmem:[%s165 + $0x8] sm:$0xff]
      %v174 = vld [vmem:[%s165 + $0x10] sm:$0xff]
      %v175 = vld [vmem:[%s165 + $0x18] sm:$0xff]
      %v176 = vld [vmem:[%s165 + $0x20] sm:$0xff]
      %v177 = vld [vmem:[%s165 + $0x28] sm:$0x11]
      %v178 = vld [vmem:[%s165 + $0x28] sm:$0x33]
      %v179 = vld [vmem:[%s165] sm:$0x88]
      %v180 = vld [vmem:[%s165 + $0x28] sm:$0xff]
      %v181 = vld [vmem:[%s165 + $0x30] sm:$0x11]
      %v188 = vunpack.c.l.b16 %v172
      %v189 = vunpack.c.h.b16 %v172
      %v190 = vunpack.c.l.b16 %v173
      %v191 = vunpack.c.h.b16 %v173
      %v192 = vunpack.c.l.b16 %v174
      %v193 = vunpack.c.h.b16 %v174
      %v194 = vunpack.c.l.b16 %v175
      %v195 = vunpack.c.h.b16 %v175
      %v196 = vunpack.c.l.b16 %v176
      %v197 = vunpack.c.h.b16 %v176
      %v198 = vunpack.c.l.b16 %v177
      %v199 = vunpack.c.h.b16 %v177
      %v200 = vpack.c.b16 %v190, %v188
      %v201 = vpack.c.b16 %v191, %v189
      %v202 = vpack.c.b16 %v194, %v192
      %v203 = vpack.c.b16 %v195, %v193
      %v204 = vpack.c.b16 %v198, %v196
      %v205 = vpack.c.b16 %v199, %v197
      %v213 = vunpack.c.l.b16 %v178
      %v214 = vunpack.c.h.b16 %v178
      %v215 = vpack.c.b16 %v213, %v196
      %v216 = vpack.c.b16 %v214, %v197
      %vm217 = vsmask.f32 7424
      %v219 = vshrl.u32 %v200, 16
      %v221 = vshll.u32 %v200, 16
      %v223 = vrot.slane %v221, 1
      %v224 = vor.u32 %v219, %v223
      %v226 = vshll.u32 %v202, 16
      %v228 = vrot.slane %v226, 1
      %v229 = vsel %vm217, %v224, %v228
      %v231 = vshrl.u32 %v201, 16
      %v233 = vshll.u32 %v201, 16
      %v235 = vrot.slane %v233, 1
      %v236 = vor.u32 %v231, %v235
      %v238 = vshll.u32 %v203, 16
      %v240 = vrot.slane %v238, 1
      %v241 = vsel %vm217, %v236, %v240
      %v242 = vshrl.u32 %v202, 16
      %v244 = vor.u32 %v242, %v228
      %v246 = vshll.u32 %v215, 16
      %v248 = vrot.slane %v246, 1
      %v249 = vsel %vm217, %v244, %v248
      %v250 = vshrl.u32 %v203, 16
      %v252 = vor.u32 %v250, %v240
      %v254 = vshll.u32 %v216, 16
      %v256 = vrot.slane %v254, 1
      %v257 = vsel %vm217, %v252, %v256
      %v258 = vshrl.u32 %v215, 16
      %v260 = vor.u32 %v258, %v248
      %v261 = vshrl.u32 %v216, 16
      %v263 = vor.u32 %v261, %v256
      %v273 = vunpack.c.l.b16 %v179
      %v274 = vunpack.c.h.b16 %v179
      %v275 = vunpack.c.l.b16 %v180
      %v276 = vunpack.c.h.b16 %v180
      %v277 = vunpack.c.l.b16 %v181
      %v278 = vunpack.c.h.b16 %v181
      %v279 = vpack.c.b16 %v190, %v273
      %v280 = vpack.c.b16 %v191, %v274
      %v281 = vpack.c.b16 %v275, %v196
      %v282 = vpack.c.b16 %v276, %v197
      %v283 = vpack.c.b16 %v277, %v277
      %v284 = vpack.c.b16 %v278, %v278
      %vm285 = vsmask.f32 4352
      %v287 = vshrl.u32 %v279, 16
      %v289 = vrot.slane %v287, 3
      %v290 = vshll.u32 %v279, 16
      %v292 = vrot.slane %v290, 4
      %v293 = vor.u32 %v289, %v292
      %v294 = vrot.slane %v242, 3
      %v295 = vrot.slane %v226, 4
      %v296 = vor.u32 %v294, %v295
      %v297 = vsel %vm285, %v293, %v296
      %v299 = vshrl.u32 %v280, 16
      %v301 = vrot.slane %v299, 3
      %v302 = vshll.u32 %v280, 16
      %v304 = vrot.slane %v302, 4
      %v305 = vor.u32 %v301, %v304
      %v306 = vrot.slane %v250, 3
      %v307 = vrot.slane %v238, 4
      %v308 = vor.u32 %v306, %v307
      %v309 = vsel %vm285, %v305, %v308
      %v311 = vshrl.u32 %v281, 16
      %v313 = vrot.slane %v311, 3
      %v314 = vshll.u32 %v281, 16
      %v316 = vrot.slane %v314, 4
      %v317 = vor.u32 %v313, %v316
      %v318 = vsel %vm285, %v296, %v317
      %v320 = vshrl.u32 %v282, 16
      %v322 = vrot.slane %v320, 3
      %v323 = vshll.u32 %v282, 16
      %v325 = vrot.slane %v323, 4
      %v326 = vor.u32 %v322, %v325
      %v327 = vsel %vm285, %v308, %v326
      %v329 = vshll.u32 %v283, 16
      %v331 = vrot.slane %v329, 4
      %v332 = vsel %vm285, %v317, %v331
      %v334 = vshll.u32 %v284, 16
      %v336 = vrot.slane %v334, 4
      %v337 = vsel %vm285, %v326, %v336
      %v344 = vpack.c.b16 %v192, %v190
      %v345 = vpack.c.b16 %v193, %v191
      %v346 = vpack.c.b16 %v196, %v194
      %v347 = vpack.c.b16 %v197, %v195
      %v348 = vpack.c.b16 %v277, %v275
      %v349 = vpack.c.b16 %v278, %v276
      %v356 = vld [vmem:[%s1] sm:$0xf]
      %v357 = vld [vmem:[%s1 + $0x4] sm:$0xf]
      %v358 = vld [vmem:[%s1 + $0x8] sm:$0xf]
      %v359 = vld [vmem:[%s1 + $0xc] sm:$0xf]
      %v360 = vld [vmem:[%s1 + $0x10] sm:$0xf]
      %v361 = vld [vmem:[%s1 + $0x14] sm:$0xf]
      %v362 = vld [vmem:[%s1 + $0x18] sm:$0xf]
      %v363 = vld [vmem:[%s1 + $0x1c] sm:$0xf]
      %v364 = vld [vmem:[%s1 + $0x20] sm:$0xf]
      %v365 = vld [vmem:[%s1 + $0x24] sm:$0xf]
      %v366 = vld [vmem:[%s1 + $0x28] sm:$0xf]
      %v367 = vld [vmem:[%s1 + $0x2c] sm:$0xf]
      %v368 = vld [vmem:[%s1 + $0x30] sm:$0xf]
      %v369 = vld [vmem:[%s1 + $0x34] sm:$0xf]
      %v370 = vld [vmem:[%s1 + $0x38] sm:$0xf]
      %v371 = vld [vmem:[%s1 + $0x3c] sm:$0xf]
      %v372 = vld [vmem:[%s1 + $0x40] sm:$0xf]
      %v373 = vld [vmem:[%s1 + $0x44] sm:$0xf]
      %v374 = vld [vmem:[%s1 + $0x48] sm:$0xf]
      %v375 = vld [vmem:[%s1 + $0x4c] sm:$0xf]
      %v376 = vld [vmem:[%s1 + $0x50] sm:$0xf]
      %v377 = vld [vmem:[%s1 + $0x54] sm:$0xf]
      %v378 = vld [vmem:[%s1 + $0x58] sm:$0xf]
      %v379 = vld [vmem:[%s1 + $0x5c] sm:$0xf]
      %v380 = vld [vmem:[%s1 + $0x60] sm:$0xf]
      %v381 = vld [vmem:[%s1 + $0x64] sm:$0xf]
      %v382 = vld [vmem:[%s1 + $0x68] sm:$0xf]
      %v383 = vld [vmem:[%s1 + $0x6c] sm:$0xf]
      %v384 = vld [vmem:[%s1 + $0x70] sm:$0xf]
      %v385 = vld [vmem:[%s1 + $0x74] sm:$0xf]
      %v386 = vld [vmem:[%s1 + $0x78] sm:$0xf]
      %v387 = vld [vmem:[%s1 + $0x7c] sm:$0xf]
      %v388 = vld [vmem:[%s1 + $0x80] sm:$0xf]
      %v389 = vld [vmem:[%s1 + $0x84] sm:$0xf]
      %v390 = vld [vmem:[%s1 + $0x88] sm:$0xf]
      %v391 = vld [vmem:[%s1 + $0x8c] sm:$0xf]
      %v392 = vld [vmem:[%s1 + $0x90] sm:$0xf]
      %v393 = vld [vmem:[%s1 + $0x94] sm:$0xf]
      %v394 = vld [vmem:[%s1 + $0x98] sm:$0xf]
      %v395 = vld [vmem:[%s1 + $0x9c] sm:$0xf]
      %v396 = vld [vmem:[%s1 + $0xa0] sm:$0xf]
      %v397 = vld [vmem:[%s1 + $0xa4] sm:$0xf]
      %v398 = vld [vmem:[%s1 + $0xa8] sm:$0xf]
      %v399 = vld [vmem:[%s1 + $0xac] sm:$0xf]
      %v400 = vld [vmem:[%s1 + $0xb0] sm:$0xf]
      %v401 = vld [vmem:[%s1 + $0xb4] sm:$0xf]
      %v402 = vld [vmem:[%s1 + $0xb8] sm:$0xf]
      %v403 = vld [vmem:[%s1 + $0xbc] sm:$0xf]
      %v404 = vld [vmem:[%s1 + $0xc0] sm:$0xf]
      %v405 = vld [vmem:[%s1 + $0xc4] sm:$0xf]
      %v406 = vld [vmem:[%s1 + $0xc8] sm:$0xf]
      %v407 = vld [vmem:[%s1 + $0xcc] sm:$0xf]
      %v408 = vld [vmem:[%s1 + $0xd0] sm:$0xf]
      %v409 = vld [vmem:[%s1 + $0xd4] sm:$0xf]
      %v410 = vld [vmem:[%s1 + $0xd8] sm:$0xf]
      %v411 = vld [vmem:[%s1 + $0xdc] sm:$0xf]
      %v412 = vld [vmem:[%s1 + $0xe0] sm:$0xf]
      %v413 = vld [vmem:[%s1 + $0xe4] sm:$0xf]
      %v414 = vld [vmem:[%s1 + $0xe8] sm:$0xf]
      %v415 = vld [vmem:[%s1 + $0xec] sm:$0xf]
      %v416 = vld [vmem:[%s1 + $0xf0] sm:$0xf]
      %v417 = vld [vmem:[%s1 + $0xf4] sm:$0xf]
      %v418 = vld [vmem:[%s1 + $0xf8] sm:$0xf]
      %v419 = vld [vmem:[%s1 + $0xfc] sm:$0xf]
      %v420 = vld [vmem:[%s1 + $0x100] sm:$0xf]
      %v421 = vld [vmem:[%s1 + $0x104] sm:$0xf]
      %v422 = vld [vmem:[%s1 + $0x108] sm:$0xf]
      %v423 = vld [vmem:[%s1 + $0x10c] sm:$0xf]
      %v424 = vld [vmem:[%s1 + $0x110] sm:$0xf]
      %v425 = vld [vmem:[%s1 + $0x114] sm:$0xf]
      %v426 = vld [vmem:[%s1 + $0x118] sm:$0xf]
      %v427 = vld [vmem:[%s1 + $0x11c] sm:$0xf]
      %v428 = vld [vmem:[%s1 + $0x120] sm:$0xf]
      %v429 = vld [vmem:[%s1 + $0x124] sm:$0xf]
      %v430 = vld [vmem:[%s1 + $0x128] sm:$0xf]
      %v431 = vld [vmem:[%s1 + $0x12c] sm:$0xf]
      %v432 = vld [vmem:[%s1 + $0x130] sm:$0xf]
      %v433 = vld [vmem:[%s1 + $0x134] sm:$0xf]
      %v434 = vld [vmem:[%s1 + $0x138] sm:$0xf]
      %v435 = vld [vmem:[%s1 + $0x13c] sm:$0xf]
      %v436 = vld [vmem:[%s1 + $0x140] sm:$0xf]
      %v437 = vld [vmem:[%s1 + $0x144] sm:$0xf]
      %v438 = vld [vmem:[%s1 + $0x148] sm:$0xf]
      %v439 = vld [vmem:[%s1 + $0x14c] sm:$0xf]
      %v440 = vld [vmem:[%s1 + $0x150] sm:$0xf]
      %v441 = vld [vmem:[%s1 + $0x154] sm:$0xf]
      %v442 = vld [vmem:[%s1 + $0x158] sm:$0xf]
      %v443 = vld [vmem:[%s1 + $0x15c] sm:$0xf]
      %v444 = vld [vmem:[%s1 + $0x160] sm:$0xf]
      %v445 = vld [vmem:[%s1 + $0x164] sm:$0xf]
      %v446 = vld [vmem:[%s1 + $0x168] sm:$0xf]
      %v447 = vld [vmem:[%s1 + $0x16c] sm:$0xf]
      %v448 = vld [vmem:[%s1 + $0x170] sm:$0xf]
      %v449 = vld [vmem:[%s1 + $0x174] sm:$0xf]
      %v450 = vld [vmem:[%s1 + $0x178] sm:$0xf]
      %v451 = vld [vmem:[%s1 + $0x17c] sm:$0xf]
      %v452 = vld [vmem:[%s1 + $0x180] sm:$0xf]
      %v453 = vld [vmem:[%s1 + $0x184] sm:$0xf]
      %v454 = vld [vmem:[%s1 + $0x188] sm:$0xf]
      %v455 = vld [vmem:[%s1 + $0x18c] sm:$0xf]
      %v456 = vld [vmem:[%s1 + $0x190] sm:$0xf]
      %v457 = vld [vmem:[%s1 + $0x194] sm:$0xf]
      %v458 = vld [vmem:[%s1 + $0x198] sm:$0xf]
      %v459 = vld [vmem:[%s1 + $0x19c] sm:$0xf]
      %v460 = vld [vmem:[%s1 + $0x1a0] sm:$0xf]
      %v461 = vld [vmem:[%s1 + $0x1a4] sm:$0xf]
      %v462 = vld [vmem:[%s1 + $0x1a8] sm:$0xf]
      %v463 = vld [vmem:[%s1 + $0x1ac] sm:$0xf]
      %v464 = vld [vmem:[%s1 + $0x1b0] sm:$0xf]
      %v465 = vld [vmem:[%s1 + $0x1b4] sm:$0xf]
      %v466 = vld [vmem:[%s1 + $0x1b8] sm:$0xf]
      %v467 = vld [vmem:[%s1 + $0x1bc] sm:$0xf]
      %v468 = vld [vmem:[%s1 + $0x1c0] sm:$0xf]
      %v469 = vld [vmem:[%s1 + $0x1c4] sm:$0xf]
      %v470 = vld [vmem:[%s1 + $0x1c8] sm:$0xf]
      %v471 = vld [vmem:[%s1 + $0x1cc] sm:$0xf]
      %v472 = vld [vmem:[%s1 + $0x1d0] sm:$0xf]
      %v473 = vld [vmem:[%s1 + $0x1d4] sm:$0xf]
      %v474 = vld [vmem:[%s1 + $0x1d8] sm:$0xf]
      %v475 = vld [vmem:[%s1 + $0x1dc] sm:$0xf]
      %v476 = vld [vmem:[%s1 + $0x1e0] sm:$0xf]
      %v477 = vld [vmem:[%s1 + $0x1e4] sm:$0xf]
      %v478 = vld [vmem:[%s1 + $0x1e8] sm:$0xf]
      %v479 = vld [vmem:[%s1 + $0x1ec] sm:$0xf]
      %v480 = vld [vmem:[%s1 + $0x1f0] sm:$0xf]
      %v481 = vld [vmem:[%s1 + $0x1f4] sm:$0xf]
      %v482 = vld [vmem:[%s1 + $0x1f8] sm:$0xf]
      %v483 = vld [vmem:[%s1 + $0x1fc] sm:$0xf]
      %v484 = vld [vmem:[%s2] sm:$0x1]
      %v486 = vlaneseq
      %v487 = vshrl.u32 %v486, 7
      %v488 = vsub.s32 0, %v487
      %v489 = vrot.slane %v484, %v488
      %v619 = vunpack.c.l.b16 %v356
      %v620 = vunpack.c.l.b16 %v357
      %v621 = vunpack.c.l.b16 %v358
      %v622 = vunpack.c.l.b16 %v359
      %v623 = vunpack.c.l.b16 %v360
      %v624 = vunpack.c.l.b16 %v361
      %v625 = vunpack.c.l.b16 %v362
      %v626 = vunpack.c.l.b16 %v363
      %v627 = vunpack.c.l.b16 %v364
      %v628 = vunpack.c.l.b16 %v365
      %v629 = vunpack.c.l.b16 %v366
      %v630 = vunpack.c.l.b16 %v367
      %v631 = vunpack.c.l.b16 %v368
      %v632 = vunpack.c.l.b16 %v369
      %v633 = vunpack.c.l.b16 %v370
      %v634 = vunpack.c.l.b16 %v371
      %v635 = vunpack.c.l.b16 %v372
      %v636 = vunpack.c.l.b16 %v373
      %v637 = vunpack.c.l.b16 %v374
      %v638 = vunpack.c.l.b16 %v375
      %v639 = vunpack.c.l.b16 %v376
      %v640 = vunpack.c.l.b16 %v377
      %v641 = vunpack.c.l.b16 %v378
      %v642 = vunpack.c.l.b16 %v379
      %v643 = vunpack.c.l.b16 %v380
      %v644 = vunpack.c.l.b16 %v381
      %v645 = vunpack.c.l.b16 %v382
      %v646 = vunpack.c.l.b16 %v383
      %v647 = vunpack.c.l.b16 %v384
      %v648 = vunpack.c.l.b16 %v385
      %v649 = vunpack.c.l.b16 %v386
      %v650 = vunpack.c.l.b16 %v387
      %v651 = vunpack.c.l.b16 %v388
      %v652 = vunpack.c.l.b16 %v389
      %v653 = vunpack.c.l.b16 %v390
      %v654 = vunpack.c.l.b16 %v391
      %v655 = vunpack.c.l.b16 %v392
      %v656 = vunpack.c.l.b16 %v393
      %v657 = vunpack.c.l.b16 %v394
      %v658 = vunpack.c.l.b16 %v395
      %v659 = vunpack.c.l.b16 %v396
      %v660 = vunpack.c.l.b16 %v397
      %v661 = vunpack.c.l.b16 %v398
      %v662 = vunpack.c.l.b16 %v399
      %v663 = vunpack.c.l.b16 %v400
      %v664 = vunpack.c.l.b16 %v401
      %v665 = vunpack.c.l.b16 %v402
      %v666 = vunpack.c.l.b16 %v403
      %v667 = vunpack.c.l.b16 %v404
      %v668 = vunpack.c.l.b16 %v405
      %v669 = vunpack.c.l.b16 %v406
      %v670 = vunpack.c.l.b16 %v407
      %v671 = vunpack.c.l.b16 %v408
      %v672 = vunpack.c.l.b16 %v409
      %v673 = vunpack.c.l.b16 %v410
      %v674 = vunpack.c.l.b16 %v411
      %v675 = vunpack.c.l.b16 %v412
      %v676 = vunpack.c.l.b16 %v413
      %v677 = vunpack.c.l.b16 %v414
      %v678 = vunpack.c.l.b16 %v415
      %v679 = vunpack.c.l.b16 %v416
      %v680 = vunpack.c.l.b16 %v417
      %v681 = vunpack.c.l.b16 %v418
      %v682 = vunpack.c.l.b16 %v419
      %v683 = vunpack.c.l.b16 %v420
      %v684 = vunpack.c.l.b16 %v421
      %v685 = vunpack.c.l.b16 %v422
      %v686 = vunpack.c.l.b16 %v423
      %v687 = vunpack.c.l.b16 %v424
      %v688 = vunpack.c.l.b16 %v425
      %v689 = vunpack.c.l.b16 %v426
      %v690 = vunpack.c.l.b16 %v427
      %v691 = vunpack.c.l.b16 %v428
      %v692 = vunpack.c.l.b16 %v429
      %v693 = vunpack.c.l.b16 %v430
      %v694 = vunpack.c.l.b16 %v431
      %v695 = vunpack.c.l.b16 %v432
      %v696 = vunpack.c.l.b16 %v433
      %v697 = vunpack.c.l.b16 %v434
      %v698 = vunpack.c.l.b16 %v435
      %v699 = vunpack.c.l.b16 %v436
      %v700 = vunpack.c.l.b16 %v437
      %v701 = vunpack.c.l.b16 %v438
      %v702 = vunpack.c.l.b16 %v439
      %v703 = vunpack.c.l.b16 %v440
      %v704 = vunpack.c.l.b16 %v441
      %v705 = vunpack.c.l.b16 %v442
      %v706 = vunpack.c.l.b16 %v443
      %v707 = vunpack.c.l.b16 %v444
      %v708 = vunpack.c.l.b16 %v445
      %v709 = vunpack.c.l.b16 %v446
      %v710 = vunpack.c.l.b16 %v447
      %v711 = vunpack.c.l.b16 %v448
      %v712 = vunpack.c.l.b16 %v449
      %v713 = vunpack.c.l.b16 %v450
      %v714 = vunpack.c.l.b16 %v451
      %v715 = vunpack.c.l.b16 %v452
      %v716 = vunpack.c.l.b16 %v453
      %v717 = vunpack.c.l.b16 %v454
      %v718 = vunpack.c.l.b16 %v455
      %v719 = vunpack.c.l.b16 %v456
      %v720 = vunpack.c.l.b16 %v457
      %v721 = vunpack.c.l.b16 %v458
      %v722 = vunpack.c.l.b16 %v459
      %v723 = vunpack.c.l.b16 %v460
      %v724 = vunpack.c.l.b16 %v461
      %v725 = vunpack.c.l.b16 %v462
      %v726 = vunpack.c.l.b16 %v463
      %v727 = vunpack.c.l.b16 %v464
      %v728 = vunpack.c.l.b16 %v465
      %v729 = vunpack.c.l.b16 %v466
      %v730 = vunpack.c.l.b16 %v467
      %v731 = vunpack.c.l.b16 %v468
      %v732 = vunpack.c.l.b16 %v469
      %v733 = vunpack.c.l.b16 %v470
      %v734 = vunpack.c.l.b16 %v471
      %v735 = vunpack.c.l.b16 %v472
      %v736 = vunpack.c.l.b16 %v473
      %v737 = vunpack.c.l.b16 %v474
      %v738 = vunpack.c.l.b16 %v475
      %v739 = vunpack.c.l.b16 %v476
      %v740 = vunpack.c.l.b16 %v477
      %v741 = vunpack.c.l.b16 %v478
      %v742 = vunpack.c.l.b16 %v479
      %v743 = vunpack.c.l.b16 %v480
      %v744 = vunpack.c.l.b16 %v481
      %v745 = vunpack.c.l.b16 %v482
      %v746 = vunpack.c.l.b16 %v483
      %v747 = vpack.c.b16 %v620, %v619
      %v748 = vpack.c.b16 %v622, %v621
      %v749 = vpack.c.b16 %v624, %v623
      %v750 = vpack.c.b16 %v626, %v625
      %v751 = vpack.c.b16 %v628, %v627
      %v752 = vpack.c.b16 %v630, %v629
      %v753 = vpack.c.b16 %v632, %v631
      %v754 = vpack.c.b16 %v634, %v633
      %v755 = vpack.c.b16 %v636, %v635
      %v756 = vpack.c.b16 %v638, %v637
      %v757 = vpack.c.b16 %v640, %v639
      %v758 = vpack.c.b16 %v642, %v641
      %v759 = vpack.c.b16 %v644, %v643
      %v760 = vpack.c.b16 %v646, %v645
      %v761 = vpack.c.b16 %v648, %v647
      %v762 = vpack.c.b16 %v650, %v649
      %v763 = vpack.c.b16 %v652, %v651
      %v764 = vpack.c.b16 %v654, %v653
      %v765 = vpack.c.b16 %v656, %v655
      %v766 = vpack.c.b16 %v658, %v657
      %v767 = vpack.c.b16 %v660, %v659
      %v768 = vpack.c.b16 %v662, %v661
      %v769 = vpack.c.b16 %v664, %v663
      %v770 = vpack.c.b16 %v666, %v665
      %v771 = vpack.c.b16 %v668, %v667
      %v772 = vpack.c.b16 %v670, %v669
      %v773 = vpack.c.b16 %v672, %v671
      %v774 = vpack.c.b16 %v674, %v673
      %v775 = vpack.c.b16 %v676, %v675
      %v776 = vpack.c.b16 %v678, %v677
      %v777 = vpack.c.b16 %v680, %v679
      %v778 = vpack.c.b16 %v682, %v681
      %v779 = vpack.c.b16 %v684, %v683
      %v780 = vpack.c.b16 %v686, %v685
      %v781 = vpack.c.b16 %v688, %v687
      %v782 = vpack.c.b16 %v690, %v689
      %v783 = vpack.c.b16 %v692, %v691
      %v784 = vpack.c.b16 %v694, %v693
      %v785 = vpack.c.b16 %v696, %v695
      %v786 = vpack.c.b16 %v698, %v697
      %v787 = vpack.c.b16 %v700, %v699
      %v788 = vpack.c.b16 %v702, %v701
      %v789 = vpack.c.b16 %v704, %v703
      %v790 = vpack.c.b16 %v706, %v705
      %v791 = vpack.c.b16 %v708, %v707
      %v792 = vpack.c.b16 %v710, %v709
      %v793 = vpack.c.b16 %v712, %v711
      %v794 = vpack.c.b16 %v714, %v713
      %v795 = vpack.c.b16 %v716, %v715
      %v796 = vpack.c.b16 %v718, %v717
      %v797 = vpack.c.b16 %v720, %v719
      %v798 = vpack.c.b16 %v722, %v721
      %v799 = vpack.c.b16 %v724, %v723
      %v800 = vpack.c.b16 %v726, %v725
      %v801 = vpack.c.b16 %v728, %v727
      %v802 = vpack.c.b16 %v730, %v729
      %v803 = vpack.c.b16 %v732, %v731
      %v804 = vpack.c.b16 %v734, %v733
      %v805 = vpack.c.b16 %v736, %v735
      %v806 = vpack.c.b16 %v738, %v737
      %v807 = vpack.c.b16 %v740, %v739
      %v808 = vpack.c.b16 %v742, %v741
      %v809 = vpack.c.b16 %v744, %v743
      %v810 = vpack.c.b16 %v746, %v745
      %875 = vmatprep.subr.bf16.mxu0 0
      %876 = vmatpush1.bf16.msra.mxu0 %v747
      %877 = vmatprep.subr.bf16.mxu0 0
      %878 = vmatpush1.bf16.msra.mxu0 %v748
      %879 = vmatprep.subr.bf16.mxu0 0
      %880 = vmatpush1.bf16.msra.mxu0 %v749
      %881 = vmatprep.subr.bf16.mxu0 0
      %882 = vmatpush1.bf16.msra.mxu0 %v750
      %883 = vmatprep.subr.bf16.mxu0 0
      %884 = vmatpush1.bf16.msra.mxu0 %v751
      %885 = vmatprep.subr.bf16.mxu0 0
      %886 = vmatpush1.bf16.msra.mxu0 %v752
      %887 = vmatprep.subr.bf16.mxu0 0
      %888 = vmatpush1.bf16.msra.mxu0 %v753
      %889 = vmatprep.subr.bf16.mxu0 0
      %890 = vmatpush1.bf16.msra.mxu0 %v754
      %891 = vmatprep.subr.bf16.mxu0 0
      %892 = vmatpush1.bf16.msra.mxu0 %v755
      %893 = vmatprep.subr.bf16.mxu0 0
      %894 = vmatpush1.bf16.msra.mxu0 %v756
      %895 = vmatprep.subr.bf16.mxu0 0
      %896 = vmatpush1.bf16.msra.mxu0 %v757
      %897 = vmatprep.subr.bf16.mxu0 0
      %898 = vmatpush1.bf16.msra.mxu0 %v758
      %899 = vmatprep.subr.bf16.mxu0 0
      %900 = vmatpush1.bf16.msra.mxu0 %v759
      %901 = vmatprep.subr.bf16.mxu0 0
      %902 = vmatpush1.bf16.msra.mxu0 %v760
      %903 = vmatprep.subr.bf16.mxu0 0
      %904 = vmatpush1.bf16.msra.mxu0 %v761
      %905 = vmatprep.subr.bf16.mxu0 0
      %906 = vmatpush1.bf16.msra.mxu0 %v762
      %907 = vmatprep.mubr.bf16.mxu0 %v201
      %908 = vmatmul.mubr.bf16.gmra.mrb[0].mxu0 %v200
      %v909 = vpop.f32.mrb[0].mxu0
      %v910 = vadd.f32 %v489, %v909
      %v911 = vpop.f32.mrb[0].mxu0
      %v912 = vpop.f32.mrb[0].mxu0
      %v913 = vadd.f32 %v489, %v912
      %v914 = vpop.f32.mrb[0].mxu0
      %915 = vmatprep.mubr.bf16.mxu0 %v203
      %916 = vmatmul.mubr.bf16.gmra.mrb[0].mxu0 %v202
      %v917 = vpop.f32.mrb[0].mxu0
      %v918 = vadd.f32 %v489, %v917
      %v919 = vpop.f32.mrb[0].mxu0
      %v920 = vpop.f32.mrb[0].mxu0
      %v921 = vadd.f32 %v489, %v920
      %v922 = vpop.f32.mrb[0].mxu0
      %923 = vmatprep.mubr.bf16.mxu0 %v205
      %924 = vmatmul.mubr.bf16.gmra.mrb[0].mxu0 %v204
      %v925 = vpop.f32.mrb[0].mxu0
      %v926 = vadd.f32 %v489, %v925
      %v927 = vpop.f32.mrb[0].mxu0
      %v928 = vpop.f32.mrb[0].mxu0
      %v929 = vadd.f32 %v489, %v928
      %v930 = vpop.f32.mrb[0].mxu0
      %931 = vdwg.mxu0
      %932 = vmatprep.subr.bf16.mxu0 0
      %933 = vmatpush1.bf16.msra.mxu0 %v763
      %934 = vmatprep.subr.bf16.mxu0 0
      %935 = vmatpush1.bf16.msra.mxu0 %v764
      %936 = vmatprep.subr.bf16.mxu0 0
      %937 = vmatpush1.bf16.msra.mxu0 %v765
      %938 = vmatprep.subr.bf16.mxu0 0
      %939 = vmatpush1.bf16.msra.mxu0 %v766
      %940 = vmatprep.subr.bf16.mxu0 0
      %941 = vmatpush1.bf16.msra.mxu0 %v767
      %942 = vmatprep.subr.bf16.mxu0 0
      %943 = vmatpush1.bf16.msra.mxu0 %v768
      %944 = vmatprep.subr.bf16.mxu0 0
      %945 = vmatpush1.bf16.msra.mxu0 %v769
      %946 = vmatprep.subr.bf16.mxu0 0
      %947 = vmatpush1.bf16.msra.mxu0 %v770
      %948 = vmatprep.subr.bf16.mxu0 0
      %949 = vmatpush1.bf16.msra.mxu0 %v771
      %950 = vmatprep.subr.bf16.mxu0 0
      %951 = vmatpush1.bf16.msra.mxu0 %v772
      %952 = vmatprep.subr.bf16.mxu0 0
      %953 = vmatpush1.bf16.msra.mxu0 %v773
      %954 = vmatprep.subr.bf16.mxu0 0
      %955 = vmatpush1.bf16.msra.mxu0 %v774
      %956 = vmatprep.subr.bf16.mxu0 0
      %957 = vmatpush1.bf16.msra.mxu0 %v775
      %958 = vmatprep.subr.bf16.mxu0 0
      %959 = vmatpush1.bf16.msra.mxu0 %v776
      %960 = vmatprep.subr.bf16.mxu0 0
      %961 = vmatpush1.bf16.msra.mxu0 %v777
      %962 = vmatprep.subr.bf16.mxu0 0
      %963 = vmatpush1.bf16.msra.mxu0 %v778
      %964 = vmatprep.mubr.bf16.mxu0 %v241
      %965 = vmatmul.mubr.bf16.gmra.mrb[0].mxu0 %v229
      %v966 = vpop.f32.mrb[0].mxu0
      %v967 = vadd.f32 %v910, %v966
      %v968 = vpop.f32.mrb[0].mxu0
      %v969 = vpop.f32.mrb[0].mxu0
      %v970 = vadd.f32 %v913, %v969
      %v971 = vpop.f32.mrb[0].mxu0
      %972 = vmatprep.mubr.bf16.mxu0 %v257
      %973 = vmatmul.mubr.bf16.gmra.mrb[0].mxu0 %v249
      %v974 = vpop.f32.mrb[0].mxu0
      %v975 = vadd.f32 %v918, %v974
      %v976 = vpop.f32.mrb[0].mxu0
      %v977 = vpop.f32.mrb[0].mxu0
      %v978 = vadd.f32 %v921, %v977
      %v979 = vpop.f32.mrb[0].mxu0
      %980 = vmatprep.mubr.bf16.mxu0 %v263
      %981 = vmatmul.mubr.bf16.gmra.mrb[0].mxu0 %v260
      %v982 = vpop.f32.mrb[0].mxu0
      %v983 = vadd.f32 %v926, %v982
      %v984 = vpop.f32.mrb[0].mxu0
      %v985 = vpop.f32.mrb[0].mxu0
      %v986 = vadd.f32 %v929, %v985
      %v987 = vpop.f32.mrb[0].mxu0
      %988 = vdwg.mxu0
      %989 = vmatprep.subr.bf16.mxu0 0
      %990 = vmatpush1.bf16.msra.mxu0 %v779
      %991 = vmatprep.subr.bf16.mxu0 0
      %992 = vmatpush1.bf16.msra.mxu0 %v780
      %993 = vmatprep.subr.bf16.mxu0 0
      %994 = vmatpush1.bf16.msra.mxu0 %v781
      %995 = vmatprep.subr.bf16.mxu0 0
      %996 = vmatpush1.bf16.msra.mxu0 %v782
      %997 = vmatprep.subr.bf16.mxu0 0
      %998 = vmatpush1.bf16.msra.mxu0 %v783
      %999 = vmatprep.subr.bf16.mxu0 0
      %1000 = vmatpush1.bf16.msra.mxu0 %v784
      %1001 = vmatprep.subr.bf16.mxu0 0
      %1002 = vmatpush1.bf16.msra.mxu0 %v785
      %1003 = vmatprep.subr.bf16.mxu0 0
      %1004 = vmatpush1.bf16.msra.mxu0 %v786
      %1005 = vmatprep.subr.bf16.mxu0 0
      %1006 = vmatpush1.bf16.msra.mxu0 %v787
      %1007 = vmatprep.subr.bf16.mxu0 0
      %1008 = vmatpush1.bf16.msra.mxu0 %v788
      %1009 = vmatprep.subr.bf16.mxu0 0
      %1010 = vmatpush1.bf16.msra.mxu0 %v789
      %1011 = vmatprep.subr.bf16.mxu0 0
      %1012 = vmatpush1.bf16.msra.mxu0 %v790
      %1013 = vmatprep.subr.bf16.mxu0 0
      %1014 = vmatpush1.bf16.msra.mxu0 %v791
      %1015 = vmatprep.subr.bf16.mxu0 0
      %1016 = vmatpush1.bf16.msra.mxu0 %v792
      %1017 = vmatprep.subr.bf16.mxu0 0
      %1018 = vmatpush1.bf16.msra.mxu0 %v793
      %1019 = vmatprep.subr.bf16.mxu0 0
      %1020 = vmatpush1.bf16.msra.mxu0 %v794
      %1021 = vmatprep.mubr.bf16.mxu0 %v309
      %1022 = vmatmul.mubr.bf16.gmra.mrb[0].mxu0 %v297
      %v1023 = vpop.f32.mrb[0].mxu0
      %v1024 = vadd.f32 %v967, %v1023
      %v1025 = vpop.f32.mrb[0].mxu0
      %v1026 = vpop.f32.mrb[0].mxu0
      %v1027 = vadd.f32 %v970, %v1026
      %v1028 = vpop.f32.mrb[0].mxu0
      %1029 = vmatprep.mubr.bf16.mxu0 %v327
      %1030 = vmatmul.mubr.bf16.gmra.mrb[0].mxu0 %v318
      %v1031 = vpop.f32.mrb[0].mxu0
      %v1032 = vadd.f32 %v975, %v1031
      %v1033 = vpop.f32.mrb[0].mxu0
      %v1034 = vpop.f32.mrb[0].mxu0
      %v1035 = vadd.f32 %v978, %v1034
      %v1036 = vpop.f32.mrb[0].mxu0
      %1037 = vmatprep.mubr.bf16.mxu0 %v337
      %1038 = vmatmul.mubr.bf16.gmra.mrb[0].mxu0 %v332
      %v1039 = vpop.f32.mrb[0].mxu0
      %v1040 = vadd.f32 %v983, %v1039
      %v1041 = vpop.f32.mrb[0].mxu0
      %v1042 = vpop.f32.mrb[0].mxu0
      %v1043 = vadd.f32 %v986, %v1042
      %v1044 = vpop.f32.mrb[0].mxu0
      %1045 = vdwg.mxu0
      %1046 = vmatprep.subr.bf16.mxu0 0
      %1047 = vmatpush1.bf16.msra.mxu0 %v795
      %1048 = vmatprep.subr.bf16.mxu0 0
      %1049 = vmatpush1.bf16.msra.mxu0 %v796
      %1050 = vmatprep.subr.bf16.mxu0 0
      %1051 = vmatpush1.bf16.msra.mxu0 %v797
      %1052 = vmatprep.subr.bf16.mxu0 0
      %1053 = vmatpush1.bf16.msra.mxu0 %v798
      %1054 = vmatprep.subr.bf16.mxu0 0
      %1055 = vmatpush1.bf16.msra.mxu0 %v799
      %1056 = vmatprep.subr.bf16.mxu0 0
      %1057 = vmatpush1.bf16.msra.mxu0 %v800
      %1058 = vmatprep.subr.bf16.mxu0 0
      %1059 = vmatpush1.bf16.msra.mxu0 %v801
      %1060 = vmatprep.subr.bf16.mxu0 0
      %1061 = vmatpush1.bf16.msra.mxu0 %v802
      %1062 = vmatprep.subr.bf16.mxu0 0
      %1063 = vmatpush1.bf16.msra.mxu0 %v803
      %1064 = vmatprep.subr.bf16.mxu0 0
      %1065 = vmatpush1.bf16.msra.mxu0 %v804
      %1066 = vmatprep.subr.bf16.mxu0 0
      %1067 = vmatpush1.bf16.msra.mxu0 %v805
      %1068 = vmatprep.subr.bf16.mxu0 0
      %1069 = vmatpush1.bf16.msra.mxu0 %v806
      %1070 = vmatprep.subr.bf16.mxu0 0
      %1071 = vmatpush1.bf16.msra.mxu0 %v807
      %1072 = vmatprep.subr.bf16.mxu0 0
      %1073 = vmatpush1.bf16.msra.mxu0 %v808
      %1074 = vmatprep.subr.bf16.mxu0 0
      %1075 = vmatpush1.bf16.msra.mxu0 %v809
      %1076 = vmatprep.subr.bf16.mxu0 0
      %1077 = vmatpush1.bf16.msra.mxu0 %v810
      %1078 = vmatprep.mubr.bf16.mxu0 %v345
      %1079 = vmatmul.mubr.bf16.gmra.mrb[0].mxu0 %v344
      %v1080 = vpop.f32.mrb[0].mxu0
      %v1081 = vadd.f32 %v1024, %v1080
      %v1082 = vpop.f32.mrb[0].mxu0
      %v1083 = vpop.f32.mrb[0].mxu0
      %v1084 = vadd.f32 %v1027, %v1083
      %v1085 = vpop.f32.mrb[0].mxu0
      %1086 = vmatprep.mubr.bf16.mxu0 %v347
      %1087 = vmatmul.mubr.bf16.gmra.mrb[0].mxu0 %v346
      %v1088 = vpop.f32.mrb[0].mxu0
      %v1089 = vadd.f32 %v1032, %v1088
      %v1090 = vpop.f32.mrb[0].mxu0
      %v1091 = vpop.f32.mrb[0].mxu0
      %v1092 = vadd.f32 %v1035, %v1091
      %v1093 = vpop.f32.mrb[0].mxu0
      %1094 = vmatprep.mubr.bf16.mxu0 %v349
      %1095 = vmatmul.mubr.bf16.gmra.mrb[0].mxu0 %v348
      %v1096 = vpop.f32.mrb[0].mxu0
      %v1097 = vadd.f32 %v1040, %v1096
      %v1098 = vpop.f32.mrb[0].mxu0
      %v1099 = vpop.f32.mrb[0].mxu0
      %v1100 = vadd.f32 %v1043, %v1099
      %v1101 = vpop.f32.mrb[0].mxu0
      %1102 = vdwg.mxu0
      %v1103 = vmax.f32 %v1081, 0.0
      %v1104 = vmax.f32 %v1084, 0.0
      %v1105 = vmax.f32 %v1089, 0.0
      %v1106 = vmax.f32 %v1092, 0.0
      %v1107 = vmax.f32 %v1097, 0.0
      %v1108 = vmax.f32 %v1100, 0.0
      %v1109 = vpack.c.bf16 %v1104, %v1103
      %v1110 = vpack.c.bf16 %v1106, %v1105
      %v1111 = vpack.c.bf16 %v1108, %v1107
      %v1115 = vunpack.c.l.b16 %v1109
      %v1116 = vunpack.c.h.b16 %v1109
      %v1117 = vunpack.c.l.b16 %v1110
      %v1118 = vunpack.c.h.b16 %v1110
      %v1119 = vunpack.c.l.b16 %v1111
      %v1120 = vunpack.c.h.b16 %v1111
      %v1121 = vpack.c.b16 %v1115, %v1115
      %v1122 = vpack.c.b16 %v1116, %v1116
      %v1123 = vpack.c.b16 %v1117, %v1117
      %v1124 = vpack.c.b16 %v1118, %v1118
      %v1125 = vpack.c.b16 %v1119, %v1119
      %v1126 = vpack.c.b16 %v1120, %v1120
      %1133 = vst [vmem:[%s170] sm:$0xf] %v1121
      %1134 = vst [vmem:[%s170 + $0x4] sm:$0xf] %v1122
      %1135 = vst [vmem:[%s170 + $0x8] sm:$0xf] %v1123
      %1136 = vst [vmem:[%s170 + $0xc] sm:$0xf] %v1124
      %1137 = vst [vmem:[%s170 + $0x10] sm:$0xf] %v1125
      %1138 = vst [vmem:[%s170 + $0x14] sm:$0x1] %v1126
      %p1139 = scmp.lt.s32.totalorder %s14, 1
      %s1140 = scalar_select %p1139, %s14, 1
      %s1141 = smul.addr %s1140, 6
      %s1142 = smul.addr %s1141, 4
      %s1143 = scalar_lea.vmem %s3, %s1142
      // Predicated region
      $region33: #{conv_encoder_forward.7} parent=31 // pred_check
        %p1144 = pneg %p100
      $region34: #{conv_encoder_forward.7} parent=31 // pred_check_branch
        %1146 = sbr.rel (%p1144) target = $region36
      $region35: #{conv_encoder_forward.7} parent=31 // pred_region
        _
      $region36: #{conv_encoder_forward.7} parent=31 // pred_fallthru
        _
    $region32: #{conv_encoder_forward.7} parent=5 // pred_fallthru
      _
    %p1147 = scmp.le.s32.totalorder 2, %s9
    // Predicated region
    $region37: #{conv_encoder_forward.7} parent=5 // pred_check
      %p1148 = pneg %p1147
    $region38: #{conv_encoder_forward.7} parent=5 // pred_check_branch
      %1150 = sbr.rel (%p1148) target = $region40
    $region39: #{conv_encoder_forward.7} parent=5 // pred_region
      %s1151 = ssub.s32 %s9, 2
      // Predicated region
      $region41: #{conv_encoder_forward.7} parent=39 // pred_check
        %p1152 = pneg %p106
      $region42: #{conv_encoder_forward.7} parent=39 // pred_check_branch
        %1154 = sbr.rel (%p1152) target = $region44
      $region43: #{conv_encoder_forward.7} parent=39 // pred_region
        %p1155 = scmp.lt.s32.totalorder %s15, 1
        %s1156 = scalar_select %p1155, %s15, 1
        %s1157 = smul.addr %s1156, 6
        %s1158 = smul.addr %s1157, 4
        %s1159 = scalar_lea.vmem %s3, %s1158
      $region44: #{conv_encoder_forward.7} parent=39 // pred_fallthru
        _
    $region40: #{conv_encoder_forward.7} parent=5 // pred_fallthru
      _
  $region6: #{conv_encoder_forward.7} parent=0 // loop_footer
    %s13 = sadd.s32 1, %s9
  $region7: #{conv_encoder_forward.7} parent=0 // loop_footer_branch
    %8 = sbr.rel target = $region3
  $region8: #{conv_encoder_forward.7} parent=0 // loop_exit
    _

// kernel: conv_encoder_forward.9
$region0: #{conv_encoder_forward.9}
  #allocation0 [shape = 'u32[]', space=smem, size = 0x4, offset = 0x4, fixed_abs, tag = 'smem constant byte address 0x4 - core index']
  #allocation1 [shape = 'u32[144,128]{1,0:T(1,128)}', space=vmem, size = 0x12000, scoped, tag = 'internal scratch']
  %s0 = inlined_call_operand.vmem [shape: bf16[2,1024], index: 0, kind: input, shape index: {}]
  %s1 = inlined_call_operand.vmem [shape: bf16[1024,128], index: 1, kind: input, shape index: {}]
  %s2 = inlined_call_operand.vmem [shape: f32[1,128], index: 2, kind: input, shape index: {}]
  %s3 = inlined_call_operand.hbm [shape: f32[2,128], index: 3, kind: output, shape index: {}]
  %s4 = sld [smem:[#allocation0]]
  $region22: #{conv_encoder_forward.9} parent=0
    _
  %s6 = ssub.s32 1, %s4
  %s7 = scalar_select 0, %s6, %s4
  $region1: #{conv_encoder_forward.9} parent=0
    #allocation2 [shape = 'u8[1024]{0}', space=vmem, size = 0x400, scoped, tag = 'output window, operand 0, single buffered']
    #allocation3 [shape = 's32[1]{0}', space=sflag, size = 0x4, scoped, tag = 'scoped memory for conv_encoder_forward.9']
    %8 = vsyncpa [#allocation3], 0
    // Predicated region
    $region2: #{conv_encoder_forward.9} parent=1 // pred_check
      _
    $region3: #{conv_encoder_forward.9} parent=1 // pred_check_branch
      %10 = sbr.rel (0) target = $region5
    $region4: #{conv_encoder_forward.9} parent=1 // pred_region
      _
    $region5: #{conv_encoder_forward.9} parent=1 // pred_fallthru
      _
    // Predicated region
    $region6: #{conv_encoder_forward.9} parent=1 // pred_check
      _
    $region7: #{conv_encoder_forward.9} parent=1 // pred_check_branch
      %12 = sbr.rel (0) target = $region9
    $region8: #{conv_encoder_forward.9} parent=1 // pred_region
      _
    $region9: #{conv_encoder_forward.9} parent=1 // pred_fallthru
      _
    // Predicated region
    $region10: #{conv_encoder_forward.9} parent=1 // pred_check
      _
    $region11: #{conv_encoder_forward.9} parent=1 // pred_check_branch
      %14 = sbr.rel (0) target = $region13
    $region12: #{conv_encoder_forward.9} parent=1 // pred_region
      _
    $region13: #{conv_encoder_forward.9} parent=1 // pred_fallthru
      _
    %v16 = vld [vmem:[%s0] sm:$0xff]
    %v17 = vld [vmem:[%s1] sm:$0xf]
    %v18 = vld [vmem:[%s1 + $0x4] sm:$0xf]
    %v19 = vld [vmem:[%s1 + $0x8] sm:$0xf]
    %v20 = vld [vmem:[%s1 + $0xc] sm:$0xf]
    %v21 = vld [vmem:[%s1 + $0x10] sm:$0xf]
    %v22 = vld [vmem:[%s1 + $0x14] sm:$0xf]
    %v23 = vld [vmem:[%s1 + $0x18] sm:$0xf]
    %v24 = vld [vmem:[%s1 + $0x1c] sm:$0xf]
    %v25 = vld [vmem:[%s1 + $0x20] sm:$0xf]
    %v26 = vld [vmem:[%s1 + $0x24] sm:$0xf]
    %v27 = vld [vmem:[%s1 + $0x28] sm:$0xf]
    %v28 = vld [vmem:[%s1 + $0x2c] sm:$0xf]
    %v29 = vld [vmem:[%s1 + $0x30] sm:$0xf]
    %v30 = vld [vmem:[%s1 + $0x34] sm:$0xf]
    %v31 = vld [vmem:[%s1 + $0x38] sm:$0xf]
    %v32 = vld [vmem:[%s1 + $0x3c] sm:$0xf]
    %v33 = vld [vmem:[%s1 + $0x40] sm:$0xf]
    %v34 = vld [vmem:[%s1 + $0x44] sm:$0xf]
    %v35 = vld [vmem:[%s1 + $0x48] sm:$0xf]
    %v36 = vld [vmem:[%s1 + $0x4c] sm:$0xf]
    %v37 = vld [vmem:[%s1 + $0x50] sm:$0xf]
    %v38 = vld [vmem:[%s1 + $0x54] sm:$0xf]
    %v39 = vld [vmem:[%s1 + $0x58] sm:$0xf]
    %v40 = vld [vmem:[%s1 + $0x5c] sm:$0xf]
    %v41 = vld [vmem:[%s1 + $0x60] sm:$0xf]
    %v42 = vld [vmem:[%s1 + $0x64] sm:$0xf]
    %v43 = vld [vmem:[%s1 + $0x68] sm:$0xf]
    %v44 = vld [vmem:[%s1 + $0x6c] sm:$0xf]
    %v45 = vld [vmem:[%s1 + $0x70] sm:$0xf]
    %v46 = vld [vmem:[%s1 + $0x74] sm:$0xf]
    %v47 = vld [vmem:[%s1 + $0x78] sm:$0xf]
    %v48 = vld [vmem:[%s1 + $0x7c] sm:$0xf]
    %v49 = vld [vmem:[%s1 + $0x80] sm:$0xf]
    %v50 = vld [vmem:[%s1 + $0x84] sm:$0xf]
    %v51 = vld [vmem:[%s1 + $0x88] sm:$0xf]
    %v52 = vld [vmem:[%s1 + $0x8c] sm:$0xf]
    %v53 = vld [vmem:[%s1 + $0x90] sm:$0xf]
    %v54 = vld [vmem:[%s1 + $0x94] sm:$0xf]
    %v55 = vld [vmem:[%s1 + $0x98] sm:$0xf]
    %v56 = vld [vmem:[%s1 + $0x9c] sm:$0xf]
    %v57 = vld [vmem:[%s1 + $0xa0] sm:$0xf]
    %v58 = vld [vmem:[%s1 + $0xa4] sm:$0xf]
    %v59 = vld [vmem:[%s1 + $0xa8] sm:$0xf]
    %v60 = vld [vmem:[%s1 + $0xac] sm:$0xf]
    %v61 = vld [vmem:[%s1 + $0xb0] sm:$0xf]
    %v62 = vld [vmem:[%s1 + $0xb4] sm:$0xf]
    %v63 = vld [vmem:[%s1 + $0xb8] sm:$0xf]
    %v64 = vld [vmem:[%s1 + $0xbc] sm:$0xf]
    %v65 = vld [vmem:[%s1 + $0xc0] sm:$0xf]
    %v66 = vld [vmem:[%s1 + $0xc4] sm:$0xf]
    %v67 = vld [vmem:[%s1 + $0xc8] sm:$0xf]
    %v68 = vld [vmem:[%s1 + $0xcc] sm:$0xf]
    %v69 = vld [vmem:[%s1 + $0xd0] sm:$0xf]
    %v70 = vld [vmem:[%s1 + $0xd4] sm:$0xf]
    %v71 = vld [vmem:[%s1 + $0xd8] sm:$0xf]
    %v72 = vld [vmem:[%s1 + $0xdc] sm:$0xf]
    %v73 = vld [vmem:[%s1 + $0xe0] sm:$0xf]
    %v74 = vld [vmem:[%s1 + $0xe4] sm:$0xf]
    %v75 = vld [vmem:[%s1 + $0xe8] sm:$0xf]
    %v76 = vld [vmem:[%s1 + $0xec] sm:$0xf]
    %v77 = vld [vmem:[%s1 + $0xf0] sm:$0xf]
    %v78 = vld [vmem:[%s1 + $0xf4] sm:$0xf]
    %v79 = vld [vmem:[%s1 + $0xf8] sm:$0xf]
    %v80 = vld [vmem:[%s1 + $0xfc] sm:$0xf]
    %v81 = vld [vmem:[%s1 + $0x100] sm:$0xf]
    %v82 = vld [vmem:[%s1 + $0x104] sm:$0xf]
    %v83 = vld [vmem:[%s1 + $0x108] sm:$0xf]
    %v84 = vld [vmem:[%s1 + $0x10c] sm:$0xf]
    %v85 = vld [vmem:[%s1 + $0x110] sm:$0xf]
    %v86 = vld [vmem:[%s1 + $0x114] sm:$0xf]
    %v87 = vld [vmem:[%s1 + $0x118] sm:$0xf]
    %v88 = vld [vmem:[%s1 + $0x11c] sm:$0xf]
    %v89 = vld [vmem:[%s1 + $0x120] sm:$0xf]
    %v90 = vld [vmem:[%s1 + $0x124] sm:$0xf]
    %v91 = vld [vmem:[%s1 + $0x128] sm:$0xf]
    %v92 = vld [vmem:[%s1 + $0x12c] sm:$0xf]
    %v93 = vld [vmem:[%s1 + $0x130] sm:$0xf]
    %v94 = vld [vmem:[%s1 + $0x134] sm:$0xf]
    %v95 = vld [vmem:[%s1 + $0x138] sm:$0xf]
    %v96 = vld [vmem:[%s1 + $0x13c] sm:$0xf]
    %v97 = vld [vmem:[%s1 + $0x140] sm:$0xf]
    %v98 = vld [vmem:[%s1 + $0x144] sm:$0xf]
    %v99 = vld [vmem:[%s1 + $0x148] sm:$0xf]
    %v100 = vld [vmem:[%s1 + $0x14c] sm:$0xf]
    %v101 = vld [vmem:[%s1 + $0x150] sm:$0xf]
    %v102 = vld [vmem:[%s1 + $0x154] sm:$0xf]
    %v103 = vld [vmem:[%s1 + $0x158] sm:$0xf]
    %v104 = vld [vmem:[%s1 + $0x15c] sm:$0xf]
    %v105 = vld [vmem:[%s1 + $0x160] sm:$0xf]
    %v106 = vld [vmem:[%s1 + $0x164] sm:$0xf]
    %v107 = vld [vmem:[%s1 + $0x168] sm:$0xf]
    %v108 = vld [vmem:[%s1 + $0x16c] sm:$0xf]
    %v109 = vld [vmem:[%s1 + $0x170] sm:$0xf]
    %v110 = vld [vmem:[%s1 + $0x174] sm:$0xf]
    %v111 = vld [vmem:[%s1 + $0x178] sm:$0xf]
    %v112 = vld [vmem:[%s1 + $0x17c] sm:$0xf]
    %v113 = vld [vmem:[%s1 + $0x180] sm:$0xf]
    %v114 = vld [vmem:[%s1 + $0x184] sm:$0xf]
    %v115 = vld [vmem:[%s1 + $0x188] sm:$0xf]
    %v116 = vld [vmem:[%s1 + $0x18c] sm:$0xf]
    %v117 = vld [vmem:[%s1 + $0x190] sm:$0xf]
    %v118 = vld [vmem:[%s1 + $0x194] sm:$0xf]
    %v119 = vld [vmem:[%s1 + $0x198] sm:$0xf]
    %v120 = vld [vmem:[%s1 + $0x19c] sm:$0xf]
    %v121 = vld [vmem:[%s1 + $0x1a0] sm:$0xf]
    %v122 = vld [vmem:[%s1 + $0x1a4] sm:$0xf]
    %v123 = vld [vmem:[%s1 + $0x1a8] sm:$0xf]
    %v124 = vld [vmem:[%s1 + $0x1ac] sm:$0xf]
    %v125 = vld [vmem:[%s1 + $0x1b0] sm:$0xf]
    %v126 = vld [vmem:[%s1 + $0x1b4] sm:$0xf]
    %v127 = vld [vmem:[%s1 + $0x1b8] sm:$0xf]
    %v128 = vld [vmem:[%s1 + $0x1bc] sm:$0xf]
    %v129 = vld [vmem:[%s1 + $0x1c0] sm:$0xf]
    %v130 = vld [vmem:[%s1 + $0x1c4] sm:$0xf]
    %v131 = vld [vmem:[%s1 + $0x1c8] sm:$0xf]
    %v132 = vld [vmem:[%s1 + $0x1cc] sm:$0xf]
    %v133 = vld [vmem:[%s1 + $0x1d0] sm:$0xf]
    %v134 = vld [vmem:[%s1 + $0x1d4] sm:$0xf]
    %v135 = vld [vmem:[%s1 + $0x1d8] sm:$0xf]
    %v136 = vld [vmem:[%s1 + $0x1dc] sm:$0xf]
    %v137 = vld [vmem:[%s1 + $0x1e0] sm:$0xf]
    %v138 = vld [vmem:[%s1 + $0x1e4] sm:$0xf]
    %v139 = vld [vmem:[%s1 + $0x1e8] sm:$0xf]
    %v140 = vld [vmem:[%s1 + $0x1ec] sm:$0xf]
    %v141 = vld [vmem:[%s1 + $0x1f0] sm:$0xf]
    %v142 = vld [vmem:[%s1 + $0x1f4] sm:$0xf]
    %v143 = vld [vmem:[%s1 + $0x1f8] sm:$0xf]
    %v144 = vld [vmem:[%s1 + $0x1fc] sm:$0xf]
    %v145 = vld [vmem:[%s2] sm:$0x1]
    %v147 = vlaneseq
    %v148 = vshrl.u32 %v147, 7
    %v149 = vsub.s32 0, %v148
    %v150 = vrot.slane %v145, %v149
    %v153 = vcombine.high %v16, %v16
    %v155 = vunpack.c.l.s4 1966171168
    %v156 = vunpack.c.0.s8 %v155
    %v157 = vlaneseq
    %v158 = vshrl.u32 %v157, 7
    %v159 = vsub.s32 %v156, %v158
    %v160 = vrot.slane %v16, %v159
    %v162 = vunpack.c.l.s4 1966171168
    %v163 = vunpack.c.0.s8 %v162
    %v164 = vlaneseq
    %v165 = vshrl.u32 %v164, 7
    %v166 = vsub.s32 %v163, %v165
    %v167 = vrot.slane %v153, %v166
    %v168 = vcombine.high %v160, %v160
    %v169 = vcombine.high %v167, %v167
    %v171 = vunpack.c.l.s4 1966171168
    %v172 = vunpack.c.0.s8 %v171
    %v173 = vlaneseq
    %v174 = vshrl.u32 %v173, 7
    %v175 = vsub.s32 %v172, %v174
    %v176 = vrot.slane %v160, %v175
    %v178 = vunpack.c.l.s4 1966171168
    %v179 = vunpack.c.0.s8 %v178
    %v180 = vlaneseq
    %v181 = vshrl.u32 %v180, 7
    %v182 = vsub.s32 %v179, %v181
    %v183 = vrot.slane %v167, %v182
    %v185 = vunpack.c.l.s4 1966171168
    %v186 = vunpack.c.0.s8 %v185
    %v187 = vlaneseq
    %v188 = vshrl.u32 %v187, 7
    %v189 = vsub.s32 %v186, %v188
    %v190 = vrot.slane %v168, %v189
    %v192 = vunpack.c.l.s4 1966171168
    %v193 = vunpack.c.0.s8 %v192
    %v194 = vlaneseq
    %v195 = vshrl.u32 %v194, 7
    %v196 = vsub.s32 %v193, %v195
    %v197 = vrot.slane %v169, %v196
    %v198 = vcombine.high %v176, %v176
    %v199 = vcombine.high %v183, %v183
    %v200 = vcombine.high %v190, %v190
    %v201 = vcombine.high %v197, %v197
    %v338 = vunpack.c.l.b16 %v17
    %v339 = vunpack.c.l.b16 %v18
    %v340 = vunpack.c.l.b16 %v19
    %v341 = vunpack.c.l.b16 %v20
    %v342 = vunpack.c.l.b16 %v21
    %v343 = vunpack.c.l.b16 %v22
    %v344 = vunpack.c.l.b16 %v23
    %v345 = vunpack.c.l.b16 %v24
    %v346 = vunpack.c.l.b16 %v25
    %v347 = vunpack.c.l.b16 %v26
    %v348 = vunpack.c.l.b16 %v27
    %v349 = vunpack.c.l.b16 %v28
    %v350 = vunpack.c.l.b16 %v29
    %v351 = vunpack.c.l.b16 %v30
    %v352 = vunpack.c.l.b16 %v31
    %v353 = vunpack.c.l.b16 %v32
    %v354 = vunpack.c.l.b16 %v33
    %v355 = vunpack.c.l.b16 %v34
    %v356 = vunpack.c.l.b16 %v35
    %v357 = vunpack.c.l.b16 %v36
    %v358 = vunpack.c.l.b16 %v37
    %v359 = vunpack.c.l.b16 %v38
    %v360 = vunpack.c.l.b16 %v39
    %v361 = vunpack.c.l.b16 %v40
    %v362 = vunpack.c.l.b16 %v41
    %v363 = vunpack.c.l.b16 %v42
    %v364 = vunpack.c.l.b16 %v43
    %v365 = vunpack.c.l.b16 %v44
    %v366 = vunpack.c.l.b16 %v45
    %v367 = vunpack.c.l.b16 %v46
    %v368 = vunpack.c.l.b16 %v47
    %v369 = vunpack.c.l.b16 %v48
    %v370 = vunpack.c.l.b16 %v49
    %v371 = vunpack.c.l.b16 %v50
    %v372 = vunpack.c.l.b16 %v51
    %v373 = vunpack.c.l.b16 %v52
    %v374 = vunpack.c.l.b16 %v53
    %v375 = vunpack.c.l.b16 %v54
    %v376 = vunpack.c.l.b16 %v55
    %v377 = vunpack.c.l.b16 %v56
    %v378 = vunpack.c.l.b16 %v57
    %v379 = vunpack.c.l.b16 %v58
    %v380 = vunpack.c.l.b16 %v59
    %v381 = vunpack.c.l.b16 %v60
    %v382 = vunpack.c.l.b16 %v61
    %v383 = vunpack.c.l.b16 %v62
    %v384 = vunpack.c.l.b16 %v63
    %v385 = vunpack.c.l.b16 %v64
    %v386 = vunpack.c.l.b16 %v65
    %v387 = vunpack.c.l.b16 %v66
    %v388 = vunpack.c.l.b16 %v67
    %v389 = vunpack.c.l.b16 %v68
    %v390 = vunpack.c.l.b16 %v69
    %v391 = vunpack.c.l.b16 %v70
    %v392 = vunpack.c.l.b16 %v71
    %v393 = vunpack.c.l.b16 %v72
    %v394 = vunpack.c.l.b16 %v73
    %v395 = vunpack.c.l.b16 %v74
    %v396 = vunpack.c.l.b16 %v75
    %v397 = vunpack.c.l.b16 %v76
    %v398 = vunpack.c.l.b16 %v77
    %v399 = vunpack.c.l.b16 %v78
    %v400 = vunpack.c.l.b16 %v79
    %v401 = vunpack.c.l.b16 %v80
    %v402 = vunpack.c.l.b16 %v81
    %v403 = vunpack.c.l.b16 %v82
    %v404 = vunpack.c.l.b16 %v83
    %v405 = vunpack.c.l.b16 %v84
    %v406 = vunpack.c.l.b16 %v85
    %v407 = vunpack.c.l.b16 %v86
    %v408 = vunpack.c.l.b16 %v87
    %v409 = vunpack.c.l.b16 %v88
    %v410 = vunpack.c.l.b16 %v89
    %v411 = vunpack.c.l.b16 %v90
    %v412 = vunpack.c.l.b16 %v91
    %v413 = vunpack.c.l.b16 %v92
    %v414 = vunpack.c.l.b16 %v93
    %v415 = vunpack.c.l.b16 %v94
    %v416 = vunpack.c.l.b16 %v95
    %v417 = vunpack.c.l.b16 %v96
    %v418 = vunpack.c.l.b16 %v97
    %v419 = vunpack.c.l.b16 %v98
    %v420 = vunpack.c.l.b16 %v99
    %v421 = vunpack.c.l.b16 %v100
    %v422 = vunpack.c.l.b16 %v101
    %v423 = vunpack.c.l.b16 %v102
    %v424 = vunpack.c.l.b16 %v103
    %v425 = vunpack.c.l.b16 %v104
    %v426 = vunpack.c.l.b16 %v105
    %v427 = vunpack.c.l.b16 %v106
    %v428 = vunpack.c.l.b16 %v107
    %v429 = vunpack.c.l.b16 %v108
    %v430 = vunpack.c.l.b16 %v109
    %v431 = vunpack.c.l.b16 %v110
    %v432 = vunpack.c.l.b16 %v111
    %v433 = vunpack.c.l.b16 %v112
    %v434 = vunpack.c.l.b16 %v113
    %v435 = vunpack.c.l.b16 %v114
    %v436 = vunpack.c.l.b16 %v115
    %v437 = vunpack.c.l.b16 %v116
    %v438 = vunpack.c.l.b16 %v117
    %v439 = vunpack.c.l.b16 %v118
    %v440 = vunpack.c.l.b16 %v119
    %v441 = vunpack.c.l.b16 %v120
    %v442 = vunpack.c.l.b16 %v121
    %v443 = vunpack.c.l.b16 %v122
    %v444 = vunpack.c.l.b16 %v123
    %v445 = vunpack.c.l.b16 %v124
    %v446 = vunpack.c.l.b16 %v125
    %v447 = vunpack.c.l.b16 %v126
    %v448 = vunpack.c.l.b16 %v127
    %v449 = vunpack.c.l.b16 %v128
    %v450 = vunpack.c.l.b16 %v129
    %v451 = vunpack.c.l.b16 %v130
    %v452 = vunpack.c.l.b16 %v131
    %v453 = vunpack.c.l.b16 %v132
    %v454 = vunpack.c.l.b16 %v133
    %v455 = vunpack.c.l.b16 %v134
    %v456 = vunpack.c.l.b16 %v135
    %v457 = vunpack.c.l.b16 %v136
    %v458 = vunpack.c.l.b16 %v137
    %v459 = vunpack.c.l.b16 %v138
    %v460 = vunpack.c.l.b16 %v139
    %v461 = vunpack.c.l.b16 %v140
    %v462 = vunpack.c.l.b16 %v141
    %v463 = vunpack.c.l.b16 %v142
    %v464 = vunpack.c.l.b16 %v143
    %v465 = vunpack.c.l.b16 %v144
    %v466 = vpack.c.b16 %v339, %v338
    %v467 = vpack.c.b16 %v341, %v340
    %v468 = vpack.c.b16 %v343, %v342
    %v469 = vpack.c.b16 %v345, %v344
    %v470 = vpack.c.b16 %v347, %v346
    %v471 = vpack.c.b16 %v349, %v348
    %v472 = vpack.c.b16 %v351, %v350
    %v473 = vpack.c.b16 %v353, %v352
    %v474 = vpack.c.b16 %v355, %v354
    %v475 = vpack.c.b16 %v357, %v356
    %v476 = vpack.c.b16 %v359, %v358
    %v477 = vpack.c.b16 %v361, %v360
    %v478 = vpack.c.b16 %v363, %v362
    %v479 = vpack.c.b16 %v365, %v364
    %v480 = vpack.c.b16 %v367, %v366
    %v481 = vpack.c.b16 %v369, %v368
    %v482 = vpack.c.b16 %v371, %v370
    %v483 = vpack.c.b16 %v373, %v372
    %v484 = vpack.c.b16 %v375, %v374
    %v485 = vpack.c.b16 %v377, %v376
    %v486 = vpack.c.b16 %v379, %v378
    %v487 = vpack.c.b16 %v381, %v380
    %v488 = vpack.c.b16 %v383, %v382
    %v489 = vpack.c.b16 %v385, %v384
    %v490 = vpack.c.b16 %v387, %v386
    %v491 = vpack.c.b16 %v389, %v388
    %v492 = vpack.c.b16 %v391, %v390
    %v493 = vpack.c.b16 %v393, %v392
    %v494 = vpack.c.b16 %v395, %v394
    %v495 = vpack.c.b16 %v397, %v396
    %v496 = vpack.c.b16 %v399, %v398
    %v497 = vpack.c.b16 %v401, %v400
    %v498 = vpack.c.b16 %v403, %v402
    %v499 = vpack.c.b16 %v405, %v404
    %v500 = vpack.c.b16 %v407, %v406
    %v501 = vpack.c.b16 %v409, %v408
    %v502 = vpack.c.b16 %v411, %v410
    %v503 = vpack.c.b16 %v413, %v412
    %v504 = vpack.c.b16 %v415, %v414
    %v505 = vpack.c.b16 %v417, %v416
    %v506 = vpack.c.b16 %v419, %v418
    %v507 = vpack.c.b16 %v421, %v420
    %v508 = vpack.c.b16 %v423, %v422
    %v509 = vpack.c.b16 %v425, %v424
    %v510 = vpack.c.b16 %v427, %v426
    %v511 = vpack.c.b16 %v429, %v428
    %v512 = vpack.c.b16 %v431, %v430
    %v513 = vpack.c.b16 %v433, %v432
    %v514 = vpack.c.b16 %v435, %v434
    %v515 = vpack.c.b16 %v437, %v436
    %v516 = vpack.c.b16 %v439, %v438
    %v517 = vpack.c.b16 %v441, %v440
    %v518 = vpack.c.b16 %v443, %v442
    %v519 = vpack.c.b16 %v445, %v444
    %v520 = vpack.c.b16 %v447, %v446
    %v521 = vpack.c.b16 %v449, %v448
    %v522 = vpack.c.b16 %v451, %v450
    %v523 = vpack.c.b16 %v453, %v452
    %v524 = vpack.c.b16 %v455, %v454
    %v525 = vpack.c.b16 %v457, %v456
    %v526 = vpack.c.b16 %v459, %v458
    %v527 = vpack.c.b16 %v461, %v460
    %v528 = vpack.c.b16 %v463, %v462
    %v529 = vpack.c.b16 %v465, %v464
    %594 = vmatprep.subr.bf16.mxu0 0
    %595 = vmatpush1.bf16.msra.mxu0 %v466
    %596 = vmatprep.subr.bf16.mxu0 0
    %597 = vmatpush1.bf16.msra.mxu0 %v467
    %598 = vmatprep.subr.bf16.mxu0 0
    %599 = vmatpush1.bf16.msra.mxu0 %v468
    %600 = vmatprep.subr.bf16.mxu0 0
    %601 = vmatpush1.bf16.msra.mxu0 %v469
    %602 = vmatprep.subr.bf16.mxu0 0
    %603 = vmatpush1.bf16.msra.mxu0 %v470
    %604 = vmatprep.subr.bf16.mxu0 0
    %605 = vmatpush1.bf16.msra.mxu0 %v471
    %606 = vmatprep.subr.bf16.mxu0 0
    %607 = vmatpush1.bf16.msra.mxu0 %v472
    %608 = vmatprep.subr.bf16.mxu0 0
    %609 = vmatpush1.bf16.msra.mxu0 %v473
    %610 = vmatprep.subr.bf16.mxu0 0
    %611 = vmatpush1.bf16.msra.mxu0 %v474
    %612 = vmatprep.subr.bf16.mxu0 0
    %613 = vmatpush1.bf16.msra.mxu0 %v475
    %614 = vmatprep.subr.bf16.mxu0 0
    %615 = vmatpush1.bf16.msra.mxu0 %v476
    %616 = vmatprep.subr.bf16.mxu0 0
    %617 = vmatpush1.bf16.msra.mxu0 %v477
    %618 = vmatprep.subr.bf16.mxu0 0
    %619 = vmatpush1.bf16.msra.mxu0 %v478
    %620 = vmatprep.subr.bf16.mxu0 0
    %621 = vmatpush1.bf16.msra.mxu0 %v479
    %622 = vmatprep.subr.bf16.mxu0 0
    %623 = vmatpush1.bf16.msra.mxu0 %v480
    %624 = vmatprep.subr.bf16.mxu0 0
    %625 = vmatpush1.bf16.msra.mxu0 %v481
    %626 = vmatprep.mubr.bf16.mxu0 %v190
    %627 = vmatmul.mubr.bf16.gmra.mrb[0].mxu0 %v176
    %v628 = vpop.f32.mrb[0].mxu0
    %v629 = vadd.f32 %v150, %v628
    %v630 = vpop.f32.mrb[0].mxu0
    %v631 = vpop.f32.mrb[0].mxu0
    %v632 = vpop.f32.mrb[0].mxu0
    %633 = vdwg.mxu0
    %634 = vmatprep.subr.bf16.mxu0 0
    %635 = vmatpush1.bf16.msra.mxu0 %v482
    %636 = vmatprep.subr.bf16.mxu0 0
    %637 = vmatpush1.bf16.msra.mxu0 %v483
    %638 = vmatprep.subr.bf16.mxu0 0
    %639 = vmatpush1.bf16.msra.mxu0 %v484
    %640 = vmatprep.subr.bf16.mxu0 0
    %641 = vmatpush1.bf16.msra.mxu0 %v485
    %642 = vmatprep.subr.bf16.mxu0 0
    %643 = vmatpush1.bf16.msra.mxu0 %v486
    %644 = vmatprep.subr.bf16.mxu0 0
    %645 = vmatpush1.bf16.msra.mxu0 %v487
    %646 = vmatprep.subr.bf16.mxu0 0
    %647 = vmatpush1.bf16.msra.mxu0 %v488
    %648 = vmatprep.subr.bf16.mxu0 0
    %649 = vmatpush1.bf16.msra.mxu0 %v489
    %650 = vmatprep.subr.bf16.mxu0 0
    %651 = vmatpush1.bf16.msra.mxu0 %v490
    %652 = vmatprep.subr.bf16.mxu0 0
    %653 = vmatpush1.bf16.msra.mxu0 %v491
    %654 = vmatprep.subr.bf16.mxu0 0
    %655 = vmatpush1.bf16.msra.mxu0 %v492
    %656 = vmatprep.subr.bf16.mxu0 0
    %657 = vmatpush1.bf16.msra.mxu0 %v493
    %658 = vmatprep.subr.bf16.mxu0 0
    %659 = vmatpush1.bf16.msra.mxu0 %v494
    %660 = vmatprep.subr.bf16.mxu0 0
    %661 = vmatpush1.bf16.msra.mxu0 %v495
    %662 = vmatprep.subr.bf16.mxu0 0
    %663 = vmatpush1.bf16.msra.mxu0 %v496
    %664 = vmatprep.subr.bf16.mxu0 0
    %665 = vmatpush1.bf16.msra.mxu0 %v497
    %666 = vmatprep.mubr.bf16.mxu0 %v200
    %667 = vmatmul.mubr.bf16.gmra.mrb[0].mxu0 %v198
    %v668 = vpop.f32.mrb[0].mxu0
    %v669 = vadd.f32 %v629, %v668
    %v670 = vpop.f32.mrb[0].mxu0
    %v671 = vpop.f32.mrb[0].mxu0
    %v672 = vpop.f32.mrb[0].mxu0
    %673 = vdwg.mxu0
    %674 = vmatprep.subr.bf16.mxu0 0
    %675 = vmatpush1.bf16.msra.mxu0 %v498
    %676 = vmatprep.subr.bf16.mxu0 0
    %677 = vmatpush1.bf16.msra.mxu0 %v499
    %678 = vmatprep.subr.bf16.mxu0 0
    %679 = vmatpush1.bf16.msra.mxu0 %v500
    %680 = vmatprep.subr.bf16.mxu0 0
    %681 = vmatpush1.bf16.msra.mxu0 %v501
    %682 = vmatprep.subr.bf16.mxu0 0
    %683 = vmatpush1.bf16.msra.mxu0 %v502
    %684 = vmatprep.subr.bf16.mxu0 0
    %685 = vmatpush1.bf16.msra.mxu0 %v503
    %686 = vmatprep.subr.bf16.mxu0 0
    %687 = vmatpush1.bf16.msra.mxu0 %v504
    %688 = vmatprep.subr.bf16.mxu0 0
    %689 = vmatpush1.bf16.msra.mxu0 %v505
    %690 = vmatprep.subr.bf16.mxu0 0
    %691 = vmatpush1.bf16.msra.mxu0 %v506
    %692 = vmatprep.subr.bf16.mxu0 0
    %693 = vmatpush1.bf16.msra.mxu0 %v507
    %694 = vmatprep.subr.bf16.mxu0 0
    %695 = vmatpush1.bf16.msra.mxu0 %v508
    %696 = vmatprep.subr.bf16.mxu0 0
    %697 = vmatpush1.bf16.msra.mxu0 %v509
    %698 = vmatprep.subr.bf16.mxu0 0
    %699 = vmatpush1.bf16.msra.mxu0 %v510
    %700 = vmatprep.subr.bf16.mxu0 0
    %701 = vmatpush1.bf16.msra.mxu0 %v511
    %702 = vmatprep.subr.bf16.mxu0 0
    %703 = vmatpush1.bf16.msra.mxu0 %v512
    %704 = vmatprep.subr.bf16.mxu0 0
    %705 = vmatpush1.bf16.msra.mxu0 %v513
    %706 = vmatprep.mubr.bf16.mxu0 %v197
    %707 = vmatmul.mubr.bf16.gmra.mrb[0].mxu0 %v183
    %v708 = vpop.f32.mrb[0].mxu0
    %v709 = vadd.f32 %v669, %v708
    %v710 = vpop.f32.mrb[0].mxu0
    %v711 = vpop.f32.mrb[0].mxu0
    %v712 = vpop.f32.mrb[0].mxu0
    %713 = vdwg.mxu0
    %714 = vmatprep.subr.bf16.mxu0 0
    %715 = vmatpush1.bf16.msra.mxu0 %v514
    %716 = vmatprep.subr.bf16.mxu0 0
    %717 = vmatpush1.bf16.msra.mxu0 %v515
    %718 = vmatprep.subr.bf16.mxu0 0
    %719 = vmatpush1.bf16.msra.mxu0 %v516
    %720 = vmatprep.subr.bf16.mxu0 0
    %721 = vmatpush1.bf16.msra.mxu0 %v517
    %722 = vmatprep.subr.bf16.mxu0 0
    %723 = vmatpush1.bf16.msra.mxu0 %v518
    %724 = vmatprep.subr.bf16.mxu0 0
    %725 = vmatpush1.bf16.msra.mxu0 %v519
    %726 = vmatprep.subr.bf16.mxu0 0
    %727 = vmatpush1.bf16.msra.mxu0 %v520
    %728 = vmatprep.subr.bf16.mxu0 0
    %729 = vmatpush1.bf16.msra.mxu0 %v521
    %730 = vmatprep.subr.bf16.mxu0 0
    %731 = vmatpush1.bf16.msra.mxu0 %v522
    %732 = vmatprep.subr.bf16.mxu0 0
    %733 = vmatpush1.bf16.msra.mxu0 %v523
    %734 = vmatprep.subr.bf16.mxu0 0
    %735 = vmatpush1.bf16.msra.mxu0 %v524
    %736 = vmatprep.subr.bf16.mxu0 0
    %737 = vmatpush1.bf16.msra.mxu0 %v525
    %738 = vmatprep.subr.bf16.mxu0 0
    %739 = vmatpush1.bf16.msra.mxu0 %v526
    %740 = vmatprep.subr.bf16.mxu0 0
    %741 = vmatpush1.bf16.msra.mxu0 %v527
    %742 = vmatprep.subr.bf16.mxu0 0
    %743 = vmatpush1.bf16.msra.mxu0 %v528
    %744 = vmatprep.subr.bf16.mxu0 0
    %745 = vmatpush1.bf16.msra.mxu0 %v529
    %746 = vmatprep.mubr.bf16.mxu0 %v201
    %747 = vmatmul.mubr.bf16.gmra.mrb[0].mxu0 %v199
    %v748 = vpop.f32.mrb[0].mxu0
    %v749 = vadd.f32 %v709, %v748
    %v750 = vpop.f32.mrb[0].mxu0
    %v751 = vpop.f32.mrb[0].mxu0
    %v752 = vpop.f32.mrb[0].mxu0
    %753 = vdwg.mxu0
    %754 = vst [vmem:[#allocation2] sm:$0x3] %v749
    // Predicated region
    $region14: #{conv_encoder_forward.9} parent=1 // pred_check
      _
    $region15: #{conv_encoder_forward.9} parent=1 // pred_check_branch
      %756 = sbr.rel (0) target = $region17
    $region16: #{conv_encoder_forward.9} parent=1 // pred_region
      %s758 = ssub.s32 32, 32
      %759 = vsyncadd [#allocation3], %s758
      %s761 = sshll.u32 [#allocation2], 4
      %s762 = int_to_ptr.vmem [resolvable:$true] %s761
      %764 = dma.vmem_to_hbm [thread:$0]  %s762, 32, %s3, [#allocation3]
    $region17: #{conv_encoder_forward.9} parent=1 // pred_fallthru
      _
    // Predicated region
    $region18: #{conv_encoder_forward.9} parent=1 // pred_check
      _
    $region19: #{conv_encoder_forward.9} parent=1 // pred_check_branch
      %766 = sbr.rel (0) target = $region21
    $region20: #{conv_encoder_forward.9} parent=1 // pred_region
      %767 = dma.done [#allocation3], 32
    $region21: #{conv_encoder_forward.9} parent=1 // pred_fallthru
      _
    %768 = vsyncpa [#allocation3], 1

// kernel: conv_encoder_forward.8
$region0: #{conv_encoder_forward.8}
  #allocation0 [shape = 'u32[]', space=smem, size = 0x4, offset = 0x4, fixed_abs, tag = 'smem constant byte address 0x4 - core index']
  #allocation1 [shape = 'u32[144,128]{1,0:T(1,128)}', space=vmem, size = 0x12000, scoped, tag = 'internal scratch']
  %s0 = inlined_call_operand.vmem [shape: bf16[2,10,512], index: 0, kind: input, shape index: {}]
  %s1 = inlined_call_operand.vmem [shape: bf16[2048,256], index: 1, kind: input, shape index: {}]
  %s2 = inlined_call_operand.vmem [shape: f32[1,256], index: 2, kind: input, shape index: {}]
  %s3 = inlined_call_operand.vmem [shape: bf16[2,6,256], index: 3, kind: output, shape index: {}]
  %s4 = sld [smem:[#allocation0]]
  $region45: #{conv_encoder_forward.8} parent=0
    _
  %s6 = ssub.s32 1, %s4
  %s7 = scalar_select 0, %s6, %s4
  loop: start=0, step=1, limit=4
  $region2: #{conv_encoder_forward.8} parent=0 // loop_pre_header
    _
  $region3: #{conv_encoder_forward.8} parent=0 // loop_header
    %s9 = sphi 0, %s13
    %p10 = scmp.ge.s32.totalorder %s9, 4
    %s19 = sphi 0, %s21
    %s22 = sphi 0, %s19
    %s23 = sphi 0, %s22
    %s39 = sphi 0, %s23
    %s43 = sphi 0, %s43
    %s45 = sphi 0, %s43
    %s46 = sphi 0, %s45
    %s60 = sphi 0, %s46
    %s64 = sphi 0, %s64
    %s66 = sphi 0, %s64
    %s67 = sphi 0, %s66
    %s81 = sphi 0, %s67
    %s87 = sphi 0, %s89
    %s90 = sphi 0, %s87
    %s91 = sphi 0, %s90
    %s107 = sphi 0, %s91
  $region4: #{conv_encoder_forward.8} parent=0 // loop_header_branch
    %12 = sbr.rel (%p10) target = $region8
  $region5: #{conv_encoder_forward.8} parent=0 // loop_body
    %s14 = ssub.s32 %s9, 1
    %s15 = ssub.s32 %s9, 2
    %s16 = sadd.s32 %s9, 1
    %s17 = ssub.s32 %s9, %s16
    %p18 = scmp.eq.s32.totalorder %s17, 0
    %s20 = sadd.s32 %s19, 1
    %s21 = scalar_select %p18, %s19, %s20
    %p24 = pneg %p18
    %p25 = scmp.eq.s32.totalorder %s9, 1
    %p26 = por %p24, %p25
    %p27 = scmp.ne.s32.totalorder %s19, %s22
    %p28 = scmp.eq.s32.totalorder %s9, 0
    %p29 = por %p27, %p28
    %p30 = scmp.ne.s32.totalorder %s19, %s22
    %p31 = scmp.eq.s32.totalorder %s14, 1
    %p32 = por %p30, %p31
    %p33 = scmp.ne.s32.totalorder %s22, %s23
    %p34 = scmp.eq.s32.totalorder %s14, 0
    %p35 = por %p33, %p34
    %p36 = scmp.ne.s32.totalorder %s22, %s23
    %p37 = scmp.eq.s32.totalorder %s15, 1
    %p38 = por %p36, %p37
    %p40 = scmp.ne.s32.totalorder %s23, %s39
    %p41 = scmp.eq.s32.totalorder %s15, 0
    %p42 = por %p40, %p41
    %s44 = sadd.s32 %s43, 1
    %p47 = scmp.eq.s32.totalorder %s9, 1
    %p48 = scmp.ne.s32.totalorder %s43, %s45
    %p49 = scmp.eq.s32.totalorder %s9, 0
    %p50 = por %p48, %p49
    %p51 = scmp.ne.s32.totalorder %s43, %s45
    %p52 = scmp.eq.s32.totalorder %s14, 1
    %p53 = por %p51, %p52
    %p54 = scmp.ne.s32.totalorder %s45, %s46
    %p55 = scmp.eq.s32.totalorder %s14, 0
    %p56 = por %p54, %p55
    %p57 = scmp.ne.s32.totalorder %s45, %s46
    %p58 = scmp.eq.s32.totalorder %s15, 1
    %p59 = por %p57, %p58
    %p61 = scmp.ne.s32.totalorder %s46, %s60
    %p62 = scmp.eq.s32.totalorder %s15, 0
    %p63 = por %p61, %p62
    %s65 = sadd.s32 %s64, 1
    %p68 = scmp.eq.s32.totalorder %s9, 1
    %p69 = scmp.ne.s32.totalorder %s64, %s66
    %p70 = scmp.eq.s32.totalorder %s9, 0
    %p71 = por %p69, %p70
    %p72 = scmp.ne.s32.totalorder %s64, %s66
    %p73 = scmp.eq.s32.totalorder %s14, 1
    %p74 = por %p72, %p73
    %p75 = scmp.ne.s32.totalorder %s66, %s67
    %p76 = scmp.eq.s32.totalorder %s14, 0
    %p77 = por %p75, %p76
    %p78 = scmp.ne.s32.totalorder %s66, %s67
    %p79 = scmp.eq.s32.totalorder %s15, 1
    %p80 = por %p78, %p79
    %p82 = scmp.ne.s32.totalorder %s67, %s81
    %p83 = scmp.eq.s32.totalorder %s15, 0
    %p84 = por %p82, %p83
    %s85 = ssub.s32 %s9, %s16
    %p86 = scmp.eq.s32.totalorder %s85, 0
    %s88 = sadd.s32 %s87, 1
    %s89 = scalar_select %p86, %s87, %s88
    %p92 = pneg %p86
    %p93 = scmp.eq.s32.totalorder %s9, 1
    %p94 = por %p92, %p93
    %p95 = scmp.ne.s32.totalorder %s87, %s90
    %p96 = scmp.eq.s32.totalorder %s9, 0
    %p97 = por %p95, %p96
    %p98 = scmp.ne.s32.totalorder %s87, %s90
    %p99 = scmp.eq.s32.totalorder %s14, 1
    %p100 = por %p98, %p99
    %p101 = scmp.ne.s32.totalorder %s90, %s91
    %p102 = scmp.eq.s32.totalorder %s14, 0
    %p103 = por %p101, %p102
    %p104 = scmp.ne.s32.totalorder %s90, %s91
    %p105 = scmp.eq.s32.totalorder %s15, 1
    %p106 = por %p104, %p105
    %p108 = scmp.ne.s32.totalorder %s91, %s107
    %p109 = scmp.eq.s32.totalorder %s15, 0
    %p110 = por %p108, %p109
    %p111 = scmp.le.s32.totalorder 1, %s9
    %p112 = scmp.lt.s32.totalorder %s9, 3
    %p113 = pnand %p111, %p112
    %p114 = pneg %p113
    // Predicated region
    $region9: #{conv_encoder_forward.8} parent=5 // pred_check
      _
    $region10: #{conv_encoder_forward.8} parent=5 // pred_check_branch
      %116 = sbr.rel (%p113) target = $region12
    $region11: #{conv_encoder_forward.8} parent=5 // pred_region
      %s117 = ssub.s32 %s9, 1
      // Predicated region
      $region13: #{conv_encoder_forward.8} parent=11 // pred_check
        %p118 = pneg %p56
      $region14: #{conv_encoder_forward.8} parent=11 // pred_check_branch
        %120 = sbr.rel (%p118) target = $region16
      $region15: #{conv_encoder_forward.8} parent=11 // pred_region
        _
      $region16: #{conv_encoder_forward.8} parent=11 // pred_fallthru
        _
      // Predicated region
      $region17: #{conv_encoder_forward.8} parent=11 // pred_check
        %p121 = pneg %p77
      $region18: #{conv_encoder_forward.8} parent=11 // pred_check_branch
        %123 = sbr.rel (%p121) target = $region20
      $region19: #{conv_encoder_forward.8} parent=11 // pred_region
        _
      $region20: #{conv_encoder_forward.8} parent=11 // pred_fallthru
        _
    $region12: #{conv_encoder_forward.8} parent=5 // pred_fallthru
      _
    %p124 = scmp.lt.s32.totalorder %s9, 2
    // Predicated region
    $region21: #{conv_encoder_forward.8} parent=5 // pred_check
      %p125 = pneg %p124
    $region22: #{conv_encoder_forward.8} parent=5 // pred_check_branch
      %127 = sbr.rel (%p125) target = $region24
    $region23: #{conv_encoder_forward.8} parent=5 // pred_region
      // Predicated region
      $region25: #{conv_encoder_forward.8} parent=23 // pred_check
        %p128 = pneg %p29
      $region26: #{conv_encoder_forward.8} parent=23 // pred_check_branch
        %130 = sbr.rel (%p128) target = $region28
      $region27: #{conv_encoder_forward.8} parent=23 // pred_region
        %p131 = scmp.lt.s32.totalorder %s9, 1
        %s132 = scalar_select %p131, %s9, 1
        %s133 = smul.addr %s132, 8
        %s134 = smul.addr %s133, 4
        %s135 = scalar_lea.vmem %s0, %s134
      $region28: #{conv_encoder_forward.8} parent=23 // pred_fallthru
        _
    $region24: #{conv_encoder_forward.8} parent=5 // pred_fallthru
      _
    %p136 = scmp.le.s32.totalorder 1, %s9
    %p137 = scmp.lt.s32.totalorder %s9, 3
    %p138 = pnand %p136, %p137
    %p139 = pneg %p138
    // Predicated region
    $region29: #{conv_encoder_forward.8} parent=5 // pred_check
      _
    $region30: #{conv_encoder_forward.8} parent=5 // pred_check_branch
      %141 = sbr.rel (%p138) target = $region32
    $region31: #{conv_encoder_forward.8} parent=5 // pred_region
      %s142 = ssub.s32 %s9, 1
      %p143 = scmp.lt.s32.totalorder %s14, 1
      %s144 = scalar_select %p143, %s14, 1
      %s145 = smul.addr %s144, 8
      %s146 = smul.addr %s145, 4
      %s147 = scalar_lea.vmem %s0, %s146
      %p148 = pneg %p35
      %p149 = pneg %p32
      %p150 = pneg %p56
      %p151 = pneg %p53
      %p152 = pneg %p77
      %p153 = pneg %p74
      %p154 = pneg %p103
      %p155 = pneg %p100
      %p156 = scmp.lt.s32.totalorder %s14, 1
      %s157 = scalar_select %p156, %s14, 1
      %s158 = smul.addr %s157, 2
      %s159 = smul.addr %s158, 4
      %s160 = scalar_lea.vmem %s3, %s159
      %p161 = scmp.lt.s32.totalorder %s14, 1
      %s162 = scalar_select %p161, %s14, 1
      %s163 = smul.addr %s162, 8
      %s164 = smul.addr %s163, 4
      %s165 = scalar_lea.vmem %s0, %s164
      %p166 = scmp.lt.s32.totalorder %s14, 1
      %s167 = scalar_select %p166, %s14, 1
      %s168 = smul.addr %s167, 2
      %s169 = smul.addr %s168, 4
      %s170 = scalar_lea.vmem %s3, %s169
      %v171 = vld [vmem:[%s165] sm:$0x77]
      %v172 = vld [vmem:[%s165 + $0x8] sm:$0x77]
      %v173 = vld [vmem:[%s165] sm:$0xff]
      %v174 = vld [vmem:[%s165 + $0x8] sm:$0xff]
      %v175 = vld [vmem:[%s165] sm:$0xee]
      %v176 = vld [vmem:[%s165 + $0x8] sm:$0xee]
      %v177 = vld [vmem:[%s165 + $0x10] sm:$0x11]
      %v178 = vld [vmem:[%s165 + $0x18] sm:$0x11]
      %v179 = vld [vmem:[%s165] sm:$0xcc]
      %v180 = vld [vmem:[%s165 + $0x8] sm:$0xcc]
      %v183 = vunpack.c.l.b16 %v171
      %v184 = vunpack.c.h.b16 %v171
      %v185 = vunpack.c.l.b16 %v172
      %v186 = vunpack.c.h.b16 %v172
      %v187 = vpack.c.b16 %v183, %v183
      %v188 = vpack.c.b16 %v184, %v184
      %v189 = vpack.c.b16 %v185, %v185
      %v190 = vpack.c.b16 %v186, %v186
      %v197 = vunpack.c.l.b16 %v173
      %v198 = vunpack.c.h.b16 %v173
      %v199 = vunpack.c.l.b16 %v174
      %v200 = vunpack.c.h.b16 %v174
      %v201 = vpack.c.b16 %v197, %v197
      %v202 = vpack.c.b16 %v198, %v198
      %v203 = vpack.c.b16 %v199, %v199
      %v204 = vpack.c.b16 %v200, %v200
      %v206 = vshrl.u32 %v201, 16
      %v208 = vshll.u32 %v201, 16
      %v210 = vrot.slane %v208, 1
      %v211 = vor.u32 %v206, %v210
      %v213 = vshrl.u32 %v202, 16
      %v215 = vshll.u32 %v202, 16
      %v217 = vrot.slane %v215, 1
      %v218 = vor.u32 %v213, %v217
      %v220 = vshrl.u32 %v203, 16
      %v222 = vshll.u32 %v203, 16
      %v224 = vrot.slane %v222, 1
      %v225 = vor.u32 %v220, %v224
      %v227 = vshrl.u32 %v204, 16
      %v229 = vshll.u32 %v204, 16
      %v231 = vrot.slane %v229, 1
      %v232 = vor.u32 %v227, %v231
      %v241 = vunpack.c.l.b16 %v175
      %v242 = vunpack.c.h.b16 %v175
      %v243 = vunpack.c.l.b16 %v176
      %v244 = vunpack.c.h.b16 %v176
      %v245 = vunpack.c.l.b16 %v177
      %v246 = vunpack.c.h.b16 %v177
      %v247 = vunpack.c.l.b16 %v178
      %v248 = vunpack.c.h.b16 %v178
      %v249 = vpack.c.b16 %v245, %v241
      %v250 = vpack.c.b16 %v246, %v242
      %v251 = vpack.c.b16 %v247, %v243
      %v252 = vpack.c.b16 %v248, %v244
      %v254 = vshrl.u32 %v249, 16
      %v256 = vrot.slane %v254, 1
      %v257 = vshll.u32 %v249, 16
      %v259 = vrot.slane %v257, 2
      %v260 = vor.u32 %v256, %v259
      %v262 = vshrl.u32 %v250, 16
      %v264 = vrot.slane %v262, 1
      %v265 = vshll.u32 %v250, 16
      %v267 = vrot.slane %v265, 2
      %v268 = vor.u32 %v264, %v267
      %v270 = vshrl.u32 %v251, 16
      %v272 = vrot.slane %v270, 1
      %v273 = vshll.u32 %v251, 16
      %v275 = vrot.slane %v273, 2
      %v276 = vor.u32 %v272, %v275
      %v278 = vshrl.u32 %v252, 16
      %v280 = vrot.slane %v278, 1
      %v281 = vshll.u32 %v252, 16
      %v283 = vrot.slane %v281, 2
      %v284 = vor.u32 %v280, %v283
      %v291 = vunpack.c.l.b16 %v179
      %v292 = vunpack.c.h.b16 %v179
      %v293 = vunpack.c.l.b16 %v180
      %v294 = vunpack.c.h.b16 %v180
      %v295 = vpack.c.b16 %v245, %v291
      %v296 = vpack.c.b16 %v246, %v292
      %v297 = vpack.c.b16 %v247, %v293
      %v298 = vpack.c.b16 %v248, %v294
      %v299 = vrot.slane %v295, 2
      %v300 = vrot.slane %v296, 2
      %v301 = vrot.slane %v297, 2
      %v302 = vrot.slane %v298, 2
      %v307 = vld [vmem:[%s1] sm:$0xff]
      %v308 = vld [vmem:[%s1 + $0x8] sm:$0xff]
      %v309 = vld [vmem:[%s1 + $0x10] sm:$0xff]
      %v310 = vld [vmem:[%s1 + $0x18] sm:$0xff]
      %v311 = vld [vmem:[%s1 + $0x20] sm:$0xff]
      %v312 = vld [vmem:[%s1 + $0x28] sm:$0xff]
      %v313 = vld [vmem:[%s1 + $0x30] sm:$0xff]
      %v314 = vld [vmem:[%s1 + $0x38] sm:$0xff]
      %v315 = vld [vmem:[%s1 + $0x40] sm:$0xff]
      %v316 = vld [vmem:[%s1 + $0x48] sm:$0xff]
      %v317 = vld [vmem:[%s1 + $0x50] sm:$0xff]
      %v318 = vld [vmem:[%s1 + $0x58] sm:$0xff]
      %v319 = vld [vmem:[%s1 + $0x60] sm:$0xff]
      %v320 = vld [vmem:[%s1 + $0x68] sm:$0xff]
      %v321 = vld [vmem:[%s1 + $0x70] sm:$0xff]
      %v322 = vld [vmem:[%s1 + $0x78] sm:$0xff]
      %v323 = vld [vmem:[%s1 + $0x80] sm:$0xff]
      %v324 = vld [vmem:[%s1 + $0x88] sm:$0xff]
      %v325 = vld [vmem:[%s1 + $0x90] sm:$0xff]
      %v326 = vld [vmem:[%s1 + $0x98] sm:$0xff]
      %v327 = vld [vmem:[%s1 + $0xa0] sm:$0xff]
      %v328 = vld [vmem:[%s1 + $0xa8] sm:$0xff]
      %v329 = vld [vmem:[%s1 + $0xb0] sm:$0xff]
      %v330 = vld [vmem:[%s1 + $0xb8] sm:$0xff]
      %v331 = vld [vmem:[%s1 + $0xc0] sm:$0xff]
      %v332 = vld [vmem:[%s1 + $0xc8] sm:$0xff]
      %v333 = vld [vmem:[%s1 + $0xd0] sm:$0xff]
      %v334 = vld [vmem:[%s1 + $0xd8] sm:$0xff]
      %v335 = vld [vmem:[%s1 + $0xe0] sm:$0xff]
      %v336 = vld [vmem:[%s1 + $0xe8] sm:$0xff]
      %v337 = vld [vmem:[%s1 + $0xf0] sm:$0xff]
      %v338 = vld [vmem:[%s1 + $0xf8] sm:$0xff]
      %v339 = vld [vmem:[%s1 + $0x100] sm:$0xff]
      %v340 = vld [vmem:[%s1 + $0x108] sm:$0xff]
      %v341 = vld [vmem:[%s1 + $0x110] sm:$0xff]
      %v342 = vld [vmem:[%s1 + $0x118] sm:$0xff]
      %v343 = vld [vmem:[%s1 + $0x120] sm:$0xff]
      %v344 = vld [vmem:[%s1 + $0x128] sm:$0xff]
      %v345 = vld [vmem:[%s1 + $0x130] sm:$0xff]
      %v346 = vld [vmem:[%s1 + $0x138] sm:$0xff]
      %v347 = vld [vmem:[%s1 + $0x140] sm:$0xff]
      %v348 = vld [vmem:[%s1 + $0x148] sm:$0xff]
      %v349 = vld [vmem:[%s1 + $0x150] sm:$0xff]
      %v350 = vld [vmem:[%s1 + $0x158] sm:$0xff]
      %v351 = vld [vmem:[%s1 + $0x160] sm:$0xff]
      %v352 = vld [vmem:[%s1 + $0x168] sm:$0xff]
      %v353 = vld [vmem:[%s1 + $0x170] sm:$0xff]
      %v354 = vld [vmem:[%s1 + $0x178] sm:$0xff]
      %v355 = vld [vmem:[%s1 + $0x180] sm:$0xff]
      %v356 = vld [vmem:[%s1 + $0x188] sm:$0xff]
      %v357 = vld [vmem:[%s1 + $0x190] sm:$0xff]
      %v358 = vld [vmem:[%s1 + $0x198] sm:$0xff]
      %v359 = vld [vmem:[%s1 + $0x1a0] sm:$0xff]
      %v360 = vld [vmem:[%s1 + $0x1a8] sm:$0xff]
      %v361 = vld [vmem:[%s1 + $0x1b0] sm:$0xff]
      %v362 = vld [vmem:[%s1 + $0x1b8] sm:$0xff]
      %v363 = vld [vmem:[%s1 + $0x1c0] sm:$0xff]
      %v364 = vld [vmem:[%s1 + $0x1c8] sm:$0xff]
      %v365 = vld [vmem:[%s1 + $0x1d0] sm:$0xff]
      %v366 = vld [vmem:[%s1 + $0x1d8] sm:$0xff]
      %v367 = vld [vmem:[%s1 + $0x1e0] sm:$0xff]
      %v368 = vld [vmem:[%s1 + $0x1e8] sm:$0xff]
      %v369 = vld [vmem:[%s1 + $0x1f0] sm:$0xff]
      %v370 = vld [vmem:[%s1 + $0x1f8] sm:$0xff]
      %v371 = vld [vmem:[%s1 + $0x200] sm:$0xff]
      %v372 = vld [vmem:[%s1 + $0x208] sm:$0xff]
      %v373 = vld [vmem:[%s1 + $0x210] sm:$0xff]
      %v374 = vld [vmem:[%s1 + $0x218] sm:$0xff]
      %v375 = vld [vmem:[%s1 + $0x220] sm:$0xff]
      %v376 = vld [vmem:[%s1 + $0x228] sm:$0xff]
      %v377 = vld [vmem:[%s1 + $0x230] sm:$0xff]
      %v378 = vld [vmem:[%s1 + $0x238] sm:$0xff]
      %v379 = vld [vmem:[%s1 + $0x240] sm:$0xff]
      %v380 = vld [vmem:[%s1 + $0x248] sm:$0xff]
      %v381 = vld [vmem:[%s1 + $0x250] sm:$0xff]
      %v382 = vld [vmem:[%s1 + $0x258] sm:$0xff]
      %v383 = vld [vmem:[%s1 + $0x260] sm:$0xff]
      %v384 = vld [vmem:[%s1 + $0x268] sm:$0xff]
      %v385 = vld [vmem:[%s1 + $0x270] sm:$0xff]
      %v386 = vld [vmem:[%s1 + $0x278] sm:$0xff]
      %v387 = vld [vmem:[%s1 + $0x280] sm:$0xff]
      %v388 = vld [vmem:[%s1 + $0x288] sm:$0xff]
      %v389 = vld [vmem:[%s1 + $0x290] sm:$0xff]
      %v390 = vld [vmem:[%s1 + $0x298] sm:$0xff]
      %v391 = vld [vmem:[%s1 + $0x2a0] sm:$0xff]
      %v392 = vld [vmem:[%s1 + $0x2a8] sm:$0xff]
      %v393 = vld [vmem:[%s1 + $0x2b0] sm:$0xff]
      %v394 = vld [vmem:[%s1 + $0x2b8] sm:$0xff]
      %v395 = vld [vmem:[%s1 + $0x2c0] sm:$0xff]
      %v396 = vld [vmem:[%s1 + $0x2c8] sm:$0xff]
      %v397 = vld [vmem:[%s1 + $0x2d0] sm:$0xff]
      %v398 = vld [vmem:[%s1 + $0x2d8] sm:$0xff]
      %v399 = vld [vmem:[%s1 + $0x2e0] sm:$0xff]
      %v400 = vld [vmem:[%s1 + $0x2e8] sm:$0xff]
      %v401 = vld [vmem:[%s1 + $0x2f0] sm:$0xff]
      %v402 = vld [vmem:[%s1 + $0x2f8] sm:$0xff]
      %v403 = vld [vmem:[%s1 + $0x300] sm:$0xff]
      %v404 = vld [vmem:[%s1 + $0x308] sm:$0xff]
      %v405 = vld [vmem:[%s1 + $0x310] sm:$0xff]
      %v406 = vld [vmem:[%s1 + $0x318] sm:$0xff]
      %v407 = vld [vmem:[%s1 + $0x320] sm:$0xff]
      %v408 = vld [vmem:[%s1 + $0x328] sm:$0xff]
      %v409 = vld [vmem:[%s1 + $0x330] sm:$0xff]
      %v410 = vld [vmem:[%s1 + $0x338] sm:$0xff]
      %v411 = vld [vmem:[%s1 + $0x340] sm:$0xff]
      %v412 = vld [vmem:[%s1 + $0x348] sm:$0xff]
      %v413 = vld [vmem:[%s1 + $0x350] sm:$0xff]
      %v414 = vld [vmem:[%s1 + $0x358] sm:$0xff]
      %v415 = vld [vmem:[%s1 + $0x360] sm:$0xff]
      %v416 = vld [vmem:[%s1 + $0x368] sm:$0xff]
      %v417 = vld [vmem:[%s1 + $0x370] sm:$0xff]
      %v418 = vld [vmem:[%s1 + $0x378] sm:$0xff]
      %v419 = vld [vmem:[%s1 + $0x380] sm:$0xff]
      %v420 = vld [vmem:[%s1 + $0x388] sm:$0xff]
      %v421 = vld [vmem:[%s1 + $0x390] sm:$0xff]
      %v422 = vld [vmem:[%s1 + $0x398] sm:$0xff]
      %v423 = vld [vmem:[%s1 + $0x3a0] sm:$0xff]
      %v424 = vld [vmem:[%s1 + $0x3a8] sm:$0xff]
      %v425 = vld [vmem:[%s1 + $0x3b0] sm:$0xff]
      %v426 = vld [vmem:[%s1 + $0x3b8] sm:$0xff]
      %v427 = vld [vmem:[%s1 + $0x3c0] sm:$0xff]
      %v428 = vld [vmem:[%s1 + $0x3c8] sm:$0xff]
      %v429 = vld [vmem:[%s1 + $0x3d0] sm:$0xff]
      %v430 = vld [vmem:[%s1 + $0x3d8] sm:$0xff]
      %v431 = vld [vmem:[%s1 + $0x3e0] sm:$0xff]
      %v432 = vld [vmem:[%s1 + $0x3e8] sm:$0xff]
      %v433 = vld [vmem:[%s1 + $0x3f0] sm:$0xff]
      %v434 = vld [vmem:[%s1 + $0x3f8] sm:$0xff]
      %v435 = vld [vmem:[%s1 + $0x400] sm:$0xff]
      %v436 = vld [vmem:[%s1 + $0x408] sm:$0xff]
      %v437 = vld [vmem:[%s1 + $0x410] sm:$0xff]
      %v438 = vld [vmem:[%s1 + $0x418] sm:$0xff]
      %v439 = vld [vmem:[%s1 + $0x420] sm:$0xff]
      %v440 = vld [vmem:[%s1 + $0x428] sm:$0xff]
      %v441 = vld [vmem:[%s1 + $0x430] sm:$0xff]
      %v442 = vld [vmem:[%s1 + $0x438] sm:$0xff]
      %v443 = vld [vmem:[%s1 + $0x440] sm:$0xff]
      %v444 = vld [vmem:[%s1 + $0x448] sm:$0xff]
      %v445 = vld [vmem:[%s1 + $0x450] sm:$0xff]
      %v446 = vld [vmem:[%s1 + $0x458] sm:$0xff]
      %v447 = vld [vmem:[%s1 + $0x460] sm:$0xff]
      %v448 = vld [vmem:[%s1 + $0x468] sm:$0xff]
      %v449 = vld [vmem:[%s1 + $0x470] sm:$0xff]
      %v450 = vld [vmem:[%s1 + $0x478] sm:$0xff]
      %v451 = vld [vmem:[%s1 + $0x480] sm:$0xff]
      %v452 = vld [vmem:[%s1 + $0x488] sm:$0xff]
      %v453 = vld [vmem:[%s1 + $0x490] sm:$0xff]
      %v454 = vld [vmem:[%s1 + $0x498] sm:$0xff]
      %v455 = vld [vmem:[%s1 + $0x4a0] sm:$0xff]
      %v456 = vld [vmem:[%s1 + $0x4a8] sm:$0xff]
      %v457 = vld [vmem:[%s1 + $0x4b0] sm:$0xff]
      %v458 = vld [vmem:[%s1 + $0x4b8] sm:$0xff]
      %v459 = vld [vmem:[%s1 + $0x4c0] sm:$0xff]
      %v460 = vld [vmem:[%s1 + $0x4c8] sm:$0xff]
      %v461 = vld [vmem:[%s1 + $0x4d0] sm:$0xff]
      %v462 = vld [vmem:[%s1 + $0x4d8] sm:$0xff]
      %v463 = vld [vmem:[%s1 + $0x4e0] sm:$0xff]
      %v464 = vld [vmem:[%s1 + $0x4e8] sm:$0xff]
      %v465 = vld [vmem:[%s1 + $0x4f0] sm:$0xff]
      %v466 = vld [vmem:[%s1 + $0x4f8] sm:$0xff]
      %v467 = vld [vmem:[%s1 + $0x500] sm:$0xff]
      %v468 = vld [vmem:[%s1 + $0x508] sm:$0xff]
      %v469 = vld [vmem:[%s1 + $0x510] sm:$0xff]
      %v470 = vld [vmem:[%s1 + $0x518] sm:$0xff]
      %v471 = vld [vmem:[%s1 + $0x520] sm:$0xff]
      %v472 = vld [vmem:[%s1 + $0x528] sm:$0xff]
      %v473 = vld [vmem:[%s1 + $0x530] sm:$0xff]
      %v474 = vld [vmem:[%s1 + $0x538] sm:$0xff]
      %v475 = vld [vmem:[%s1 + $0x540] sm:$0xff]
      %v476 = vld [vmem:[%s1 + $0x548] sm:$0xff]
      %v477 = vld [vmem:[%s1 + $0x550] sm:$0xff]
      %v478 = vld [vmem:[%s1 + $0x558] sm:$0xff]
      %v479 = vld [vmem:[%s1 + $0x560] sm:$0xff]
      %v480 = vld [vmem:[%s1 + $0x568] sm:$0xff]
      %v481 = vld [vmem:[%s1 + $0x570] sm:$0xff]
      %v482 = vld [vmem:[%s1 + $0x578] sm:$0xff]
      %v483 = vld [vmem:[%s1 + $0x580] sm:$0xff]
      %v484 = vld [vmem:[%s1 + $0x588] sm:$0xff]
      %v485 = vld [vmem:[%s1 + $0x590] sm:$0xff]
      %v486 = vld [vmem:[%s1 + $0x598] sm:$0xff]
      %v487 = vld [vmem:[%s1 + $0x5a0] sm:$0xff]
      %v488 = vld [vmem:[%s1 + $0x5a8] sm:$0xff]
      %v489 = vld [vmem:[%s1 + $0x5b0] sm:$0xff]
      %v490 = vld [vmem:[%s1 + $0x5b8] sm:$0xff]
      %v491 = vld [vmem:[%s1 + $0x5c0] sm:$0xff]
      %v492 = vld [vmem:[%s1 + $0x5c8] sm:$0xff]
      %v493 = vld [vmem:[%s1 + $0x5d0] sm:$0xff]
      %v494 = vld [vmem:[%s1 + $0x5d8] sm:$0xff]
      %v495 = vld [vmem:[%s1 + $0x5e0] sm:$0xff]
      %v496 = vld [vmem:[%s1 + $0x5e8] sm:$0xff]
      %v497 = vld [vmem:[%s1 + $0x5f0] sm:$0xff]
      %v498 = vld [vmem:[%s1 + $0x5f8] sm:$0xff]
      %v499 = vld [vmem:[%s1 + $0x600] sm:$0xff]
      %v500 = vld [vmem:[%s1 + $0x608] sm:$0xff]
      %v501 = vld [vmem:[%s1 + $0x610] sm:$0xff]
      %v502 = vld [vmem:[%s1 + $0x618] sm:$0xff]
      %v503 = vld [vmem:[%s1 + $0x620] sm:$0xff]
      %v504 = vld [vmem:[%s1 + $0x628] sm:$0xff]
      %v505 = vld [vmem:[%s1 + $0x630] sm:$0xff]
      %v506 = vld [vmem:[%s1 + $0x638] sm:$0xff]
      %v507 = vld [vmem:[%s1 + $0x640] sm:$0xff]
      %v508 = vld [vmem:[%s1 + $0x648] sm:$0xff]
      %v509 = vld [vmem:[%s1 + $0x650] sm:$0xff]
      %v510 = vld [vmem:[%s1 + $0x658] sm:$0xff]
      %v511 = vld [vmem:[%s1 + $0x660] sm:$0xff]
      %v512 = vld [vmem:[%s1 + $0x668] sm:$0xff]
      %v513 = vld [vmem:[%s1 + $0x670] sm:$0xff]
      %v514 = vld [vmem:[%s1 + $0x678] sm:$0xff]
      %v515 = vld [vmem:[%s1 + $0x680] sm:$0xff]
      %v516 = vld [vmem:[%s1 + $0x688] sm:$0xff]
      %v517 = vld [vmem:[%s1 + $0x690] sm:$0xff]
      %v518 = vld [vmem:[%s1 + $0x698] sm:$0xff]
      %v519 = vld [vmem:[%s1 + $0x6a0] sm:$0xff]
      %v520 = vld [vmem:[%s1 + $0x6a8] sm:$0xff]
      %v521 = vld [vmem:[%s1 + $0x6b0] sm:$0xff]
      %v522 = vld [vmem:[%s1 + $0x6b8] sm:$0xff]
      %v523 = vld [vmem:[%s1 + $0x6c0] sm:$0xff]
      %v524 = vld [vmem:[%s1 + $0x6c8] sm:$0xff]
      %v525 = vld [vmem:[%s1 + $0x6d0] sm:$0xff]
      %v526 = vld [vmem:[%s1 + $0x6d8] sm:$0xff]
      %v527 = vld [vmem:[%s1 + $0x6e0] sm:$0xff]
      %v528 = vld [vmem:[%s1 + $0x6e8] sm:$0xff]
      %v529 = vld [vmem:[%s1 + $0x6f0] sm:$0xff]
      %v530 = vld [vmem:[%s1 + $0x6f8] sm:$0xff]
      %v531 = vld [vmem:[%s1 + $0x700] sm:$0xff]
      %v532 = vld [vmem:[%s1 + $0x708] sm:$0xff]
      %v533 = vld [vmem:[%s1 + $0x710] sm:$0xff]
      %v534 = vld [vmem:[%s1 + $0x718] sm:$0xff]
      %v535 = vld [vmem:[%s1 + $0x720] sm:$0xff]
      %v536 = vld [vmem:[%s1 + $0x728] sm:$0xff]
      %v537 = vld [vmem:[%s1 + $0x730] sm:$0xff]
      %v538 = vld [vmem:[%s1 + $0x738] sm:$0xff]
      %v539 = vld [vmem:[%s1 + $0x740] sm:$0xff]
      %v540 = vld [vmem:[%s1 + $0x748] sm:$0xff]
      %v541 = vld [vmem:[%s1 + $0x750] sm:$0xff]
      %v542 = vld [vmem:[%s1 + $0x758] sm:$0xff]
      %v543 = vld [vmem:[%s1 + $0x760] sm:$0xff]
      %v544 = vld [vmem:[%s1 + $0x768] sm:$0xff]
      %v545 = vld [vmem:[%s1 + $0x770] sm:$0xff]
      %v546 = vld [vmem:[%s1 + $0x778] sm:$0xff]
      %v547 = vld [vmem:[%s1 + $0x780] sm:$0xff]
      %v548 = vld [vmem:[%s1 + $0x788] sm:$0xff]
      %v549 = vld [vmem:[%s1 + $0x790] sm:$0xff]
      %v550 = vld [vmem:[%s1 + $0x798] sm:$0xff]
      %v551 = vld [vmem:[%s1 + $0x7a0] sm:$0xff]
      %v552 = vld [vmem:[%s1 + $0x7a8] sm:$0xff]
      %v553 = vld [vmem:[%s1 + $0x7b0] sm:$0xff]
      %v554 = vld [vmem:[%s1 + $0x7b8] sm:$0xff]
      %v555 = vld [vmem:[%s1 + $0x7c0] sm:$0xff]
      %v556 = vld [vmem:[%s1 + $0x7c8] sm:$0xff]
      %v557 = vld [vmem:[%s1 + $0x7d0] sm:$0xff]
      %v558 = vld [vmem:[%s1 + $0x7d8] sm:$0xff]
      %v559 = vld [vmem:[%s1 + $0x7e0] sm:$0xff]
      %v560 = vld [vmem:[%s1 + $0x7e8] sm:$0xff]
      %v561 = vld [vmem:[%s1 + $0x7f0] sm:$0xff]
      %v562 = vld [vmem:[%s1 + $0x7f8] sm:$0xff]
      %v563 = vld [vmem:[%s2] sm:$0x3]
      %v565 = vlaneseq
      %v566 = vshrl.u32 %v565, 7
      %v567 = vsub.s32 0, %v566
      %v568 = vrot.slane %v563, %v567
      %v569 = vlaneseq
      %v570 = vshrl.u32 %v569, 7
      %v571 = vsub.s32 1, %v570
      %v572 = vrot.slane %v563, %v571
      %v831 = vunpack.c.l.b16 %v307
      %v832 = vunpack.c.h.b16 %v307
      %v833 = vunpack.c.l.b16 %v308
      %v834 = vunpack.c.h.b16 %v308
      %v835 = vunpack.c.l.b16 %v309
      %v836 = vunpack.c.h.b16 %v309
      %v837 = vunpack.c.l.b16 %v310
      %v838 = vunpack.c.h.b16 %v310
      %v839 = vunpack.c.l.b16 %v311
      %v840 = vunpack.c.h.b16 %v311
      %v841 = vunpack.c.l.b16 %v312
      %v842 = vunpack.c.h.b16 %v312
      %v843 = vunpack.c.l.b16 %v313
      %v844 = vunpack.c.h.b16 %v313
      %v845 = vunpack.c.l.b16 %v314
      %v846 = vunpack.c.h.b16 %v314
      %v847 = vunpack.c.l.b16 %v315
      %v848 = vunpack.c.h.b16 %v315
      %v849 = vunpack.c.l.b16 %v316
      %v850 = vunpack.c.h.b16 %v316
      %v851 = vunpack.c.l.b16 %v317
      %v852 = vunpack.c.h.b16 %v317
      %v853 = vunpack.c.l.b16 %v318
      %v854 = vunpack.c.h.b16 %v318
      %v855 = vunpack.c.l.b16 %v319
      %v856 = vunpack.c.h.b16 %v319
      %v857 = vunpack.c.l.b16 %v320
      %v858 = vunpack.c.h.b16 %v320
      %v859 = vunpack.c.l.b16 %v321
      %v860 = vunpack.c.h.b16 %v321
      %v861 = vunpack.c.l.b16 %v322
      %v862 = vunpack.c.h.b16 %v322
      %v863 = vunpack.c.l.b16 %v323
      %v864 = vunpack.c.h.b16 %v323
      %v865 = vunpack.c.l.b16 %v324
      %v866 = vunpack.c.h.b16 %v324
      %v867 = vunpack.c.l.b16 %v325
      %v868 = vunpack.c.h.b16 %v325
      %v869 = vunpack.c.l.b16 %v326
      %v870 = vunpack.c.h.b16 %v326
      %v871 = vunpack.c.l.b16 %v327
      %v872 = vunpack.c.h.b16 %v327
      %v873 = vunpack.c.l.b16 %v328
      %v874 = vunpack.c.h.b16 %v328
      %v875 = vunpack.c.l.b16 %v329
      %v876 = vunpack.c.h.b16 %v329
      %v877 = vunpack.c.l.b16 %v330
      %v878 = vunpack.c.h.b16 %v330
      %v879 = vunpack.c.l.b16 %v331
      %v880 = vunpack.c.h.b16 %v331
      %v881 = vunpack.c.l.b16 %v332
      %v882 = vunpack.c.h.b16 %v332
      %v883 = vunpack.c.l.b16 %v333
      %v884 = vunpack.c.h.b16 %v333
      %v885 = vunpack.c.l.b16 %v334
      %v886 = vunpack.c.h.b16 %v334
      %v887 = vunpack.c.l.b16 %v335
      %v888 = vunpack.c.h.b16 %v335
      %v889 = vunpack.c.l.b16 %v336
      %v890 = vunpack.c.h.b16 %v336
      %v891 = vunpack.c.l.b16 %v337
      %v892 = vunpack.c.h.b16 %v337
      %v893 = vunpack.c.l.b16 %v338
      %v894 = vunpack.c.h.b16 %v338
      %v895 = vunpack.c.l.b16 %v339
      %v896 = vunpack.c.h.b16 %v339
      %v897 = vunpack.c.l.b16 %v340
      %v898 = vunpack.c.h.b16 %v340
      %v899 = vunpack.c.l.b16 %v341
      %v900 = vunpack.c.h.b16 %v341
      %v901 = vunpack.c.l.b16 %v342
      %v902 = vunpack.c.h.b16 %v342
      %v903 = vunpack.c.l.b16 %v343
      %v904 = vunpack.c.h.b16 %v343
      %v905 = vunpack.c.l.b16 %v344
      %v906 = vunpack.c.h.b16 %v344
      %v907 = vunpack.c.l.b16 %v345
      %v908 = vunpack.c.h.b16 %v345
      %v909 = vunpack.c.l.b16 %v346
      %v910 = vunpack.c.h.b16 %v346
      %v911 = vunpack.c.l.b16 %v347
      %v912 = vunpack.c.h.b16 %v347
      %v913 = vunpack.c.l.b16 %v348
      %v914 = vunpack.c.h.b16 %v348
      %v915 = vunpack.c.l.b16 %v349
      %v916 = vunpack.c.h.b16 %v349
      %v917 = vunpack.c.l.b16 %v350
      %v918 = vunpack.c.h.b16 %v350
      %v919 = vunpack.c.l.b16 %v351
      %v920 = vunpack.c.h.b16 %v351
      %v921 = vunpack.c.l.b16 %v352
      %v922 = vunpack.c.h.b16 %v352
      %v923 = vunpack.c.l.b16 %v353
      %v924 = vunpack.c.h.b16 %v353
      %v925 = vunpack.c.l.b16 %v354
      %v926 = vunpack.c.h.b16 %v354
      %v927 = vunpack.c.l.b16 %v355
      %v928 = vunpack.c.h.b16 %v355
      %v929 = vunpack.c.l.b16 %v356
      %v930 = vunpack.c.h.b16 %v356
      %v931 = vunpack.c.l.b16 %v357
      %v932 = vunpack.c.h.b16 %v357
      %v933 = vunpack.c.l.b16 %v358
      %v934 = vunpack.c.h.b16 %v358
      %v935 = vunpack.c.l.b16 %v359
      %v936 = vunpack.c.h.b16 %v359
      %v937 = vunpack.c.l.b16 %v360
      %v938 = vunpack.c.h.b16 %v360
      %v939 = vunpack.c.l.b16 %v361
      %v940 = vunpack.c.h.b16 %v361
      %v941 = vunpack.c.l.b16 %v362
      %v942 = vunpack.c.h.b16 %v362
      %v943 = vunpack.c.l.b16 %v363
      %v944 = vunpack.c.h.b16 %v363
      %v945 = vunpack.c.l.b16 %v364
      %v946 = vunpack.c.h.b16 %v364
      %v947 = vunpack.c.l.b16 %v365
      %v948 = vunpack.c.h.b16 %v365
      %v949 = vunpack.c.l.b16 %v366
      %v950 = vunpack.c.h.b16 %v366
      %v951 = vunpack.c.l.b16 %v367
      %v952 = vunpack.c.h.b16 %v367
      %v953 = vunpack.c.l.b16 %v368
      %v954 = vunpack.c.h.b16 %v368
      %v955 = vunpack.c.l.b16 %v369
      %v956 = vunpack.c.h.b16 %v369
      %v957 = vunpack.c.l.b16 %v370
      %v958 = vunpack.c.h.b16 %v370
      %v959 = vunpack.c.l.b16 %v371
      %v960 = vunpack.c.h.b16 %v371
      %v961 = vunpack.c.l.b16 %v372
      %v962 = vunpack.c.h.b16 %v372
      %v963 = vunpack.c.l.b16 %v373
      %v964 = vunpack.c.h.b16 %v373
      %v965 = vunpack.c.l.b16 %v374
      %v966 = vunpack.c.h.b16 %v374
      %v967 = vunpack.c.l.b16 %v375
      %v968 = vunpack.c.h.b16 %v375
      %v969 = vunpack.c.l.b16 %v376
      %v970 = vunpack.c.h.b16 %v376
      %v971 = vunpack.c.l.b16 %v377
      %v972 = vunpack.c.h.b16 %v377
      %v973 = vunpack.c.l.b16 %v378
      %v974 = vunpack.c.h.b16 %v378
      %v975 = vunpack.c.l.b16 %v379
      %v976 = vunpack.c.h.b16 %v379
      %v977 = vunpack.c.l.b16 %v380
      %v978 = vunpack.c.h.b16 %v380
      %v979 = vunpack.c.l.b16 %v381
      %v980 = vunpack.c.h.b16 %v381
      %v981 = vunpack.c.l.b16 %v382
      %v982 = vunpack.c.h.b16 %v382
      %v983 = vunpack.c.l.b16 %v383
      %v984 = vunpack.c.h.b16 %v383
      %v985 = vunpack.c.l.b16 %v384
      %v986 = vunpack.c.h.b16 %v384
      %v987 = vunpack.c.l.b16 %v385
      %v988 = vunpack.c.h.b16 %v385
      %v989 = vunpack.c.l.b16 %v386
      %v990 = vunpack.c.h.b16 %v386
      %v991 = vunpack.c.l.b16 %v387
      %v992 = vunpack.c.h.b16 %v387
      %v993 = vunpack.c.l.b16 %v388
      %v994 = vunpack.c.h.b16 %v388
      %v995 = vunpack.c.l.b16 %v389
      %v996 = vunpack.c.h.b16 %v389
      %v997 = vunpack.c.l.b16 %v390
      %v998 = vunpack.c.h.b16 %v390
      %v999 = vunpack.c.l.b16 %v391
      %v1000 = vunpack.c.h.b16 %v391
      %v1001 = vunpack.c.l.b16 %v392
      %v1002 = vunpack.c.h.b16 %v392
      %v1003 = vunpack.c.l.b16 %v393
      %v1004 = vunpack.c.h.b16 %v393
      %v1005 = vunpack.c.l.b16 %v394
      %v1006 = vunpack.c.h.b16 %v394
      %v1007 = vunpack.c.l.b16 %v395
      %v1008 = vunpack.c.h.b16 %v395
      %v1009 = vunpack.c.l.b16 %v396
      %v1010 = vunpack.c.h.b16 %v396
      %v1011 = vunpack.c.l.b16 %v397
      %v1012 = vunpack.c.h.b16 %v397
      %v1013 = vunpack.c.l.b16 %v398
      %v1014 = vunpack.c.h.b16 %v398
      %v1015 = vunpack.c.l.b16 %v399
      %v1016 = vunpack.c.h.b16 %v399
      %v1017 = vunpack.c.l.b16 %v400
      %v1018 = vunpack.c.h.b16 %v400
      %v1019 = vunpack.c.l.b16 %v401
      %v1020 = vunpack.c.h.b16 %v401
      %v1021 = vunpack.c.l.b16 %v402
      %v1022 = vunpack.c.h.b16 %v402
      %v1023 = vunpack.c.l.b16 %v403
      %v1024 = vunpack.c.h.b16 %v403
      %v1025 = vunpack.c.l.b16 %v404
      %v1026 = vunpack.c.h.b16 %v404
      %v1027 = vunpack.c.l.b16 %v405
      %v1028 = vunpack.c.h.b16 %v405
      %v1029 = vunpack.c.l.b16 %v406
      %v1030 = vunpack.c.h.b16 %v406
      %v1031 = vunpack.c.l.b16 %v407
      %v1032 = vunpack.c.h.b16 %v407
      %v1033 = vunpack.c.l.b16 %v408
      %v1034 = vunpack.c.h.b16 %v408
      %v1035 = vunpack.c.l.b16 %v409
      %v1036 = vunpack.c.h.b16 %v409
      %v1037 = vunpack.c.l.b16 %v410
      %v1038 = vunpack.c.h.b16 %v410
      %v1039 = vunpack.c.l.b16 %v411
      %v1040 = vunpack.c.h.b16 %v411
      %v1041 = vunpack.c.l.b16 %v412
      %v1042 = vunpack.c.h.b16 %v412
      %v1043 = vunpack.c.l.b16 %v413
      %v1044 = vunpack.c.h.b16 %v413
      %v1045 = vunpack.c.l.b16 %v414
      %v1046 = vunpack.c.h.b16 %v414
      %v1047 = vunpack.c.l.b16 %v415
      %v1048 = vunpack.c.h.b16 %v415
      %v1049 = vunpack.c.l.b16 %v416
      %v1050 = vunpack.c.h.b16 %v416
      %v1051 = vunpack.c.l.b16 %v417
      %v1052 = vunpack.c.h.b16 %v417
      %v1053 = vunpack.c.l.b16 %v418
      %v1054 = vunpack.c.h.b16 %v418
      %v1055 = vunpack.c.l.b16 %v419
      %v1056 = vunpack.c.h.b16 %v419
      %v1057 = vunpack.c.l.b16 %v420
      %v1058 = vunpack.c.h.b16 %v420
      %v1059 = vunpack.c.l.b16 %v421
      %v1060 = vunpack.c.h.b16 %v421
      %v1061 = vunpack.c.l.b16 %v422
      %v1062 = vunpack.c.h.b16 %v422
      %v1063 = vunpack.c.l.b16 %v423
      %v1064 = vunpack.c.h.b16 %v423
      %v1065 = vunpack.c.l.b16 %v424
      %v1066 = vunpack.c.h.b16 %v424
      %v1067 = vunpack.c.l.b16 %v425
      %v1068 = vunpack.c.h.b16 %v425
      %v1069 = vunpack.c.l.b16 %v426
      %v1070 = vunpack.c.h.b16 %v426
      %v1071 = vunpack.c.l.b16 %v427
      %v1072 = vunpack.c.h.b16 %v427
      %v1073 = vunpack.c.l.b16 %v428
      %v1074 = vunpack.c.h.b16 %v428
      %v1075 = vunpack.c.l.b16 %v429
      %v1076 = vunpack.c.h.b16 %v429
      %v1077 = vunpack.c.l.b16 %v430
      %v1078 = vunpack.c.h.b16 %v430
      %v1079 = vunpack.c.l.b16 %v431
      %v1080 = vunpack.c.h.b16 %v431
      %v1081 = vunpack.c.l.b16 %v432
      %v1082 = vunpack.c.h.b16 %v432
      %v1083 = vunpack.c.l.b16 %v433
      %v1084 = vunpack.c.h.b16 %v433
      %v1085 = vunpack.c.l.b16 %v434
      %v1086 = vunpack.c.h.b16 %v434
      %v1087 = vunpack.c.l.b16 %v435
      %v1088 = vunpack.c.h.b16 %v435
      %v1089 = vunpack.c.l.b16 %v436
      %v1090 = vunpack.c.h.b16 %v436
      %v1091 = vunpack.c.l.b16 %v437
      %v1092 = vunpack.c.h.b16 %v437
      %v1093 = vunpack.c.l.b16 %v438
      %v1094 = vunpack.c.h.b16 %v438
      %v1095 = vunpack.c.l.b16 %v439
      %v1096 = vunpack.c.h.b16 %v439
      %v1097 = vunpack.c.l.b16 %v440
      %v1098 = vunpack.c.h.b16 %v440
      %v1099 = vunpack.c.l.b16 %v441
      %v1100 = vunpack.c.h.b16 %v441
      %v1101 = vunpack.c.l.b16 %v442
      %v1102 = vunpack.c.h.b16 %v442
      %v1103 = vunpack.c.l.b16 %v443
      %v1104 = vunpack.c.h.b16 %v443
      %v1105 = vunpack.c.l.b16 %v444
      %v1106 = vunpack.c.h.b16 %v444
      %v1107 = vunpack.c.l.b16 %v445
      %v1108 = vunpack.c.h.b16 %v445
      %v1109 = vunpack.c.l.b16 %v446
      %v1110 = vunpack.c.h.b16 %v446
      %v1111 = vunpack.c.l.b16 %v447
      %v1112 = vunpack.c.h.b16 %v447
      %v1113 = vunpack.c.l.b16 %v448
      %v1114 = vunpack.c.h.b16 %v448
      %v1115 = vunpack.c.l.b16 %v449
      %v1116 = vunpack.c.h.b16 %v449
      %v1117 = vunpack.c.l.b16 %v450
      %v1118 = vunpack.c.h.b16 %v450
      %v1119 = vunpack.c.l.b16 %v451
      %v1120 = vunpack.c.h.b16 %v451
      %v1121 = vunpack.c.l.b16 %v452
      %v1122 = vunpack.c.h.b16 %v452
      %v1123 = vunpack.c.l.b16 %v453
      %v1124 = vunpack.c.h.b16 %v453
      %v1125 = vunpack.c.l.b16 %v454
      %v1126 = vunpack.c.h.b16 %v454
      %v1127 = vunpack.c.l.b16 %v455
      %v1128 = vunpack.c.h.b16 %v455
      %v1129 = vunpack.c.l.b16 %v456
      %v1130 = vunpack.c.h.b16 %v456
      %v1131 = vunpack.c.l.b16 %v457
      %v1132 = vunpack.c.h.b16 %v457
      %v1133 = vunpack.c.l.b16 %v458
      %v1134 = vunpack.c.h.b16 %v458
      %v1135 = vunpack.c.l.b16 %v459
      %v1136 = vunpack.c.h.b16 %v459
      %v1137 = vunpack.c.l.b16 %v460
      %v1138 = vunpack.c.h.b16 %v460
      %v1139 = vunpack.c.l.b16 %v461
      %v1140 = vunpack.c.h.b16 %v461
      %v1141 = vunpack.c.l.b16 %v462
      %v1142 = vunpack.c.h.b16 %v462
      %v1143 = vunpack.c.l.b16 %v463
      %v1144 = vunpack.c.h.b16 %v463
      %v1145 = vunpack.c.l.b16 %v464
      %v1146 = vunpack.c.h.b16 %v464
      %v1147 = vunpack.c.l.b16 %v465
      %v1148 = vunpack.c.h.b16 %v465
      %v1149 = vunpack.c.l.b16 %v466
      %v1150 = vunpack.c.h.b16 %v466
      %v1151 = vunpack.c.l.b16 %v467
      %v1152 = vunpack.c.h.b16 %v467
      %v1153 = vunpack.c.l.b16 %v468
      %v1154 = vunpack.c.h.b16 %v468
      %v1155 = vunpack.c.l.b16 %v469
      %v1156 = vunpack.c.h.b16 %v469
      %v1157 = vunpack.c.l.b16 %v470
      %v1158 = vunpack.c.h.b16 %v470
      %v1159 = vunpack.c.l.b16 %v471
      %v1160 = vunpack.c.h.b16 %v471
      %v1161 = vunpack.c.l.b16 %v472
      %v1162 = vunpack.c.h.b16 %v472
      %v1163 = vunpack.c.l.b16 %v473
      %v1164 = vunpack.c.h.b16 %v473
      %v1165 = vunpack.c.l.b16 %v474
      %v1166 = vunpack.c.h.b16 %v474
      %v1167 = vunpack.c.l.b16 %v475
      %v1168 = vunpack.c.h.b16 %v475
      %v1169 = vunpack.c.l.b16 %v476
      %v1170 = vunpack.c.h.b16 %v476
      %v1171 = vunpack.c.l.b16 %v477
      %v1172 = vunpack.c.h.b16 %v477
      %v1173 = vunpack.c.l.b16 %v478
      %v1174 = vunpack.c.h.b16 %v478
      %v1175 = vunpack.c.l.b16 %v479
      %v1176 = vunpack.c.h.b16 %v479
      %v1177 = vunpack.c.l.b16 %v480
      %v1178 = vunpack.c.h.b16 %v480
      %v1179 = vunpack.c.l.b16 %v481
      %v1180 = vunpack.c.h.b16 %v481
      %v1181 = vunpack.c.l.b16 %v482
      %v1182 = vunpack.c.h.b16 %v482
      %v1183 = vunpack.c.l.b16 %v483
      %v1184 = vunpack.c.h.b16 %v483
      %v1185 = vunpack.c.l.b16 %v484
      %v1186 = vunpack.c.h.b16 %v484
      %v1187 = vunpack.c.l.b16 %v485
      %v1188 = vunpack.c.h.b16 %v485
      %v1189 = vunpack.c.l.b16 %v486
      %v1190 = vunpack.c.h.b16 %v486
      %v1191 = vunpack.c.l.b16 %v487
      %v1192 = vunpack.c.h.b16 %v487
      %v1193 = vunpack.c.l.b16 %v488
      %v1194 = vunpack.c.h.b16 %v488
      %v1195 = vunpack.c.l.b16 %v489
      %v1196 = vunpack.c.h.b16 %v489
      %v1197 = vunpack.c.l.b16 %v490
      %v1198 = vunpack.c.h.b16 %v490
      %v1199 = vunpack.c.l.b16 %v491
      %v1200 = vunpack.c.h.b16 %v491
      %v1201 = vunpack.c.l.b16 %v492
      %v1202 = vunpack.c.h.b16 %v492
      %v1203 = vunpack.c.l.b16 %v493
      %v1204 = vunpack.c.h.b16 %v493
      %v1205 = vunpack.c.l.b16 %v494
      %v1206 = vunpack.c.h.b16 %v494
      %v1207 = vunpack.c.l.b16 %v495
      %v1208 = vunpack.c.h.b16 %v495
      %v1209 = vunpack.c.l.b16 %v496
      %v1210 = vunpack.c.h.b16 %v496
      %v1211 = vunpack.c.l.b16 %v497
      %v1212 = vunpack.c.h.b16 %v497
      %v1213 = vunpack.c.l.b16 %v498
      %v1214 = vunpack.c.h.b16 %v498
      %v1215 = vunpack.c.l.b16 %v499
      %v1216 = vunpack.c.h.b16 %v499
      %v1217 = vunpack.c.l.b16 %v500
      %v1218 = vunpack.c.h.b16 %v500
      %v1219 = vunpack.c.l.b16 %v501
      %v1220 = vunpack.c.h.b16 %v501
      %v1221 = vunpack.c.l.b16 %v502
      %v1222 = vunpack.c.h.b16 %v502
      %v1223 = vunpack.c.l.b16 %v503
      %v1224 = vunpack.c.h.b16 %v503
      %v1225 = vunpack.c.l.b16 %v504
      %v1226 = vunpack.c.h.b16 %v504
      %v1227 = vunpack.c.l.b16 %v505
      %v1228 = vunpack.c.h.b16 %v505
      %v1229 = vunpack.c.l.b16 %v506
      %v1230 = vunpack.c.h.b16 %v506
      %v1231 = vunpack.c.l.b16 %v507
      %v1232 = vunpack.c.h.b16 %v507
      %v1233 = vunpack.c.l.b16 %v508
      %v1234 = vunpack.c.h.b16 %v508
      %v1235 = vunpack.c.l.b16 %v509
      %v1236 = vunpack.c.h.b16 %v509
      %v1237 = vunpack.c.l.b16 %v510
      %v1238 = vunpack.c.h.b16 %v510
      %v1239 = vunpack.c.l.b16 %v511
      %v1240 = vunpack.c.h.b16 %v511
      %v1241 = vunpack.c.l.b16 %v512
      %v1242 = vunpack.c.h.b16 %v512
      %v1243 = vunpack.c.l.b16 %v513
      %v1244 = vunpack.c.h.b16 %v513
      %v1245 = vunpack.c.l.b16 %v514
      %v1246 = vunpack.c.h.b16 %v514
      %v1247 = vunpack.c.l.b16 %v515
      %v1248 = vunpack.c.h.b16 %v515
      %v1249 = vunpack.c.l.b16 %v516
      %v1250 = vunpack.c.h.b16 %v516
      %v1251 = vunpack.c.l.b16 %v517
      %v1252 = vunpack.c.h.b16 %v517
      %v1253 = vunpack.c.l.b16 %v518
      %v1254 = vunpack.c.h.b16 %v518
      %v1255 = vunpack.c.l.b16 %v519
      %v1256 = vunpack.c.h.b16 %v519
      %v1257 = vunpack.c.l.b16 %v520
      %v1258 = vunpack.c.h.b16 %v520
      %v1259 = vunpack.c.l.b16 %v521
      %v1260 = vunpack.c.h.b16 %v521
      %v1261 = vunpack.c.l.b16 %v522
      %v1262 = vunpack.c.h.b16 %v522
      %v1263 = vunpack.c.l.b16 %v523
      %v1264 = vunpack.c.h.b16 %v523
      %v1265 = vunpack.c.l.b16 %v524
      %v1266 = vunpack.c.h.b16 %v524
      %v1267 = vunpack.c.l.b16 %v525
      %v1268 = vunpack.c.h.b16 %v525
      %v1269 = vunpack.c.l.b16 %v526
      %v1270 = vunpack.c.h.b16 %v526
      %v1271 = vunpack.c.l.b16 %v527
      %v1272 = vunpack.c.h.b16 %v527
      %v1273 = vunpack.c.l.b16 %v528
      %v1274 = vunpack.c.h.b16 %v528
      %v1275 = vunpack.c.l.b16 %v529
      %v1276 = vunpack.c.h.b16 %v529
      %v1277 = vunpack.c.l.b16 %v530
      %v1278 = vunpack.c.h.b16 %v530
      %v1279 = vunpack.c.l.b16 %v531
      %v1280 = vunpack.c.h.b16 %v531
      %v1281 = vunpack.c.l.b16 %v532
      %v1282 = vunpack.c.h.b16 %v532
      %v1283 = vunpack.c.l.b16 %v533
      %v1284 = vunpack.c.h.b16 %v533
      %v1285 = vunpack.c.l.b16 %v534
      %v1286 = vunpack.c.h.b16 %v534
      %v1287 = vunpack.c.l.b16 %v535
      %v1288 = vunpack.c.h.b16 %v535
      %v1289 = vunpack.c.l.b16 %v536
      %v1290 = vunpack.c.h.b16 %v536
      %v1291 = vunpack.c.l.b16 %v537
      %v1292 = vunpack.c.h.b16 %v537
      %v1293 = vunpack.c.l.b16 %v538
      %v1294 = vunpack.c.h.b16 %v538
      %v1295 = vunpack.c.l.b16 %v539
      %v1296 = vunpack.c.h.b16 %v539
      %v1297 = vunpack.c.l.b16 %v540
      %v1298 = vunpack.c.h.b16 %v540
      %v1299 = vunpack.c.l.b16 %v541
      %v1300 = vunpack.c.h.b16 %v541
      %v1301 = vunpack.c.l.b16 %v542
      %v1302 = vunpack.c.h.b16 %v542
      %v1303 = vunpack.c.l.b16 %v543
      %v1304 = vunpack.c.h.b16 %v543
      %v1305 = vunpack.c.l.b16 %v544
      %v1306 = vunpack.c.h.b16 %v544
      %v1307 = vunpack.c.l.b16 %v545
      %v1308 = vunpack.c.h.b16 %v545
      %v1309 = vunpack.c.l.b16 %v546
      %v1310 = vunpack.c.h.b16 %v546
      %v1311 = vunpack.c.l.b16 %v547
      %v1312 = vunpack.c.h.b16 %v547
      %v1313 = vunpack.c.l.b16 %v548
      %v1314 = vunpack.c.h.b16 %v548
      %v1315 = vunpack.c.l.b16 %v549
      %v1316 = vunpack.c.h.b16 %v549
      %v1317 = vunpack.c.l.b16 %v550
      %v1318 = vunpack.c.h.b16 %v550
      %v1319 = vunpack.c.l.b16 %v551
      %v1320 = vunpack.c.h.b16 %v551
      %v1321 = vunpack.c.l.b16 %v552
      %v1322 = vunpack.c.h.b16 %v552
      %v1323 = vunpack.c.l.b16 %v553
      %v1324 = vunpack.c.h.b16 %v553
      %v1325 = vunpack.c.l.b16 %v554
      %v1326 = vunpack.c.h.b16 %v554
      %v1327 = vunpack.c.l.b16 %v555
      %v1328 = vunpack.c.h.b16 %v555
      %v1329 = vunpack.c.l.b16 %v556
      %v1330 = vunpack.c.h.b16 %v556
      %v1331 = vunpack.c.l.b16 %v557
      %v1332 = vunpack.c.h.b16 %v557
      %v1333 = vunpack.c.l.b16 %v558
      %v1334 = vunpack.c.h.b16 %v558
      %v1335 = vunpack.c.l.b16 %v559
      %v1336 = vunpack.c.h.b16 %v559
      %v1337 = vunpack.c.l.b16 %v560
      %v1338 = vunpack.c.h.b16 %v560
      %v1339 = vunpack.c.l.b16 %v561
      %v1340 = vunpack.c.h.b16 %v561
      %v1341 = vunpack.c.l.b16 %v562
      %v1342 = vunpack.c.h.b16 %v562
      %v1343 = vpack.c.b16 %v833, %v831
      %v1344 = vpack.c.b16 %v834, %v832
      %v1345 = vpack.c.b16 %v837, %v835
      %v1346 = vpack.c.b16 %v838, %v836
      %v1347 = vpack.c.b16 %v841, %v839
      %v1348 = vpack.c.b16 %v842, %v840
      %v1349 = vpack.c.b16 %v845, %v843
      %v1350 = vpack.c.b16 %v846, %v844
      %v1351 = vpack.c.b16 %v849, %v847
      %v1352 = vpack.c.b16 %v850, %v848
      %v1353 = vpack.c.b16 %v853, %v851
      %v1354 = vpack.c.b16 %v854, %v852
      %v1355 = vpack.c.b16 %v857, %v855
      %v1356 = vpack.c.b16 %v858, %v856
      %v1357 = vpack.c.b16 %v861, %v859
      %v1358 = vpack.c.b16 %v862, %v860
      %v1359 = vpack.c.b16 %v865, %v863
      %v1360 = vpack.c.b16 %v866, %v864
      %v1361 = vpack.c.b16 %v869, %v867
      %v1362 = vpack.c.b16 %v870, %v868
      %v1363 = vpack.c.b16 %v873, %v871
      %v1364 = vpack.c.b16 %v874, %v872
      %v1365 = vpack.c.b16 %v877, %v875
      %v1366 = vpack.c.b16 %v878, %v876
      %v1367 = vpack.c.b16 %v881, %v879
      %v1368 = vpack.c.b16 %v882, %v880
      %v1369 = vpack.c.b16 %v885, %v883
      %v1370 = vpack.c.b16 %v886, %v884
      %v1371 = vpack.c.b16 %v889, %v887
      %v1372 = vpack.c.b16 %v890, %v888
      %v1373 = vpack.c.b16 %v893, %v891
      %v1374 = vpack.c.b16 %v894, %v892
      %v1375 = vpack.c.b16 %v897, %v895
      %v1376 = vpack.c.b16 %v898, %v896
      %v1377 = vpack.c.b16 %v901, %v899
      %v1378 = vpack.c.b16 %v902, %v900
      %v1379 = vpack.c.b16 %v905, %v903
      %v1380 = vpack.c.b16 %v906, %v904
      %v1381 = vpack.c.b16 %v909, %v907
      %v1382 = vpack.c.b16 %v910, %v908
      %v1383 = vpack.c.b16 %v913, %v911
      %v1384 = vpack.c.b16 %v914, %v912
      %v1385 = vpack.c.b16 %v917, %v915
      %v1386 = vpack.c.b16 %v918, %v916
      %v1387 = vpack.c.b16 %v921, %v919
      %v1388 = vpack.c.b16 %v922, %v920
      %v1389 = vpack.c.b16 %v925, %v923
      %v1390 = vpack.c.b16 %v926, %v924
      %v1391 = vpack.c.b16 %v929, %v927
      %v1392 = vpack.c.b16 %v930, %v928
      %v1393 = vpack.c.b16 %v933, %v931
      %v1394 = vpack.c.b16 %v934, %v932
      %v1395 = vpack.c.b16 %v937, %v935
      %v1396 = vpack.c.b16 %v938, %v936
      %v1397 = vpack.c.b16 %v941, %v939
      %v1398 = vpack.c.b16 %v942, %v940
      %v1399 = vpack.c.b16 %v945, %v943
      %v1400 = vpack.c.b16 %v946, %v944
      %v1401 = vpack.c.b16 %v949, %v947
      %v1402 = vpack.c.b16 %v950, %v948
      %v1403 = vpack.c.b16 %v953, %v951
      %v1404 = vpack.c.b16 %v954, %v952
      %v1405 = vpack.c.b16 %v957, %v955
      %v1406 = vpack.c.b16 %v958, %v956
      %v1407 = vpack.c.b16 %v961, %v959
      %v1408 = vpack.c.b16 %v962, %v960
      %v1409 = vpack.c.b16 %v965, %v963
      %v1410 = vpack.c.b16 %v966, %v964
      %v1411 = vpack.c.b16 %v969, %v967
      %v1412 = vpack.c.b16 %v970, %v968
      %v1413 = vpack.c.b16 %v973, %v971
      %v1414 = vpack.c.b16 %v974, %v972
      %v1415 = vpack.c.b16 %v977, %v975
      %v1416 = vpack.c.b16 %v978, %v976
      %v1417 = vpack.c.b16 %v981, %v979
      %v1418 = vpack.c.b16 %v982, %v980
      %v1419 = vpack.c.b16 %v985, %v983
      %v1420 = vpack.c.b16 %v986, %v984
      %v1421 = vpack.c.b16 %v989, %v987
      %v1422 = vpack.c.b16 %v990, %v988
      %v1423 = vpack.c.b16 %v993, %v991
      %v1424 = vpack.c.b16 %v994, %v992
      %v1425 = vpack.c.b16 %v997, %v995
      %v1426 = vpack.c.b16 %v998, %v996
      %v1427 = vpack.c.b16 %v1001, %v999
      %v1428 = vpack.c.b16 %v1002, %v1000
      %v1429 = vpack.c.b16 %v1005, %v1003
      %v1430 = vpack.c.b16 %v1006, %v1004
      %v1431 = vpack.c.b16 %v1009, %v1007
      %v1432 = vpack.c.b16 %v1010, %v1008
      %v1433 = vpack.c.b16 %v1013, %v1011
      %v1434 = vpack.c.b16 %v1014, %v1012
      %v1435 = vpack.c.b16 %v1017, %v1015
      %v1436 = vpack.c.b16 %v1018, %v1016
      %v1437 = vpack.c.b16 %v1021, %v1019
      %v1438 = vpack.c.b16 %v1022, %v1020
      %v1439 = vpack.c.b16 %v1025, %v1023
      %v1440 = vpack.c.b16 %v1026, %v1024
      %v1441 = vpack.c.b16 %v1029, %v1027
      %v1442 = vpack.c.b16 %v1030, %v1028
      %v1443 = vpack.c.b16 %v1033, %v1031
      %v1444 = vpack.c.b16 %v1034, %v1032
      %v1445 = vpack.c.b16 %v1037, %v1035
      %v1446 = vpack.c.b16 %v1038, %v1036
      %v1447 = vpack.c.b16 %v1041, %v1039
      %v1448 = vpack.c.b16 %v1042, %v1040
      %v1449 = vpack.c.b16 %v1045, %v1043
      %v1450 = vpack.c.b16 %v1046, %v1044
      %v1451 = vpack.c.b16 %v1049, %v1047
      %v1452 = vpack.c.b16 %v1050, %v1048
      %v1453 = vpack.c.b16 %v1053, %v1051
      %v1454 = vpack.c.b16 %v1054, %v1052
      %v1455 = vpack.c.b16 %v1057, %v1055
      %v1456 = vpack.c.b16 %v1058, %v1056
      %v1457 = vpack.c.b16 %v1061, %v1059
      %v1458 = vpack.c.b16 %v1062, %v1060
      %v1459 = vpack.c.b16 %v1065, %v1063
      %v1460 = vpack.c.b16 %v1066, %v1064
      %v1461 = vpack.c.b16 %v1069, %v1067
      %v1462 = vpack.c.b16 %v1070, %v1068
      %v1463 = vpack.c.b16 %v1073, %v1071
      %v1464 = vpack.c.b16 %v1074, %v1072
      %v1465 = vpack.c.b16 %v1077, %v1075
      %v1466 = vpack.c.b16 %v1078, %v1076
      %v1467 = vpack.c.b16 %v1081, %v1079
      %v1468 = vpack.c.b16 %v1082, %v1080
      %v1469 = vpack.c.b16 %v1085, %v1083
      %v1470 = vpack.c.b16 %v1086, %v1084
      %v1471 = vpack.c.b16 %v1089, %v1087
      %v1472 = vpack.c.b16 %v1090, %v1088
      %v1473 = vpack.c.b16 %v1093, %v1091
      %v1474 = vpack.c.b16 %v1094, %v1092
      %v1475 = vpack.c.b16 %v1097, %v1095
      %v1476 = vpack.c.b16 %v1098, %v1096
      %v1477 = vpack.c.b16 %v1101, %v1099
      %v1478 = vpack.c.b16 %v1102, %v1100
      %v1479 = vpack.c.b16 %v1105, %v1103
      %v1480 = vpack.c.b16 %v1106, %v1104
      %v1481 = vpack.c.b16 %v1109, %v1107
      %v1482 = vpack.c.b16 %v1110, %v1108
      %v1483 = vpack.c.b16 %v1113, %v1111
      %v1484 = vpack.c.b16 %v1114, %v1112
      %v1485 = vpack.c.b16 %v1117, %v1115
      %v1486 = vpack.c.b16 %v1118, %v1116
      %v1487 = vpack.c.b16 %v1121, %v1119
      %v1488 = vpack.c.b16 %v1122, %v1120
      %v1489 = vpack.c.b16 %v1125, %v1123
      %v1490 = vpack.c.b16 %v1126, %v1124
      %v1491 = vpack.c.b16 %v1129, %v1127
      %v1492 = vpack.c.b16 %v1130, %v1128
      %v1493 = vpack.c.b16 %v1133, %v1131
      %v1494 = vpack.c.b16 %v1134, %v1132
      %v1495 = vpack.c.b16 %v1137, %v1135
      %v1496 = vpack.c.b16 %v1138, %v1136
      %v1497 = vpack.c.b16 %v1141, %v1139
      %v1498 = vpack.c.b16 %v1142, %v1140
      %v1499 = vpack.c.b16 %v1145, %v1143
      %v1500 = vpack.c.b16 %v1146, %v1144
      %v1501 = vpack.c.b16 %v1149, %v1147
      %v1502 = vpack.c.b16 %v1150, %v1148
      %v1503 = vpack.c.b16 %v1153, %v1151
      %v1504 = vpack.c.b16 %v1154, %v1152
      %v1505 = vpack.c.b16 %v1157, %v1155
      %v1506 = vpack.c.b16 %v1158, %v1156
      %v1507 = vpack.c.b16 %v1161, %v1159
      %v1508 = vpack.c.b16 %v1162, %v1160
      %v1509 = vpack.c.b16 %v1165, %v1163
      %v1510 = vpack.c.b16 %v1166, %v1164
      %v1511 = vpack.c.b16 %v1169, %v1167
      %v1512 = vpack.c.b16 %v1170, %v1168
      %v1513 = vpack.c.b16 %v1173, %v1171
      %v1514 = vpack.c.b16 %v1174, %v1172
      %v1515 = vpack.c.b16 %v1177, %v1175
      %v1516 = vpack.c.b16 %v1178, %v1176
      %v1517 = vpack.c.b16 %v1181, %v1179
      %v1518 = vpack.c.b16 %v1182, %v1180
      %v1519 = vpack.c.b16 %v1185, %v1183
      %v1520 = vpack.c.b16 %v1186, %v1184
      %v1521 = vpack.c.b16 %v1189, %v1187
      %v1522 = vpack.c.b16 %v1190, %v1188
      %v1523 = vpack.c.b16 %v1193, %v1191
      %v1524 = vpack.c.b16 %v1194, %v1192
      %v1525 = vpack.c.b16 %v1197, %v1195
      %v1526 = vpack.c.b16 %v1198, %v1196
      %v1527 = vpack.c.b16 %v1201, %v1199
      %v1528 = vpack.c.b16 %v1202, %v1200
      %v1529 = vpack.c.b16 %v1205, %v1203
      %v1530 = vpack.c.b16 %v1206, %v1204
      %v1531 = vpack.c.b16 %v1209, %v1207
      %v1532 = vpack.c.b16 %v1210, %v1208
      %v1533 = vpack.c.b16 %v1213, %v1211
      %v1534 = vpack.c.b16 %v1214, %v1212
      %v1535 = vpack.c.b16 %v1217, %v1215
      %v1536 = vpack.c.b16 %v1218, %v1216
      %v1537 = vpack.c.b16 %v1221, %v1219
      %v1538 = vpack.c.b16 %v1222, %v1220
      %v1539 = vpack.c.b16 %v1225, %v1223
      %v1540 = vpack.c.b16 %v1226, %v1224
      %v1541 = vpack.c.b16 %v1229, %v1227
      %v1542 = vpack.c.b16 %v1230, %v1228
      %v1543 = vpack.c.b16 %v1233, %v1231
      %v1544 = vpack.c.b16 %v1234, %v1232
      %v1545 = vpack.c.b16 %v1237, %v1235
      %v1546 = vpack.c.b16 %v1238, %v1236
      %v1547 = vpack.c.b16 %v1241, %v1239
      %v1548 = vpack.c.b16 %v1242, %v1240
      %v1549 = vpack.c.b16 %v1245, %v1243
      %v1550 = vpack.c.b16 %v1246, %v1244
      %v1551 = vpack.c.b16 %v1249, %v1247
      %v1552 = vpack.c.b16 %v1250, %v1248
      %v1553 = vpack.c.b16 %v1253, %v1251
      %v1554 = vpack.c.b16 %v1254, %v1252
      %v1555 = vpack.c.b16 %v1257, %v1255
      %v1556 = vpack.c.b16 %v1258, %v1256
      %v1557 = vpack.c.b16 %v1261, %v1259
      %v1558 = vpack.c.b16 %v1262, %v1260
      %v1559 = vpack.c.b16 %v1265, %v1263
      %v1560 = vpack.c.b16 %v1266, %v1264
      %v1561 = vpack.c.b16 %v1269, %v1267
      %v1562 = vpack.c.b16 %v1270, %v1268
      %v1563 = vpack.c.b16 %v1273, %v1271
      %v1564 = vpack.c.b16 %v1274, %v1272
      %v1565 = vpack.c.b16 %v1277, %v1275
      %v1566 = vpack.c.b16 %v1278, %v1276
      %v1567 = vpack.c.b16 %v1281, %v1279
      %v1568 = vpack.c.b16 %v1282, %v1280
      %v1569 = vpack.c.b16 %v1285, %v1283
      %v1570 = vpack.c.b16 %v1286, %v1284
      %v1571 = vpack.c.b16 %v1289, %v1287
      %v1572 = vpack.c.b16 %v1290, %v1288
      %v1573 = vpack.c.b16 %v1293, %v1291
      %v1574 = vpack.c.b16 %v1294, %v1292
      %v1575 = vpack.c.b16 %v1297, %v1295
      %v1576 = vpack.c.b16 %v1298, %v1296
      %v1577 = vpack.c.b16 %v1301, %v1299
      %v1578 = vpack.c.b16 %v1302, %v1300
      %v1579 = vpack.c.b16 %v1305, %v1303
      %v1580 = vpack.c.b16 %v1306, %v1304
      %v1581 = vpack.c.b16 %v1309, %v1307
      %v1582 = vpack.c.b16 %v1310, %v1308
      %v1583 = vpack.c.b16 %v1313, %v1311
      %v1584 = vpack.c.b16 %v1314, %v1312
      %v1585 = vpack.c.b16 %v1317, %v1315
      %v1586 = vpack.c.b16 %v1318, %v1316
      %v1587 = vpack.c.b16 %v1321, %v1319
      %v1588 = vpack.c.b16 %v1322, %v1320
      %v1589 = vpack.c.b16 %v1325, %v1323
      %v1590 = vpack.c.b16 %v1326, %v1324
      %v1591 = vpack.c.b16 %v1329, %v1327
      %v1592 = vpack.c.b16 %v1330, %v1328
      %v1593 = vpack.c.b16 %v1333, %v1331
      %v1594 = vpack.c.b16 %v1334, %v1332
      %v1595 = vpack.c.b16 %v1337, %v1335
      %v1596 = vpack.c.b16 %v1338, %v1336
      %v1597 = vpack.c.b16 %v1341, %v1339
      %v1598 = vpack.c.b16 %v1342, %v1340
      %1855 = vmatprep.subr.bf16.mxu0 %v1344
      %1856 = vmatpush1.bf16.msra.mxu0 %v1343
      %1857 = vmatprep.subr.bf16.mxu0 %v1346
      %1858 = vmatpush1.bf16.msra.mxu0 %v1345
      %1859 = vmatprep.subr.bf16.mxu0 %v1348
      %1860 = vmatpush1.bf16.msra.mxu0 %v1347
      %1861 = vmatprep.subr.bf16.mxu0 %v1350
      %1862 = vmatpush1.bf16.msra.mxu0 %v1349
      %1863 = vmatprep.subr.bf16.mxu0 %v1352
      %1864 = vmatpush1.bf16.msra.mxu0 %v1351
      %1865 = vmatprep.subr.bf16.mxu0 %v1354
      %1866 = vmatpush1.bf16.msra.mxu0 %v1353
      %1867 = vmatprep.subr.bf16.mxu0 %v1356
      %1868 = vmatpush1.bf16.msra.mxu0 %v1355
      %1869 = vmatprep.subr.bf16.mxu0 %v1358
      %1870 = vmatpush1.bf16.msra.mxu0 %v1357
      %1871 = vmatprep.subr.bf16.mxu0 %v1360
      %1872 = vmatpush1.bf16.msra.mxu0 %v1359
      %1873 = vmatprep.subr.bf16.mxu0 %v1362
      %1874 = vmatpush1.bf16.msra.mxu0 %v1361
      %1875 = vmatprep.subr.bf16.mxu0 %v1364
      %1876 = vmatpush1.bf16.msra.mxu0 %v1363
      %1877 = vmatprep.subr.bf16.mxu0 %v1366
      %1878 = vmatpush1.bf16.msra.mxu0 %v1365
      %1879 = vmatprep.subr.bf16.mxu0 %v1368
      %1880 = vmatpush1.bf16.msra.mxu0 %v1367
      %1881 = vmatprep.subr.bf16.mxu0 %v1370
      %1882 = vmatpush1.bf16.msra.mxu0 %v1369
      %1883 = vmatprep.subr.bf16.mxu0 %v1372
      %1884 = vmatpush1.bf16.msra.mxu0 %v1371
      %1885 = vmatprep.subr.bf16.mxu0 %v1374
      %1886 = vmatpush1.bf16.msra.mxu0 %v1373
      %1887 = vmatprep.mubr.bf16.mxu0 %v188
      %1888 = vmatmul.mubr.bf16.gmra.mrb[0].mxu0 %v187
      %v1889 = vpop.f32.mrb[0].mxu0
      %v1890 = vadd.f32 %v568, %v1889
      %v1891 = vpop.f32.mrb[0].mxu0
      %v1892 = vadd.f32 %v572, %v1891
      %v1893 = vpop.f32.mrb[0].mxu0
      %v1894 = vpop.f32.mrb[0].mxu0
      %1895 = vdwg.mxu0
      %1896 = vmatprep.subr.bf16.mxu0 %v1376
      %1897 = vmatpush1.bf16.msra.mxu0 %v1375
      %1898 = vmatprep.subr.bf16.mxu0 %v1378
      %1899 = vmatpush1.bf16.msra.mxu0 %v1377
      %1900 = vmatprep.subr.bf16.mxu0 %v1380
      %1901 = vmatpush1.bf16.msra.mxu0 %v1379
      %1902 = vmatprep.subr.bf16.mxu0 %v1382
      %1903 = vmatpush1.bf16.msra.mxu0 %v1381
      %1904 = vmatprep.subr.bf16.mxu0 %v1384
      %1905 = vmatpush1.bf16.msra.mxu0 %v1383
      %1906 = vmatprep.subr.bf16.mxu0 %v1386
      %1907 = vmatpush1.bf16.msra.mxu0 %v1385
      %1908 = vmatprep.subr.bf16.mxu0 %v1388
      %1909 = vmatpush1.bf16.msra.mxu0 %v1387
      %1910 = vmatprep.subr.bf16.mxu0 %v1390
      %1911 = vmatpush1.bf16.msra.mxu0 %v1389
      %1912 = vmatprep.subr.bf16.mxu0 %v1392
      %1913 = vmatpush1.bf16.msra.mxu0 %v1391
      %1914 = vmatprep.subr.bf16.mxu0 %v1394
      %1915 = vmatpush1.bf16.msra.mxu0 %v1393
      %1916 = vmatprep.subr.bf16.mxu0 %v1396
      %1917 = vmatpush1.bf16.msra.mxu0 %v1395
      %1918 = vmatprep.subr.bf16.mxu0 %v1398
      %1919 = vmatpush1.bf16.msra.mxu0 %v1397
      %1920 = vmatprep.subr.bf16.mxu0 %v1400
      %1921 = vmatpush1.bf16.msra.mxu0 %v1399
      %1922 = vmatprep.subr.bf16.mxu0 %v1402
      %1923 = vmatpush1.bf16.msra.mxu0 %v1401
      %1924 = vmatprep.subr.bf16.mxu0 %v1404
      %1925 = vmatpush1.bf16.msra.mxu0 %v1403
      %1926 = vmatprep.subr.bf16.mxu0 %v1406
      %1927 = vmatpush1.bf16.msra.mxu0 %v1405
      %1928 = vmatprep.mubr.bf16.mxu0 %v190
      %1929 = vmatmul.mubr.bf16.gmra.mrb[0].mxu0 %v189
      %v1930 = vpop.f32.mrb[0].mxu0
      %v1931 = vadd.f32 %v1890, %v1930
      %v1932 = vpop.f32.mrb[0].mxu0
      %v1933 = vadd.f32 %v1892, %v1932
      %v1934 = vpop.f32.mrb[0].mxu0
      %v1935 = vpop.f32.mrb[0].mxu0
      %1936 = vdwg.mxu0
      %1937 = vmatprep.subr.bf16.mxu0 %v1408
      %1938 = vmatpush1.bf16.msra.mxu0 %v1407
      %1939 = vmatprep.subr.bf16.mxu0 %v1410
      %1940 = vmatpush1.bf16.msra.mxu0 %v1409
      %1941 = vmatprep.subr.bf16.mxu0 %v1412
      %1942 = vmatpush1.bf16.msra.mxu0 %v1411
      %1943 = vmatprep.subr.bf16.mxu0 %v1414
      %1944 = vmatpush1.bf16.msra.mxu0 %v1413
      %1945 = vmatprep.subr.bf16.mxu0 %v1416
      %1946 = vmatpush1.bf16.msra.mxu0 %v1415
      %1947 = vmatprep.subr.bf16.mxu0 %v1418
      %1948 = vmatpush1.bf16.msra.mxu0 %v1417
      %1949 = vmatprep.subr.bf16.mxu0 %v1420
      %1950 = vmatpush1.bf16.msra.mxu0 %v1419
      %1951 = vmatprep.subr.bf16.mxu0 %v1422
      %1952 = vmatpush1.bf16.msra.mxu0 %v1421
      %1953 = vmatprep.subr.bf16.mxu0 %v1424
      %1954 = vmatpush1.bf16.msra.mxu0 %v1423
      %1955 = vmatprep.subr.bf16.mxu0 %v1426
      %1956 = vmatpush1.bf16.msra.mxu0 %v1425
      %1957 = vmatprep.subr.bf16.mxu0 %v1428
      %1958 = vmatpush1.bf16.msra.mxu0 %v1427
      %1959 = vmatprep.subr.bf16.mxu0 %v1430
      %1960 = vmatpush1.bf16.msra.mxu0 %v1429
      %1961 = vmatprep.subr.bf16.mxu0 %v1432
      %1962 = vmatpush1.bf16.msra.mxu0 %v1431
      %1963 = vmatprep.subr.bf16.mxu0 %v1434
      %1964 = vmatpush1.bf16.msra.mxu0 %v1433
      %1965 = vmatprep.subr.bf16.mxu0 %v1436
      %1966 = vmatpush1.bf16.msra.mxu0 %v1435
      %1967 = vmatprep.subr.bf16.mxu0 %v1438
      %1968 = vmatpush1.bf16.msra.mxu0 %v1437
      %1969 = vmatprep.mubr.bf16.mxu0 %v218
      %1970 = vmatmul.mubr.bf16.gmra.mrb[0].mxu0 %v211
      %v1971 = vpop.f32.mrb[0].mxu0
      %v1972 = vadd.f32 %v1931, %v1971
      %v1973 = vpop.f32.mrb[0].mxu0
      %v1974 = vadd.f32 %v1933, %v1973
      %v1975 = vpop.f32.mrb[0].mxu0
      %v1976 = vpop.f32.mrb[0].mxu0
      %1977 = vdwg.mxu0
      %1978 = vmatprep.subr.bf16.mxu0 %v1440
      %1979 = vmatpush1.bf16.msra.mxu0 %v1439
      %1980 = vmatprep.subr.bf16.mxu0 %v1442
      %1981 = vmatpush1.bf16.msra.mxu0 %v1441
      %1982 = vmatprep.subr.bf16.mxu0 %v1444
      %1983 = vmatpush1.bf16.msra.mxu0 %v1443
      %1984 = vmatprep.subr.bf16.mxu0 %v1446
      %1985 = vmatpush1.bf16.msra.mxu0 %v1445
      %1986 = vmatprep.subr.bf16.mxu0 %v1448
      %1987 = vmatpush1.bf16.msra.mxu0 %v1447
      %1988 = vmatprep.subr.bf16.mxu0 %v1450
      %1989 = vmatpush1.bf16.msra.mxu0 %v1449
      %1990 = vmatprep.subr.bf16.mxu0 %v1452
      %1991 = vmatpush1.bf16.msra.mxu0 %v1451
      %1992 = vmatprep.subr.bf16.mxu0 %v1454
      %1993 = vmatpush1.bf16.msra.mxu0 %v1453
      %1994 = vmatprep.subr.bf16.mxu0 %v1456
      %1995 = vmatpush1.bf16.msra.mxu0 %v1455
      %1996 = vmatprep.subr.bf16.mxu0 %v1458
      %1997 = vmatpush1.bf16.msra.mxu0 %v1457
      %1998 = vmatprep.subr.bf16.mxu0 %v1460
      %1999 = vmatpush1.bf16.msra.mxu0 %v1459
      %2000 = vmatprep.subr.bf16.mxu0 %v1462
      %2001 = vmatpush1.bf16.msra.mxu0 %v1461
      %2002 = vmatprep.subr.bf16.mxu0 %v1464
      %2003 = vmatpush1.bf16.msra.mxu0 %v1463
      %2004 = vmatprep.subr.bf16.mxu0 %v1466
      %2005 = vmatpush1.bf16.msra.mxu0 %v1465
      %2006 = vmatprep.subr.bf16.mxu0 %v1468
      %2007 = vmatpush1.bf16.msra.mxu0 %v1467
      %2008 = vmatprep.subr.bf16.mxu0 %v1470
      %2009 = vmatpush1.bf16.msra.mxu0 %v1469
      %2010 = vmatprep.mubr.bf16.mxu0 %v232
      %2011 = vmatmul.mubr.bf16.gmra.mrb[0].mxu0 %v225
      %v2012 = vpop.f32.mrb[0].mxu0
      %v2013 = vadd.f32 %v1972, %v2012
      %v2014 = vpop.f32.mrb[0].mxu0
      %v2015 = vadd.f32 %v1974, %v2014
      %v2016 = vpop.f32.mrb[0].mxu0
      %v2017 = vpop.f32.mrb[0].mxu0
      %2018 = vdwg.mxu0
      %2019 = vmatprep.subr.bf16.mxu0 %v1472
      %2020 = vmatpush1.bf16.msra.mxu0 %v1471
      %2021 = vmatprep.subr.bf16.mxu0 %v1474
      %2022 = vmatpush1.bf16.msra.mxu0 %v1473
      %2023 = vmatprep.subr.bf16.mxu0 %v1476
      %2024 = vmatpush1.bf16.msra.mxu0 %v1475
      %2025 = vmatprep.subr.bf16.mxu0 %v1478
      %2026 = vmatpush1.bf16.msra.mxu0 %v1477
      %2027 = vmatprep.subr.bf16.mxu0 %v1480
      %2028 = vmatpush1.bf16.msra.mxu0 %v1479
      %2029 = vmatprep.subr.bf16.mxu0 %v1482
      %2030 = vmatpush1.bf16.msra.mxu0 %v1481
      %2031 = vmatprep.subr.bf16.mxu0 %v1484
      %2032 = vmatpush1.bf16.msra.mxu0 %v1483
      %2033 = vmatprep.subr.bf16.mxu0 %v1486
      %2034 = vmatpush1.bf16.msra.mxu0 %v1485
      %2035 = vmatprep.subr.bf16.mxu0 %v1488
      %2036 = vmatpush1.bf16.msra.mxu0 %v1487
      %2037 = vmatprep.subr.bf16.mxu0 %v1490
      %2038 = vmatpush1.bf16.msra.mxu0 %v1489
      %2039 = vmatprep.subr.bf16.mxu0 %v1492
      %2040 = vmatpush1.bf16.msra.mxu0 %v1491
      %2041 = vmatprep.subr.bf16.mxu0 %v1494
      %2042 = vmatpush1.bf16.msra.mxu0 %v1493
      %2043 = vmatprep.subr.bf16.mxu0 %v1496
      %2044 = vmatpush1.bf16.msra.mxu0 %v1495
      %2045 = vmatprep.subr.bf16.mxu0 %v1498
      %2046 = vmatpush1.bf16.msra.mxu0 %v1497
      %2047 = vmatprep.subr.bf16.mxu0 %v1500
      %2048 = vmatpush1.bf16.msra.mxu0 %v1499
      %2049 = vmatprep.subr.bf16.mxu0 %v1502
      %2050 = vmatpush1.bf16.msra.mxu0 %v1501
      %2051 = vmatprep.mubr.bf16.mxu0 %v268
      %2052 = vmatmul.mubr.bf16.gmra.mrb[0].mxu0 %v260
      %v2053 = vpop.f32.mrb[0].mxu0
      %v2054 = vadd.f32 %v2013, %v2053
      %v2055 = vpop.f32.mrb[0].mxu0
      %v2056 = vadd.f32 %v2015, %v2055
      %v2057 = vpop.f32.mrb[0].mxu0
      %v2058 = vpop.f32.mrb[0].mxu0
      %2059 = vdwg.mxu0
      %2060 = vmatprep.subr.bf16.mxu0 %v1504
      %2061 = vmatpush1.bf16.msra.mxu0 %v1503
      %2062 = vmatprep.subr.bf16.mxu0 %v1506
      %2063 = vmatpush1.bf16.msra.mxu0 %v1505
      %2064 = vmatprep.subr.bf16.mxu0 %v1508
      %2065 = vmatpush1.bf16.msra.mxu0 %v1507
      %2066 = vmatprep.subr.bf16.mxu0 %v1510
      %2067 = vmatpush1.bf16.msra.mxu0 %v1509
      %2068 = vmatprep.subr.bf16.mxu0 %v1512
      %2069 = vmatpush1.bf16.msra.mxu0 %v1511
      %2070 = vmatprep.subr.bf16.mxu0 %v1514
      %2071 = vmatpush1.bf16.msra.mxu0 %v1513
      %2072 = vmatprep.subr.bf16.mxu0 %v1516
      %2073 = vmatpush1.bf16.msra.mxu0 %v1515
      %2074 = vmatprep.subr.bf16.mxu0 %v1518
      %2075 = vmatpush1.bf16.msra.mxu0 %v1517
      %2076 = vmatprep.subr.bf16.mxu0 %v1520
      %2077 = vmatpush1.bf16.msra.mxu0 %v1519
      %2078 = vmatprep.subr.bf16.mxu0 %v1522
      %2079 = vmatpush1.bf16.msra.mxu0 %v1521
      %2080 = vmatprep.subr.bf16.mxu0 %v1524
      %2081 = vmatpush1.bf16.msra.mxu0 %v1523
      %2082 = vmatprep.subr.bf16.mxu0 %v1526
      %2083 = vmatpush1.bf16.msra.mxu0 %v1525
      %2084 = vmatprep.subr.bf16.mxu0 %v1528
      %2085 = vmatpush1.bf16.msra.mxu0 %v1527
      %2086 = vmatprep.subr.bf16.mxu0 %v1530
      %2087 = vmatpush1.bf16.msra.mxu0 %v1529
      %2088 = vmatprep.subr.bf16.mxu0 %v1532
      %2089 = vmatpush1.bf16.msra.mxu0 %v1531
      %2090 = vmatprep.subr.bf16.mxu0 %v1534
      %2091 = vmatpush1.bf16.msra.mxu0 %v1533
      %2092 = vmatprep.mubr.bf16.mxu0 %v284
      %2093 = vmatmul.mubr.bf16.gmra.mrb[0].mxu0 %v276
      %v2094 = vpop.f32.mrb[0].mxu0
      %v2095 = vadd.f32 %v2054, %v2094
      %v2096 = vpop.f32.mrb[0].mxu0
      %v2097 = vadd.f32 %v2056, %v2096
      %v2098 = vpop.f32.mrb[0].mxu0
      %v2099 = vpop.f32.mrb[0].mxu0
      %2100 = vdwg.mxu0
      %2101 = vmatprep.subr.bf16.mxu0 %v1536
      %2102 = vmatpush1.bf16.msra.mxu0 %v1535
      %2103 = vmatprep.subr.bf16.mxu0 %v1538
      %2104 = vmatpush1.bf16.msra.mxu0 %v1537
      %2105 = vmatprep.subr.bf16.mxu0 %v1540
      %2106 = vmatpush1.bf16.msra.mxu0 %v1539
      %2107 = vmatprep.subr.bf16.mxu0 %v1542
      %2108 = vmatpush1.bf16.msra.mxu0 %v1541
      %2109 = vmatprep.subr.bf16.mxu0 %v1544
      %2110 = vmatpush1.bf16.msra.mxu0 %v1543
      %2111 = vmatprep.subr.bf16.mxu0 %v1546
      %2112 = vmatpush1.bf16.msra.mxu0 %v1545
      %2113 = vmatprep.subr.bf16.mxu0 %v1548
      %2114 = vmatpush1.bf16.msra.mxu0 %v1547
      %2115 = vmatprep.subr.bf16.mxu0 %v1550
      %2116 = vmatpush1.bf16.msra.mxu0 %v1549
      %2117 = vmatprep.subr.bf16.mxu0 %v1552
      %2118 = vmatpush1.bf16.msra.mxu0 %v1551
      %2119 = vmatprep.subr.bf16.mxu0 %v1554
      %2120 = vmatpush1.bf16.msra.mxu0 %v1553
      %2121 = vmatprep.subr.bf16.mxu0 %v1556
      %2122 = vmatpush1.bf16.msra.mxu0 %v1555
      %2123 = vmatprep.subr.bf16.mxu0 %v1558
      %2124 = vmatpush1.bf16.msra.mxu0 %v1557
      %2125 = vmatprep.subr.bf16.mxu0 %v1560
      %2126 = vmatpush1.bf16.msra.mxu0 %v1559
      %2127 = vmatprep.subr.bf16.mxu0 %v1562
      %2128 = vmatpush1.bf16.msra.mxu0 %v1561
      %2129 = vmatprep.subr.bf16.mxu0 %v1564
      %2130 = vmatpush1.bf16.msra.mxu0 %v1563
      %2131 = vmatprep.subr.bf16.mxu0 %v1566
      %2132 = vmatpush1.bf16.msra.mxu0 %v1565
      %2133 = vmatprep.mubr.bf16.mxu0 %v300
      %2134 = vmatmul.mubr.bf16.gmra.mrb[0].mxu0 %v299
      %v2135 = vpop.f32.mrb[0].mxu0
      %v2136 = vadd.f32 %v2095, %v2135
      %v2137 = vpop.f32.mrb[0].mxu0
      %v2138 = vadd.f32 %v2097, %v2137
      %v2139 = vpop.f32.mrb[0].mxu0
      %v2140 = vpop.f32.mrb[0].mxu0
      %2141 = vdwg.mxu0
      %2142 = vmatprep.subr.bf16.mxu0 %v1568
      %2143 = vmatpush1.bf16.msra.mxu0 %v1567
      %2144 = vmatprep.subr.bf16.mxu0 %v1570
      %2145 = vmatpush1.bf16.msra.mxu0 %v1569
      %2146 = vmatprep.subr.bf16.mxu0 %v1572
      %2147 = vmatpush1.bf16.msra.mxu0 %v1571
      %2148 = vmatprep.subr.bf16.mxu0 %v1574
      %2149 = vmatpush1.bf16.msra.mxu0 %v1573
      %2150 = vmatprep.subr.bf16.mxu0 %v1576
      %2151 = vmatpush1.bf16.msra.mxu0 %v1575
      %2152 = vmatprep.subr.bf16.mxu0 %v1578
      %2153 = vmatpush1.bf16.msra.mxu0 %v1577
      %2154 = vmatprep.subr.bf16.mxu0 %v1580
      %2155 = vmatpush1.bf16.msra.mxu0 %v1579
      %2156 = vmatprep.subr.bf16.mxu0 %v1582
      %2157 = vmatpush1.bf16.msra.mxu0 %v1581
      %2158 = vmatprep.subr.bf16.mxu0 %v1584
      %2159 = vmatpush1.bf16.msra.mxu0 %v1583
      %2160 = vmatprep.subr.bf16.mxu0 %v1586
      %2161 = vmatpush1.bf16.msra.mxu0 %v1585
      %2162 = vmatprep.subr.bf16.mxu0 %v1588
      %2163 = vmatpush1.bf16.msra.mxu0 %v1587
      %2164 = vmatprep.subr.bf16.mxu0 %v1590
      %2165 = vmatpush1.bf16.msra.mxu0 %v1589
      %2166 = vmatprep.subr.bf16.mxu0 %v1592
      %2167 = vmatpush1.bf16.msra.mxu0 %v1591
      %2168 = vmatprep.subr.bf16.mxu0 %v1594
      %2169 = vmatpush1.bf16.msra.mxu0 %v1593
      %2170 = vmatprep.subr.bf16.mxu0 %v1596
      %2171 = vmatpush1.bf16.msra.mxu0 %v1595
      %2172 = vmatprep.subr.bf16.mxu0 %v1598
      %2173 = vmatpush1.bf16.msra.mxu0 %v1597
      %2174 = vmatprep.mubr.bf16.mxu0 %v302
      %2175 = vmatmul.mubr.bf16.gmra.mrb[0].mxu0 %v301
      %v2176 = vpop.f32.mrb[0].mxu0
      %v2177 = vadd.f32 %v2136, %v2176
      %v2178 = vpop.f32.mrb[0].mxu0
      %v2179 = vadd.f32 %v2138, %v2178
      %v2180 = vpop.f32.mrb[0].mxu0
      %v2181 = vpop.f32.mrb[0].mxu0
      %2182 = vdwg.mxu0
      %v2183 = vmax.f32 %v2177, 0.0
      %v2184 = vmax.f32 %v2179, 0.0
      %v2185 = vpack.c.bf16 %v2183, %v2183
      %v2186 = vpack.c.bf16 %v2184, %v2184
      %v2189 = vunpack.c.l.b16 %v2185
      %v2190 = vunpack.c.l.b16 %v2186
      %v2191 = vpack.c.b16 %v2190, %v2189
      %2193 = vst [vmem:[%s170] sm:$0x77] %v2191
      %p2194 = scmp.lt.s32.totalorder %s14, 1
      %s2195 = scalar_select %p2194, %s14, 1
      %s2196 = smul.addr %s2195, 2
      %s2197 = smul.addr %s2196, 4
      %s2198 = scalar_lea.vmem %s3, %s2197
      // Predicated region
      $region33: #{conv_encoder_forward.8} parent=31 // pred_check
        %p2199 = pneg %p100
      $region34: #{conv_encoder_forward.8} parent=31 // pred_check_branch
        %2201 = sbr.rel (%p2199) target = $region36
      $region35: #{conv_encoder_forward.8} parent=31 // pred_region
        _
      $region36: #{conv_encoder_forward.8} parent=31 // pred_fallthru
        _
    $region32: #{conv_encoder_forward.8} parent=5 // pred_fallthru
      _
    %p2202 = scmp.le.s32.totalorder 2, %s9
    // Predicated region
    $region37: #{conv_encoder_forward.8} parent=5 // pred_check
      %p2203 = pneg %p2202
    $region38: #{conv_encoder_forward.8} parent=5 // pred_check_branch
      %2205 = sbr.rel (%p2203) target = $region40
    $region39: #{conv_encoder_forward.8} parent=5 // pred_region
      %s2206 = ssub.s32 %s9, 2
      // Predicated region
      $region41: #{conv_encoder_forward.8} parent=39 // pred_check
        %p2207 = pneg %p106
      $region42: #{conv_encoder_forward.8} parent=39 // pred_check_branch
        %2209 = sbr.rel (%p2207) target = $region44
      $region43: #{conv_encoder_forward.8} parent=39 // pred_region
        %p2210 = scmp.lt.s32.totalorder %s15, 1
        %s2211 = scalar_select %p2210, %s15, 1
        %s2212 = smul.addr %s2211, 2
        %s2213 = smul.addr %s2212, 4
        %s2214 = scalar_lea.vmem %s3, %s2213
      $region44: #{conv_encoder_forward.8} parent=39 // pred_fallthru
        _
    $region40: #{conv_encoder_forward.8} parent=5 // pred_fallthru
      _
  $region6: #{conv_encoder_forward.8} parent=0 // loop_footer
    %s13 = sadd.s32 1, %s9
  $region7: #{conv_encoder_forward.8} parent=0 // loop_footer_branch
    %8 = sbr.rel target = $region3
  $region8: #{conv_encoder_forward.8} parent=0 // loop_exit
    _

</llo_original>
